<compile_context>
chip_gen: v7x
topology: tpu7x:2x2x1
jax: 0.10.0
libtpu: 0.0.40
codegen_flags: <defaults>
</compile_context>

<pallas_src>
import numpy as np
import jax
import jax.numpy as jnp
from jax import lax
from jax.experimental import pallas as pl
from jax.experimental.pallas import tpu as pltpu


def _round_up(x, m):
    return (x + m - 1) // m * m


def make_lstm_decoder_kernel(T, Bp, Hp, unroll):
    """Fused 2-layer LSTM + linear head (all weights VMEM-resident)."""

    def kernel(x_ref, hin_ref, cin_ref,
               W0T, U0T, b0, W1T, U1T, b1, WfcT, bfc,
               y_ref, hout_ref, cout_ref,
               g0, h0seq, g1, h1seq, h_sc, c_sc):

        def gate_math(g, c):
            # PyTorch LSTM gate order (i, f, g, o); all slices lane-aligned (Hp % 128 == 0).
            i = jax.nn.sigmoid(g[:, 0 * Hp:1 * Hp])
            f = jax.nn.sigmoid(g[:, 1 * Hp:2 * Hp])
            gg = jnp.tanh(g[:, 2 * Hp:3 * Hp])
            o = jax.nn.sigmoid(g[:, 3 * Hp:4 * Hp])
            c_new = f * c + i * gg
            h_new = o * jnp.tanh(c_new)
            return h_new, c_new

        def run_layer(gpre, UT, hseq, layer):
            # Recurrence only: per-step h @ U plus a slice of the precomputed
            # (bias-folded) input projection. No broadcasts / concats in-loop.
            h_sc[...] = hin_ref[layer]
            c_sc[...] = cin_ref[layer]

            def body(t, carry):
                r = pl.multiple_of(t * Bp, Bp)          # Bp is a multiple of 8
                g = (gpre[pl.ds(r, Bp), :]
                     + jnp.dot(h_sc[...], UT[...],
                               preferred_element_type=jnp.float32))
                h_new, c_new = gate_math(g, c_sc[...])
                h_sc[...] = h_new
                c_sc[...] = c_new
                hseq[pl.ds(r, Bp), :] = h_new
                return carry

            lax.fori_loop(0, T, body, 0, unroll=unroll)
            hout_ref[layer] = h_sc[...]
            cout_ref[layer] = c_sc[...]

        # ---- Layer 0: one big input-projection matmul (bias folded), then recurrence.
        g0[...] = (jnp.dot(x_ref[...], W0T[...], preferred_element_type=jnp.float32)
                   + b0[...])
        run_layer(g0, U0T, h0seq, 0)

        # nn.LSTM dropout between layers acts only in training -> identity (eval).
        # ---- Layer 1: batched input projection over all time steps, then recurrence.
        g1[...] = (jnp.dot(h0seq[...], W1T[...], preferred_element_type=jnp.float32)
                   + b1[...])
        run_layer(g1, U1T, h1seq, 1)

        # ---- fc head: single batched, lane-dense matmul + store (no per-step masked vst).
        y_ref[...] = (jnp.dot(h1seq[...], WfcT[...], preferred_element_type=jnp.float32)
                      + bfc[...])

    return kernel


def lstm_decoder_forward(params, x_t, hidden, cell):
    """x_t: (B, T, input_dim), hidden/cell: (2, B, H).  Returns (y, hidden, cell)."""
    B, T, D = x_t.shape
    H = params["H"]
    ydim = params["WfcT"].shape[1]

    Bp = _round_up(B, 8)          # sublane alignment
    Hp = _round_up(H, 128)        # lane-aligned gate slices
    Dp = _round_up(D, 128)        # lane-dense input slab
    Yp = _round_up(ydim, 128)     # lane-dense output store

    f32 = jnp.float32

    # ---- glue (plain JAX): time-major, zero-padded, flattened to (T*Bp, .) ----
    x_tm = jnp.transpose(x_t, (1, 0, 2))
    x_tm = jnp.pad(x_tm, ((0, 0), (0, Bp - B), (0, Dp - D)))
    x_flat = x_tm.reshape(T * Bp, Dp).astype(f32)

    h_p = jnp.pad(hidden, ((0, 0), (0, Bp - B), (0, Hp - H))).astype(f32)
    c_p = jnp.pad(cell, ((0, 0), (0, Bp - B), (0, Hp - H))).astype(f32)

    # Gate-wise zero padding keeps the math exact: padded gate lanes see only
    # zero weights/bias, so padded h/c stay exactly 0 across all steps.
    def pad_w(W, in_pad):
        ind = W.shape[0]
        Wg = W.reshape(ind, 4, H)
        Wg = jnp.pad(Wg, ((0, in_pad - ind), (0, 0), (0, Hp - H)))
        return Wg.reshape(in_pad, 4 * Hp).astype(f32)

    def pad_b(b):
        bg = b.reshape(4, H)
        bg = jnp.pad(bg, ((0, 0), (0, Hp - H)))
        return bg.reshape(1, 4 * Hp).astype(f32)

    W0T = pad_w(params["W0T"], Dp)
    U0T = pad_w(params["U0T"], Hp)
    b0 = pad_b(params["b0"])
    W1T = pad_w(params["W1T"], Hp)
    U1T = pad_w(params["U1T"], Hp)
    b1 = pad_b(params["b1"])
    WfcT = jnp.pad(params["WfcT"], ((0, Hp - H), (0, Yp - ydim))).astype(f32)
    bfc = jnp.pad(params["bfc"], ((0, Yp - ydim),)).reshape(1, Yp).astype(f32)

    unroll = True if T <= 16 else 2
    kernel = make_lstm_decoder_kernel(T, Bp, Hp, unroll)

    vmem = pl.BlockSpec(memory_space=pltpu.MemorySpace.VMEM)

    y_flat, h_out, c_out = pl.pallas_call(
        kernel,
        out_shape=(jax.ShapeDtypeStruct((T * Bp, Yp), f32),
                   jax.ShapeDtypeStruct((2, Bp, Hp), f32),
                   jax.ShapeDtypeStruct((2, Bp, Hp), f32)),
        in_specs=[vmem] * 11,
        out_specs=(vmem, vmem, vmem),
        scratch_shapes=[pltpu.VMEM((T * Bp, 4 * Hp), f32),   # layer-0 input projections
                        pltpu.VMEM((T * Bp, Hp), f32),       # layer-0 hidden sequence
                        pltpu.VMEM((T * Bp, 4 * Hp), f32),   # layer-1 input projections
                        pltpu.VMEM((T * Bp, Hp), f32),       # layer-1 hidden sequence
                        pltpu.VMEM((Bp, Hp), f32),           # current h
                        pltpu.VMEM((Bp, Hp), f32)],          # current c
    )(x_flat, h_p, c_p, W0T, U0T, b0, W1T, U1T, b1, WfcT, bfc)

    y = y_flat.reshape(T, Bp, Yp)[:, :B, :ydim].transpose(1, 0, 2)   # (B, T, ydim)
    hidden_out = h_out[:, :B, :H]
    cell_out = c_out[:, :B, :H]
    return y, hidden_out, cell_out


def reference_forward(params, x_t, hidden, cell):
    """Pure-JAX reference mirroring PyTorch LSTM_Decoder.forward (eval mode)."""
    H = params["H"]
    hi = lax.Precision.HIGHEST

    def cell_fn(x, h, c, WT, UT, b):
        g = (jnp.dot(x, WT, precision=hi) + jnp.dot(h, UT, precision=hi) + b)
        i = jax.nn.sigmoid(g[:, :H])
        f = jax.nn.sigmoid(g[:, H:2 * H])
        gg = jnp.tanh(g[:, 2 * H:3 * H])
        o = jax.nn.sigmoid(g[:, 3 * H:])
        c = f * c + i * gg
        h = o * jnp.tanh(c)
        return h, c

    B, T, _ = x_t.shape
    h0, h1 = hidden[0], hidden[1]
    c0, c1 = cell[0], cell[1]
    outs = []
    for t in range(T):
        h0, c0 = cell_fn(x_t[:, t], h0, c0, params["W0T"], params["U0T"], params["b0"])
        h1, c1 = cell_fn(h0, h1, c1, params["W1T"], params["U1T"], params["b1"])
        outs.append(jnp.dot(h1, params["WfcT"], precision=hi) + params["bfc"])
    return (jnp.stack(outs, axis=1),
            jnp.stack([h0, h1], axis=0),
            jnp.stack([c0, c1], axis=0))


def init_params(key, input_dim, hidden_dim, output_dim):
    """Synthetic PyTorch-LSTM-like uniform init. Weights pre-transposed to
    (in_dim, 4H); bias_ih + bias_hh pre-summed as (4H,)."""
    bound = 1.0 / np.sqrt(hidden_dim)

    def u(k, shape):
        return jax.random.uniform(k, shape, jnp.float32, -bound, bound)

    shapes = {
        "W0T": (input_dim, 4 * hidden_dim), "U0T": (hidden_dim, 4 * hidden_dim),
        "b0": (4 * hidden_dim,),
        "W1T": (hidden_dim, 4 * hidden_dim), "U1T": (hidden_dim, 4 * hidden_dim),
        "b1": (4 * hidden_dim,),
        "WfcT": (hidden_dim, output_dim), "bfc": (output_dim,),
    }
    params = {"H": hidden_dim}
    keys = jax.random.split(key, len(shapes))
    for k, (name, shp) in zip(keys, shapes.items()):
        params[name] = u(k, shp)
    return params


if __name__ == "__main__":
    B, T = 2, 8
    input_dim, hidden_dim, output_dim = 5, 128, 2   # hidden chosen lane-aligned (x128)
    n_layers = 2

    root = jax.random.PRNGKey(0)
    kp, kx, kh, kc = jax.random.split(root, 4)
    params = init_params(kp, input_dim, hidden_dim, output_dim)

    x_t = jax.random.normal(kx, (B, T, input_dim), jnp.float32)
    hidden = 0.1 * jax.random.normal(kh, (n_layers, B, hidden_dim), jnp.float32)
    cell = 0.1 * jax.random.normal(kc, (n_layers, B, hidden_dim), jnp.float32)

    y, h_out, c_out = lstm_decoder_forward(params, x_t, hidden, cell)
    y, h_out, c_out = jax.block_until_ready((y, h_out, c_out))

    y_ref, h_ref, c_ref = reference_forward(params, x_t, hidden, cell)
    y_ref, h_ref, c_ref = jax.block_until_ready((y_ref, h_ref, c_ref))

    assert y.shape == (B, T, output_dim)
    assert h_out.shape == (n_layers, B, hidden_dim)
    assert c_out.shape == (n_layers, B, hidden_dim)
    np.testing.assert_allclose(np.asarray(y), np.asarray(y_ref), rtol=1e-3, atol=1e-4)
    np.testing.assert_allclose(np.asarray(h_out), np.asarray(h_ref), rtol=1e-3, atol=1e-4)
    np.testing.assert_allclose(np.asarray(c_out), np.asarray(c_ref), rtol=1e-3, atol=1e-4)
    print("KERNEL_OK")
</pallas_src>

<mosaic_0001>
module attributes {stable_mosaic.version = 11 : i64} {
  func.func @kernel(%arg0: memref<64x128xf32, #tpu.memory_space<vmem>>, %arg1: memref<2x8x128xf32, #tpu.memory_space<vmem>>, %arg2: memref<2x8x128xf32, #tpu.memory_space<vmem>>, %arg3: memref<128x512xf32, #tpu.memory_space<vmem>>, %arg4: memref<128x512xf32, #tpu.memory_space<vmem>>, %arg5: memref<1x512xf32, #tpu.memory_space<vmem>>, %arg6: memref<128x512xf32, #tpu.memory_space<vmem>>, %arg7: memref<128x512xf32, #tpu.memory_space<vmem>>, %arg8: memref<1x512xf32, #tpu.memory_space<vmem>>, %arg9: memref<128x128xf32, #tpu.memory_space<vmem>>, %arg10: memref<1x128xf32, #tpu.memory_space<vmem>>, %arg11: memref<64x128xf32, #tpu.memory_space<vmem>>, %arg12: memref<2x8x128xf32, #tpu.memory_space<vmem>>, %arg13: memref<2x8x128xf32, #tpu.memory_space<vmem>>, %arg14: memref<64x512xf32, #tpu.memory_space<vmem>>, %arg15: memref<64x128xf32, #tpu.memory_space<vmem>>, %arg16: memref<64x512xf32, #tpu.memory_space<vmem>>, %arg17: memref<64x128xf32, #tpu.memory_space<vmem>>, %arg18: memref<8x128xf32, #tpu.memory_space<vmem>>, %arg19: memref<8x128xf32, #tpu.memory_space<vmem>>) attributes {dimension_semantics = [], scalar_prefetch = 0 : i64, scratch_operands = 6 : i64, tpu.core_type = #tpu.core_type<tc>} {
    %c0 = arith.constant 0 : index
    %c0_0 = arith.constant 0 : index
    %0 = vector.load %arg0[%c0, %c0_0] : memref<64x128xf32, #tpu.memory_space<vmem>>, vector<64x128xf32>
    %c0_1 = arith.constant 0 : index
    %c0_2 = arith.constant 0 : index
    %1 = vector.load %arg3[%c0_1, %c0_2] : memref<128x512xf32, #tpu.memory_space<vmem>>, vector<128x512xf32>
    %cst = arith.constant dense<0.000000e+00> : vector<64x512xf32>
    %2 = tpu.matmul %0, %1, %cst {dimension_numbers = #tpu.dot_dimension_numbers<[1], [0], [0], [1], [0, 0, 1, 1], [], []>} : vector<64x128xf32>, vector<128x512xf32>, vector<64x512xf32> -> vector<64x512xf32>
    %c0_3 = arith.constant 0 : index
    %c0_4 = arith.constant 0 : index
    %3 = vector.load %arg5[%c0_3, %c0_4] : memref<1x512xf32, #tpu.memory_space<vmem>>, vector<1x512xf32>
    %4 = vector.broadcast %3 : vector<1x512xf32> to vector<64x512xf32>
    %5 = arith.addf %2, %4 : vector<64x512xf32>
    %c0_5 = arith.constant 0 : index
    %c0_6 = arith.constant 0 : index
    %6 = vector.load %arg14[%c0_5, %c0_6] : memref<64x512xf32, #tpu.memory_space<vmem>>, vector<64x512xf32>
    tpu.vector_store %arg14[%c0_5, %c0_6], %5 {strides = array<i32>} : memref<64x512xf32, #tpu.memory_space<vmem>>, vector<64x512xf32>,
    %c0_7 = arith.constant 0 : index
    %c0_8 = arith.constant 0 : index
    %c0_9 = arith.constant 0 : index
    %7 = vector.load %arg1[%c0_7, %c0_8, %c0_9] : memref<2x8x128xf32, #tpu.memory_space<vmem>>, vector<1x8x128xf32>
    %8 = vector.shape_cast %7 : vector<1x8x128xf32> to vector<8x128xf32>
    %c0_10 = arith.constant 0 : index
    %c0_11 = arith.constant 0 : index
    %9 = vector.load %arg18[%c0_10, %c0_11] : memref<8x128xf32, #tpu.memory_space<vmem>>, vector<8x128xf32>
    tpu.vector_store %arg18[%c0_10, %c0_11], %8 {strides = array<i32>} : memref<8x128xf32, #tpu.memory_space<vmem>>, vector<8x128xf32>,
    %c0_12 = arith.constant 0 : index
    %c0_13 = arith.constant 0 : index
    %c0_14 = arith.constant 0 : index
    %10 = vector.load %arg2[%c0_12, %c0_13, %c0_14] : memref<2x8x128xf32, #tpu.memory_space<vmem>>, vector<1x8x128xf32>
    %11 = vector.shape_cast %10 : vector<1x8x128xf32> to vector<8x128xf32>
    %c0_15 = arith.constant 0 : index
    %c0_16 = arith.constant 0 : index
    %12 = vector.load %arg19[%c0_15, %c0_16] : memref<8x128xf32, #tpu.memory_space<vmem>>, vector<8x128xf32>
    tpu.vector_store %arg19[%c0_15, %c0_16], %11 {strides = array<i32>} : memref<8x128xf32, #tpu.memory_space<vmem>>, vector<8x128xf32>,
    %c0_i32 = arith.constant 0 : i32
    %c8_i32 = arith.constant 8 : i32
    %13 = arith.muli %c0_i32, %c8_i32 : i32
    %14 = tpu.assume_multiple %13, 8 : i32
    %15 = arith.index_cast %14 : i32 to index
    %c0_17 = arith.constant 0 : index
    %16 = vector.load %arg14[%15, %c0_17] : memref<64x512xf32, #tpu.memory_space<vmem>>, vector<8x512xf32>
    %c0_18 = arith.constant 0 : index
    %c0_19 = arith.constant 0 : index
    %17 = vector.load %arg18[%c0_18, %c0_19] : memref<8x128xf32, #tpu.memory_space<vmem>>, vector<8x128xf32>
    %c0_20 = arith.constant 0 : index
    %c0_21 = arith.constant 0 : index
    %18 = vector.load %arg4[%c0_20, %c0_21] : memref<128x512xf32, #tpu.memory_space<vmem>>, vector<128x512xf32>
    %cst_22 = arith.constant dense<0.000000e+00> : vector<8x512xf32>
    %19 = tpu.matmul %17, %18, %cst_22 {dimension_numbers = #tpu.dot_dimension_numbers<[1], [0], [0], [1], [0, 0, 1, 1], [], []>} : vector<8x128xf32>, vector<128x512xf32>, vector<8x512xf32> -> vector<8x512xf32>
    %20 = arith.addf %16, %19 : vector<8x512xf32>
    %c0_23 = arith.constant 0 : index
    %c0_24 = arith.constant 0 : index
    %21 = vector.load %arg19[%c0_23, %c0_24] : memref<8x128xf32, #tpu.memory_space<vmem>>, vector<8x128xf32>
    %22 = vector.extract_strided_slice %20 {offsets = [0, 0], sizes = [8, 128], strides = [1, 1]} : vector<8x512xf32> to vector<8x128xf32>
    %23 = arith.negf %22 : vector<8x128xf32>
    %24 = math.exp %23 : vector<8x128xf32>
    %cst_25 = arith.constant 1.000000e+00 : f32
    %25 = vector.broadcast %cst_25 : f32 to vector<8x128xf32>
    %26 = arith.addf %25, %24 : vector<8x128xf32>
    %27 = arith.divf %25, %26 : vector<8x128xf32>
    %28 = vector.extract_strided_slice %20 {offsets = [0, 128], sizes = [8, 128], strides = [1, 1]} : vector<8x512xf32> to vector<8x128xf32>
    %29 = arith.negf %28 : vector<8x128xf32>
    %30 = math.exp %29 : vector<8x128xf32>
    %cst_26 = arith.constant 1.000000e+00 : f32
    %31 = vector.broadcast %cst_26 : f32 to vector<8x128xf32>
    %32 = arith.addf %31, %30 : vector<8x128xf32>
    %33 = arith.divf %31, %32 : vector<8x128xf32>
    %34 = vector.extract_strided_slice %20 {offsets = [0, 256], sizes = [8, 128], strides = [1, 1]} : vector<8x512xf32> to vector<8x128xf32>
    %35 = math.tanh %34 : vector<8x128xf32>
    %36 = vector.extract_strided_slice %20 {offsets = [0, 384], sizes = [8, 128], strides = [1, 1]} : vector<8x512xf32> to vector<8x128xf32>
    %37 = arith.negf %36 : vector<8x128xf32>
    %38 = math.exp %37 : vector<8x128xf32>
    %cst_27 = arith.constant 1.000000e+00 : f32
    %39 = vector.broadcast %cst_27 : f32 to vector<8x128xf32>
    %40 = arith.addf %39, %38 : vector<8x128xf32>
    %41 = arith.divf %39, %40 : vector<8x128xf32>
    %42 = arith.mulf %33, %21 : vector<8x128xf32>
    %43 = arith.mulf %27, %35 : vector<8x128xf32>
    %44 = arith.addf %42, %43 : vector<8x128xf32>
    %45 = math.tanh %44 : vector<8x128xf32>
    %46 = arith.mulf %41, %45 : vector<8x128xf32>
    %c0_28 = arith.constant 0 : index
    %c0_29 = arith.constant 0 : index
    %47 = vector.load %arg18[%c0_28, %c0_29] : memref<8x128xf32, #tpu.memory_space<vmem>>, vector<8x128xf32>
    tpu.vector_store %arg18[%c0_28, %c0_29], %46 {strides = array<i32>} : memref<8x128xf32, #tpu.memory_space<vmem>>, vector<8x128xf32>,
    %c0_30 = arith.constant 0 : index
    %c0_31 = arith.constant 0 : index
    %48 = vector.load %arg19[%c0_30, %c0_31] : memref<8x128xf32, #tpu.memory_space<vmem>>, vector<8x128xf32>
    tpu.vector_store %arg19[%c0_30, %c0_31], %44 {strides = array<i32>} : memref<8x128xf32, #tpu.memory_space<vmem>>, vector<8x128xf32>,
    %49 = arith.index_cast %14 : i32 to index
    %c0_32 = arith.constant 0 : index
    %50 = vector.load %arg15[%49, %c0_32] : memref<64x128xf32, #tpu.memory_space<vmem>>, vector<8x128xf32>
    tpu.vector_store %arg15[%49, %c0_32], %46 {strides = array<i32>} : memref<64x128xf32, #tpu.memory_space<vmem>>, vector<8x128xf32>,
    %c1_i32 = arith.constant 1 : i32
    %c8_i32_33 = arith.constant 8 : i32
    %51 = arith.muli %c1_i32, %c8_i32_33 : i32
    %52 = tpu.assume_multiple %51, 8 : i32
    %53 = arith.index_cast %52 : i32 to index
    %c0_34 = arith.constant 0 : index
    %54 = vector.load %arg14[%53, %c0_34] : memref<64x512xf32, #tpu.memory_space<vmem>>, vector<8x512xf32>
    %c0_35 = arith.constant 0 : index
    %c0_36 = arith.constant 0 : index
    %55 = vector.load %arg18[%c0_35, %c0_36] : memref<8x128xf32, #tpu.memory_space<vmem>>, vector<8x128xf32>
    %c0_37 = arith.constant 0 : index
    %c0_38 = arith.constant 0 : index
    %56 = vector.load %arg4[%c0_37, %c0_38] : memref<128x512xf32, #tpu.memory_space<vmem>>, vector<128x512xf32>
    %cst_39 = arith.constant dense<0.000000e+00> : vector<8x512xf32>
    %57 = tpu.matmul %55, %56, %cst_39 {dimension_numbers = #tpu.dot_dimension_numbers<[1], [0], [0], [1], [0, 0, 1, 1], [], []>} : vector<8x128xf32>, vector<128x512xf32>, vector<8x512xf32> -> vector<8x512xf32>
    %58 = arith.addf %54, %57 : vector<8x512xf32>
    %c0_40 = arith.constant 0 : index
    %c0_41 = arith.constant 0 : index
    %59 = vector.load %arg19[%c0_40, %c0_41] : memref<8x128xf32, #tpu.memory_space<vmem>>, vector<8x128xf32>
    %60 = vector.extract_strided_slice %58 {offsets = [0, 0], sizes = [8, 128], strides = [1, 1]} : vector<8x512xf32> to vector<8x128xf32>
    %61 = arith.negf %60 : vector<8x128xf32>
    %62 = math.exp %61 : vector<8x128xf32>
    %cst_42 = arith.constant 1.000000e+00 : f32
    %63 = vector.broadcast %cst_42 : f32 to vector<8x128xf32>
    %64 = arith.addf %63, %62 : vector<8x128xf32>
    %65 = arith.divf %63, %64 : vector<8x128xf32>
    %66 = vector.extract_strided_slice %58 {offsets = [0, 128], sizes = [8, 128], strides = [1, 1]} : vector<8x512xf32> to vector<8x128xf32>
    %67 = arith.negf %66 : vector<8x128xf32>
    %68 = math.exp %67 : vector<8x128xf32>
    %cst_43 = arith.constant 1.000000e+00 : f32
    %69 = vector.broadcast %cst_43 : f32 to vector<8x128xf32>
    %70 = arith.addf %69, %68 : vector<8x128xf32>
    %71 = arith.divf %69, %70 : vector<8x128xf32>
    %72 = vector.extract_strided_slice %58 {offsets = [0, 256], sizes = [8, 128], strides = [1, 1]} : vector<8x512xf32> to vector<8x128xf32>
    %73 = math.tanh %72 : vector<8x128xf32>
    %74 = vector.extract_strided_slice %58 {offsets = [0, 384], sizes = [8, 128], strides = [1, 1]} : vector<8x512xf32> to vector<8x128xf32>
    %75 = arith.negf %74 : vector<8x128xf32>
    %76 = math.exp %75 : vector<8x128xf32>
    %cst_44 = arith.constant 1.000000e+00 : f32
    %77 = vector.broadcast %cst_44 : f32 to vector<8x128xf32>
    %78 = arith.addf %77, %76 : vector<8x128xf32>
    %79 = arith.divf %77, %78 : vector<8x128xf32>
    %80 = arith.mulf %71, %59 : vector<8x128xf32>
    %81 = arith.mulf %65, %73 : vector<8x128xf32>
    %82 = arith.addf %80, %81 : vector<8x128xf32>
    %83 = math.tanh %82 : vector<8x128xf32>
    %84 = arith.mulf %79, %83 : vector<8x128xf32>
    %c0_45 = arith.constant 0 : index
    %c0_46 = arith.constant 0 : index
    %85 = vector.load %arg18[%c0_45, %c0_46] : memref<8x128xf32, #tpu.memory_space<vmem>>, vector<8x128xf32>
    tpu.vector_store %arg18[%c0_45, %c0_46], %84 {strides = array<i32>} : memref<8x128xf32, #tpu.memory_space<vmem>>, vector<8x128xf32>,
    %c0_47 = arith.constant 0 : index
    %c0_48 = arith.constant 0 : index
    %86 = vector.load %arg19[%c0_47, %c0_48] : memref<8x128xf32, #tpu.memory_space<vmem>>, vector<8x128xf32>
    tpu.vector_store %arg19[%c0_47, %c0_48], %82 {strides = array<i32>} : memref<8x128xf32, #tpu.memory_space<vmem>>, vector<8x128xf32>,
    %87 = arith.index_cast %52 : i32 to index
    %c0_49 = arith.constant 0 : index
    %88 = vector.load %arg15[%87, %c0_49] : memref<64x128xf32, #tpu.memory_space<vmem>>, vector<8x128xf32>
    tpu.vector_store %arg15[%87, %c0_49], %84 {strides = array<i32>} : memref<64x128xf32, #tpu.memory_space<vmem>>, vector<8x128xf32>,
    %c2_i32 = arith.constant 2 : i32
    %c8_i32_50 = arith.constant 8 : i32
    %89 = arith.muli %c2_i32, %c8_i32_50 : i32
    %90 = tpu.assume_multiple %89, 8 : i32
    %91 = arith.index_cast %90 : i32 to index
    %c0_51 = arith.constant 0 : index
    %92 = vector.load %arg14[%91, %c0_51] : memref<64x512xf32, #tpu.memory_space<vmem>>, vector<8x512xf32>
    %c0_52 = arith.constant 0 : index
    %c0_53 = arith.constant 0 : index
    %93 = vector.load %arg18[%c0_52, %c0_53] : memref<8x128xf32, #tpu.memory_space<vmem>>, vector<8x128xf32>
    %c0_54 = arith.constant 0 : index
    %c0_55 = arith.constant 0 : index
    %94 = vector.load %arg4[%c0_54, %c0_55] : memref<128x512xf32, #tpu.memory_space<vmem>>, vector<128x512xf32>
    %cst_56 = arith.constant dense<0.000000e+00> : vector<8x512xf32>
    %95 = tpu.matmul %93, %94, %cst_56 {dimension_numbers = #tpu.dot_dimension_numbers<[1], [0], [0], [1], [0, 0, 1, 1], [], []>} : vector<8x128xf32>, vector<128x512xf32>, vector<8x512xf32> -> vector<8x512xf32>
    %96 = arith.addf %92, %95 : vector<8x512xf32>
    %c0_57 = arith.constant 0 : index
    %c0_58 = arith.constant 0 : index
    %97 = vector.load %arg19[%c0_57, %c0_58] : memref<8x128xf32, #tpu.memory_space<vmem>>, vector<8x128xf32>
    %98 = vector.extract_strided_slice %96 {offsets = [0, 0], sizes = [8, 128], strides = [1, 1]} : vector<8x512xf32> to vector<8x128xf32>
    %99 = arith.negf %98 : vector<8x128xf32>
    %100 = math.exp %99 : vector<8x128xf32>
    %cst_59 = arith.constant 1.000000e+00 : f32
    %101 = vector.broadcast %cst_59 : f32 to vector<8x128xf32>
    %102 = arith.addf %101, %100 : vector<8x128xf32>
    %103 = arith.divf %101, %102 : vector<8x128xf32>
    %104 = vector.extract_strided_slice %96 {offsets = [0, 128], sizes = [8, 128], strides = [1, 1]} : vector<8x512xf32> to vector<8x128xf32>
    %105 = arith.negf %104 : vector<8x128xf32>
    %106 = math.exp %105 : vector<8x128xf32>
    %cst_60 = arith.constant 1.000000e+00 : f32
    %107 = vector.broadcast %cst_60 : f32 to vector<8x128xf32>
    %108 = arith.addf %107, %106 : vector<8x128xf32>
    %109 = arith.divf %107, %108 : vector<8x128xf32>
    %110 = vector.extract_strided_slice %96 {offsets = [0, 256], sizes = [8, 128], strides = [1, 1]} : vector<8x512xf32> to vector<8x128xf32>
    %111 = math.tanh %110 : vector<8x128xf32>
    %112 = vector.extract_strided_slice %96 {offsets = [0, 384], sizes = [8, 128], strides = [1, 1]} : vector<8x512xf32> to vector<8x128xf32>
    %113 = arith.negf %112 : vector<8x128xf32>
    %114 = math.exp %113 : vector<8x128xf32>
    %cst_61 = arith.constant 1.000000e+00 : f32
    %115 = vector.broadcast %cst_61 : f32 to vector<8x128xf32>
    %116 = arith.addf %115, %114 : vector<8x128xf32>
    %117 = arith.divf %115, %116 : vector<8x128xf32>
    %118 = arith.mulf %109, %97 : vector<8x128xf32>
    %119 = arith.mulf %103, %111 : vector<8x128xf32>
    %120 = arith.addf %118, %119 : vector<8x128xf32>
    %121 = math.tanh %120 : vector<8x128xf32>
    %122 = arith.mulf %117, %121 : vector<8x128xf32>
    %c0_62 = arith.constant 0 : index
    %c0_63 = arith.constant 0 : index
    %123 = vector.load %arg18[%c0_62, %c0_63] : memref<8x128xf32, #tpu.memory_space<vmem>>, vector<8x128xf32>
    tpu.vector_store %arg18[%c0_62, %c0_63], %122 {strides = array<i32>} : memref<8x128xf32, #tpu.memory_space<vmem>>, vector<8x128xf32>,
    %c0_64 = arith.constant 0 : index
    %c0_65 = arith.constant 0 : index
    %124 = vector.load %arg19[%c0_64, %c0_65] : memref<8x128xf32, #tpu.memory_space<vmem>>, vector<8x128xf32>
    tpu.vector_store %arg19[%c0_64, %c0_65], %120 {strides = array<i32>} : memref<8x128xf32, #tpu.memory_space<vmem>>, vector<8x128xf32>,
    %125 = arith.index_cast %90 : i32 to index
    %c0_66 = arith.constant 0 : index
    %126 = vector.load %arg15[%125, %c0_66] : memref<64x128xf32, #tpu.memory_space<vmem>>, vector<8x128xf32>
    tpu.vector_store %arg15[%125, %c0_66], %122 {strides = array<i32>} : memref<64x128xf32, #tpu.memory_space<vmem>>, vector<8x128xf32>,
    %c3_i32 = arith.constant 3 : i32
    %c8_i32_67 = arith.constant 8 : i32
    %127 = arith.muli %c3_i32, %c8_i32_67 : i32
    %128 = tpu.assume_multiple %127, 8 : i32
    %129 = arith.index_cast %128 : i32 to index
    %c0_68 = arith.constant 0 : index
    %130 = vector.load %arg14[%129, %c0_68] : memref<64x512xf32, #tpu.memory_space<vmem>>, vector<8x512xf32>
    %c0_69 = arith.constant 0 : index
    %c0_70 = arith.constant 0 : index
    %131 = vector.load %arg18[%c0_69, %c0_70] : memref<8x128xf32, #tpu.memory_space<vmem>>, vector<8x128xf32>
    %c0_71 = arith.constant 0 : index
    %c0_72 = arith.constant 0 : index
    %132 = vector.load %arg4[%c0_71, %c0_72] : memref<128x512xf32, #tpu.memory_space<vmem>>, vector<128x512xf32>
    %cst_73 = arith.constant dense<0.000000e+00> : vector<8x512xf32>
    %133 = tpu.matmul %131, %132, %cst_73 {dimension_numbers = #tpu.dot_dimension_numbers<[1], [0], [0], [1], [0, 0, 1, 1], [], []>} : vector<8x128xf32>, vector<128x512xf32>, vector<8x512xf32> -> vector<8x512xf32>
    %134 = arith.addf %130, %133 : vector<8x512xf32>
    %c0_74 = arith.constant 0 : index
    %c0_75 = arith.constant 0 : index
    %135 = vector.load %arg19[%c0_74, %c0_75] : memref<8x128xf32, #tpu.memory_space<vmem>>, vector<8x128xf32>
    %136 = vector.extract_strided_slice %134 {offsets = [0, 0], sizes = [8, 128], strides = [1, 1]} : vector<8x512xf32> to vector<8x128xf32>
    %137 = arith.negf %136 : vector<8x128xf32>
    %138 = math.exp %137 : vector<8x128xf32>
    %cst_76 = arith.constant 1.000000e+00 : f32
    %139 = vector.broadcast %cst_76 : f32 to vector<8x128xf32>
    %140 = arith.addf %139, %138 : vector<8x128xf32>
    %141 = arith.divf %139, %140 : vector<8x128xf32>
    %142 = vector.extract_strided_slice %134 {offsets = [0, 128], sizes = [8, 128], strides = [1, 1]} : vector<8x512xf32> to vector<8x128xf32>
    %143 = arith.negf %142 : vector<8x128xf32>
    %144 = math.exp %143 : vector<8x128xf32>
    %cst_77 = arith.constant 1.000000e+00 : f32
    %145 = vector.broadcast %cst_77 : f32 to vector<8x128xf32>
    %146 = arith.addf %145, %144 : vector<8x128xf32>
    %147 = arith.divf %145, %146 : vector<8x128xf32>
    %148 = vector.extract_strided_slice %134 {offsets = [0, 256], sizes = [8, 128], strides = [1, 1]} : vector<8x512xf32> to vector<8x128xf32>
    %149 = math.tanh %148 : vector<8x128xf32>
    %150 = vector.extract_strided_slice %134 {offsets = [0, 384], sizes = [8, 128], strides = [1, 1]} : vector<8x512xf32> to vector<8x128xf32>
    %151 = arith.negf %150 : vector<8x128xf32>
    %152 = math.exp %151 : vector<8x128xf32>
    %cst_78 = arith.constant 1.000000e+00 : f32
    %153 = vector.broadcast %cst_78 : f32 to vector<8x128xf32>
    %154 = arith.addf %153, %152 : vector<8x128xf32>
    %155 = arith.divf %153, %154 : vector<8x128xf32>
    %156 = arith.mulf %147, %135 : vector<8x128xf32>
    %157 = arith.mulf %141, %149 : vector<8x128xf32>
    %158 = arith.addf %156, %157 : vector<8x128xf32>
    %159 = math.tanh %158 : vector<8x128xf32>
    %160 = arith.mulf %155, %159 : vector<8x128xf32>
    %c0_79 = arith.constant 0 : index
    %c0_80 = arith.constant 0 : index
    %161 = vector.load %arg18[%c0_79, %c0_80] : memref<8x128xf32, #tpu.memory_space<vmem>>, vector<8x128xf32>
    tpu.vector_store %arg18[%c0_79, %c0_80], %160 {strides = array<i32>} : memref<8x128xf32, #tpu.memory_space<vmem>>, vector<8x128xf32>,
    %c0_81 = arith.constant 0 : index
    %c0_82 = arith.constant 0 : index
    %162 = vector.load %arg19[%c0_81, %c0_82] : memref<8x128xf32, #tpu.memory_space<vmem>>, vector<8x128xf32>
    tpu.vector_store %arg19[%c0_81, %c0_82], %158 {strides = array<i32>} : memref<8x128xf32, #tpu.memory_space<vmem>>, vector<8x128xf32>,
    %163 = arith.index_cast %128 : i32 to index
    %c0_83 = arith.constant 0 : index
    %164 = vector.load %arg15[%163, %c0_83] : memref<64x128xf32, #tpu.memory_space<vmem>>, vector<8x128xf32>
    tpu.vector_store %arg15[%163, %c0_83], %160 {strides = array<i32>} : memref<64x128xf32, #tpu.memory_space<vmem>>, vector<8x128xf32>,
    %c4_i32 = arith.constant 4 : i32
    %c8_i32_84 = arith.constant 8 : i32
    %165 = arith.muli %c4_i32, %c8_i32_84 : i32
    %166 = tpu.assume_multiple %165, 8 : i32
    %167 = arith.index_cast %166 : i32 to index
    %c0_85 = arith.constant 0 : index
    %168 = vector.load %arg14[%167, %c0_85] : memref<64x512xf32, #tpu.memory_space<vmem>>, vector<8x512xf32>
    %c0_86 = arith.constant 0 : index
    %c0_87 = arith.constant 0 : index
    %169 = vector.load %arg18[%c0_86, %c0_87] : memref<8x128xf32, #tpu.memory_space<vmem>>, vector<8x128xf32>
    %c0_88 = arith.constant 0 : index
    %c0_89 = arith.constant 0 : index
    %170 = vector.load %arg4[%c0_88, %c0_89] : memref<128x512xf32, #tpu.memory_space<vmem>>, vector<128x512xf32>
    %cst_90 = arith.constant dense<0.000000e+00> : vector<8x512xf32>
    %171 = tpu.matmul %169, %170, %cst_90 {dimension_numbers = #tpu.dot_dimension_numbers<[1], [0], [0], [1], [0, 0, 1, 1], [], []>} : vector<8x128xf32>, vector<128x512xf32>, vector<8x512xf32> -> vector<8x512xf32>
    %172 = arith.addf %168, %171 : vector<8x512xf32>
    %c0_91 = arith.constant 0 : index
    %c0_92 = arith.constant 0 : index
    %173 = vector.load %arg19[%c0_91, %c0_92] : memref<8x128xf32, #tpu.memory_space<vmem>>, vector<8x128xf32>
    %174 = vector.extract_strided_slice %172 {offsets = [0, 0], sizes = [8, 128], strides = [1, 1]} : vector<8x512xf32> to vector<8x128xf32>
    %175 = arith.negf %174 : vector<8x128xf32>
    %176 = math.exp %175 : vector<8x128xf32>
    %cst_93 = arith.constant 1.000000e+00 : f32
    %177 = vector.broadcast %cst_93 : f32 to vector<8x128xf32>
    %178 = arith.addf %177, %176 : vector<8x128xf32>
    %179 = arith.divf %177, %178 : vector<8x128xf32>
    %180 = vector.extract_strided_slice %172 {offsets = [0, 128], sizes = [8, 128], strides = [1, 1]} : vector<8x512xf32> to vector<8x128xf32>
    %181 = arith.negf %180 : vector<8x128xf32>
    %182 = math.exp %181 : vector<8x128xf32>
    %cst_94 = arith.constant 1.000000e+00 : f32
    %183 = vector.broadcast %cst_94 : f32 to vector<8x128xf32>
    %184 = arith.addf %183, %182 : vector<8x128xf32>
    %185 = arith.divf %183, %184 : vector<8x128xf32>
    %186 = vector.extract_strided_slice %172 {offsets = [0, 256], sizes = [8, 128], strides = [1, 1]} : vector<8x512xf32> to vector<8x128xf32>
    %187 = math.tanh %186 : vector<8x128xf32>
    %188 = vector.extract_strided_slice %172 {offsets = [0, 384], sizes = [8, 128], strides = [1, 1]} : vector<8x512xf32> to vector<8x128xf32>
    %189 = arith.negf %188 : vector<8x128xf32>
    %190 = math.exp %189 : vector<8x128xf32>
    %cst_95 = arith.constant 1.000000e+00 : f32
    %191 = vector.broadcast %cst_95 : f32 to vector<8x128xf32>
    %192 = arith.addf %191, %190 : vector<8x128xf32>
    %193 = arith.divf %191, %192 : vector<8x128xf32>
    %194 = arith.mulf %185, %173 : vector<8x128xf32>
    %195 = arith.mulf %179, %187 : vector<8x128xf32>
    %196 = arith.addf %194, %195 : vector<8x128xf32>
    %197 = math.tanh %196 : vector<8x128xf32>
    %198 = arith.mulf %193, %197 : vector<8x128xf32>
    %c0_96 = arith.constant 0 : index
    %c0_97 = arith.constant 0 : index
    %199 = vector.load %arg18[%c0_96, %c0_97] : memref<8x128xf32, #tpu.memory_space<vmem>>, vector<8x128xf32>
    tpu.vector_store %arg18[%c0_96, %c0_97], %198 {strides = array<i32>} : memref<8x128xf32, #tpu.memory_space<vmem>>, vector<8x128xf32>,
    %c0_98 = arith.constant 0 : index
    %c0_99 = arith.constant 0 : index
    %200 = vector.load %arg19[%c0_98, %c0_99] : memref<8x128xf32, #tpu.memory_space<vmem>>, vector<8x128xf32>
    tpu.vector_store %arg19[%c0_98, %c0_99], %196 {strides = array<i32>} : memref<8x128xf32, #tpu.memory_space<vmem>>, vector<8x128xf32>,
    %201 = arith.index_cast %166 : i32 to index
    %c0_100 = arith.constant 0 : index
    %202 = vector.load %arg15[%201, %c0_100] : memref<64x128xf32, #tpu.memory_space<vmem>>, vector<8x128xf32>
    tpu.vector_store %arg15[%201, %c0_100], %198 {strides = array<i32>} : memref<64x128xf32, #tpu.memory_space<vmem>>, vector<8x128xf32>,
    %c5_i32 = arith.constant 5 : i32
    %c8_i32_101 = arith.constant 8 : i32
    %203 = arith.muli %c5_i32, %c8_i32_101 : i32
    %204 = tpu.assume_multiple %203, 8 : i32
    %205 = arith.index_cast %204 : i32 to index
    %c0_102 = arith.constant 0 : index
    %206 = vector.load %arg14[%205, %c0_102] : memref<64x512xf32, #tpu.memory_space<vmem>>, vector<8x512xf32>
    %c0_103 = arith.constant 0 : index
    %c0_104 = arith.constant 0 : index
    %207 = vector.load %arg18[%c0_103, %c0_104] : memref<8x128xf32, #tpu.memory_space<vmem>>, vector<8x128xf32>
    %c0_105 = arith.constant 0 : index
    %c0_106 = arith.constant 0 : index
    %208 = vector.load %arg4[%c0_105, %c0_106] : memref<128x512xf32, #tpu.memory_space<vmem>>, vector<128x512xf32>
    %cst_107 = arith.constant dense<0.000000e+00> : vector<8x512xf32>
    %209 = tpu.matmul %207, %208, %cst_107 {dimension_numbers = #tpu.dot_dimension_numbers<[1], [0], [0], [1], [0, 0, 1, 1], [], []>} : vector<8x128xf32>, vector<128x512xf32>, vector<8x512xf32> -> vector<8x512xf32>
    %210 = arith.addf %206, %209 : vector<8x512xf32>
    %c0_108 = arith.constant 0 : index
    %c0_109 = arith.constant 0 : index
    %211 = vector.load %arg19[%c0_108, %c0_109] : memref<8x128xf32, #tpu.memory_space<vmem>>, vector<8x128xf32>
    %212 = vector.extract_strided_slice %210 {offsets = [0, 0], sizes = [8, 128], strides = [1, 1]} : vector<8x512xf32> to vector<8x128xf32>
    %213 = arith.negf %212 : vector<8x128xf32>
    %214 = math.exp %213 : vector<8x128xf32>
    %cst_110 = arith.constant 1.000000e+00 : f32
    %215 = vector.broadcast %cst_110 : f32 to vector<8x128xf32>
    %216 = arith.addf %215, %214 : vector<8x128xf32>
    %217 = arith.divf %215, %216 : vector<8x128xf32>
    %218 = vector.extract_strided_slice %210 {offsets = [0, 128], sizes = [8, 128], strides = [1, 1]} : vector<8x512xf32> to vector<8x128xf32>
    %219 = arith.negf %218 : vector<8x128xf32>
    %220 = math.exp %219 : vector<8x128xf32>
    %cst_111 = arith.constant 1.000000e+00 : f32
    %221 = vector.broadcast %cst_111 : f32 to vector<8x128xf32>
    %222 = arith.addf %221, %220 : vector<8x128xf32>
    %223 = arith.divf %221, %222 : vector<8x128xf32>
    %224 = vector.extract_strided_slice %210 {offsets = [0, 256], sizes = [8, 128], strides = [1, 1]} : vector<8x512xf32> to vector<8x128xf32>
    %225 = math.tanh %224 : vector<8x128xf32>
    %226 = vector.extract_strided_slice %210 {offsets = [0, 384], sizes = [8, 128], strides = [1, 1]} : vector<8x512xf32> to vector<8x128xf32>
    %227 = arith.negf %226 : vector<8x128xf32>
    %228 = math.exp %227 : vector<8x128xf32>
    %cst_112 = arith.constant 1.000000e+00 : f32
    %229 = vector.broadcast %cst_112 : f32 to vector<8x128xf32>
    %230 = arith.addf %229, %228 : vector<8x128xf32>
    %231 = arith.divf %229, %230 : vector<8x128xf32>
    %232 = arith.mulf %223, %211 : vector<8x128xf32>
    %233 = arith.mulf %217, %225 : vector<8x128xf32>
    %234 = arith.addf %232, %233 : vector<8x128xf32>
    %235 = math.tanh %234 : vector<8x128xf32>
    %236 = arith.mulf %231, %235 : vector<8x128xf32>
    %c0_113 = arith.constant 0 : index
    %c0_114 = arith.constant 0 : index
    %237 = vector.load %arg18[%c0_113, %c0_114] : memref<8x128xf32, #tpu.memory_space<vmem>>, vector<8x128xf32>
    tpu.vector_store %arg18[%c0_113, %c0_114], %236 {strides = array<i32>} : memref<8x128xf32, #tpu.memory_space<vmem>>, vector<8x128xf32>,
    %c0_115 = arith.constant 0 : index
    %c0_116 = arith.constant 0 : index
    %238 = vector.load %arg19[%c0_115, %c0_116] : memref<8x128xf32, #tpu.memory_space<vmem>>, vector<8x128xf32>
    tpu.vector_store %arg19[%c0_115, %c0_116], %234 {strides = array<i32>} : memref<8x128xf32, #tpu.memory_space<vmem>>, vector<8x128xf32>,
    %239 = arith.index_cast %204 : i32 to index
    %c0_117 = arith.constant 0 : index
    %240 = vector.load %arg15[%239, %c0_117] : memref<64x128xf32, #tpu.memory_space<vmem>>, vector<8x128xf32>
    tpu.vector_store %arg15[%239, %c0_117], %236 {strides = array<i32>} : memref<64x128xf32, #tpu.memory_space<vmem>>, vector<8x128xf32>,
    %c6_i32 = arith.constant 6 : i32
    %c8_i32_118 = arith.constant 8 : i32
    %241 = arith.muli %c6_i32, %c8_i32_118 : i32
    %242 = tpu.assume_multiple %241, 8 : i32
    %243 = arith.index_cast %242 : i32 to index
    %c0_119 = arith.constant 0 : index
    %244 = vector.load %arg14[%243, %c0_119] : memref<64x512xf32, #tpu.memory_space<vmem>>, vector<8x512xf32>
    %c0_120 = arith.constant 0 : index
    %c0_121 = arith.constant 0 : index
    %245 = vector.load %arg18[%c0_120, %c0_121] : memref<8x128xf32, #tpu.memory_space<vmem>>, vector<8x128xf32>
    %c0_122 = arith.constant 0 : index
    %c0_123 = arith.constant 0 : index
    %246 = vector.load %arg4[%c0_122, %c0_123] : memref<128x512xf32, #tpu.memory_space<vmem>>, vector<128x512xf32>
    %cst_124 = arith.constant dense<0.000000e+00> : vector<8x512xf32>
    %247 = tpu.matmul %245, %246, %cst_124 {dimension_numbers = #tpu.dot_dimension_numbers<[1], [0], [0], [1], [0, 0, 1, 1], [], []>} : vector<8x128xf32>, vector<128x512xf32>, vector<8x512xf32> -> vector<8x512xf32>
    %248 = arith.addf %244, %247 : vector<8x512xf32>
    %c0_125 = arith.constant 0 : index
    %c0_126 = arith.constant 0 : index
    %249 = vector.load %arg19[%c0_125, %c0_126] : memref<8x128xf32, #tpu.memory_space<vmem>>, vector<8x128xf32>
    %250 = vector.extract_strided_slice %248 {offsets = [0, 0], sizes = [8, 128], strides = [1, 1]} : vector<8x512xf32> to vector<8x128xf32>
    %251 = arith.negf %250 : vector<8x128xf32>
    %252 = math.exp %251 : vector<8x128xf32>
    %cst_127 = arith.constant 1.000000e+00 : f32
    %253 = vector.broadcast %cst_127 : f32 to vector<8x128xf32>
    %254 = arith.addf %253, %252 : vector<8x128xf32>
    %255 = arith.divf %253, %254 : vector<8x128xf32>
    %256 = vector.extract_strided_slice %248 {offsets = [0, 128], sizes = [8, 128], strides = [1, 1]} : vector<8x512xf32> to vector<8x128xf32>
    %257 = arith.negf %256 : vector<8x128xf32>
    %258 = math.exp %257 : vector<8x128xf32>
    %cst_128 = arith.constant 1.000000e+00 : f32
    %259 = vector.broadcast %cst_128 : f32 to vector<8x128xf32>
    %260 = arith.addf %259, %258 : vector<8x128xf32>
    %261 = arith.divf %259, %260 : vector<8x128xf32>
    %262 = vector.extract_strided_slice %248 {offsets = [0, 256], sizes = [8, 128], strides = [1, 1]} : vector<8x512xf32> to vector<8x128xf32>
    %263 = math.tanh %262 : vector<8x128xf32>
    %264 = vector.extract_strided_slice %248 {offsets = [0, 384], sizes = [8, 128], strides = [1, 1]} : vector<8x512xf32> to vector<8x128xf32>
    %265 = arith.negf %264 : vector<8x128xf32>
    %266 = math.exp %265 : vector<8x128xf32>
    %cst_129 = arith.constant 1.000000e+00 : f32
    %267 = vector.broadcast %cst_129 : f32 to vector<8x128xf32>
    %268 = arith.addf %267, %266 : vector<8x128xf32>
    %269 = arith.divf %267, %268 : vector<8x128xf32>
    %270 = arith.mulf %261, %249 : vector<8x128xf32>
    %271 = arith.mulf %255, %263 : vector<8x128xf32>
    %272 = arith.addf %270, %271 : vector<8x128xf32>
    %273 = math.tanh %272 : vector<8x128xf32>
    %274 = arith.mulf %269, %273 : vector<8x128xf32>
    %c0_130 = arith.constant 0 : index
    %c0_131 = arith.constant 0 : index
    %275 = vector.load %arg18[%c0_130, %c0_131] : memref<8x128xf32, #tpu.memory_space<vmem>>, vector<8x128xf32>
    tpu.vector_store %arg18[%c0_130, %c0_131], %274 {strides = array<i32>} : memref<8x128xf32, #tpu.memory_space<vmem>>, vector<8x128xf32>,
    %c0_132 = arith.constant 0 : index
    %c0_133 = arith.constant 0 : index
    %276 = vector.load %arg19[%c0_132, %c0_133] : memref<8x128xf32, #tpu.memory_space<vmem>>, vector<8x128xf32>
    tpu.vector_store %arg19[%c0_132, %c0_133], %272 {strides = array<i32>} : memref<8x128xf32, #tpu.memory_space<vmem>>, vector<8x128xf32>,
    %277 = arith.index_cast %242 : i32 to index
    %c0_134 = arith.constant 0 : index
    %278 = vector.load %arg15[%277, %c0_134] : memref<64x128xf32, #tpu.memory_space<vmem>>, vector<8x128xf32>
    tpu.vector_store %arg15[%277, %c0_134], %274 {strides = array<i32>} : memref<64x128xf32, #tpu.memory_space<vmem>>, vector<8x128xf32>,
    %c7_i32 = arith.constant 7 : i32
    %c8_i32_135 = arith.constant 8 : i32
    %279 = arith.muli %c7_i32, %c8_i32_135 : i32
    %280 = tpu.assume_multiple %279, 8 : i32
    %281 = arith.index_cast %280 : i32 to index
    %c0_136 = arith.constant 0 : index
    %282 = vector.load %arg14[%281, %c0_136] : memref<64x512xf32, #tpu.memory_space<vmem>>, vector<8x512xf32>
    %c0_137 = arith.constant 0 : index
    %c0_138 = arith.constant 0 : index
    %283 = vector.load %arg18[%c0_137, %c0_138] : memref<8x128xf32, #tpu.memory_space<vmem>>, vector<8x128xf32>
    %c0_139 = arith.constant 0 : index
    %c0_140 = arith.constant 0 : index
    %284 = vector.load %arg4[%c0_139, %c0_140] : memref<128x512xf32, #tpu.memory_space<vmem>>, vector<128x512xf32>
    %cst_141 = arith.constant dense<0.000000e+00> : vector<8x512xf32>
    %285 = tpu.matmul %283, %284, %cst_141 {dimension_numbers = #tpu.dot_dimension_numbers<[1], [0], [0], [1], [0, 0, 1, 1], [], []>} : vector<8x128xf32>, vector<128x512xf32>, vector<8x512xf32> -> vector<8x512xf32>
    %286 = arith.addf %282, %285 : vector<8x512xf32>
    %c0_142 = arith.constant 0 : index
    %c0_143 = arith.constant 0 : index
    %287 = vector.load %arg19[%c0_142, %c0_143] : memref<8x128xf32, #tpu.memory_space<vmem>>, vector<8x128xf32>
    %288 = vector.extract_strided_slice %286 {offsets = [0, 0], sizes = [8, 128], strides = [1, 1]} : vector<8x512xf32> to vector<8x128xf32>
    %289 = arith.negf %288 : vector<8x128xf32>
    %290 = math.exp %289 : vector<8x128xf32>
    %cst_144 = arith.constant 1.000000e+00 : f32
    %291 = vector.broadcast %cst_144 : f32 to vector<8x128xf32>
    %292 = arith.addf %291, %290 : vector<8x128xf32>
    %293 = arith.divf %291, %292 : vector<8x128xf32>
    %294 = vector.extract_strided_slice %286 {offsets = [0, 128], sizes = [8, 128], strides = [1, 1]} : vector<8x512xf32> to vector<8x128xf32>
    %295 = arith.negf %294 : vector<8x128xf32>
    %296 = math.exp %295 : vector<8x128xf32>
    %cst_145 = arith.constant 1.000000e+00 : f32
    %297 = vector.broadcast %cst_145 : f32 to vector<8x128xf32>
    %298 = arith.addf %297, %296 : vector<8x128xf32>
    %299 = arith.divf %297, %298 : vector<8x128xf32>
    %300 = vector.extract_strided_slice %286 {offsets = [0, 256], sizes = [8, 128], strides = [1, 1]} : vector<8x512xf32> to vector<8x128xf32>
    %301 = math.tanh %300 : vector<8x128xf32>
    %302 = vector.extract_strided_slice %286 {offsets = [0, 384], sizes = [8, 128], strides = [1, 1]} : vector<8x512xf32> to vector<8x128xf32>
    %303 = arith.negf %302 : vector<8x128xf32>
    %304 = math.exp %303 : vector<8x128xf32>
    %cst_146 = arith.constant 1.000000e+00 : f32
    %305 = vector.broadcast %cst_146 : f32 to vector<8x128xf32>
    %306 = arith.addf %305, %304 : vector<8x128xf32>
    %307 = arith.divf %305, %306 : vector<8x128xf32>
    %308 = arith.mulf %299, %287 : vector<8x128xf32>
    %309 = arith.mulf %293, %301 : vector<8x128xf32>
    %310 = arith.addf %308, %309 : vector<8x128xf32>
    %311 = math.tanh %310 : vector<8x128xf32>
    %312 = arith.mulf %307, %311 : vector<8x128xf32>
    %c0_147 = arith.constant 0 : index
    %c0_148 = arith.constant 0 : index
    %313 = vector.load %arg18[%c0_147, %c0_148] : memref<8x128xf32, #tpu.memory_space<vmem>>, vector<8x128xf32>
    tpu.vector_store %arg18[%c0_147, %c0_148], %312 {strides = array<i32>} : memref<8x128xf32, #tpu.memory_space<vmem>>, vector<8x128xf32>,
    %c0_149 = arith.constant 0 : index
    %c0_150 = arith.constant 0 : index
    %314 = vector.load %arg19[%c0_149, %c0_150] : memref<8x128xf32, #tpu.memory_space<vmem>>, vector<8x128xf32>
    tpu.vector_store %arg19[%c0_149, %c0_150], %310 {strides = array<i32>} : memref<8x128xf32, #tpu.memory_space<vmem>>, vector<8x128xf32>,
    %315 = arith.index_cast %280 : i32 to index
    %c0_151 = arith.constant 0 : index
    %316 = vector.load %arg15[%315, %c0_151] : memref<64x128xf32, #tpu.memory_space<vmem>>, vector<8x128xf32>
    tpu.vector_store %arg15[%315, %c0_151], %312 {strides = array<i32>} : memref<64x128xf32, #tpu.memory_space<vmem>>, vector<8x128xf32>,
    %c8_i32_152 = arith.constant 8 : i32
    %c0_153 = arith.constant 0 : index
    %c0_154 = arith.constant 0 : index
    %317 = vector.load %arg18[%c0_153, %c0_154] : memref<8x128xf32, #tpu.memory_space<vmem>>, vector<8x128xf32>
    %c0_155 = arith.constant 0 : index
    %c0_156 = arith.constant 0 : index
    %c0_157 = arith.constant 0 : index
    %318 = vector.load %arg12[%c0_155, %c0_156, %c0_157] : memref<2x8x128xf32, #tpu.memory_space<vmem>>, vector<1x8x128xf32>
    %319 = vector.shape_cast %318 : vector<1x8x128xf32> to vector<8x128xf32>
    %320 = vector.shape_cast %317 : vector<8x128xf32> to vector<1x8x128xf32>
    tpu.vector_store %arg12[%c0_155, %c0_156, %c0_157], %320 {strides = array<i32>} : memref<2x8x128xf32, #tpu.memory_space<vmem>>, vector<1x8x128xf32>,
    %c0_158 = arith.constant 0 : index
    %c0_159 = arith.constant 0 : index
    %321 = vector.load %arg19[%c0_158, %c0_159] : memref<8x128xf32, #tpu.memory_space<vmem>>, vector<8x128xf32>
    %c0_160 = arith.constant 0 : index
    %c0_161 = arith.constant 0 : index
    %c0_162 = arith.constant 0 : index
    %322 = vector.load %arg13[%c0_160, %c0_161, %c0_162] : memref<2x8x128xf32, #tpu.memory_space<vmem>>, vector<1x8x128xf32>
    %323 = vector.shape_cast %322 : vector<1x8x128xf32> to vector<8x128xf32>
    %324 = vector.shape_cast %321 : vector<8x128xf32> to vector<1x8x128xf32>
    tpu.vector_store %arg13[%c0_160, %c0_161, %c0_162], %324 {strides = array<i32>} : memref<2x8x128xf32, #tpu.memory_space<vmem>>, vector<1x8x128xf32>,
    %c0_163 = arith.constant 0 : index
    %c0_164 = arith.constant 0 : index
    %325 = vector.load %arg15[%c0_163, %c0_164] : memref<64x128xf32, #tpu.memory_space<vmem>>, vector<64x128xf32>
    %c0_165 = arith.constant 0 : index
    %c0_166 = arith.constant 0 : index
    %326 = vector.load %arg6[%c0_165, %c0_166] : memref<128x512xf32, #tpu.memory_space<vmem>>, vector<128x512xf32>
    %cst_167 = arith.constant dense<0.000000e+00> : vector<64x512xf32>
    %327 = tpu.matmul %325, %326, %cst_167 {dimension_numbers = #tpu.dot_dimension_numbers<[1], [0], [0], [1], [0, 0, 1, 1], [], []>} : vector<64x128xf32>, vector<128x512xf32>, vector<64x512xf32> -> vector<64x512xf32>
    %c0_168 = arith.constant 0 : index
    %c0_169 = arith.constant 0 : index
    %328 = vector.load %arg8[%c0_168, %c0_169] : memref<1x512xf32, #tpu.memory_space<vmem>>, vector<1x512xf32>
    %329 = vector.broadcast %328 : vector<1x512xf32> to vector<64x512xf32>
    %330 = arith.addf %327, %329 : vector<64x512xf32>
    %c0_170 = arith.constant 0 : index
    %c0_171 = arith.constant 0 : index
    %331 = vector.load %arg16[%c0_170, %c0_171] : memref<64x512xf32, #tpu.memory_space<vmem>>, vector<64x512xf32>
    tpu.vector_store %arg16[%c0_170, %c0_171], %330 {strides = array<i32>} : memref<64x512xf32, #tpu.memory_space<vmem>>, vector<64x512xf32>,
    %c1 = arith.constant 1 : index
    %c0_172 = arith.constant 0 : index
    %c0_173 = arith.constant 0 : index
    %332 = vector.load %arg1[%c1, %c0_172, %c0_173] : memref<2x8x128xf32, #tpu.memory_space<vmem>>, vector<1x8x128xf32>
    %333 = vector.shape_cast %332 : vector<1x8x128xf32> to vector<8x128xf32>
    %c0_174 = arith.constant 0 : index
    %c0_175 = arith.constant 0 : index
    %334 = vector.load %arg18[%c0_174, %c0_175] : memref<8x128xf32, #tpu.memory_space<vmem>>, vector<8x128xf32>
    tpu.vector_store %arg18[%c0_174, %c0_175], %333 {strides = array<i32>} : memref<8x128xf32, #tpu.memory_space<vmem>>, vector<8x128xf32>,
    %c1_176 = arith.constant 1 : index
    %c0_177 = arith.constant 0 : index
    %c0_178 = arith.constant 0 : index
    %335 = vector.load %arg2[%c1_176, %c0_177, %c0_178] : memref<2x8x128xf32, #tpu.memory_space<vmem>>, vector<1x8x128xf32>
    %336 = vector.shape_cast %335 : vector<1x8x128xf32> to vector<8x128xf32>
    %c0_179 = arith.constant 0 : index
    %c0_180 = arith.constant 0 : index
    %337 = vector.load %arg19[%c0_179, %c0_180] : memref<8x128xf32, #tpu.memory_space<vmem>>, vector<8x128xf32>
    tpu.vector_store %arg19[%c0_179, %c0_180], %336 {strides = array<i32>} : memref<8x128xf32, #tpu.memory_space<vmem>>, vector<8x128xf32>,
    %c0_i32_181 = arith.constant 0 : i32
    %c8_i32_182 = arith.constant 8 : i32
    %338 = arith.muli %c0_i32_181, %c8_i32_182 : i32
    %339 = tpu.assume_multiple %338, 8 : i32
    %340 = arith.index_cast %339 : i32 to index
    %c0_183 = arith.constant 0 : index
    %341 = vector.load %arg16[%340, %c0_183] : memref<64x512xf32, #tpu.memory_space<vmem>>, vector<8x512xf32>
    %c0_184 = arith.constant 0 : index
    %c0_185 = arith.constant 0 : index
    %342 = vector.load %arg18[%c0_184, %c0_185] : memref<8x128xf32, #tpu.memory_space<vmem>>, vector<8x128xf32>
    %c0_186 = arith.constant 0 : index
    %c0_187 = arith.constant 0 : index
    %343 = vector.load %arg7[%c0_186, %c0_187] : memref<128x512xf32, #tpu.memory_space<vmem>>, vector<128x512xf32>
    %cst_188 = arith.constant dense<0.000000e+00> : vector<8x512xf32>
    %344 = tpu.matmul %342, %343, %cst_188 {dimension_numbers = #tpu.dot_dimension_numbers<[1], [0], [0], [1], [0, 0, 1, 1], [], []>} : vector<8x128xf32>, vector<128x512xf32>, vector<8x512xf32> -> vector<8x512xf32>
    %345 = arith.addf %341, %344 : vector<8x512xf32>
    %c0_189 = arith.constant 0 : index
    %c0_190 = arith.constant 0 : index
    %346 = vector.load %arg19[%c0_189, %c0_190] : memref<8x128xf32, #tpu.memory_space<vmem>>, vector<8x128xf32>
    %347 = vector.extract_strided_slice %345 {offsets = [0, 0], sizes = [8, 128], strides = [1, 1]} : vector<8x512xf32> to vector<8x128xf32>
    %348 = arith.negf %347 : vector<8x128xf32>
    %349 = math.exp %348 : vector<8x128xf32>
    %cst_191 = arith.constant 1.000000e+00 : f32
    %350 = vector.broadcast %cst_191 : f32 to vector<8x128xf32>
    %351 = arith.addf %350, %349 : vector<8x128xf32>
    %352 = arith.divf %350, %351 : vector<8x128xf32>
    %353 = vector.extract_strided_slice %345 {offsets = [0, 128], sizes = [8, 128], strides = [1, 1]} : vector<8x512xf32> to vector<8x128xf32>
    %354 = arith.negf %353 : vector<8x128xf32>
    %355 = math.exp %354 : vector<8x128xf32>
    %cst_192 = arith.constant 1.000000e+00 : f32
    %356 = vector.broadcast %cst_192 : f32 to vector<8x128xf32>
    %357 = arith.addf %356, %355 : vector<8x128xf32>
    %358 = arith.divf %356, %357 : vector<8x128xf32>
    %359 = vector.extract_strided_slice %345 {offsets = [0, 256], sizes = [8, 128], strides = [1, 1]} : vector<8x512xf32> to vector<8x128xf32>
    %360 = math.tanh %359 : vector<8x128xf32>
    %361 = vector.extract_strided_slice %345 {offsets = [0, 384], sizes = [8, 128], strides = [1, 1]} : vector<8x512xf32> to vector<8x128xf32>
    %362 = arith.negf %361 : vector<8x128xf32>
    %363 = math.exp %362 : vector<8x128xf32>
    %cst_193 = arith.constant 1.000000e+00 : f32
    %364 = vector.broadcast %cst_193 : f32 to vector<8x128xf32>
    %365 = arith.addf %364, %363 : vector<8x128xf32>
    %366 = arith.divf %364, %365 : vector<8x128xf32>
    %367 = arith.mulf %358, %346 : vector<8x128xf32>
    %368 = arith.mulf %352, %360 : vector<8x128xf32>
    %369 = arith.addf %367, %368 : vector<8x128xf32>
    %370 = math.tanh %369 : vector<8x128xf32>
    %371 = arith.mulf %366, %370 : vector<8x128xf32>
    %c0_194 = arith.constant 0 : index
    %c0_195 = arith.constant 0 : index
    %372 = vector.load %arg18[%c0_194, %c0_195] : memref<8x128xf32, #tpu.memory_space<vmem>>, vector<8x128xf32>
    tpu.vector_store %arg18[%c0_194, %c0_195], %371 {strides = array<i32>} : memref<8x128xf32, #tpu.memory_space<vmem>>, vector<8x128xf32>,
    %c0_196 = arith.constant 0 : index
    %c0_197 = arith.constant 0 : index
    %373 = vector.load %arg19[%c0_196, %c0_197] : memref<8x128xf32, #tpu.memory_space<vmem>>, vector<8x128xf32>
    tpu.vector_store %arg19[%c0_196, %c0_197], %369 {strides = array<i32>} : memref<8x128xf32, #tpu.memory_space<vmem>>, vector<8x128xf32>,
    %374 = arith.index_cast %339 : i32 to index
    %c0_198 = arith.constant 0 : index
    %375 = vector.load %arg17[%374, %c0_198] : memref<64x128xf32, #tpu.memory_space<vmem>>, vector<8x128xf32>
    tpu.vector_store %arg17[%374, %c0_198], %371 {strides = array<i32>} : memref<64x128xf32, #tpu.memory_space<vmem>>, vector<8x128xf32>,
    %c1_i32_199 = arith.constant 1 : i32
    %c8_i32_200 = arith.constant 8 : i32
    %376 = arith.muli %c1_i32_199, %c8_i32_200 : i32
    %377 = tpu.assume_multiple %376, 8 : i32
    %378 = arith.index_cast %377 : i32 to index
    %c0_201 = arith.constant 0 : index
    %379 = vector.load %arg16[%378, %c0_201] : memref<64x512xf32, #tpu.memory_space<vmem>>, vector<8x512xf32>
    %c0_202 = arith.constant 0 : index
    %c0_203 = arith.constant 0 : index
    %380 = vector.load %arg18[%c0_202, %c0_203] : memref<8x128xf32, #tpu.memory_space<vmem>>, vector<8x128xf32>
    %c0_204 = arith.constant 0 : index
    %c0_205 = arith.constant 0 : index
    %381 = vector.load %arg7[%c0_204, %c0_205] : memref<128x512xf32, #tpu.memory_space<vmem>>, vector<128x512xf32>
    %cst_206 = arith.constant dense<0.000000e+00> : vector<8x512xf32>
    %382 = tpu.matmul %380, %381, %cst_206 {dimension_numbers = #tpu.dot_dimension_numbers<[1], [0], [0], [1], [0, 0, 1, 1], [], []>} : vector<8x128xf32>, vector<128x512xf32>, vector<8x512xf32> -> vector<8x512xf32>
    %383 = arith.addf %379, %382 : vector<8x512xf32>
    %c0_207 = arith.constant 0 : index
    %c0_208 = arith.constant 0 : index
    %384 = vector.load %arg19[%c0_207, %c0_208] : memref<8x128xf32, #tpu.memory_space<vmem>>, vector<8x128xf32>
    %385 = vector.extract_strided_slice %383 {offsets = [0, 0], sizes = [8, 128], strides = [1, 1]} : vector<8x512xf32> to vector<8x128xf32>
    %386 = arith.negf %385 : vector<8x128xf32>
    %387 = math.exp %386 : vector<8x128xf32>
    %cst_209 = arith.constant 1.000000e+00 : f32
    %388 = vector.broadcast %cst_209 : f32 to vector<8x128xf32>
    %389 = arith.addf %388, %387 : vector<8x128xf32>
    %390 = arith.divf %388, %389 : vector<8x128xf32>
    %391 = vector.extract_strided_slice %383 {offsets = [0, 128], sizes = [8, 128], strides = [1, 1]} : vector<8x512xf32> to vector<8x128xf32>
    %392 = arith.negf %391 : vector<8x128xf32>
    %393 = math.exp %392 : vector<8x128xf32>
    %cst_210 = arith.constant 1.000000e+00 : f32
    %394 = vector.broadcast %cst_210 : f32 to vector<8x128xf32>
    %395 = arith.addf %394, %393 : vector<8x128xf32>
    %396 = arith.divf %394, %395 : vector<8x128xf32>
    %397 = vector.extract_strided_slice %383 {offsets = [0, 256], sizes = [8, 128], strides = [1, 1]} : vector<8x512xf32> to vector<8x128xf32>
    %398 = math.tanh %397 : vector<8x128xf32>
    %399 = vector.extract_strided_slice %383 {offsets = [0, 384], sizes = [8, 128], strides = [1, 1]} : vector<8x512xf32> to vector<8x128xf32>
    %400 = arith.negf %399 : vector<8x128xf32>
    %401 = math.exp %400 : vector<8x128xf32>
    %cst_211 = arith.constant 1.000000e+00 : f32
    %402 = vector.broadcast %cst_211 : f32 to vector<8x128xf32>
    %403 = arith.addf %402, %401 : vector<8x128xf32>
    %404 = arith.divf %402, %403 : vector<8x128xf32>
    %405 = arith.mulf %396, %384 : vector<8x128xf32>
    %406 = arith.mulf %390, %398 : vector<8x128xf32>
    %407 = arith.addf %405, %406 : vector<8x128xf32>
    %408 = math.tanh %407 : vector<8x128xf32>
    %409 = arith.mulf %404, %408 : vector<8x128xf32>
    %c0_212 = arith.constant 0 : index
    %c0_213 = arith.constant 0 : index
    %410 = vector.load %arg18[%c0_212, %c0_213] : memref<8x128xf32, #tpu.memory_space<vmem>>, vector<8x128xf32>
    tpu.vector_store %arg18[%c0_212, %c0_213], %409 {strides = array<i32>} : memref<8x128xf32, #tpu.memory_space<vmem>>, vector<8x128xf32>,
    %c0_214 = arith.constant 0 : index
    %c0_215 = arith.constant 0 : index
    %411 = vector.load %arg19[%c0_214, %c0_215] : memref<8x128xf32, #tpu.memory_space<vmem>>, vector<8x128xf32>
    tpu.vector_store %arg19[%c0_214, %c0_215], %407 {strides = array<i32>} : memref<8x128xf32, #tpu.memory_space<vmem>>, vector<8x128xf32>,
    %412 = arith.index_cast %377 : i32 to index
    %c0_216 = arith.constant 0 : index
    %413 = vector.load %arg17[%412, %c0_216] : memref<64x128xf32, #tpu.memory_space<vmem>>, vector<8x128xf32>
    tpu.vector_store %arg17[%412, %c0_216], %409 {strides = array<i32>} : memref<64x128xf32, #tpu.memory_space<vmem>>, vector<8x128xf32>,
    %c2_i32_217 = arith.constant 2 : i32
    %c8_i32_218 = arith.constant 8 : i32
    %414 = arith.muli %c2_i32_217, %c8_i32_218 : i32
    %415 = tpu.assume_multiple %414, 8 : i32
    %416 = arith.index_cast %415 : i32 to index
    %c0_219 = arith.constant 0 : index
    %417 = vector.load %arg16[%416, %c0_219] : memref<64x512xf32, #tpu.memory_space<vmem>>, vector<8x512xf32>
    %c0_220 = arith.constant 0 : index
    %c0_221 = arith.constant 0 : index
    %418 = vector.load %arg18[%c0_220, %c0_221] : memref<8x128xf32, #tpu.memory_space<vmem>>, vector<8x128xf32>
    %c0_222 = arith.constant 0 : index
    %c0_223 = arith.constant 0 : index
    %419 = vector.load %arg7[%c0_222, %c0_223] : memref<128x512xf32, #tpu.memory_space<vmem>>, vector<128x512xf32>
    %cst_224 = arith.constant dense<0.000000e+00> : vector<8x512xf32>
    %420 = tpu.matmul %418, %419, %cst_224 {dimension_numbers = #tpu.dot_dimension_numbers<[1], [0], [0], [1], [0, 0, 1, 1], [], []>} : vector<8x128xf32>, vector<128x512xf32>, vector<8x512xf32> -> vector<8x512xf32>
    %421 = arith.addf %417, %420 : vector<8x512xf32>
    %c0_225 = arith.constant 0 : index
    %c0_226 = arith.constant 0 : index
    %422 = vector.load %arg19[%c0_225, %c0_226] : memref<8x128xf32, #tpu.memory_space<vmem>>, vector<8x128xf32>
    %423 = vector.extract_strided_slice %421 {offsets = [0, 0], sizes = [8, 128], strides = [1, 1]} : vector<8x512xf32> to vector<8x128xf32>
    %424 = arith.negf %423 : vector<8x128xf32>
    %425 = math.exp %424 : vector<8x128xf32>
    %cst_227 = arith.constant 1.000000e+00 : f32
    %426 = vector.broadcast %cst_227 : f32 to vector<8x128xf32>
    %427 = arith.addf %426, %425 : vector<8x128xf32>
    %428 = arith.divf %426, %427 : vector<8x128xf32>
    %429 = vector.extract_strided_slice %421 {offsets = [0, 128], sizes = [8, 128], strides = [1, 1]} : vector<8x512xf32> to vector<8x128xf32>
    %430 = arith.negf %429 : vector<8x128xf32>
    %431 = math.exp %430 : vector<8x128xf32>
    %cst_228 = arith.constant 1.000000e+00 : f32
    %432 = vector.broadcast %cst_228 : f32 to vector<8x128xf32>
    %433 = arith.addf %432, %431 : vector<8x128xf32>
    %434 = arith.divf %432, %433 : vector<8x128xf32>
    %435 = vector.extract_strided_slice %421 {offsets = [0, 256], sizes = [8, 128], strides = [1, 1]} : vector<8x512xf32> to vector<8x128xf32>
    %436 = math.tanh %435 : vector<8x128xf32>
    %437 = vector.extract_strided_slice %421 {offsets = [0, 384], sizes = [8, 128], strides = [1, 1]} : vector<8x512xf32> to vector<8x128xf32>
    %438 = arith.negf %437 : vector<8x128xf32>
    %439 = math.exp %438 : vector<8x128xf32>
    %cst_229 = arith.constant 1.000000e+00 : f32
    %440 = vector.broadcast %cst_229 : f32 to vector<8x128xf32>
    %441 = arith.addf %440, %439 : vector<8x128xf32>
    %442 = arith.divf %440, %441 : vector<8x128xf32>
    %443 = arith.mulf %434, %422 : vector<8x128xf32>
    %444 = arith.mulf %428, %436 : vector<8x128xf32>
    %445 = arith.addf %443, %444 : vector<8x128xf32>
    %446 = math.tanh %445 : vector<8x128xf32>
    %447 = arith.mulf %442, %446 : vector<8x128xf32>
    %c0_230 = arith.constant 0 : index
    %c0_231 = arith.constant 0 : index
    %448 = vector.load %arg18[%c0_230, %c0_231] : memref<8x128xf32, #tpu.memory_space<vmem>>, vector<8x128xf32>
    tpu.vector_store %arg18[%c0_230, %c0_231], %447 {strides = array<i32>} : memref<8x128xf32, #tpu.memory_space<vmem>>, vector<8x128xf32>,
    %c0_232 = arith.constant 0 : index
    %c0_233 = arith.constant 0 : index
    %449 = vector.load %arg19[%c0_232, %c0_233] : memref<8x128xf32, #tpu.memory_space<vmem>>, vector<8x128xf32>
    tpu.vector_store %arg19[%c0_232, %c0_233], %445 {strides = array<i32>} : memref<8x128xf32, #tpu.memory_space<vmem>>, vector<8x128xf32>,
    %450 = arith.index_cast %415 : i32 to index
    %c0_234 = arith.constant 0 : index
    %451 = vector.load %arg17[%450, %c0_234] : memref<64x128xf32, #tpu.memory_space<vmem>>, vector<8x128xf32>
    tpu.vector_store %arg17[%450, %c0_234], %447 {strides = array<i32>} : memref<64x128xf32, #tpu.memory_space<vmem>>, vector<8x128xf32>,
    %c3_i32_235 = arith.constant 3 : i32
    %c8_i32_236 = arith.constant 8 : i32
    %452 = arith.muli %c3_i32_235, %c8_i32_236 : i32
    %453 = tpu.assume_multiple %452, 8 : i32
    %454 = arith.index_cast %453 : i32 to index
    %c0_237 = arith.constant 0 : index
    %455 = vector.load %arg16[%454, %c0_237] : memref<64x512xf32, #tpu.memory_space<vmem>>, vector<8x512xf32>
    %c0_238 = arith.constant 0 : index
    %c0_239 = arith.constant 0 : index
    %456 = vector.load %arg18[%c0_238, %c0_239] : memref<8x128xf32, #tpu.memory_space<vmem>>, vector<8x128xf32>
    %c0_240 = arith.constant 0 : index
    %c0_241 = arith.constant 0 : index
    %457 = vector.load %arg7[%c0_240, %c0_241] : memref<128x512xf32, #tpu.memory_space<vmem>>, vector<128x512xf32>
    %cst_242 = arith.constant dense<0.000000e+00> : vector<8x512xf32>
    %458 = tpu.matmul %456, %457, %cst_242 {dimension_numbers = #tpu.dot_dimension_numbers<[1], [0], [0], [1], [0, 0, 1, 1], [], []>} : vector<8x128xf32>, vector<128x512xf32>, vector<8x512xf32> -> vector<8x512xf32>
    %459 = arith.addf %455, %458 : vector<8x512xf32>
    %c0_243 = arith.constant 0 : index
    %c0_244 = arith.constant 0 : index
    %460 = vector.load %arg19[%c0_243, %c0_244] : memref<8x128xf32, #tpu.memory_space<vmem>>, vector<8x128xf32>
    %461 = vector.extract_strided_slice %459 {offsets = [0, 0], sizes = [8, 128], strides = [1, 1]} : vector<8x512xf32> to vector<8x128xf32>
    %462 = arith.negf %461 : vector<8x128xf32>
    %463 = math.exp %462 : vector<8x128xf32>
    %cst_245 = arith.constant 1.000000e+00 : f32
    %464 = vector.broadcast %cst_245 : f32 to vector<8x128xf32>
    %465 = arith.addf %464, %463 : vector<8x128xf32>
    %466 = arith.divf %464, %465 : vector<8x128xf32>
    %467 = vector.extract_strided_slice %459 {offsets = [0, 128], sizes = [8, 128], strides = [1, 1]} : vector<8x512xf32> to vector<8x128xf32>
    %468 = arith.negf %467 : vector<8x128xf32>
    %469 = math.exp %468 : vector<8x128xf32>
    %cst_246 = arith.constant 1.000000e+00 : f32
    %470 = vector.broadcast %cst_246 : f32 to vector<8x128xf32>
    %471 = arith.addf %470, %469 : vector<8x128xf32>
    %472 = arith.divf %470, %471 : vector<8x128xf32>
    %473 = vector.extract_strided_slice %459 {offsets = [0, 256], sizes = [8, 128], strides = [1, 1]} : vector<8x512xf32> to vector<8x128xf32>
    %474 = math.tanh %473 : vector<8x128xf32>
    %475 = vector.extract_strided_slice %459 {offsets = [0, 384], sizes = [8, 128], strides = [1, 1]} : vector<8x512xf32> to vector<8x128xf32>
    %476 = arith.negf %475 : vector<8x128xf32>
    %477 = math.exp %476 : vector<8x128xf32>
    %cst_247 = arith.constant 1.000000e+00 : f32
    %478 = vector.broadcast %cst_247 : f32 to vector<8x128xf32>
    %479 = arith.addf %478, %477 : vector<8x128xf32>
    %480 = arith.divf %478, %479 : vector<8x128xf32>
    %481 = arith.mulf %472, %460 : vector<8x128xf32>
    %482 = arith.mulf %466, %474 : vector<8x128xf32>
    %483 = arith.addf %481, %482 : vector<8x128xf32>
    %484 = math.tanh %483 : vector<8x128xf32>
    %485 = arith.mulf %480, %484 : vector<8x128xf32>
    %c0_248 = arith.constant 0 : index
    %c0_249 = arith.constant 0 : index
    %486 = vector.load %arg18[%c0_248, %c0_249] : memref<8x128xf32, #tpu.memory_space<vmem>>, vector<8x128xf32>
    tpu.vector_store %arg18[%c0_248, %c0_249], %485 {strides = array<i32>} : memref<8x128xf32, #tpu.memory_space<vmem>>, vector<8x128xf32>,
    %c0_250 = arith.constant 0 : index
    %c0_251 = arith.constant 0 : index
    %487 = vector.load %arg19[%c0_250, %c0_251] : memref<8x128xf32, #tpu.memory_space<vmem>>, vector<8x128xf32>
    tpu.vector_store %arg19[%c0_250, %c0_251], %483 {strides = array<i32>} : memref<8x128xf32, #tpu.memory_space<vmem>>, vector<8x128xf32>,
    %488 = arith.index_cast %453 : i32 to index
    %c0_252 = arith.constant 0 : index
    %489 = vector.load %arg17[%488, %c0_252] : memref<64x128xf32, #tpu.memory_space<vmem>>, vector<8x128xf32>
    tpu.vector_store %arg17[%488, %c0_252], %485 {strides = array<i32>} : memref<64x128xf32, #tpu.memory_space<vmem>>, vector<8x128xf32>,
    %c4_i32_253 = arith.constant 4 : i32
    %c8_i32_254 = arith.constant 8 : i32
    %490 = arith.muli %c4_i32_253, %c8_i32_254 : i32
    %491 = tpu.assume_multiple %490, 8 : i32
    %492 = arith.index_cast %491 : i32 to index
    %c0_255 = arith.constant 0 : index
    %493 = vector.load %arg16[%492, %c0_255] : memref<64x512xf32, #tpu.memory_space<vmem>>, vector<8x512xf32>
    %c0_256 = arith.constant 0 : index
    %c0_257 = arith.constant 0 : index
    %494 = vector.load %arg18[%c0_256, %c0_257] : memref<8x128xf32, #tpu.memory_space<vmem>>, vector<8x128xf32>
    %c0_258 = arith.constant 0 : index
    %c0_259 = arith.constant 0 : index
    %495 = vector.load %arg7[%c0_258, %c0_259] : memref<128x512xf32, #tpu.memory_space<vmem>>, vector<128x512xf32>
    %cst_260 = arith.constant dense<0.000000e+00> : vector<8x512xf32>
    %496 = tpu.matmul %494, %495, %cst_260 {dimension_numbers = #tpu.dot_dimension_numbers<[1], [0], [0], [1], [0, 0, 1, 1], [], []>} : vector<8x128xf32>, vector<128x512xf32>, vector<8x512xf32> -> vector<8x512xf32>
    %497 = arith.addf %493, %496 : vector<8x512xf32>
    %c0_261 = arith.constant 0 : index
    %c0_262 = arith.constant 0 : index
    %498 = vector.load %arg19[%c0_261, %c0_262] : memref<8x128xf32, #tpu.memory_space<vmem>>, vector<8x128xf32>
    %499 = vector.extract_strided_slice %497 {offsets = [0, 0], sizes = [8, 128], strides = [1, 1]} : vector<8x512xf32> to vector<8x128xf32>
    %500 = arith.negf %499 : vector<8x128xf32>
    %501 = math.exp %500 : vector<8x128xf32>
    %cst_263 = arith.constant 1.000000e+00 : f32
    %502 = vector.broadcast %cst_263 : f32 to vector<8x128xf32>
    %503 = arith.addf %502, %501 : vector<8x128xf32>
    %504 = arith.divf %502, %503 : vector<8x128xf32>
    %505 = vector.extract_strided_slice %497 {offsets = [0, 128], sizes = [8, 128], strides = [1, 1]} : vector<8x512xf32> to vector<8x128xf32>
    %506 = arith.negf %505 : vector<8x128xf32>
    %507 = math.exp %506 : vector<8x128xf32>
    %cst_264 = arith.constant 1.000000e+00 : f32
    %508 = vector.broadcast %cst_264 : f32 to vector<8x128xf32>
    %509 = arith.addf %508, %507 : vector<8x128xf32>
    %510 = arith.divf %508, %509 : vector<8x128xf32>
    %511 = vector.extract_strided_slice %497 {offsets = [0, 256], sizes = [8, 128], strides = [1, 1]} : vector<8x512xf32> to vector<8x128xf32>
    %512 = math.tanh %511 : vector<8x128xf32>
    %513 = vector.extract_strided_slice %497 {offsets = [0, 384], sizes = [8, 128], strides = [1, 1]} : vector<8x512xf32> to vector<8x128xf32>
    %514 = arith.negf %513 : vector<8x128xf32>
    %515 = math.exp %514 : vector<8x128xf32>
    %cst_265 = arith.constant 1.000000e+00 : f32
    %516 = vector.broadcast %cst_265 : f32 to vector<8x128xf32>
    %517 = arith.addf %516, %515 : vector<8x128xf32>
    %518 = arith.divf %516, %517 : vector<8x128xf32>
    %519 = arith.mulf %510, %498 : vector<8x128xf32>
    %520 = arith.mulf %504, %512 : vector<8x128xf32>
    %521 = arith.addf %519, %520 : vector<8x128xf32>
    %522 = math.tanh %521 : vector<8x128xf32>
    %523 = arith.mulf %518, %522 : vector<8x128xf32>
    %c0_266 = arith.constant 0 : index
    %c0_267 = arith.constant 0 : index
    %524 = vector.load %arg18[%c0_266, %c0_267] : memref<8x128xf32, #tpu.memory_space<vmem>>, vector<8x128xf32>
    tpu.vector_store %arg18[%c0_266, %c0_267], %523 {strides = array<i32>} : memref<8x128xf32, #tpu.memory_space<vmem>>, vector<8x128xf32>,
    %c0_268 = arith.constant 0 : index
    %c0_269 = arith.constant 0 : index
    %525 = vector.load %arg19[%c0_268, %c0_269] : memref<8x128xf32, #tpu.memory_space<vmem>>, vector<8x128xf32>
    tpu.vector_store %arg19[%c0_268, %c0_269], %521 {strides = array<i32>} : memref<8x128xf32, #tpu.memory_space<vmem>>, vector<8x128xf32>,
    %526 = arith.index_cast %491 : i32 to index
    %c0_270 = arith.constant 0 : index
    %527 = vector.load %arg17[%526, %c0_270] : memref<64x128xf32, #tpu.memory_space<vmem>>, vector<8x128xf32>
    tpu.vector_store %arg17[%526, %c0_270], %523 {strides = array<i32>} : memref<64x128xf32, #tpu.memory_space<vmem>>, vector<8x128xf32>,
    %c5_i32_271 = arith.constant 5 : i32
    %c8_i32_272 = arith.constant 8 : i32
    %528 = arith.muli %c5_i32_271, %c8_i32_272 : i32
    %529 = tpu.assume_multiple %528, 8 : i32
    %530 = arith.index_cast %529 : i32 to index
    %c0_273 = arith.constant 0 : index
    %531 = vector.load %arg16[%530, %c0_273] : memref<64x512xf32, #tpu.memory_space<vmem>>, vector<8x512xf32>
    %c0_274 = arith.constant 0 : index
    %c0_275 = arith.constant 0 : index
    %532 = vector.load %arg18[%c0_274, %c0_275] : memref<8x128xf32, #tpu.memory_space<vmem>>, vector<8x128xf32>
    %c0_276 = arith.constant 0 : index
    %c0_277 = arith.constant 0 : index
    %533 = vector.load %arg7[%c0_276, %c0_277] : memref<128x512xf32, #tpu.memory_space<vmem>>, vector<128x512xf32>
    %cst_278 = arith.constant dense<0.000000e+00> : vector<8x512xf32>
    %534 = tpu.matmul %532, %533, %cst_278 {dimension_numbers = #tpu.dot_dimension_numbers<[1], [0], [0], [1], [0, 0, 1, 1], [], []>} : vector<8x128xf32>, vector<128x512xf32>, vector<8x512xf32> -> vector<8x512xf32>
    %535 = arith.addf %531, %534 : vector<8x512xf32>
    %c0_279 = arith.constant 0 : index
    %c0_280 = arith.constant 0 : index
    %536 = vector.load %arg19[%c0_279, %c0_280] : memref<8x128xf32, #tpu.memory_space<vmem>>, vector<8x128xf32>
    %537 = vector.extract_strided_slice %535 {offsets = [0, 0], sizes = [8, 128], strides = [1, 1]} : vector<8x512xf32> to vector<8x128xf32>
    %538 = arith.negf %537 : vector<8x128xf32>
    %539 = math.exp %538 : vector<8x128xf32>
    %cst_281 = arith.constant 1.000000e+00 : f32
    %540 = vector.broadcast %cst_281 : f32 to vector<8x128xf32>
    %541 = arith.addf %540, %539 : vector<8x128xf32>
    %542 = arith.divf %540, %541 : vector<8x128xf32>
    %543 = vector.extract_strided_slice %535 {offsets = [0, 128], sizes = [8, 128], strides = [1, 1]} : vector<8x512xf32> to vector<8x128xf32>
    %544 = arith.negf %543 : vector<8x128xf32>
    %545 = math.exp %544 : vector<8x128xf32>
    %cst_282 = arith.constant 1.000000e+00 : f32
    %546 = vector.broadcast %cst_282 : f32 to vector<8x128xf32>
    %547 = arith.addf %546, %545 : vector<8x128xf32>
    %548 = arith.divf %546, %547 : vector<8x128xf32>
    %549 = vector.extract_strided_slice %535 {offsets = [0, 256], sizes = [8, 128], strides = [1, 1]} : vector<8x512xf32> to vector<8x128xf32>
    %550 = math.tanh %549 : vector<8x128xf32>
    %551 = vector.extract_strided_slice %535 {offsets = [0, 384], sizes = [8, 128], strides = [1, 1]} : vector<8x512xf32> to vector<8x128xf32>
    %552 = arith.negf %551 : vector<8x128xf32>
    %553 = math.exp %552 : vector<8x128xf32>
    %cst_283 = arith.constant 1.000000e+00 : f32
    %554 = vector.broadcast %cst_283 : f32 to vector<8x128xf32>
    %555 = arith.addf %554, %553 : vector<8x128xf32>
    %556 = arith.divf %554, %555 : vector<8x128xf32>
    %557 = arith.mulf %548, %536 : vector<8x128xf32>
    %558 = arith.mulf %542, %550 : vector<8x128xf32>
    %559 = arith.addf %557, %558 : vector<8x128xf32>
    %560 = math.tanh %559 : vector<8x128xf32>
    %561 = arith.mulf %556, %560 : vector<8x128xf32>
    %c0_284 = arith.constant 0 : index
    %c0_285 = arith.constant 0 : index
    %562 = vector.load %arg18[%c0_284, %c0_285] : memref<8x128xf32, #tpu.memory_space<vmem>>, vector<8x128xf32>
    tpu.vector_store %arg18[%c0_284, %c0_285], %561 {strides = array<i32>} : memref<8x128xf32, #tpu.memory_space<vmem>>, vector<8x128xf32>,
    %c0_286 = arith.constant 0 : index
    %c0_287 = arith.constant 0 : index
    %563 = vector.load %arg19[%c0_286, %c0_287] : memref<8x128xf32, #tpu.memory_space<vmem>>, vector<8x128xf32>
    tpu.vector_store %arg19[%c0_286, %c0_287], %559 {strides = array<i32>} : memref<8x128xf32, #tpu.memory_space<vmem>>, vector<8x128xf32>,
    %564 = arith.index_cast %529 : i32 to index
    %c0_288 = arith.constant 0 : index
    %565 = vector.load %arg17[%564, %c0_288] : memref<64x128xf32, #tpu.memory_space<vmem>>, vector<8x128xf32>
    tpu.vector_store %arg17[%564, %c0_288], %561 {strides = array<i32>} : memref<64x128xf32, #tpu.memory_space<vmem>>, vector<8x128xf32>,
    %c6_i32_289 = arith.constant 6 : i32
    %c8_i32_290 = arith.constant 8 : i32
    %566 = arith.muli %c6_i32_289, %c8_i32_290 : i32
    %567 = tpu.assume_multiple %566, 8 : i32
    %568 = arith.index_cast %567 : i32 to index
    %c0_291 = arith.constant 0 : index
    %569 = vector.load %arg16[%568, %c0_291] : memref<64x512xf32, #tpu.memory_space<vmem>>, vector<8x512xf32>
    %c0_292 = arith.constant 0 : index
    %c0_293 = arith.constant 0 : index
    %570 = vector.load %arg18[%c0_292, %c0_293] : memref<8x128xf32, #tpu.memory_space<vmem>>, vector<8x128xf32>
    %c0_294 = arith.constant 0 : index
    %c0_295 = arith.constant 0 : index
    %571 = vector.load %arg7[%c0_294, %c0_295] : memref<128x512xf32, #tpu.memory_space<vmem>>, vector<128x512xf32>
    %cst_296 = arith.constant dense<0.000000e+00> : vector<8x512xf32>
    %572 = tpu.matmul %570, %571, %cst_296 {dimension_numbers = #tpu.dot_dimension_numbers<[1], [0], [0], [1], [0, 0, 1, 1], [], []>} : vector<8x128xf32>, vector<128x512xf32>, vector<8x512xf32> -> vector<8x512xf32>
    %573 = arith.addf %569, %572 : vector<8x512xf32>
    %c0_297 = arith.constant 0 : index
    %c0_298 = arith.constant 0 : index
    %574 = vector.load %arg19[%c0_297, %c0_298] : memref<8x128xf32, #tpu.memory_space<vmem>>, vector<8x128xf32>
    %575 = vector.extract_strided_slice %573 {offsets = [0, 0], sizes = [8, 128], strides = [1, 1]} : vector<8x512xf32> to vector<8x128xf32>
    %576 = arith.negf %575 : vector<8x128xf32>
    %577 = math.exp %576 : vector<8x128xf32>
    %cst_299 = arith.constant 1.000000e+00 : f32
    %578 = vector.broadcast %cst_299 : f32 to vector<8x128xf32>
    %579 = arith.addf %578, %577 : vector<8x128xf32>
    %580 = arith.divf %578, %579 : vector<8x128xf32>
    %581 = vector.extract_strided_slice %573 {offsets = [0, 128], sizes = [8, 128], strides = [1, 1]} : vector<8x512xf32> to vector<8x128xf32>
    %582 = arith.negf %581 : vector<8x128xf32>
    %583 = math.exp %582 : vector<8x128xf32>
    %cst_300 = arith.constant 1.000000e+00 : f32
    %584 = vector.broadcast %cst_300 : f32 to vector<8x128xf32>
    %585 = arith.addf %584, %583 : vector<8x128xf32>
    %586 = arith.divf %584, %585 : vector<8x128xf32>
    %587 = vector.extract_strided_slice %573 {offsets = [0, 256], sizes = [8, 128], strides = [1, 1]} : vector<8x512xf32> to vector<8x128xf32>
    %588 = math.tanh %587 : vector<8x128xf32>
    %589 = vector.extract_strided_slice %573 {offsets = [0, 384], sizes = [8, 128], strides = [1, 1]} : vector<8x512xf32> to vector<8x128xf32>
    %590 = arith.negf %589 : vector<8x128xf32>
    %591 = math.exp %590 : vector<8x128xf32>
    %cst_301 = arith.constant 1.000000e+00 : f32
    %592 = vector.broadcast %cst_301 : f32 to vector<8x128xf32>
    %593 = arith.addf %592, %591 : vector<8x128xf32>
    %594 = arith.divf %592, %593 : vector<8x128xf32>
    %595 = arith.mulf %586, %574 : vector<8x128xf32>
    %596 = arith.mulf %580, %588 : vector<8x128xf32>
    %597 = arith.addf %595, %596 : vector<8x128xf32>
    %598 = math.tanh %597 : vector<8x128xf32>
    %599 = arith.mulf %594, %598 : vector<8x128xf32>
    %c0_302 = arith.constant 0 : index
    %c0_303 = arith.constant 0 : index
    %600 = vector.load %arg18[%c0_302, %c0_303] : memref<8x128xf32, #tpu.memory_space<vmem>>, vector<8x128xf32>
    tpu.vector_store %arg18[%c0_302, %c0_303], %599 {strides = array<i32>} : memref<8x128xf32, #tpu.memory_space<vmem>>, vector<8x128xf32>,
    %c0_304 = arith.constant 0 : index
    %c0_305 = arith.constant 0 : index
    %601 = vector.load %arg19[%c0_304, %c0_305] : memref<8x128xf32, #tpu.memory_space<vmem>>, vector<8x128xf32>
    tpu.vector_store %arg19[%c0_304, %c0_305], %597 {strides = array<i32>} : memref<8x128xf32, #tpu.memory_space<vmem>>, vector<8x128xf32>,
    %602 = arith.index_cast %567 : i32 to index
    %c0_306 = arith.constant 0 : index
    %603 = vector.load %arg17[%602, %c0_306] : memref<64x128xf32, #tpu.memory_space<vmem>>, vector<8x128xf32>
    tpu.vector_store %arg17[%602, %c0_306], %599 {strides = array<i32>} : memref<64x128xf32, #tpu.memory_space<vmem>>, vector<8x128xf32>,
    %c7_i32_307 = arith.constant 7 : i32
    %c8_i32_308 = arith.constant 8 : i32
    %604 = arith.muli %c7_i32_307, %c8_i32_308 : i32
    %605 = tpu.assume_multiple %604, 8 : i32
    %606 = arith.index_cast %605 : i32 to index
    %c0_309 = arith.constant 0 : index
    %607 = vector.load %arg16[%606, %c0_309] : memref<64x512xf32, #tpu.memory_space<vmem>>, vector<8x512xf32>
    %c0_310 = arith.constant 0 : index
    %c0_311 = arith.constant 0 : index
    %608 = vector.load %arg18[%c0_310, %c0_311] : memref<8x128xf32, #tpu.memory_space<vmem>>, vector<8x128xf32>
    %c0_312 = arith.constant 0 : index
    %c0_313 = arith.constant 0 : index
    %609 = vector.load %arg7[%c0_312, %c0_313] : memref<128x512xf32, #tpu.memory_space<vmem>>, vector<128x512xf32>
    %cst_314 = arith.constant dense<0.000000e+00> : vector<8x512xf32>
    %610 = tpu.matmul %608, %609, %cst_314 {dimension_numbers = #tpu.dot_dimension_numbers<[1], [0], [0], [1], [0, 0, 1, 1], [], []>} : vector<8x128xf32>, vector<128x512xf32>, vector<8x512xf32> -> vector<8x512xf32>
    %611 = arith.addf %607, %610 : vector<8x512xf32>
    %c0_315 = arith.constant 0 : index
    %c0_316 = arith.constant 0 : index
    %612 = vector.load %arg19[%c0_315, %c0_316] : memref<8x128xf32, #tpu.memory_space<vmem>>, vector<8x128xf32>
    %613 = vector.extract_strided_slice %611 {offsets = [0, 0], sizes = [8, 128], strides = [1, 1]} : vector<8x512xf32> to vector<8x128xf32>
    %614 = arith.negf %613 : vector<8x128xf32>
    %615 = math.exp %614 : vector<8x128xf32>
    %cst_317 = arith.constant 1.000000e+00 : f32
    %616 = vector.broadcast %cst_317 : f32 to vector<8x128xf32>
    %617 = arith.addf %616, %615 : vector<8x128xf32>
    %618 = arith.divf %616, %617 : vector<8x128xf32>
    %619 = vector.extract_strided_slice %611 {offsets = [0, 128], sizes = [8, 128], strides = [1, 1]} : vector<8x512xf32> to vector<8x128xf32>
    %620 = arith.negf %619 : vector<8x128xf32>
    %621 = math.exp %620 : vector<8x128xf32>
    %cst_318 = arith.constant 1.000000e+00 : f32
    %622 = vector.broadcast %cst_318 : f32 to vector<8x128xf32>
    %623 = arith.addf %622, %621 : vector<8x128xf32>
    %624 = arith.divf %622, %623 : vector<8x128xf32>
    %625 = vector.extract_strided_slice %611 {offsets = [0, 256], sizes = [8, 128], strides = [1, 1]} : vector<8x512xf32> to vector<8x128xf32>
    %626 = math.tanh %625 : vector<8x128xf32>
    %627 = vector.extract_strided_slice %611 {offsets = [0, 384], sizes = [8, 128], strides = [1, 1]} : vector<8x512xf32> to vector<8x128xf32>
    %628 = arith.negf %627 : vector<8x128xf32>
    %629 = math.exp %628 : vector<8x128xf32>
    %cst_319 = arith.constant 1.000000e+00 : f32
    %630 = vector.broadcast %cst_319 : f32 to vector<8x128xf32>
    %631 = arith.addf %630, %629 : vector<8x128xf32>
    %632 = arith.divf %630, %631 : vector<8x128xf32>
    %633 = arith.mulf %624, %612 : vector<8x128xf32>
    %634 = arith.mulf %618, %626 : vector<8x128xf32>
    %635 = arith.addf %633, %634 : vector<8x128xf32>
    %636 = math.tanh %635 : vector<8x128xf32>
    %637 = arith.mulf %632, %636 : vector<8x128xf32>
    %c0_320 = arith.constant 0 : index
    %c0_321 = arith.constant 0 : index
    %638 = vector.load %arg18[%c0_320, %c0_321] : memref<8x128xf32, #tpu.memory_space<vmem>>, vector<8x128xf32>
    tpu.vector_store %arg18[%c0_320, %c0_321], %637 {strides = array<i32>} : memref<8x128xf32, #tpu.memory_space<vmem>>, vector<8x128xf32>,
    %c0_322 = arith.constant 0 : index
    %c0_323 = arith.constant 0 : index
    %639 = vector.load %arg19[%c0_322, %c0_323] : memref<8x128xf32, #tpu.memory_space<vmem>>, vector<8x128xf32>
    tpu.vector_store %arg19[%c0_322, %c0_323], %635 {strides = array<i32>} : memref<8x128xf32, #tpu.memory_space<vmem>>, vector<8x128xf32>,
    %640 = arith.index_cast %605 : i32 to index
    %c0_324 = arith.constant 0 : index
    %641 = vector.load %arg17[%640, %c0_324] : memref<64x128xf32, #tpu.memory_space<vmem>>, vector<8x128xf32>
    tpu.vector_store %arg17[%640, %c0_324], %637 {strides = array<i32>} : memref<64x128xf32, #tpu.memory_space<vmem>>, vector<8x128xf32>,
    %c8_i32_325 = arith.constant 8 : i32
    %c0_326 = arith.constant 0 : index
    %c0_327 = arith.constant 0 : index
    %642 = vector.load %arg18[%c0_326, %c0_327] : memref<8x128xf32, #tpu.memory_space<vmem>>, vector<8x128xf32>
    %c1_328 = arith.constant 1 : index
    %c0_329 = arith.constant 0 : index
    %c0_330 = arith.constant 0 : index
    %643 = vector.load %arg12[%c1_328, %c0_329, %c0_330] : memref<2x8x128xf32, #tpu.memory_space<vmem>>, vector<1x8x128xf32>
    %644 = vector.shape_cast %643 : vector<1x8x128xf32> to vector<8x128xf32>
    %645 = vector.shape_cast %642 : vector<8x128xf32> to vector<1x8x128xf32>
    tpu.vector_store %arg12[%c1_328, %c0_329, %c0_330], %645 {strides = array<i32>} : memref<2x8x128xf32, #tpu.memory_space<vmem>>, vector<1x8x128xf32>,
    %c0_331 = arith.constant 0 : index
    %c0_332 = arith.constant 0 : index
    %646 = vector.load %arg19[%c0_331, %c0_332] : memref<8x128xf32, #tpu.memory_space<vmem>>, vector<8x128xf32>
    %c1_333 = arith.constant 1 : index
    %c0_334 = arith.constant 0 : index
    %c0_335 = arith.constant 0 : index
    %647 = vector.load %arg13[%c1_333, %c0_334, %c0_335] : memref<2x8x128xf32, #tpu.memory_space<vmem>>, vector<1x8x128xf32>
    %648 = vector.shape_cast %647 : vector<1x8x128xf32> to vector<8x128xf32>
    %649 = vector.shape_cast %646 : vector<8x128xf32> to vector<1x8x128xf32>
    tpu.vector_store %arg13[%c1_333, %c0_334, %c0_335], %649 {strides = array<i32>} : memref<2x8x128xf32, #tpu.memory_space<vmem>>, vector<1x8x128xf32>,
    %c0_336 = arith.constant 0 : index
    %c0_337 = arith.constant 0 : index
    %650 = vector.load %arg17[%c0_336, %c0_337] : memref<64x128xf32, #tpu.memory_space<vmem>>, vector<64x128xf32>
    %c0_338 = arith.constant 0 : index
    %c0_339 = arith.constant 0 : index
    %651 = vector.load %arg9[%c0_338, %c0_339] : memref<128x128xf32, #tpu.memory_space<vmem>>, vector<128x128xf32>
    %cst_340 = arith.constant dense<0.000000e+00> : vector<64x128xf32>
    %652 = tpu.matmul %650, %651, %cst_340 {dimension_numbers = #tpu.dot_dimension_numbers<[1], [0], [0], [1], [0, 0, 1, 1], [], []>} : vector<64x128xf32>, vector<128x128xf32>, vector<64x128xf32> -> vector<64x128xf32>
    %c0_341 = arith.constant 0 : index
    %c0_342 = arith.constant 0 : index
    %653 = vector.load %arg10[%c0_341, %c0_342] : memref<1x128xf32, #tpu.memory_space<vmem>>, vector<1x128xf32>
    %654 = vector.broadcast %653 : vector<1x128xf32> to vector<64x128xf32>
    %655 = arith.addf %652, %654 : vector<64x128xf32>
    %c0_343 = arith.constant 0 : index
    %c0_344 = arith.constant 0 : index
    %656 = vector.load %arg11[%c0_343, %c0_344] : memref<64x128xf32, #tpu.memory_space<vmem>>, vector<64x128xf32>
    tpu.vector_store %arg11[%c0_343, %c0_344], %655 {strides = array<i32>} : memref<64x128xf32, #tpu.memory_space<vmem>>, vector<64x128xf32>,
    return
  }
}

</mosaic_0001>

<llo_original>
// kernel: tpu_custom_call.1
$region0: #{tpu_custom_call.1}
  #allocation0 [shape = 'u32[]', space=smem, size = 0x4, offset = 0x4, fixed_abs, tag = 'smem constant byte address 0x4 - core index']
  #allocation1 [shape = 'u32[144,128]{1,0:T(1,128)}', space=vmem, size = 0x12000, scoped, tag = 'internal scratch']
  #allocation2 [shape = 'f32[64,512]{1,0:T(8,128)}', space=vmem, size = 0x20000, scoped, tag = 'scratch operand']
  #allocation3 [shape = 'f32[64,128]{1,0:T(8,128)}', space=vmem, size = 0x8000, scoped, tag = 'scratch operand']
  #allocation4 [shape = 'f32[64,512]{1,0:T(8,128)}', space=vmem, size = 0x20000, scoped, tag = 'scratch operand']
  #allocation5 [shape = 'f32[64,128]{1,0:T(8,128)}', space=vmem, size = 0x8000, scoped, tag = 'scratch operand']
  #allocation6 [shape = 'f32[8,128]{1,0:T(8,128)}', space=vmem, size = 0x1000, scoped, tag = 'scratch operand']
  #allocation7 [shape = 'f32[8,128]{1,0:T(8,128)}', space=vmem, size = 0x1000, scoped, tag = 'scratch operand']
  %s0 = inlined_call_operand.hbm [shape: f32[64,128], index: 0, kind: input, shape index: {}]
  %s1 = inlined_call_operand.hbm [shape: f32[2,8,128], index: 1, kind: input, shape index: {}]
  %s2 = inlined_call_operand.hbm [shape: f32[2,8,128], index: 2, kind: input, shape index: {}]
  %s3 = inlined_call_operand.hbm [shape: f32[128,512], index: 3, kind: input, shape index: {}]
  %s4 = inlined_call_operand.hbm [shape: f32[128,512], index: 4, kind: input, shape index: {}]
  %s5 = inlined_call_operand.vmem [shape: f32[1,512], index: 5, kind: input, shape index: {}]
  %s6 = inlined_call_operand.hbm [shape: f32[128,512], index: 6, kind: input, shape index: {}]
  %s7 = inlined_call_operand.hbm [shape: f32[128,512], index: 7, kind: input, shape index: {}]
  %s8 = inlined_call_operand.vmem [shape: f32[1,512], index: 8, kind: input, shape index: {}]
  %s9 = inlined_call_operand.hbm [shape: f32[128,128], index: 9, kind: input, shape index: {}]
  %s10 = inlined_call_operand.vmem [shape: f32[1,128], index: 10, kind: input, shape index: {}]
  %s11 = inlined_call_operand.hbm [shape: f32[64,128], index: 11, kind: output, shape index: {0}]
  %s12 = inlined_call_operand.hbm [shape: f32[2,8,128], index: 12, kind: output, shape index: {1}]
  %s13 = inlined_call_operand.hbm [shape: f32[2,8,128], index: 13, kind: output, shape index: {2}]
  %14 = xla_tuple %s11, %s12, %s13
  %s15 = sld [smem:[#allocation0]]
  $region102: #{tpu_custom_call.1} parent=0
    _
  %s17 = ssub.s32 1, %s15
  %s18 = scalar_select 0, %s17, %s15
  $region1: #{tpu_custom_call.1} parent=0
    #allocation8 [shape = 'u8[32768]{0}', space=vmem, size = 0x8000, scoped, tag = 'input window, operand 0, single buffered']
    #allocation9 [shape = 's32[1]{0}', space=sflag, size = 0x4, scoped, tag = 'scoped memory for tpu_custom_call.1']
    #allocation10 [shape = 's32[1]{0}', space=sflag, size = 0x4, scoped, tag = 'scoped memory for tpu_custom_call.1']
    #allocation11 [shape = 'u8[8192]{0}', space=vmem, size = 0x2000, scoped, tag = 'input window, operand 1, single buffered']
    #allocation12 [shape = 's32[1]{0}', space=sflag, size = 0x4, scoped, tag = 'scoped memory for tpu_custom_call.1']
    #allocation13 [shape = 'u8[8192]{0}', space=vmem, size = 0x2000, scoped, tag = 'input window, operand 2, single buffered']
    #allocation14 [shape = 'u8[262144]{0}', space=vmem, size = 0x40000, scoped, tag = 'input window, operand 3, single buffered']
    #allocation15 [shape = 's32[1]{0}', space=sflag, size = 0x4, scoped, tag = 'scoped memory for tpu_custom_call.1']
    #allocation16 [shape = 'u8[262144]{0}', space=vmem, size = 0x40000, scoped, tag = 'input window, operand 4, single buffered']
    #allocation17 [shape = 'u8[262144]{0}', space=vmem, size = 0x40000, scoped, tag = 'input window, operand 6, single buffered']
    #allocation18 [shape = 's32[1]{0}', space=sflag, size = 0x4, scoped, tag = 'scoped memory for tpu_custom_call.1']
    #allocation19 [shape = 'u8[262144]{0}', space=vmem, size = 0x40000, scoped, tag = 'input window, operand 7, single buffered']
    #allocation20 [shape = 'u8[65536]{0}', space=vmem, size = 0x10000, scoped, tag = 'input window, operand 9, single buffered']
    #allocation21 [shape = 's32[1]{0}', space=sflag, size = 0x4, scoped, tag = 'scoped memory for tpu_custom_call.1']
    #allocation22 [shape = 'u8[32768]{0}', space=vmem, size = 0x8000, scoped, tag = 'output window, operand 0, single buffered']
    #allocation23 [shape = 'u8[8192]{0}', space=vmem, size = 0x2000, scoped, tag = 'output window, operand 1, single buffered']
    #allocation24 [shape = 's32[1]{0}', space=sflag, size = 0x4, scoped, tag = 'scoped memory for tpu_custom_call.1']
    #allocation25 [shape = 'u8[8192]{0}', space=vmem, size = 0x2000, scoped, tag = 'output window, operand 2, single buffered']
    %19 = vsyncpa [#allocation9], 0
    %20 = vsyncpa [#allocation12], 0
    %21 = vsyncpa [#allocation15], 0
    %22 = vsyncpa [#allocation18], 0
    %23 = vsyncpa [#allocation21], 0
    %24 = vsyncpa [#allocation10], 0
    %25 = vsyncpa [#allocation24], 0
    // Predicated region
    $region2: #{tpu_custom_call.1} parent=1 // pred_check
      _
    $region3: #{tpu_custom_call.1} parent=1 // pred_check_branch
      %27 = sbr.rel (0) target = $region5
    $region4: #{tpu_custom_call.1} parent=1 // pred_region
      %s29 = ssub.s32 1024, 1024
      %30 = vsyncadd [#allocation9], %s29
      %s31 = sshll.u32 [#allocation8], 4
      %s32 = int_to_ptr.vmem [resolvable:$true] %s31
      %37 = dma.hbm_to_vmem [thread:$0]  %s0, 1024, %s32, [#allocation9], 128, 128, 8
    $region5: #{tpu_custom_call.1} parent=1 // pred_fallthru
      _
    // Predicated region
    $region6: #{tpu_custom_call.1} parent=1 // pred_check
      _
    $region7: #{tpu_custom_call.1} parent=1 // pred_check_branch
      %39 = sbr.rel (0) target = $region9
    $region8: #{tpu_custom_call.1} parent=1 // pred_region
      %s41 = ssub.s32 256, 256
      %42 = vsyncadd [#allocation12], %s41
      %s43 = sshll.u32 [#allocation11], 4
      %s44 = int_to_ptr.vmem [resolvable:$true] %s43
      %49 = dma.hbm_to_vmem [thread:$0]  %s1, 256, %s44, [#allocation12], 128, 128, 8
    $region9: #{tpu_custom_call.1} parent=1 // pred_fallthru
      _
    // Predicated region
    $region10: #{tpu_custom_call.1} parent=1 // pred_check
      _
    $region11: #{tpu_custom_call.1} parent=1 // pred_check_branch
      %51 = sbr.rel (0) target = $region13
    $region12: #{tpu_custom_call.1} parent=1 // pred_region
      %s53 = ssub.s32 256, 256
      %54 = vsyncadd [#allocation12], %s53
      %s55 = sshll.u32 [#allocation13], 4
      %s56 = int_to_ptr.vmem [resolvable:$true] %s55
      %61 = dma.hbm_to_vmem [thread:$0]  %s2, 256, %s56, [#allocation12], 128, 128, 8
    $region13: #{tpu_custom_call.1} parent=1 // pred_fallthru
      _
    // Predicated region
    $region14: #{tpu_custom_call.1} parent=1 // pred_check
      _
    $region15: #{tpu_custom_call.1} parent=1 // pred_check_branch
      %63 = sbr.rel (0) target = $region17
    $region16: #{tpu_custom_call.1} parent=1 // pred_region
      %s65 = ssub.s32 8192, 8192
      %66 = vsyncadd [#allocation15], %s65
      %s67 = sshll.u32 [#allocation14], 4
      %s68 = int_to_ptr.vmem [resolvable:$true] %s67
      %73 = dma.hbm_to_vmem [thread:$0]  %s3, 8192, %s68, [#allocation15], 512, 512, 32
    $region17: #{tpu_custom_call.1} parent=1 // pred_fallthru
      _
    // Predicated region
    $region18: #{tpu_custom_call.1} parent=1 // pred_check
      _
    $region19: #{tpu_custom_call.1} parent=1 // pred_check_branch
      %75 = sbr.rel (0) target = $region21
    $region20: #{tpu_custom_call.1} parent=1 // pred_region
      %s77 = ssub.s32 8192, 8192
      %78 = vsyncadd [#allocation15], %s77
      %s79 = sshll.u32 [#allocation16], 4
      %s80 = int_to_ptr.vmem [resolvable:$true] %s79
      %85 = dma.hbm_to_vmem [thread:$0]  %s4, 8192, %s80, [#allocation15], 512, 512, 32
    $region21: #{tpu_custom_call.1} parent=1 // pred_fallthru
      _
    // Predicated region
    $region22: #{tpu_custom_call.1} parent=1 // pred_check
      _
    $region23: #{tpu_custom_call.1} parent=1 // pred_check_branch
      %87 = sbr.rel (0) target = $region25
    $region24: #{tpu_custom_call.1} parent=1 // pred_region
      _
    $region25: #{tpu_custom_call.1} parent=1 // pred_fallthru
      _
    // Predicated region
    $region26: #{tpu_custom_call.1} parent=1 // pred_check
      _
    $region27: #{tpu_custom_call.1} parent=1 // pred_check_branch
      %89 = sbr.rel (0) target = $region29
    $region28: #{tpu_custom_call.1} parent=1 // pred_region
      %s91 = ssub.s32 8192, 8192
      %92 = vsyncadd [#allocation18], %s91
      %s93 = sshll.u32 [#allocation17], 4
      %s94 = int_to_ptr.vmem [resolvable:$true] %s93
      %99 = dma.hbm_to_vmem [thread:$0]  %s6, 8192, %s94, [#allocation18], 512, 512, 32
    $region29: #{tpu_custom_call.1} parent=1 // pred_fallthru
      _
    // Predicated region
    $region30: #{tpu_custom_call.1} parent=1 // pred_check
      _
    $region31: #{tpu_custom_call.1} parent=1 // pred_check_branch
      %101 = sbr.rel (0) target = $region33
    $region32: #{tpu_custom_call.1} parent=1 // pred_region
      %s103 = ssub.s32 8192, 8192
      %104 = vsyncadd [#allocation18], %s103
      %s105 = sshll.u32 [#allocation19], 4
      %s106 = int_to_ptr.vmem [resolvable:$true] %s105
      %111 = dma.hbm_to_vmem [thread:$0]  %s7, 8192, %s106, [#allocation18], 512, 512, 32
    $region33: #{tpu_custom_call.1} parent=1 // pred_fallthru
      _
    // Predicated region
    $region34: #{tpu_custom_call.1} parent=1 // pred_check
      _
    $region35: #{tpu_custom_call.1} parent=1 // pred_check_branch
      %113 = sbr.rel (0) target = $region37
    $region36: #{tpu_custom_call.1} parent=1 // pred_region
      _
    $region37: #{tpu_custom_call.1} parent=1 // pred_fallthru
      _
    // Predicated region
    $region38: #{tpu_custom_call.1} parent=1 // pred_check
      _
    $region39: #{tpu_custom_call.1} parent=1 // pred_check_branch
      %115 = sbr.rel (0) target = $region41
    $region40: #{tpu_custom_call.1} parent=1 // pred_region
      %s117 = ssub.s32 2048, 2048
      %118 = vsyncadd [#allocation21], %s117
      %s119 = sshll.u32 [#allocation20], 4
      %s120 = int_to_ptr.vmem [resolvable:$true] %s119
      %125 = dma.hbm_to_vmem [thread:$0]  %s9, 2048, %s120, [#allocation21], 128, 128, 8
    $region41: #{tpu_custom_call.1} parent=1 // pred_fallthru
      _
    // Predicated region
    $region42: #{tpu_custom_call.1} parent=1 // pred_check
      _
    $region43: #{tpu_custom_call.1} parent=1 // pred_check_branch
      %127 = sbr.rel (0) target = $region45
    $region44: #{tpu_custom_call.1} parent=1 // pred_region
      _
    $region45: #{tpu_custom_call.1} parent=1 // pred_fallthru
      _
    // Predicated region
    $region46: #{tpu_custom_call.1} parent=1 // pred_check
      _
    $region47: #{tpu_custom_call.1} parent=1 // pred_check_branch
      %129 = sbr.rel (0) target = $region49
    $region48: #{tpu_custom_call.1} parent=1 // pred_region
      %130 = dma.done [#allocation9], 1024
    $region49: #{tpu_custom_call.1} parent=1 // pred_fallthru
      _
    // Predicated region
    $region50: #{tpu_custom_call.1} parent=1 // pred_check
      _
    $region51: #{tpu_custom_call.1} parent=1 // pred_check_branch
      %132 = sbr.rel (0) target = $region53
    $region52: #{tpu_custom_call.1} parent=1 // pred_region
      %133 = dma.done [#allocation12], 256
    $region53: #{tpu_custom_call.1} parent=1 // pred_fallthru
      _
    // Predicated region
    $region54: #{tpu_custom_call.1} parent=1 // pred_check
      _
    $region55: #{tpu_custom_call.1} parent=1 // pred_check_branch
      %135 = sbr.rel (0) target = $region57
    $region56: #{tpu_custom_call.1} parent=1 // pred_region
      %136 = dma.done [#allocation12], 256
    $region57: #{tpu_custom_call.1} parent=1 // pred_fallthru
      _
    // Predicated region
    $region58: #{tpu_custom_call.1} parent=1 // pred_check
      _
    $region59: #{tpu_custom_call.1} parent=1 // pred_check_branch
      %138 = sbr.rel (0) target = $region61
    $region60: #{tpu_custom_call.1} parent=1 // pred_region
      %139 = dma.done [#allocation15], 8192
    $region61: #{tpu_custom_call.1} parent=1 // pred_fallthru
      _
    // Predicated region
    $region62: #{tpu_custom_call.1} parent=1 // pred_check
      _
    $region63: #{tpu_custom_call.1} parent=1 // pred_check_branch
      %141 = sbr.rel (0) target = $region65
    $region64: #{tpu_custom_call.1} parent=1 // pred_region
      %142 = dma.done [#allocation15], 8192
    $region65: #{tpu_custom_call.1} parent=1 // pred_fallthru
      _
    // Predicated region
    $region66: #{tpu_custom_call.1} parent=1 // pred_check
      _
    $region67: #{tpu_custom_call.1} parent=1 // pred_check_branch
      %144 = sbr.rel (0) target = $region69
    $region68: #{tpu_custom_call.1} parent=1 // pred_region
      %145 = dma.done [#allocation18], 8192
    $region69: #{tpu_custom_call.1} parent=1 // pred_fallthru
      _
    // Predicated region
    $region70: #{tpu_custom_call.1} parent=1 // pred_check
      _
    $region71: #{tpu_custom_call.1} parent=1 // pred_check_branch
      %147 = sbr.rel (0) target = $region73
    $region72: #{tpu_custom_call.1} parent=1 // pred_region
      %148 = dma.done [#allocation18], 8192
    $region73: #{tpu_custom_call.1} parent=1 // pred_fallthru
      _
    // Predicated region
    $region74: #{tpu_custom_call.1} parent=1 // pred_check
      _
    $region75: #{tpu_custom_call.1} parent=1 // pred_check_branch
      %150 = sbr.rel (0) target = $region77
    $region76: #{tpu_custom_call.1} parent=1 // pred_region
      %151 = dma.done [#allocation21], 2048
    $region77: #{tpu_custom_call.1} parent=1 // pred_fallthru
      _
    %v152 = vld [vmem:[#allocation8] sm:$0xff]
    %v153 = vld [vmem:[#allocation8 + $0x8] sm:$0xff]
    %v154 = vld [vmem:[#allocation8 + $0x10] sm:$0xff]
    %v155 = vld [vmem:[#allocation8 + $0x18] sm:$0xff]
    %v156 = vld [vmem:[#allocation8 + $0x20] sm:$0xff]
    %v157 = vld [vmem:[#allocation8 + $0x28] sm:$0xff]
    %v158 = vld [vmem:[#allocation8 + $0x30] sm:$0xff]
    %v159 = vld [vmem:[#allocation8 + $0x38] sm:$0xff]
    %v160 = vld [vmem:[#allocation14] sm:$0xff]
    %v161 = vld [vmem:[#allocation14 + $0x8] sm:$0xff]
    %v162 = vld [vmem:[#allocation14 + $0x10] sm:$0xff]
    %v163 = vld [vmem:[#allocation14 + $0x18] sm:$0xff]
    %v164 = vld [vmem:[#allocation14 + $0x20] sm:$0xff]
    %v165 = vld [vmem:[#allocation14 + $0x28] sm:$0xff]
    %v166 = vld [vmem:[#allocation14 + $0x30] sm:$0xff]
    %v167 = vld [vmem:[#allocation14 + $0x38] sm:$0xff]
    %v168 = vld [vmem:[#allocation14 + $0x40] sm:$0xff]
    %v169 = vld [vmem:[#allocation14 + $0x48] sm:$0xff]
    %v170 = vld [vmem:[#allocation14 + $0x50] sm:$0xff]
    %v171 = vld [vmem:[#allocation14 + $0x58] sm:$0xff]
    %v172 = vld [vmem:[#allocation14 + $0x60] sm:$0xff]
    %v173 = vld [vmem:[#allocation14 + $0x68] sm:$0xff]
    %v174 = vld [vmem:[#allocation14 + $0x70] sm:$0xff]
    %v175 = vld [vmem:[#allocation14 + $0x78] sm:$0xff]
    %v176 = vld [vmem:[#allocation14 + $0x80] sm:$0xff]
    %v177 = vld [vmem:[#allocation14 + $0x88] sm:$0xff]
    %v178 = vld [vmem:[#allocation14 + $0x90] sm:$0xff]
    %v179 = vld [vmem:[#allocation14 + $0x98] sm:$0xff]
    %v180 = vld [vmem:[#allocation14 + $0xa0] sm:$0xff]
    %v181 = vld [vmem:[#allocation14 + $0xa8] sm:$0xff]
    %v182 = vld [vmem:[#allocation14 + $0xb0] sm:$0xff]
    %v183 = vld [vmem:[#allocation14 + $0xb8] sm:$0xff]
    %v184 = vld [vmem:[#allocation14 + $0xc0] sm:$0xff]
    %v185 = vld [vmem:[#allocation14 + $0xc8] sm:$0xff]
    %v186 = vld [vmem:[#allocation14 + $0xd0] sm:$0xff]
    %v187 = vld [vmem:[#allocation14 + $0xd8] sm:$0xff]
    %v188 = vld [vmem:[#allocation14 + $0xe0] sm:$0xff]
    %v189 = vld [vmem:[#allocation14 + $0xe8] sm:$0xff]
    %v190 = vld [vmem:[#allocation14 + $0xf0] sm:$0xff]
    %v191 = vld [vmem:[#allocation14 + $0xf8] sm:$0xff]
    %v192 = vld [vmem:[#allocation14 + $0x100] sm:$0xff]
    %v193 = vld [vmem:[#allocation14 + $0x108] sm:$0xff]
    %v194 = vld [vmem:[#allocation14 + $0x110] sm:$0xff]
    %v195 = vld [vmem:[#allocation14 + $0x118] sm:$0xff]
    %v196 = vld [vmem:[#allocation14 + $0x120] sm:$0xff]
    %v197 = vld [vmem:[#allocation14 + $0x128] sm:$0xff]
    %v198 = vld [vmem:[#allocation14 + $0x130] sm:$0xff]
    %v199 = vld [vmem:[#allocation14 + $0x138] sm:$0xff]
    %v200 = vld [vmem:[#allocation14 + $0x140] sm:$0xff]
    %v201 = vld [vmem:[#allocation14 + $0x148] sm:$0xff]
    %v202 = vld [vmem:[#allocation14 + $0x150] sm:$0xff]
    %v203 = vld [vmem:[#allocation14 + $0x158] sm:$0xff]
    %v204 = vld [vmem:[#allocation14 + $0x160] sm:$0xff]
    %v205 = vld [vmem:[#allocation14 + $0x168] sm:$0xff]
    %v206 = vld [vmem:[#allocation14 + $0x170] sm:$0xff]
    %v207 = vld [vmem:[#allocation14 + $0x178] sm:$0xff]
    %v208 = vld [vmem:[#allocation14 + $0x180] sm:$0xff]
    %v209 = vld [vmem:[#allocation14 + $0x188] sm:$0xff]
    %v210 = vld [vmem:[#allocation14 + $0x190] sm:$0xff]
    %v211 = vld [vmem:[#allocation14 + $0x198] sm:$0xff]
    %v212 = vld [vmem:[#allocation14 + $0x1a0] sm:$0xff]
    %v213 = vld [vmem:[#allocation14 + $0x1a8] sm:$0xff]
    %v214 = vld [vmem:[#allocation14 + $0x1b0] sm:$0xff]
    %v215 = vld [vmem:[#allocation14 + $0x1b8] sm:$0xff]
    %v216 = vld [vmem:[#allocation14 + $0x1c0] sm:$0xff]
    %v217 = vld [vmem:[#allocation14 + $0x1c8] sm:$0xff]
    %v218 = vld [vmem:[#allocation14 + $0x1d0] sm:$0xff]
    %v219 = vld [vmem:[#allocation14 + $0x1d8] sm:$0xff]
    %v220 = vld [vmem:[#allocation14 + $0x1e0] sm:$0xff]
    %v221 = vld [vmem:[#allocation14 + $0x1e8] sm:$0xff]
    %v222 = vld [vmem:[#allocation14 + $0x1f0] sm:$0xff]
    %v223 = vld [vmem:[#allocation14 + $0x1f8] sm:$0xff]
    %v224 = vld [vmem:[%s5] sm:$0xf]
    %v226 = vlaneseq
    %v227 = vshrl.u32 %v226, 7
    %v228 = vsub.s32 0, %v227
    %v229 = vrot.slane %v224, %v228
    %v230 = vlaneseq
    %v231 = vshrl.u32 %v230, 7
    %v232 = vsub.s32 1, %v231
    %v233 = vrot.slane %v224, %v232
    %v234 = vlaneseq
    %v235 = vshrl.u32 %v234, 7
    %v236 = vsub.s32 2, %v235
    %v237 = vrot.slane %v224, %v236
    %v238 = vlaneseq
    %v239 = vshrl.u32 %v238, 7
    %v240 = vsub.s32 3, %v239
    %v241 = vrot.slane %v224, %v240
    %246 = vmatprep.subr.mxu0 %v161
    %247 = vmatpush1.msra.mxu0 %v160
    %248 = vmatprep.subr.mxu0 %v165
    %249 = vmatpush1.msra.mxu0 %v164
    %250 = vmatprep.subr.mxu0 %v169
    %251 = vmatpush1.msra.mxu0 %v168
    %252 = vmatprep.subr.mxu0 %v173
    %253 = vmatpush1.msra.mxu0 %v172
    %254 = vmatprep.subr.mxu0 %v177
    %255 = vmatpush1.msra.mxu0 %v176
    %256 = vmatprep.subr.mxu0 %v181
    %257 = vmatpush1.msra.mxu0 %v180
    %258 = vmatprep.subr.mxu0 %v185
    %259 = vmatpush1.msra.mxu0 %v184
    %260 = vmatprep.subr.mxu0 %v189
    %261 = vmatpush1.msra.mxu0 %v188
    %262 = vmatprep.subr.mxu0 %v193
    %263 = vmatpush1.msra.mxu0 %v192
    %264 = vmatprep.subr.mxu0 %v197
    %265 = vmatpush1.msra.mxu0 %v196
    %266 = vmatprep.subr.mxu0 %v201
    %267 = vmatpush1.msra.mxu0 %v200
    %268 = vmatprep.subr.mxu0 %v205
    %269 = vmatpush1.msra.mxu0 %v204
    %270 = vmatprep.subr.mxu0 %v209
    %271 = vmatpush1.msra.mxu0 %v208
    %272 = vmatprep.subr.mxu0 %v213
    %273 = vmatpush1.msra.mxu0 %v212
    %274 = vmatprep.subr.mxu0 %v217
    %275 = vmatpush1.msra.mxu0 %v216
    %276 = vmatprep.subr.mxu0 %v221
    %277 = vmatpush1.msra.mxu0 %v220
    %278 = vmatprep.subr.mxu0 0.0
    %279 = vmatpush1.msra.mxu0 0.0
    %280 = vmatprep.subr.mxu0 0.0
    %281 = vmatpush1.msra.mxu0 0.0
    %282 = vmatprep.subr.mxu0 0.0
    %283 = vmatpush1.msra.mxu0 0.0
    %284 = vmatprep.subr.mxu0 0.0
    %285 = vmatpush1.msra.mxu0 0.0
    %286 = vmatprep.subr.mxu0 0.0
    %287 = vmatpush1.msra.mxu0 0.0
    %288 = vmatprep.subr.mxu0 0.0
    %289 = vmatpush1.msra.mxu0 0.0
    %290 = vmatprep.subr.mxu0 0.0
    %291 = vmatpush1.msra.mxu0 0.0
    %292 = vmatprep.subr.mxu0 0.0
    %293 = vmatpush1.msra.mxu0 0.0
    %294 = vmatprep.subr.mxu0 0.0
    %295 = vmatpush1.msra.mxu0 0.0
    %296 = vmatprep.subr.mxu0 0.0
    %297 = vmatpush1.msra.mxu0 0.0
    %298 = vmatprep.subr.mxu0 0.0
    %299 = vmatpush1.msra.mxu0 0.0
    %300 = vmatprep.subr.mxu0 0.0
    %301 = vmatpush1.msra.mxu0 0.0
    %302 = vmatprep.subr.mxu0 0.0
    %303 = vmatpush1.msra.mxu0 0.0
    %304 = vmatprep.subr.mxu0 0.0
    %305 = vmatpush1.msra.mxu0 0.0
    %306 = vmatprep.subr.mxu0 0.0
    %307 = vmatpush1.msra.mxu0 0.0
    %308 = vmatprep.subr.mxu0 0.0
    %309 = vmatpush1.msra.mxu0 0.0
    %310 = vmatprep.mubr.f32.mxu0 0.0
    %311 = vmatmul.mubr.f32.gmra.mrb[0].mxu0 %v152
    %v312 = vpop.f32.mrb[0].mxu0
    %v313 = vadd.f32 %v229, %v312
    %v314 = vpop.f32.mrb[0].mxu0
    %v315 = vadd.f32 %v233, %v314
    %316 = vmatprep.mubr.f32.mxu0 0.0
    %317 = vmatmul.mubr.f32.gmra.mrb[0].mxu0 %v153
    %v318 = vpop.f32.mrb[0].mxu0
    %v319 = vadd.f32 %v229, %v318
    %v320 = vpop.f32.mrb[0].mxu0
    %v321 = vadd.f32 %v233, %v320
    %322 = vmatprep.mubr.f32.mxu0 0.0
    %323 = vmatmul.mubr.f32.gmra.mrb[0].mxu0 %v154
    %v324 = vpop.f32.mrb[0].mxu0
    %v325 = vadd.f32 %v229, %v324
    %v326 = vpop.f32.mrb[0].mxu0
    %v327 = vadd.f32 %v233, %v326
    %328 = vmatprep.mubr.f32.mxu0 0.0
    %329 = vmatmul.mubr.f32.gmra.mrb[0].mxu0 %v155
    %v330 = vpop.f32.mrb[0].mxu0
    %v331 = vadd.f32 %v229, %v330
    %v332 = vpop.f32.mrb[0].mxu0
    %v333 = vadd.f32 %v233, %v332
    %334 = vmatprep.mubr.f32.mxu0 0.0
    %335 = vmatmul.mubr.f32.gmra.mrb[0].mxu0 %v156
    %v336 = vpop.f32.mrb[0].mxu0
    %v337 = vadd.f32 %v229, %v336
    %v338 = vpop.f32.mrb[0].mxu0
    %v339 = vadd.f32 %v233, %v338
    %340 = vmatprep.mubr.f32.mxu0 0.0
    %341 = vmatmul.mubr.f32.gmra.mrb[0].mxu0 %v157
    %v342 = vpop.f32.mrb[0].mxu0
    %v343 = vadd.f32 %v229, %v342
    %v344 = vpop.f32.mrb[0].mxu0
    %v345 = vadd.f32 %v233, %v344
    %346 = vmatprep.mubr.f32.mxu0 0.0
    %347 = vmatmul.mubr.f32.gmra.mrb[0].mxu0 %v158
    %v348 = vpop.f32.mrb[0].mxu0
    %v349 = vadd.f32 %v229, %v348
    %v350 = vpop.f32.mrb[0].mxu0
    %v351 = vadd.f32 %v233, %v350
    %352 = vmatprep.mubr.f32.mxu0 0.0
    %353 = vmatmul.mubr.f32.gmra.mrb[0].mxu0 %v159
    %v354 = vpop.f32.mrb[0].mxu0
    %v355 = vadd.f32 %v229, %v354
    %v356 = vpop.f32.mrb[0].mxu0
    %v357 = vadd.f32 %v233, %v356
    %358 = vdwg.mxu0
    %359 = vmatprep.subr.mxu0 %v163
    %360 = vmatpush1.msra.mxu0 %v162
    %361 = vmatprep.subr.mxu0 %v167
    %362 = vmatpush1.msra.mxu0 %v166
    %363 = vmatprep.subr.mxu0 %v171
    %364 = vmatpush1.msra.mxu0 %v170
    %365 = vmatprep.subr.mxu0 %v175
    %366 = vmatpush1.msra.mxu0 %v174
    %367 = vmatprep.subr.mxu0 %v179
    %368 = vmatpush1.msra.mxu0 %v178
    %369 = vmatprep.subr.mxu0 %v183
    %370 = vmatpush1.msra.mxu0 %v182
    %371 = vmatprep.subr.mxu0 %v187
    %372 = vmatpush1.msra.mxu0 %v186
    %373 = vmatprep.subr.mxu0 %v191
    %374 = vmatpush1.msra.mxu0 %v190
    %375 = vmatprep.subr.mxu0 %v195
    %376 = vmatpush1.msra.mxu0 %v194
    %377 = vmatprep.subr.mxu0 %v199
    %378 = vmatpush1.msra.mxu0 %v198
    %379 = vmatprep.subr.mxu0 %v203
    %380 = vmatpush1.msra.mxu0 %v202
    %381 = vmatprep.subr.mxu0 %v207
    %382 = vmatpush1.msra.mxu0 %v206
    %383 = vmatprep.subr.mxu0 %v211
    %384 = vmatpush1.msra.mxu0 %v210
    %385 = vmatprep.subr.mxu0 %v215
    %386 = vmatpush1.msra.mxu0 %v214
    %387 = vmatprep.subr.mxu0 %v219
    %388 = vmatpush1.msra.mxu0 %v218
    %389 = vmatprep.subr.mxu0 %v223
    %390 = vmatpush1.msra.mxu0 %v222
    %391 = vmatprep.subr.mxu0 0.0
    %392 = vmatpush1.msra.mxu0 0.0
    %393 = vmatprep.subr.mxu0 0.0
    %394 = vmatpush1.msra.mxu0 0.0
    %395 = vmatprep.subr.mxu0 0.0
    %396 = vmatpush1.msra.mxu0 0.0
    %397 = vmatprep.subr.mxu0 0.0
    %398 = vmatpush1.msra.mxu0 0.0
    %399 = vmatprep.subr.mxu0 0.0
    %400 = vmatpush1.msra.mxu0 0.0
    %401 = vmatprep.subr.mxu0 0.0
    %402 = vmatpush1.msra.mxu0 0.0
    %403 = vmatprep.subr.mxu0 0.0
    %404 = vmatpush1.msra.mxu0 0.0
    %405 = vmatprep.subr.mxu0 0.0
    %406 = vmatpush1.msra.mxu0 0.0
    %407 = vmatprep.subr.mxu0 0.0
    %408 = vmatpush1.msra.mxu0 0.0
    %409 = vmatprep.subr.mxu0 0.0
    %410 = vmatpush1.msra.mxu0 0.0
    %411 = vmatprep.subr.mxu0 0.0
    %412 = vmatpush1.msra.mxu0 0.0
    %413 = vmatprep.subr.mxu0 0.0
    %414 = vmatpush1.msra.mxu0 0.0
    %415 = vmatprep.subr.mxu0 0.0
    %416 = vmatpush1.msra.mxu0 0.0
    %417 = vmatprep.subr.mxu0 0.0
    %418 = vmatpush1.msra.mxu0 0.0
    %419 = vmatprep.subr.mxu0 0.0
    %420 = vmatpush1.msra.mxu0 0.0
    %421 = vmatprep.subr.mxu0 0.0
    %422 = vmatpush1.msra.mxu0 0.0
    %423 = vmatprep.mubr.f32.mxu0 0.0
    %424 = vmatmul.mubr.f32.gmra.mrb[0].mxu0 %v152
    %v425 = vpop.f32.mrb[0].mxu0
    %v426 = vadd.f32 %v237, %v425
    %v427 = vpop.f32.mrb[0].mxu0
    %v428 = vadd.f32 %v241, %v427
    %429 = vmatprep.mubr.f32.mxu0 0.0
    %430 = vmatmul.mubr.f32.gmra.mrb[0].mxu0 %v153
    %v431 = vpop.f32.mrb[0].mxu0
    %v432 = vadd.f32 %v237, %v431
    %v433 = vpop.f32.mrb[0].mxu0
    %v434 = vadd.f32 %v241, %v433
    %435 = vmatprep.mubr.f32.mxu0 0.0
    %436 = vmatmul.mubr.f32.gmra.mrb[0].mxu0 %v154
    %v437 = vpop.f32.mrb[0].mxu0
    %v438 = vadd.f32 %v237, %v437
    %v439 = vpop.f32.mrb[0].mxu0
    %v440 = vadd.f32 %v241, %v439
    %441 = vmatprep.mubr.f32.mxu0 0.0
    %442 = vmatmul.mubr.f32.gmra.mrb[0].mxu0 %v155
    %v443 = vpop.f32.mrb[0].mxu0
    %v444 = vadd.f32 %v237, %v443
    %v445 = vpop.f32.mrb[0].mxu0
    %v446 = vadd.f32 %v241, %v445
    %447 = vmatprep.mubr.f32.mxu0 0.0
    %448 = vmatmul.mubr.f32.gmra.mrb[0].mxu0 %v156
    %v449 = vpop.f32.mrb[0].mxu0
    %v450 = vadd.f32 %v237, %v449
    %v451 = vpop.f32.mrb[0].mxu0
    %v452 = vadd.f32 %v241, %v451
    %453 = vmatprep.mubr.f32.mxu0 0.0
    %454 = vmatmul.mubr.f32.gmra.mrb[0].mxu0 %v157
    %v455 = vpop.f32.mrb[0].mxu0
    %v456 = vadd.f32 %v237, %v455
    %v457 = vpop.f32.mrb[0].mxu0
    %v458 = vadd.f32 %v241, %v457
    %459 = vmatprep.mubr.f32.mxu0 0.0
    %460 = vmatmul.mubr.f32.gmra.mrb[0].mxu0 %v158
    %v461 = vpop.f32.mrb[0].mxu0
    %v462 = vadd.f32 %v237, %v461
    %v463 = vpop.f32.mrb[0].mxu0
    %v464 = vadd.f32 %v241, %v463
    %465 = vmatprep.mubr.f32.mxu0 0.0
    %466 = vmatmul.mubr.f32.gmra.mrb[0].mxu0 %v159
    %v467 = vpop.f32.mrb[0].mxu0
    %v468 = vadd.f32 %v237, %v467
    %v469 = vpop.f32.mrb[0].mxu0
    %v470 = vadd.f32 %v241, %v469
    %471 = vdwg.mxu0
    %472 = vst [vmem:[#allocation2] sm:$0xff] %v313
    %473 = vst [vmem:[#allocation2 + $0x8] sm:$0xff] %v315
    %474 = vst [vmem:[#allocation2 + $0x10] sm:$0xff] %v426
    %475 = vst [vmem:[#allocation2 + $0x18] sm:$0xff] %v428
    %476 = vst [vmem:[#allocation2 + $0x20] sm:$0xff] %v319
    %477 = vst [vmem:[#allocation2 + $0x28] sm:$0xff] %v321
    %478 = vst [vmem:[#allocation2 + $0x30] sm:$0xff] %v432
    %479 = vst [vmem:[#allocation2 + $0x38] sm:$0xff] %v434
    %480 = vst [vmem:[#allocation2 + $0x40] sm:$0xff] %v325
    %481 = vst [vmem:[#allocation2 + $0x48] sm:$0xff] %v327
    %482 = vst [vmem:[#allocation2 + $0x50] sm:$0xff] %v438
    %483 = vst [vmem:[#allocation2 + $0x58] sm:$0xff] %v440
    %484 = vst [vmem:[#allocation2 + $0x60] sm:$0xff] %v331
    %485 = vst [vmem:[#allocation2 + $0x68] sm:$0xff] %v333
    %486 = vst [vmem:[#allocation2 + $0x70] sm:$0xff] %v444
    %487 = vst [vmem:[#allocation2 + $0x78] sm:$0xff] %v446
    %488 = vst [vmem:[#allocation2 + $0x80] sm:$0xff] %v337
    %489 = vst [vmem:[#allocation2 + $0x88] sm:$0xff] %v339
    %490 = vst [vmem:[#allocation2 + $0x90] sm:$0xff] %v450
    %491 = vst [vmem:[#allocation2 + $0x98] sm:$0xff] %v452
    %492 = vst [vmem:[#allocation2 + $0xa0] sm:$0xff] %v343
    %493 = vst [vmem:[#allocation2 + $0xa8] sm:$0xff] %v345
    %494 = vst [vmem:[#allocation2 + $0xb0] sm:$0xff] %v456
    %495 = vst [vmem:[#allocation2 + $0xb8] sm:$0xff] %v458
    %496 = vst [vmem:[#allocation2 + $0xc0] sm:$0xff] %v349
    %497 = vst [vmem:[#allocation2 + $0xc8] sm:$0xff] %v351
    %498 = vst [vmem:[#allocation2 + $0xd0] sm:$0xff] %v462
    %499 = vst [vmem:[#allocation2 + $0xd8] sm:$0xff] %v464
    %500 = vst [vmem:[#allocation2 + $0xe0] sm:$0xff] %v355
    %501 = vst [vmem:[#allocation2 + $0xe8] sm:$0xff] %v357
    %502 = vst [vmem:[#allocation2 + $0xf0] sm:$0xff] %v468
    %503 = vst [vmem:[#allocation2 + $0xf8] sm:$0xff] %v470
    %v504 = vld [vmem:[#allocation11] sm:$0xff]
    %505 = vst [vmem:[#allocation6] sm:$0xff] %v504
    %v506 = vld [vmem:[#allocation13] sm:$0xff]
    %507 = vst [vmem:[#allocation7] sm:$0xff] %v506
    %s508 = smul.u32 0, 4
    %s509 = smul.addr %s508, 8
    %s510 = scalar_lea.vmem [#allocation2], %s509
    %v511 = vld [vmem:[%s510] sm:$0xff]
    %v512 = vld [vmem:[%s510 + $0x8] sm:$0xff]
    %v513 = vld [vmem:[%s510 + $0x10] sm:$0xff]
    %v514 = vld [vmem:[%s510 + $0x18] sm:$0xff]
    %v515 = vld [vmem:[#allocation6] sm:$0xff]
    %v516 = vld [vmem:[#allocation16] sm:$0xff]
    %v517 = vld [vmem:[#allocation16 + $0x8] sm:$0xff]
    %v518 = vld [vmem:[#allocation16 + $0x10] sm:$0xff]
    %v519 = vld [vmem:[#allocation16 + $0x18] sm:$0xff]
    %v520 = vld [vmem:[#allocation16 + $0x20] sm:$0xff]
    %v521 = vld [vmem:[#allocation16 + $0x28] sm:$0xff]
    %v522 = vld [vmem:[#allocation16 + $0x30] sm:$0xff]
    %v523 = vld [vmem:[#allocation16 + $0x38] sm:$0xff]
    %v524 = vld [vmem:[#allocation16 + $0x40] sm:$0xff]
    %v525 = vld [vmem:[#allocation16 + $0x48] sm:$0xff]
    %v526 = vld [vmem:[#allocation16 + $0x50] sm:$0xff]
    %v527 = vld [vmem:[#allocation16 + $0x58] sm:$0xff]
    %v528 = vld [vmem:[#allocation16 + $0x60] sm:$0xff]
    %v529 = vld [vmem:[#allocation16 + $0x68] sm:$0xff]
    %v530 = vld [vmem:[#allocation16 + $0x70] sm:$0xff]
    %v531 = vld [vmem:[#allocation16 + $0x78] sm:$0xff]
    %v532 = vld [vmem:[#allocation16 + $0x80] sm:$0xff]
    %v533 = vld [vmem:[#allocation16 + $0x88] sm:$0xff]
    %v534 = vld [vmem:[#allocation16 + $0x90] sm:$0xff]
    %v535 = vld [vmem:[#allocation16 + $0x98] sm:$0xff]
    %v536 = vld [vmem:[#allocation16 + $0xa0] sm:$0xff]
    %v537 = vld [vmem:[#allocation16 + $0xa8] sm:$0xff]
    %v538 = vld [vmem:[#allocation16 + $0xb0] sm:$0xff]
    %v539 = vld [vmem:[#allocation16 + $0xb8] sm:$0xff]
    %v540 = vld [vmem:[#allocation16 + $0xc0] sm:$0xff]
    %v541 = vld [vmem:[#allocation16 + $0xc8] sm:$0xff]
    %v542 = vld [vmem:[#allocation16 + $0xd0] sm:$0xff]
    %v543 = vld [vmem:[#allocation16 + $0xd8] sm:$0xff]
    %v544 = vld [vmem:[#allocation16 + $0xe0] sm:$0xff]
    %v545 = vld [vmem:[#allocation16 + $0xe8] sm:$0xff]
    %v546 = vld [vmem:[#allocation16 + $0xf0] sm:$0xff]
    %v547 = vld [vmem:[#allocation16 + $0xf8] sm:$0xff]
    %v548 = vld [vmem:[#allocation16 + $0x100] sm:$0xff]
    %v549 = vld [vmem:[#allocation16 + $0x108] sm:$0xff]
    %v550 = vld [vmem:[#allocation16 + $0x110] sm:$0xff]
    %v551 = vld [vmem:[#allocation16 + $0x118] sm:$0xff]
    %v552 = vld [vmem:[#allocation16 + $0x120] sm:$0xff]
    %v553 = vld [vmem:[#allocation16 + $0x128] sm:$0xff]
    %v554 = vld [vmem:[#allocation16 + $0x130] sm:$0xff]
    %v555 = vld [vmem:[#allocation16 + $0x138] sm:$0xff]
    %v556 = vld [vmem:[#allocation16 + $0x140] sm:$0xff]
    %v557 = vld [vmem:[#allocation16 + $0x148] sm:$0xff]
    %v558 = vld [vmem:[#allocation16 + $0x150] sm:$0xff]
    %v559 = vld [vmem:[#allocation16 + $0x158] sm:$0xff]
    %v560 = vld [vmem:[#allocation16 + $0x160] sm:$0xff]
    %v561 = vld [vmem:[#allocation16 + $0x168] sm:$0xff]
    %v562 = vld [vmem:[#allocation16 + $0x170] sm:$0xff]
    %v563 = vld [vmem:[#allocation16 + $0x178] sm:$0xff]
    %v564 = vld [vmem:[#allocation16 + $0x180] sm:$0xff]
    %v565 = vld [vmem:[#allocation16 + $0x188] sm:$0xff]
    %v566 = vld [vmem:[#allocation16 + $0x190] sm:$0xff]
    %v567 = vld [vmem:[#allocation16 + $0x198] sm:$0xff]
    %v568 = vld [vmem:[#allocation16 + $0x1a0] sm:$0xff]
    %v569 = vld [vmem:[#allocation16 + $0x1a8] sm:$0xff]
    %v570 = vld [vmem:[#allocation16 + $0x1b0] sm:$0xff]
    %v571 = vld [vmem:[#allocation16 + $0x1b8] sm:$0xff]
    %v572 = vld [vmem:[#allocation16 + $0x1c0] sm:$0xff]
    %v573 = vld [vmem:[#allocation16 + $0x1c8] sm:$0xff]
    %v574 = vld [vmem:[#allocation16 + $0x1d0] sm:$0xff]
    %v575 = vld [vmem:[#allocation16 + $0x1d8] sm:$0xff]
    %v576 = vld [vmem:[#allocation16 + $0x1e0] sm:$0xff]
    %v577 = vld [vmem:[#allocation16 + $0x1e8] sm:$0xff]
    %v578 = vld [vmem:[#allocation16 + $0x1f0] sm:$0xff]
    %v579 = vld [vmem:[#allocation16 + $0x1f8] sm:$0xff]
    %580 = vmatprep.subr.mxu0 %v517
    %581 = vmatpush1.msra.mxu0 %v516
    %582 = vmatprep.subr.mxu0 %v521
    %583 = vmatpush1.msra.mxu0 %v520
    %584 = vmatprep.subr.mxu0 %v525
    %585 = vmatpush1.msra.mxu0 %v524
    %586 = vmatprep.subr.mxu0 %v529
    %587 = vmatpush1.msra.mxu0 %v528
    %588 = vmatprep.subr.mxu0 %v533
    %589 = vmatpush1.msra.mxu0 %v532
    %590 = vmatprep.subr.mxu0 %v537
    %591 = vmatpush1.msra.mxu0 %v536
    %592 = vmatprep.subr.mxu0 %v541
    %593 = vmatpush1.msra.mxu0 %v540
    %594 = vmatprep.subr.mxu0 %v545
    %595 = vmatpush1.msra.mxu0 %v544
    %596 = vmatprep.subr.mxu0 %v549
    %597 = vmatpush1.msra.mxu0 %v548
    %598 = vmatprep.subr.mxu0 %v553
    %599 = vmatpush1.msra.mxu0 %v552
    %600 = vmatprep.subr.mxu0 %v557
    %601 = vmatpush1.msra.mxu0 %v556
    %602 = vmatprep.subr.mxu0 %v561
    %603 = vmatpush1.msra.mxu0 %v560
    %604 = vmatprep.subr.mxu0 %v565
    %605 = vmatpush1.msra.mxu0 %v564
    %606 = vmatprep.subr.mxu0 %v569
    %607 = vmatpush1.msra.mxu0 %v568
    %608 = vmatprep.subr.mxu0 %v573
    %609 = vmatpush1.msra.mxu0 %v572
    %610 = vmatprep.subr.mxu0 %v577
    %611 = vmatpush1.msra.mxu0 %v576
    %612 = vmatprep.subr.mxu0 0.0
    %613 = vmatpush1.msra.mxu0 0.0
    %614 = vmatprep.subr.mxu0 0.0
    %615 = vmatpush1.msra.mxu0 0.0
    %616 = vmatprep.subr.mxu0 0.0
    %617 = vmatpush1.msra.mxu0 0.0
    %618 = vmatprep.subr.mxu0 0.0
    %619 = vmatpush1.msra.mxu0 0.0
    %620 = vmatprep.subr.mxu0 0.0
    %621 = vmatpush1.msra.mxu0 0.0
    %622 = vmatprep.subr.mxu0 0.0
    %623 = vmatpush1.msra.mxu0 0.0
    %624 = vmatprep.subr.mxu0 0.0
    %625 = vmatpush1.msra.mxu0 0.0
    %626 = vmatprep.subr.mxu0 0.0
    %627 = vmatpush1.msra.mxu0 0.0
    %628 = vmatprep.subr.mxu0 0.0
    %629 = vmatpush1.msra.mxu0 0.0
    %630 = vmatprep.subr.mxu0 0.0
    %631 = vmatpush1.msra.mxu0 0.0
    %632 = vmatprep.subr.mxu0 0.0
    %633 = vmatpush1.msra.mxu0 0.0
    %634 = vmatprep.subr.mxu0 0.0
    %635 = vmatpush1.msra.mxu0 0.0
    %636 = vmatprep.subr.mxu0 0.0
    %637 = vmatpush1.msra.mxu0 0.0
    %638 = vmatprep.subr.mxu0 0.0
    %639 = vmatpush1.msra.mxu0 0.0
    %640 = vmatprep.subr.mxu0 0.0
    %641 = vmatpush1.msra.mxu0 0.0
    %642 = vmatprep.subr.mxu0 0.0
    %643 = vmatpush1.msra.mxu0 0.0
    %644 = vmatprep.mubr.f32.mxu0 0.0
    %645 = vmatmul.mubr.f32.gmra.mrb[0].mxu0 %v515
    %v646 = vpop.f32.mrb[0].mxu0
    %v647 = vadd.f32 0.0, %v646
    %v648 = vpop.f32.mrb[0].mxu0
    %v649 = vadd.f32 0.0, %v648
    %650 = vdwg.mxu0
    %651 = vmatprep.subr.mxu0 %v519
    %652 = vmatpush1.msra.mxu0 %v518
    %653 = vmatprep.subr.mxu0 %v523
    %654 = vmatpush1.msra.mxu0 %v522
    %655 = vmatprep.subr.mxu0 %v527
    %656 = vmatpush1.msra.mxu0 %v526
    %657 = vmatprep.subr.mxu0 %v531
    %658 = vmatpush1.msra.mxu0 %v530
    %659 = vmatprep.subr.mxu0 %v535
    %660 = vmatpush1.msra.mxu0 %v534
    %661 = vmatprep.subr.mxu0 %v539
    %662 = vmatpush1.msra.mxu0 %v538
    %663 = vmatprep.subr.mxu0 %v543
    %664 = vmatpush1.msra.mxu0 %v542
    %665 = vmatprep.subr.mxu0 %v547
    %666 = vmatpush1.msra.mxu0 %v546
    %667 = vmatprep.subr.mxu0 %v551
    %668 = vmatpush1.msra.mxu0 %v550
    %669 = vmatprep.subr.mxu0 %v555
    %670 = vmatpush1.msra.mxu0 %v554
    %671 = vmatprep.subr.mxu0 %v559
    %672 = vmatpush1.msra.mxu0 %v558
    %673 = vmatprep.subr.mxu0 %v563
    %674 = vmatpush1.msra.mxu0 %v562
    %675 = vmatprep.subr.mxu0 %v567
    %676 = vmatpush1.msra.mxu0 %v566
    %677 = vmatprep.subr.mxu0 %v571
    %678 = vmatpush1.msra.mxu0 %v570
    %679 = vmatprep.subr.mxu0 %v575
    %680 = vmatpush1.msra.mxu0 %v574
    %681 = vmatprep.subr.mxu0 %v579
    %682 = vmatpush1.msra.mxu0 %v578
    %683 = vmatprep.subr.mxu0 0.0
    %684 = vmatpush1.msra.mxu0 0.0
    %685 = vmatprep.subr.mxu0 0.0
    %686 = vmatpush1.msra.mxu0 0.0
    %687 = vmatprep.subr.mxu0 0.0
    %688 = vmatpush1.msra.mxu0 0.0
    %689 = vmatprep.subr.mxu0 0.0
    %690 = vmatpush1.msra.mxu0 0.0
    %691 = vmatprep.subr.mxu0 0.0
    %692 = vmatpush1.msra.mxu0 0.0
    %693 = vmatprep.subr.mxu0 0.0
    %694 = vmatpush1.msra.mxu0 0.0
    %695 = vmatprep.subr.mxu0 0.0
    %696 = vmatpush1.msra.mxu0 0.0
    %697 = vmatprep.subr.mxu0 0.0
    %698 = vmatpush1.msra.mxu0 0.0
    %699 = vmatprep.subr.mxu0 0.0
    %700 = vmatpush1.msra.mxu0 0.0
    %701 = vmatprep.subr.mxu0 0.0
    %702 = vmatpush1.msra.mxu0 0.0
    %703 = vmatprep.subr.mxu0 0.0
    %704 = vmatpush1.msra.mxu0 0.0
    %705 = vmatprep.subr.mxu0 0.0
    %706 = vmatpush1.msra.mxu0 0.0
    %707 = vmatprep.subr.mxu0 0.0
    %708 = vmatpush1.msra.mxu0 0.0
    %709 = vmatprep.subr.mxu0 0.0
    %710 = vmatpush1.msra.mxu0 0.0
    %711 = vmatprep.subr.mxu0 0.0
    %712 = vmatpush1.msra.mxu0 0.0
    %713 = vmatprep.subr.mxu0 0.0
    %714 = vmatpush1.msra.mxu0 0.0
    %715 = vmatprep.mubr.f32.mxu0 0.0
    %716 = vmatmul.mubr.f32.gmra.mrb[0].mxu0 %v515
    %v717 = vpop.f32.mrb[0].mxu0
    %v718 = vadd.f32 0.0, %v717
    %v719 = vpop.f32.mrb[0].mxu0
    %v720 = vadd.f32 0.0, %v719
    %721 = vdwg.mxu0
    %v722 = vadd.f32 %v511, %v647
    %v723 = vadd.f32 %v512, %v649
    %v724 = vadd.f32 %v513, %v718
    %v725 = vadd.f32 %v514, %v720
    %v726 = vld [vmem:[#allocation7] sm:$0xff]
    %v727 = vxor.u32 %v722, 2147483648
    %v728 = vmul.f32 %v727, 1.442695
    %v729 = vpow.pop %v728
    %v730 = vadd.f32 %v729, 1.0
    %v731 = vrcp.pop %v730
    %v732 = vmul.f32 1.0, %v731
    %v733 = vxor.u32 %v723, 2147483648
    %v734 = vmul.f32 %v733, 1.442695
    %v735 = vpow.pop %v734
    %v736 = vadd.f32 %v735, 1.0
    %v737 = vrcp.pop %v736
    %v738 = vmul.f32 1.0, %v737
    %v739 = vtanh.pop %v724
    %v740 = vxor.u32 %v725, 2147483648
    %v741 = vmul.f32 %v740, 1.442695
    %v742 = vpow.pop %v741
    %v743 = vadd.f32 %v742, 1.0
    %v744 = vrcp.pop %v743
    %v745 = vmul.f32 1.0, %v744
    %v746 = vmul.f32 %v738, %v726
    %v747 = vmul.f32 %v732, %v739
    %v748 = vadd.f32 %v746, %v747
    %v749 = vtanh.pop %v748
    %v750 = vmul.f32 %v745, %v749
    %751 = vst [vmem:[#allocation6] sm:$0xff] %v750
    %752 = vst [vmem:[#allocation7] sm:$0xff] %v748
    %753 = vst [vmem:[#allocation3] sm:$0xff] %v750
    %s754 = smul.u32 1, 4
    %s755 = smul.addr %s754, 8
    %s756 = scalar_lea.vmem [#allocation2], %s755
    %v757 = vld [vmem:[%s756] sm:$0xff]
    %v758 = vld [vmem:[%s756 + $0x8] sm:$0xff]
    %v759 = vld [vmem:[%s756 + $0x10] sm:$0xff]
    %v760 = vld [vmem:[%s756 + $0x18] sm:$0xff]
    %v761 = vld [vmem:[#allocation6] sm:$0xff]
    %v762 = vld [vmem:[#allocation16] sm:$0xff]
    %v763 = vld [vmem:[#allocation16 + $0x8] sm:$0xff]
    %v764 = vld [vmem:[#allocation16 + $0x10] sm:$0xff]
    %v765 = vld [vmem:[#allocation16 + $0x18] sm:$0xff]
    %v766 = vld [vmem:[#allocation16 + $0x20] sm:$0xff]
    %v767 = vld [vmem:[#allocation16 + $0x28] sm:$0xff]
    %v768 = vld [vmem:[#allocation16 + $0x30] sm:$0xff]
    %v769 = vld [vmem:[#allocation16 + $0x38] sm:$0xff]
    %v770 = vld [vmem:[#allocation16 + $0x40] sm:$0xff]
    %v771 = vld [vmem:[#allocation16 + $0x48] sm:$0xff]
    %v772 = vld [vmem:[#allocation16 + $0x50] sm:$0xff]
    %v773 = vld [vmem:[#allocation16 + $0x58] sm:$0xff]
    %v774 = vld [vmem:[#allocation16 + $0x60] sm:$0xff]
    %v775 = vld [vmem:[#allocation16 + $0x68] sm:$0xff]
    %v776 = vld [vmem:[#allocation16 + $0x70] sm:$0xff]
    %v777 = vld [vmem:[#allocation16 + $0x78] sm:$0xff]
    %v778 = vld [vmem:[#allocation16 + $0x80] sm:$0xff]
    %v779 = vld [vmem:[#allocation16 + $0x88] sm:$0xff]
    %v780 = vld [vmem:[#allocation16 + $0x90] sm:$0xff]
    %v781 = vld [vmem:[#allocation16 + $0x98] sm:$0xff]
    %v782 = vld [vmem:[#allocation16 + $0xa0] sm:$0xff]
    %v783 = vld [vmem:[#allocation16 + $0xa8] sm:$0xff]
    %v784 = vld [vmem:[#allocation16 + $0xb0] sm:$0xff]
    %v785 = vld [vmem:[#allocation16 + $0xb8] sm:$0xff]
    %v786 = vld [vmem:[#allocation16 + $0xc0] sm:$0xff]
    %v787 = vld [vmem:[#allocation16 + $0xc8] sm:$0xff]
    %v788 = vld [vmem:[#allocation16 + $0xd0] sm:$0xff]
    %v789 = vld [vmem:[#allocation16 + $0xd8] sm:$0xff]
    %v790 = vld [vmem:[#allocation16 + $0xe0] sm:$0xff]
    %v791 = vld [vmem:[#allocation16 + $0xe8] sm:$0xff]
    %v792 = vld [vmem:[#allocation16 + $0xf0] sm:$0xff]
    %v793 = vld [vmem:[#allocation16 + $0xf8] sm:$0xff]
    %v794 = vld [vmem:[#allocation16 + $0x100] sm:$0xff]
    %v795 = vld [vmem:[#allocation16 + $0x108] sm:$0xff]
    %v796 = vld [vmem:[#allocation16 + $0x110] sm:$0xff]
    %v797 = vld [vmem:[#allocation16 + $0x118] sm:$0xff]
    %v798 = vld [vmem:[#allocation16 + $0x120] sm:$0xff]
    %v799 = vld [vmem:[#allocation16 + $0x128] sm:$0xff]
    %v800 = vld [vmem:[#allocation16 + $0x130] sm:$0xff]
    %v801 = vld [vmem:[#allocation16 + $0x138] sm:$0xff]
    %v802 = vld [vmem:[#allocation16 + $0x140] sm:$0xff]
    %v803 = vld [vmem:[#allocation16 + $0x148] sm:$0xff]
    %v804 = vld [vmem:[#allocation16 + $0x150] sm:$0xff]
    %v805 = vld [vmem:[#allocation16 + $0x158] sm:$0xff]
    %v806 = vld [vmem:[#allocation16 + $0x160] sm:$0xff]
    %v807 = vld [vmem:[#allocation16 + $0x168] sm:$0xff]
    %v808 = vld [vmem:[#allocation16 + $0x170] sm:$0xff]
    %v809 = vld [vmem:[#allocation16 + $0x178] sm:$0xff]
    %v810 = vld [vmem:[#allocation16 + $0x180] sm:$0xff]
    %v811 = vld [vmem:[#allocation16 + $0x188] sm:$0xff]
    %v812 = vld [vmem:[#allocation16 + $0x190] sm:$0xff]
    %v813 = vld [vmem:[#allocation16 + $0x198] sm:$0xff]
    %v814 = vld [vmem:[#allocation16 + $0x1a0] sm:$0xff]
    %v815 = vld [vmem:[#allocation16 + $0x1a8] sm:$0xff]
    %v816 = vld [vmem:[#allocation16 + $0x1b0] sm:$0xff]
    %v817 = vld [vmem:[#allocation16 + $0x1b8] sm:$0xff]
    %v818 = vld [vmem:[#allocation16 + $0x1c0] sm:$0xff]
    %v819 = vld [vmem:[#allocation16 + $0x1c8] sm:$0xff]
    %v820 = vld [vmem:[#allocation16 + $0x1d0] sm:$0xff]
    %v821 = vld [vmem:[#allocation16 + $0x1d8] sm:$0xff]
    %v822 = vld [vmem:[#allocation16 + $0x1e0] sm:$0xff]
    %v823 = vld [vmem:[#allocation16 + $0x1e8] sm:$0xff]
    %v824 = vld [vmem:[#allocation16 + $0x1f0] sm:$0xff]
    %v825 = vld [vmem:[#allocation16 + $0x1f8] sm:$0xff]
    %826 = vmatprep.subr.mxu0 %v763
    %827 = vmatpush1.msra.mxu0 %v762
    %828 = vmatprep.subr.mxu0 %v767
    %829 = vmatpush1.msra.mxu0 %v766
    %830 = vmatprep.subr.mxu0 %v771
    %831 = vmatpush1.msra.mxu0 %v770
    %832 = vmatprep.subr.mxu0 %v775
    %833 = vmatpush1.msra.mxu0 %v774
    %834 = vmatprep.subr.mxu0 %v779
    %835 = vmatpush1.msra.mxu0 %v778
    %836 = vmatprep.subr.mxu0 %v783
    %837 = vmatpush1.msra.mxu0 %v782
    %838 = vmatprep.subr.mxu0 %v787
    %839 = vmatpush1.msra.mxu0 %v786
    %840 = vmatprep.subr.mxu0 %v791
    %841 = vmatpush1.msra.mxu0 %v790
    %842 = vmatprep.subr.mxu0 %v795
    %843 = vmatpush1.msra.mxu0 %v794
    %844 = vmatprep.subr.mxu0 %v799
    %845 = vmatpush1.msra.mxu0 %v798
    %846 = vmatprep.subr.mxu0 %v803
    %847 = vmatpush1.msra.mxu0 %v802
    %848 = vmatprep.subr.mxu0 %v807
    %849 = vmatpush1.msra.mxu0 %v806
    %850 = vmatprep.subr.mxu0 %v811
    %851 = vmatpush1.msra.mxu0 %v810
    %852 = vmatprep.subr.mxu0 %v815
    %853 = vmatpush1.msra.mxu0 %v814
    %854 = vmatprep.subr.mxu0 %v819
    %855 = vmatpush1.msra.mxu0 %v818
    %856 = vmatprep.subr.mxu0 %v823
    %857 = vmatpush1.msra.mxu0 %v822
    %858 = vmatprep.subr.mxu0 0.0
    %859 = vmatpush1.msra.mxu0 0.0
    %860 = vmatprep.subr.mxu0 0.0
    %861 = vmatpush1.msra.mxu0 0.0
    %862 = vmatprep.subr.mxu0 0.0
    %863 = vmatpush1.msra.mxu0 0.0
    %864 = vmatprep.subr.mxu0 0.0
    %865 = vmatpush1.msra.mxu0 0.0
    %866 = vmatprep.subr.mxu0 0.0
    %867 = vmatpush1.msra.mxu0 0.0
    %868 = vmatprep.subr.mxu0 0.0
    %869 = vmatpush1.msra.mxu0 0.0
    %870 = vmatprep.subr.mxu0 0.0
    %871 = vmatpush1.msra.mxu0 0.0
    %872 = vmatprep.subr.mxu0 0.0
    %873 = vmatpush1.msra.mxu0 0.0
    %874 = vmatprep.subr.mxu0 0.0
    %875 = vmatpush1.msra.mxu0 0.0
    %876 = vmatprep.subr.mxu0 0.0
    %877 = vmatpush1.msra.mxu0 0.0
    %878 = vmatprep.subr.mxu0 0.0
    %879 = vmatpush1.msra.mxu0 0.0
    %880 = vmatprep.subr.mxu0 0.0
    %881 = vmatpush1.msra.mxu0 0.0
    %882 = vmatprep.subr.mxu0 0.0
    %883 = vmatpush1.msra.mxu0 0.0
    %884 = vmatprep.subr.mxu0 0.0
    %885 = vmatpush1.msra.mxu0 0.0
    %886 = vmatprep.subr.mxu0 0.0
    %887 = vmatpush1.msra.mxu0 0.0
    %888 = vmatprep.subr.mxu0 0.0
    %889 = vmatpush1.msra.mxu0 0.0
    %890 = vmatprep.mubr.f32.mxu0 0.0
    %891 = vmatmul.mubr.f32.gmra.mrb[0].mxu0 %v761
    %v892 = vpop.f32.mrb[0].mxu0
    %v893 = vadd.f32 0.0, %v892
    %v894 = vpop.f32.mrb[0].mxu0
    %v895 = vadd.f32 0.0, %v894
    %896 = vdwg.mxu0
    %897 = vmatprep.subr.mxu0 %v765
    %898 = vmatpush1.msra.mxu0 %v764
    %899 = vmatprep.subr.mxu0 %v769
    %900 = vmatpush1.msra.mxu0 %v768
    %901 = vmatprep.subr.mxu0 %v773
    %902 = vmatpush1.msra.mxu0 %v772
    %903 = vmatprep.subr.mxu0 %v777
    %904 = vmatpush1.msra.mxu0 %v776
    %905 = vmatprep.subr.mxu0 %v781
    %906 = vmatpush1.msra.mxu0 %v780
    %907 = vmatprep.subr.mxu0 %v785
    %908 = vmatpush1.msra.mxu0 %v784
    %909 = vmatprep.subr.mxu0 %v789
    %910 = vmatpush1.msra.mxu0 %v788
    %911 = vmatprep.subr.mxu0 %v793
    %912 = vmatpush1.msra.mxu0 %v792
    %913 = vmatprep.subr.mxu0 %v797
    %914 = vmatpush1.msra.mxu0 %v796
    %915 = vmatprep.subr.mxu0 %v801
    %916 = vmatpush1.msra.mxu0 %v800
    %917 = vmatprep.subr.mxu0 %v805
    %918 = vmatpush1.msra.mxu0 %v804
    %919 = vmatprep.subr.mxu0 %v809
    %920 = vmatpush1.msra.mxu0 %v808
    %921 = vmatprep.subr.mxu0 %v813
    %922 = vmatpush1.msra.mxu0 %v812
    %923 = vmatprep.subr.mxu0 %v817
    %924 = vmatpush1.msra.mxu0 %v816
    %925 = vmatprep.subr.mxu0 %v821
    %926 = vmatpush1.msra.mxu0 %v820
    %927 = vmatprep.subr.mxu0 %v825
    %928 = vmatpush1.msra.mxu0 %v824
    %929 = vmatprep.subr.mxu0 0.0
    %930 = vmatpush1.msra.mxu0 0.0
    %931 = vmatprep.subr.mxu0 0.0
    %932 = vmatpush1.msra.mxu0 0.0
    %933 = vmatprep.subr.mxu0 0.0
    %934 = vmatpush1.msra.mxu0 0.0
    %935 = vmatprep.subr.mxu0 0.0
    %936 = vmatpush1.msra.mxu0 0.0
    %937 = vmatprep.subr.mxu0 0.0
    %938 = vmatpush1.msra.mxu0 0.0
    %939 = vmatprep.subr.mxu0 0.0
    %940 = vmatpush1.msra.mxu0 0.0
    %941 = vmatprep.subr.mxu0 0.0
    %942 = vmatpush1.msra.mxu0 0.0
    %943 = vmatprep.subr.mxu0 0.0
    %944 = vmatpush1.msra.mxu0 0.0
    %945 = vmatprep.subr.mxu0 0.0
    %946 = vmatpush1.msra.mxu0 0.0
    %947 = vmatprep.subr.mxu0 0.0
    %948 = vmatpush1.msra.mxu0 0.0
    %949 = vmatprep.subr.mxu0 0.0
    %950 = vmatpush1.msra.mxu0 0.0
    %951 = vmatprep.subr.mxu0 0.0
    %952 = vmatpush1.msra.mxu0 0.0
    %953 = vmatprep.subr.mxu0 0.0
    %954 = vmatpush1.msra.mxu0 0.0
    %955 = vmatprep.subr.mxu0 0.0
    %956 = vmatpush1.msra.mxu0 0.0
    %957 = vmatprep.subr.mxu0 0.0
    %958 = vmatpush1.msra.mxu0 0.0
    %959 = vmatprep.subr.mxu0 0.0
    %960 = vmatpush1.msra.mxu0 0.0
    %961 = vmatprep.mubr.f32.mxu0 0.0
    %962 = vmatmul.mubr.f32.gmra.mrb[0].mxu0 %v761
    %v963 = vpop.f32.mrb[0].mxu0
    %v964 = vadd.f32 0.0, %v963
    %v965 = vpop.f32.mrb[0].mxu0
    %v966 = vadd.f32 0.0, %v965
    %967 = vdwg.mxu0
    %v968 = vadd.f32 %v757, %v893
    %v969 = vadd.f32 %v758, %v895
    %v970 = vadd.f32 %v759, %v964
    %v971 = vadd.f32 %v760, %v966
    %v972 = vld [vmem:[#allocation7] sm:$0xff]
    %v973 = vxor.u32 %v968, 2147483648
    %v974 = vmul.f32 %v973, 1.442695
    %v975 = vpow.pop %v974
    %v976 = vadd.f32 %v975, 1.0
    %v977 = vrcp.pop %v976
    %v978 = vmul.f32 1.0, %v977
    %v979 = vxor.u32 %v969, 2147483648
    %v980 = vmul.f32 %v979, 1.442695
    %v981 = vpow.pop %v980
    %v982 = vadd.f32 %v981, 1.0
    %v983 = vrcp.pop %v982
    %v984 = vmul.f32 1.0, %v983
    %v985 = vtanh.pop %v970
    %v986 = vxor.u32 %v971, 2147483648
    %v987 = vmul.f32 %v986, 1.442695
    %v988 = vpow.pop %v987
    %v989 = vadd.f32 %v988, 1.0
    %v990 = vrcp.pop %v989
    %v991 = vmul.f32 1.0, %v990
    %v992 = vmul.f32 %v984, %v972
    %v993 = vmul.f32 %v978, %v985
    %v994 = vadd.f32 %v992, %v993
    %v995 = vtanh.pop %v994
    %v996 = vmul.f32 %v991, %v995
    %997 = vst [vmem:[#allocation6] sm:$0xff] %v996
    %998 = vst [vmem:[#allocation7] sm:$0xff] %v994
    %s999 = scalar_lea.vmem [#allocation3], 8
    %1000 = vst [vmem:[%s999] sm:$0xff] %v996
    %s1001 = smul.u32 2, 4
    %s1002 = smul.addr %s1001, 8
    %s1003 = scalar_lea.vmem [#allocation2], %s1002
    %v1004 = vld [vmem:[%s1003] sm:$0xff]
    %v1005 = vld [vmem:[%s1003 + $0x8] sm:$0xff]
    %v1006 = vld [vmem:[%s1003 + $0x10] sm:$0xff]
    %v1007 = vld [vmem:[%s1003 + $0x18] sm:$0xff]
    %v1008 = vld [vmem:[#allocation6] sm:$0xff]
    %v1009 = vld [vmem:[#allocation16] sm:$0xff]
    %v1010 = vld [vmem:[#allocation16 + $0x8] sm:$0xff]
    %v1011 = vld [vmem:[#allocation16 + $0x10] sm:$0xff]
    %v1012 = vld [vmem:[#allocation16 + $0x18] sm:$0xff]
    %v1013 = vld [vmem:[#allocation16 + $0x20] sm:$0xff]
    %v1014 = vld [vmem:[#allocation16 + $0x28] sm:$0xff]
    %v1015 = vld [vmem:[#allocation16 + $0x30] sm:$0xff]
    %v1016 = vld [vmem:[#allocation16 + $0x38] sm:$0xff]
    %v1017 = vld [vmem:[#allocation16 + $0x40] sm:$0xff]
    %v1018 = vld [vmem:[#allocation16 + $0x48] sm:$0xff]
    %v1019 = vld [vmem:[#allocation16 + $0x50] sm:$0xff]
    %v1020 = vld [vmem:[#allocation16 + $0x58] sm:$0xff]
    %v1021 = vld [vmem:[#allocation16 + $0x60] sm:$0xff]
    %v1022 = vld [vmem:[#allocation16 + $0x68] sm:$0xff]
    %v1023 = vld [vmem:[#allocation16 + $0x70] sm:$0xff]
    %v1024 = vld [vmem:[#allocation16 + $0x78] sm:$0xff]
    %v1025 = vld [vmem:[#allocation16 + $0x80] sm:$0xff]
    %v1026 = vld [vmem:[#allocation16 + $0x88] sm:$0xff]
    %v1027 = vld [vmem:[#allocation16 + $0x90] sm:$0xff]
    %v1028 = vld [vmem:[#allocation16 + $0x98] sm:$0xff]
    %v1029 = vld [vmem:[#allocation16 + $0xa0] sm:$0xff]
    %v1030 = vld [vmem:[#allocation16 + $0xa8] sm:$0xff]
    %v1031 = vld [vmem:[#allocation16 + $0xb0] sm:$0xff]
    %v1032 = vld [vmem:[#allocation16 + $0xb8] sm:$0xff]
    %v1033 = vld [vmem:[#allocation16 + $0xc0] sm:$0xff]
    %v1034 = vld [vmem:[#allocation16 + $0xc8] sm:$0xff]
    %v1035 = vld [vmem:[#allocation16 + $0xd0] sm:$0xff]
    %v1036 = vld [vmem:[#allocation16 + $0xd8] sm:$0xff]
    %v1037 = vld [vmem:[#allocation16 + $0xe0] sm:$0xff]
    %v1038 = vld [vmem:[#allocation16 + $0xe8] sm:$0xff]
    %v1039 = vld [vmem:[#allocation16 + $0xf0] sm:$0xff]
    %v1040 = vld [vmem:[#allocation16 + $0xf8] sm:$0xff]
    %v1041 = vld [vmem:[#allocation16 + $0x100] sm:$0xff]
    %v1042 = vld [vmem:[#allocation16 + $0x108] sm:$0xff]
    %v1043 = vld [vmem:[#allocation16 + $0x110] sm:$0xff]
    %v1044 = vld [vmem:[#allocation16 + $0x118] sm:$0xff]
    %v1045 = vld [vmem:[#allocation16 + $0x120] sm:$0xff]
    %v1046 = vld [vmem:[#allocation16 + $0x128] sm:$0xff]
    %v1047 = vld [vmem:[#allocation16 + $0x130] sm:$0xff]
    %v1048 = vld [vmem:[#allocation16 + $0x138] sm:$0xff]
    %v1049 = vld [vmem:[#allocation16 + $0x140] sm:$0xff]
    %v1050 = vld [vmem:[#allocation16 + $0x148] sm:$0xff]
    %v1051 = vld [vmem:[#allocation16 + $0x150] sm:$0xff]
    %v1052 = vld [vmem:[#allocation16 + $0x158] sm:$0xff]
    %v1053 = vld [vmem:[#allocation16 + $0x160] sm:$0xff]
    %v1054 = vld [vmem:[#allocation16 + $0x168] sm:$0xff]
    %v1055 = vld [vmem:[#allocation16 + $0x170] sm:$0xff]
    %v1056 = vld [vmem:[#allocation16 + $0x178] sm:$0xff]
    %v1057 = vld [vmem:[#allocation16 + $0x180] sm:$0xff]
    %v1058 = vld [vmem:[#allocation16 + $0x188] sm:$0xff]
    %v1059 = vld [vmem:[#allocation16 + $0x190] sm:$0xff]
    %v1060 = vld [vmem:[#allocation16 + $0x198] sm:$0xff]
    %v1061 = vld [vmem:[#allocation16 + $0x1a0] sm:$0xff]
    %v1062 = vld [vmem:[#allocation16 + $0x1a8] sm:$0xff]
    %v1063 = vld [vmem:[#allocation16 + $0x1b0] sm:$0xff]
    %v1064 = vld [vmem:[#allocation16 + $0x1b8] sm:$0xff]
    %v1065 = vld [vmem:[#allocation16 + $0x1c0] sm:$0xff]
    %v1066 = vld [vmem:[#allocation16 + $0x1c8] sm:$0xff]
    %v1067 = vld [vmem:[#allocation16 + $0x1d0] sm:$0xff]
    %v1068 = vld [vmem:[#allocation16 + $0x1d8] sm:$0xff]
    %v1069 = vld [vmem:[#allocation16 + $0x1e0] sm:$0xff]
    %v1070 = vld [vmem:[#allocation16 + $0x1e8] sm:$0xff]
    %v1071 = vld [vmem:[#allocation16 + $0x1f0] sm:$0xff]
    %v1072 = vld [vmem:[#allocation16 + $0x1f8] sm:$0xff]
    %1073 = vmatprep.subr.mxu0 %v1010
    %1074 = vmatpush1.msra.mxu0 %v1009
    %1075 = vmatprep.subr.mxu0 %v1014
    %1076 = vmatpush1.msra.mxu0 %v1013
    %1077 = vmatprep.subr.mxu0 %v1018
    %1078 = vmatpush1.msra.mxu0 %v1017
    %1079 = vmatprep.subr.mxu0 %v1022
    %1080 = vmatpush1.msra.mxu0 %v1021
    %1081 = vmatprep.subr.mxu0 %v1026
    %1082 = vmatpush1.msra.mxu0 %v1025
    %1083 = vmatprep.subr.mxu0 %v1030
    %1084 = vmatpush1.msra.mxu0 %v1029
    %1085 = vmatprep.subr.mxu0 %v1034
    %1086 = vmatpush1.msra.mxu0 %v1033
    %1087 = vmatprep.subr.mxu0 %v1038
    %1088 = vmatpush1.msra.mxu0 %v1037
    %1089 = vmatprep.subr.mxu0 %v1042
    %1090 = vmatpush1.msra.mxu0 %v1041
    %1091 = vmatprep.subr.mxu0 %v1046
    %1092 = vmatpush1.msra.mxu0 %v1045
    %1093 = vmatprep.subr.mxu0 %v1050
    %1094 = vmatpush1.msra.mxu0 %v1049
    %1095 = vmatprep.subr.mxu0 %v1054
    %1096 = vmatpush1.msra.mxu0 %v1053
    %1097 = vmatprep.subr.mxu0 %v1058
    %1098 = vmatpush1.msra.mxu0 %v1057
    %1099 = vmatprep.subr.mxu0 %v1062
    %1100 = vmatpush1.msra.mxu0 %v1061
    %1101 = vmatprep.subr.mxu0 %v1066
    %1102 = vmatpush1.msra.mxu0 %v1065
    %1103 = vmatprep.subr.mxu0 %v1070
    %1104 = vmatpush1.msra.mxu0 %v1069
    %1105 = vmatprep.subr.mxu0 0.0
    %1106 = vmatpush1.msra.mxu0 0.0
    %1107 = vmatprep.subr.mxu0 0.0
    %1108 = vmatpush1.msra.mxu0 0.0
    %1109 = vmatprep.subr.mxu0 0.0
    %1110 = vmatpush1.msra.mxu0 0.0
    %1111 = vmatprep.subr.mxu0 0.0
    %1112 = vmatpush1.msra.mxu0 0.0
    %1113 = vmatprep.subr.mxu0 0.0
    %1114 = vmatpush1.msra.mxu0 0.0
    %1115 = vmatprep.subr.mxu0 0.0
    %1116 = vmatpush1.msra.mxu0 0.0
    %1117 = vmatprep.subr.mxu0 0.0
    %1118 = vmatpush1.msra.mxu0 0.0
    %1119 = vmatprep.subr.mxu0 0.0
    %1120 = vmatpush1.msra.mxu0 0.0
    %1121 = vmatprep.subr.mxu0 0.0
    %1122 = vmatpush1.msra.mxu0 0.0
    %1123 = vmatprep.subr.mxu0 0.0
    %1124 = vmatpush1.msra.mxu0 0.0
    %1125 = vmatprep.subr.mxu0 0.0
    %1126 = vmatpush1.msra.mxu0 0.0
    %1127 = vmatprep.subr.mxu0 0.0
    %1128 = vmatpush1.msra.mxu0 0.0
    %1129 = vmatprep.subr.mxu0 0.0
    %1130 = vmatpush1.msra.mxu0 0.0
    %1131 = vmatprep.subr.mxu0 0.0
    %1132 = vmatpush1.msra.mxu0 0.0
    %1133 = vmatprep.subr.mxu0 0.0
    %1134 = vmatpush1.msra.mxu0 0.0
    %1135 = vmatprep.subr.mxu0 0.0
    %1136 = vmatpush1.msra.mxu0 0.0
    %1137 = vmatprep.mubr.f32.mxu0 0.0
    %1138 = vmatmul.mubr.f32.gmra.mrb[0].mxu0 %v1008
    %v1139 = vpop.f32.mrb[0].mxu0
    %v1140 = vadd.f32 0.0, %v1139
    %v1141 = vpop.f32.mrb[0].mxu0
    %v1142 = vadd.f32 0.0, %v1141
    %1143 = vdwg.mxu0
    %1144 = vmatprep.subr.mxu0 %v1012
    %1145 = vmatpush1.msra.mxu0 %v1011
    %1146 = vmatprep.subr.mxu0 %v1016
    %1147 = vmatpush1.msra.mxu0 %v1015
    %1148 = vmatprep.subr.mxu0 %v1020
    %1149 = vmatpush1.msra.mxu0 %v1019
    %1150 = vmatprep.subr.mxu0 %v1024
    %1151 = vmatpush1.msra.mxu0 %v1023
    %1152 = vmatprep.subr.mxu0 %v1028
    %1153 = vmatpush1.msra.mxu0 %v1027
    %1154 = vmatprep.subr.mxu0 %v1032
    %1155 = vmatpush1.msra.mxu0 %v1031
    %1156 = vmatprep.subr.mxu0 %v1036
    %1157 = vmatpush1.msra.mxu0 %v1035
    %1158 = vmatprep.subr.mxu0 %v1040
    %1159 = vmatpush1.msra.mxu0 %v1039
    %1160 = vmatprep.subr.mxu0 %v1044
    %1161 = vmatpush1.msra.mxu0 %v1043
    %1162 = vmatprep.subr.mxu0 %v1048
    %1163 = vmatpush1.msra.mxu0 %v1047
    %1164 = vmatprep.subr.mxu0 %v1052
    %1165 = vmatpush1.msra.mxu0 %v1051
    %1166 = vmatprep.subr.mxu0 %v1056
    %1167 = vmatpush1.msra.mxu0 %v1055
    %1168 = vmatprep.subr.mxu0 %v1060
    %1169 = vmatpush1.msra.mxu0 %v1059
    %1170 = vmatprep.subr.mxu0 %v1064
    %1171 = vmatpush1.msra.mxu0 %v1063
    %1172 = vmatprep.subr.mxu0 %v1068
    %1173 = vmatpush1.msra.mxu0 %v1067
    %1174 = vmatprep.subr.mxu0 %v1072
    %1175 = vmatpush1.msra.mxu0 %v1071
    %1176 = vmatprep.subr.mxu0 0.0
    %1177 = vmatpush1.msra.mxu0 0.0
    %1178 = vmatprep.subr.mxu0 0.0
    %1179 = vmatpush1.msra.mxu0 0.0
    %1180 = vmatprep.subr.mxu0 0.0
    %1181 = vmatpush1.msra.mxu0 0.0
    %1182 = vmatprep.subr.mxu0 0.0
    %1183 = vmatpush1.msra.mxu0 0.0
    %1184 = vmatprep.subr.mxu0 0.0
    %1185 = vmatpush1.msra.mxu0 0.0
    %1186 = vmatprep.subr.mxu0 0.0
    %1187 = vmatpush1.msra.mxu0 0.0
    %1188 = vmatprep.subr.mxu0 0.0
    %1189 = vmatpush1.msra.mxu0 0.0
    %1190 = vmatprep.subr.mxu0 0.0
    %1191 = vmatpush1.msra.mxu0 0.0
    %1192 = vmatprep.subr.mxu0 0.0
    %1193 = vmatpush1.msra.mxu0 0.0
    %1194 = vmatprep.subr.mxu0 0.0
    %1195 = vmatpush1.msra.mxu0 0.0
    %1196 = vmatprep.subr.mxu0 0.0
    %1197 = vmatpush1.msra.mxu0 0.0
    %1198 = vmatprep.subr.mxu0 0.0
    %1199 = vmatpush1.msra.mxu0 0.0
    %1200 = vmatprep.subr.mxu0 0.0
    %1201 = vmatpush1.msra.mxu0 0.0
    %1202 = vmatprep.subr.mxu0 0.0
    %1203 = vmatpush1.msra.mxu0 0.0
    %1204 = vmatprep.subr.mxu0 0.0
    %1205 = vmatpush1.msra.mxu0 0.0
    %1206 = vmatprep.subr.mxu0 0.0
    %1207 = vmatpush1.msra.mxu0 0.0
    %1208 = vmatprep.mubr.f32.mxu0 0.0
    %1209 = vmatmul.mubr.f32.gmra.mrb[0].mxu0 %v1008
    %v1210 = vpop.f32.mrb[0].mxu0
    %v1211 = vadd.f32 0.0, %v1210
    %v1212 = vpop.f32.mrb[0].mxu0
    %v1213 = vadd.f32 0.0, %v1212
    %1214 = vdwg.mxu0
    %v1215 = vadd.f32 %v1004, %v1140
    %v1216 = vadd.f32 %v1005, %v1142
    %v1217 = vadd.f32 %v1006, %v1211
    %v1218 = vadd.f32 %v1007, %v1213
    %v1219 = vld [vmem:[#allocation7] sm:$0xff]
    %v1220 = vxor.u32 %v1215, 2147483648
    %v1221 = vmul.f32 %v1220, 1.442695
    %v1222 = vpow.pop %v1221
    %v1223 = vadd.f32 %v1222, 1.0
    %v1224 = vrcp.pop %v1223
    %v1225 = vmul.f32 1.0, %v1224
    %v1226 = vxor.u32 %v1216, 2147483648
    %v1227 = vmul.f32 %v1226, 1.442695
    %v1228 = vpow.pop %v1227
    %v1229 = vadd.f32 %v1228, 1.0
    %v1230 = vrcp.pop %v1229
    %v1231 = vmul.f32 1.0, %v1230
    %v1232 = vtanh.pop %v1217
    %v1233 = vxor.u32 %v1218, 2147483648
    %v1234 = vmul.f32 %v1233, 1.442695
    %v1235 = vpow.pop %v1234
    %v1236 = vadd.f32 %v1235, 1.0
    %v1237 = vrcp.pop %v1236
    %v1238 = vmul.f32 1.0, %v1237
    %v1239 = vmul.f32 %v1231, %v1219
    %v1240 = vmul.f32 %v1225, %v1232
    %v1241 = vadd.f32 %v1239, %v1240
    %v1242 = vtanh.pop %v1241
    %v1243 = vmul.f32 %v1238, %v1242
    %1244 = vst [vmem:[#allocation6] sm:$0xff] %v1243
    %1245 = vst [vmem:[#allocation7] sm:$0xff] %v1241
    %s1246 = scalar_lea.vmem [#allocation3], 16
    %1247 = vst [vmem:[%s1246] sm:$0xff] %v1243
    %s1248 = smul.u32 3, 4
    %s1249 = smul.addr %s1248, 8
    %s1250 = scalar_lea.vmem [#allocation2], %s1249
    %v1251 = vld [vmem:[%s1250] sm:$0xff]
    %v1252 = vld [vmem:[%s1250 + $0x8] sm:$0xff]
    %v1253 = vld [vmem:[%s1250 + $0x10] sm:$0xff]
    %v1254 = vld [vmem:[%s1250 + $0x18] sm:$0xff]
    %v1255 = vld [vmem:[#allocation6] sm:$0xff]
    %v1256 = vld [vmem:[#allocation16] sm:$0xff]
    %v1257 = vld [vmem:[#allocation16 + $0x8] sm:$0xff]
    %v1258 = vld [vmem:[#allocation16 + $0x10] sm:$0xff]
    %v1259 = vld [vmem:[#allocation16 + $0x18] sm:$0xff]
    %v1260 = vld [vmem:[#allocation16 + $0x20] sm:$0xff]
    %v1261 = vld [vmem:[#allocation16 + $0x28] sm:$0xff]
    %v1262 = vld [vmem:[#allocation16 + $0x30] sm:$0xff]
    %v1263 = vld [vmem:[#allocation16 + $0x38] sm:$0xff]
    %v1264 = vld [vmem:[#allocation16 + $0x40] sm:$0xff]
    %v1265 = vld [vmem:[#allocation16 + $0x48] sm:$0xff]
    %v1266 = vld [vmem:[#allocation16 + $0x50] sm:$0xff]
    %v1267 = vld [vmem:[#allocation16 + $0x58] sm:$0xff]
    %v1268 = vld [vmem:[#allocation16 + $0x60] sm:$0xff]
    %v1269 = vld [vmem:[#allocation16 + $0x68] sm:$0xff]
    %v1270 = vld [vmem:[#allocation16 + $0x70] sm:$0xff]
    %v1271 = vld [vmem:[#allocation16 + $0x78] sm:$0xff]
    %v1272 = vld [vmem:[#allocation16 + $0x80] sm:$0xff]
    %v1273 = vld [vmem:[#allocation16 + $0x88] sm:$0xff]
    %v1274 = vld [vmem:[#allocation16 + $0x90] sm:$0xff]
    %v1275 = vld [vmem:[#allocation16 + $0x98] sm:$0xff]
    %v1276 = vld [vmem:[#allocation16 + $0xa0] sm:$0xff]
    %v1277 = vld [vmem:[#allocation16 + $0xa8] sm:$0xff]
    %v1278 = vld [vmem:[#allocation16 + $0xb0] sm:$0xff]
    %v1279 = vld [vmem:[#allocation16 + $0xb8] sm:$0xff]
    %v1280 = vld [vmem:[#allocation16 + $0xc0] sm:$0xff]
    %v1281 = vld [vmem:[#allocation16 + $0xc8] sm:$0xff]
    %v1282 = vld [vmem:[#allocation16 + $0xd0] sm:$0xff]
    %v1283 = vld [vmem:[#allocation16 + $0xd8] sm:$0xff]
    %v1284 = vld [vmem:[#allocation16 + $0xe0] sm:$0xff]
    %v1285 = vld [vmem:[#allocation16 + $0xe8] sm:$0xff]
    %v1286 = vld [vmem:[#allocation16 + $0xf0] sm:$0xff]
    %v1287 = vld [vmem:[#allocation16 + $0xf8] sm:$0xff]
    %v1288 = vld [vmem:[#allocation16 + $0x100] sm:$0xff]
    %v1289 = vld [vmem:[#allocation16 + $0x108] sm:$0xff]
    %v1290 = vld [vmem:[#allocation16 + $0x110] sm:$0xff]
    %v1291 = vld [vmem:[#allocation16 + $0x118] sm:$0xff]
    %v1292 = vld [vmem:[#allocation16 + $0x120] sm:$0xff]
    %v1293 = vld [vmem:[#allocation16 + $0x128] sm:$0xff]
    %v1294 = vld [vmem:[#allocation16 + $0x130] sm:$0xff]
    %v1295 = vld [vmem:[#allocation16 + $0x138] sm:$0xff]
    %v1296 = vld [vmem:[#allocation16 + $0x140] sm:$0xff]
    %v1297 = vld [vmem:[#allocation16 + $0x148] sm:$0xff]
    %v1298 = vld [vmem:[#allocation16 + $0x150] sm:$0xff]
    %v1299 = vld [vmem:[#allocation16 + $0x158] sm:$0xff]
    %v1300 = vld [vmem:[#allocation16 + $0x160] sm:$0xff]
    %v1301 = vld [vmem:[#allocation16 + $0x168] sm:$0xff]
    %v1302 = vld [vmem:[#allocation16 + $0x170] sm:$0xff]
    %v1303 = vld [vmem:[#allocation16 + $0x178] sm:$0xff]
    %v1304 = vld [vmem:[#allocation16 + $0x180] sm:$0xff]
    %v1305 = vld [vmem:[#allocation16 + $0x188] sm:$0xff]
    %v1306 = vld [vmem:[#allocation16 + $0x190] sm:$0xff]
    %v1307 = vld [vmem:[#allocation16 + $0x198] sm:$0xff]
    %v1308 = vld [vmem:[#allocation16 + $0x1a0] sm:$0xff]
    %v1309 = vld [vmem:[#allocation16 + $0x1a8] sm:$0xff]
    %v1310 = vld [vmem:[#allocation16 + $0x1b0] sm:$0xff]
    %v1311 = vld [vmem:[#allocation16 + $0x1b8] sm:$0xff]
    %v1312 = vld [vmem:[#allocation16 + $0x1c0] sm:$0xff]
    %v1313 = vld [vmem:[#allocation16 + $0x1c8] sm:$0xff]
    %v1314 = vld [vmem:[#allocation16 + $0x1d0] sm:$0xff]
    %v1315 = vld [vmem:[#allocation16 + $0x1d8] sm:$0xff]
    %v1316 = vld [vmem:[#allocation16 + $0x1e0] sm:$0xff]
    %v1317 = vld [vmem:[#allocation16 + $0x1e8] sm:$0xff]
    %v1318 = vld [vmem:[#allocation16 + $0x1f0] sm:$0xff]
    %v1319 = vld [vmem:[#allocation16 + $0x1f8] sm:$0xff]
    %1320 = vmatprep.subr.mxu0 %v1257
    %1321 = vmatpush1.msra.mxu0 %v1256
    %1322 = vmatprep.subr.mxu0 %v1261
    %1323 = vmatpush1.msra.mxu0 %v1260
    %1324 = vmatprep.subr.mxu0 %v1265
    %1325 = vmatpush1.msra.mxu0 %v1264
    %1326 = vmatprep.subr.mxu0 %v1269
    %1327 = vmatpush1.msra.mxu0 %v1268
    %1328 = vmatprep.subr.mxu0 %v1273
    %1329 = vmatpush1.msra.mxu0 %v1272
    %1330 = vmatprep.subr.mxu0 %v1277
    %1331 = vmatpush1.msra.mxu0 %v1276
    %1332 = vmatprep.subr.mxu0 %v1281
    %1333 = vmatpush1.msra.mxu0 %v1280
    %1334 = vmatprep.subr.mxu0 %v1285
    %1335 = vmatpush1.msra.mxu0 %v1284
    %1336 = vmatprep.subr.mxu0 %v1289
    %1337 = vmatpush1.msra.mxu0 %v1288
    %1338 = vmatprep.subr.mxu0 %v1293
    %1339 = vmatpush1.msra.mxu0 %v1292
    %1340 = vmatprep.subr.mxu0 %v1297
    %1341 = vmatpush1.msra.mxu0 %v1296
    %1342 = vmatprep.subr.mxu0 %v1301
    %1343 = vmatpush1.msra.mxu0 %v1300
    %1344 = vmatprep.subr.mxu0 %v1305
    %1345 = vmatpush1.msra.mxu0 %v1304
    %1346 = vmatprep.subr.mxu0 %v1309
    %1347 = vmatpush1.msra.mxu0 %v1308
    %1348 = vmatprep.subr.mxu0 %v1313
    %1349 = vmatpush1.msra.mxu0 %v1312
    %1350 = vmatprep.subr.mxu0 %v1317
    %1351 = vmatpush1.msra.mxu0 %v1316
    %1352 = vmatprep.subr.mxu0 0.0
    %1353 = vmatpush1.msra.mxu0 0.0
    %1354 = vmatprep.subr.mxu0 0.0
    %1355 = vmatpush1.msra.mxu0 0.0
    %1356 = vmatprep.subr.mxu0 0.0
    %1357 = vmatpush1.msra.mxu0 0.0
    %1358 = vmatprep.subr.mxu0 0.0
    %1359 = vmatpush1.msra.mxu0 0.0
    %1360 = vmatprep.subr.mxu0 0.0
    %1361 = vmatpush1.msra.mxu0 0.0
    %1362 = vmatprep.subr.mxu0 0.0
    %1363 = vmatpush1.msra.mxu0 0.0
    %1364 = vmatprep.subr.mxu0 0.0
    %1365 = vmatpush1.msra.mxu0 0.0
    %1366 = vmatprep.subr.mxu0 0.0
    %1367 = vmatpush1.msra.mxu0 0.0
    %1368 = vmatprep.subr.mxu0 0.0
    %1369 = vmatpush1.msra.mxu0 0.0
    %1370 = vmatprep.subr.mxu0 0.0
    %1371 = vmatpush1.msra.mxu0 0.0
    %1372 = vmatprep.subr.mxu0 0.0
    %1373 = vmatpush1.msra.mxu0 0.0
    %1374 = vmatprep.subr.mxu0 0.0
    %1375 = vmatpush1.msra.mxu0 0.0
    %1376 = vmatprep.subr.mxu0 0.0
    %1377 = vmatpush1.msra.mxu0 0.0
    %1378 = vmatprep.subr.mxu0 0.0
    %1379 = vmatpush1.msra.mxu0 0.0
    %1380 = vmatprep.subr.mxu0 0.0
    %1381 = vmatpush1.msra.mxu0 0.0
    %1382 = vmatprep.subr.mxu0 0.0
    %1383 = vmatpush1.msra.mxu0 0.0
    %1384 = vmatprep.mubr.f32.mxu0 0.0
    %1385 = vmatmul.mubr.f32.gmra.mrb[0].mxu0 %v1255
    %v1386 = vpop.f32.mrb[0].mxu0
    %v1387 = vadd.f32 0.0, %v1386
    %v1388 = vpop.f32.mrb[0].mxu0
    %v1389 = vadd.f32 0.0, %v1388
    %1390 = vdwg.mxu0
    %1391 = vmatprep.subr.mxu0 %v1259
    %1392 = vmatpush1.msra.mxu0 %v1258
    %1393 = vmatprep.subr.mxu0 %v1263
    %1394 = vmatpush1.msra.mxu0 %v1262
    %1395 = vmatprep.subr.mxu0 %v1267
    %1396 = vmatpush1.msra.mxu0 %v1266
    %1397 = vmatprep.subr.mxu0 %v1271
    %1398 = vmatpush1.msra.mxu0 %v1270
    %1399 = vmatprep.subr.mxu0 %v1275
    %1400 = vmatpush1.msra.mxu0 %v1274
    %1401 = vmatprep.subr.mxu0 %v1279
    %1402 = vmatpush1.msra.mxu0 %v1278
    %1403 = vmatprep.subr.mxu0 %v1283
    %1404 = vmatpush1.msra.mxu0 %v1282
    %1405 = vmatprep.subr.mxu0 %v1287
    %1406 = vmatpush1.msra.mxu0 %v1286
    %1407 = vmatprep.subr.mxu0 %v1291
    %1408 = vmatpush1.msra.mxu0 %v1290
    %1409 = vmatprep.subr.mxu0 %v1295
    %1410 = vmatpush1.msra.mxu0 %v1294
    %1411 = vmatprep.subr.mxu0 %v1299
    %1412 = vmatpush1.msra.mxu0 %v1298
    %1413 = vmatprep.subr.mxu0 %v1303
    %1414 = vmatpush1.msra.mxu0 %v1302
    %1415 = vmatprep.subr.mxu0 %v1307
    %1416 = vmatpush1.msra.mxu0 %v1306
    %1417 = vmatprep.subr.mxu0 %v1311
    %1418 = vmatpush1.msra.mxu0 %v1310
    %1419 = vmatprep.subr.mxu0 %v1315
    %1420 = vmatpush1.msra.mxu0 %v1314
    %1421 = vmatprep.subr.mxu0 %v1319
    %1422 = vmatpush1.msra.mxu0 %v1318
    %1423 = vmatprep.subr.mxu0 0.0
    %1424 = vmatpush1.msra.mxu0 0.0
    %1425 = vmatprep.subr.mxu0 0.0
    %1426 = vmatpush1.msra.mxu0 0.0
    %1427 = vmatprep.subr.mxu0 0.0
    %1428 = vmatpush1.msra.mxu0 0.0
    %1429 = vmatprep.subr.mxu0 0.0
    %1430 = vmatpush1.msra.mxu0 0.0
    %1431 = vmatprep.subr.mxu0 0.0
    %1432 = vmatpush1.msra.mxu0 0.0
    %1433 = vmatprep.subr.mxu0 0.0
    %1434 = vmatpush1.msra.mxu0 0.0
    %1435 = vmatprep.subr.mxu0 0.0
    %1436 = vmatpush1.msra.mxu0 0.0
    %1437 = vmatprep.subr.mxu0 0.0
    %1438 = vmatpush1.msra.mxu0 0.0
    %1439 = vmatprep.subr.mxu0 0.0
    %1440 = vmatpush1.msra.mxu0 0.0
    %1441 = vmatprep.subr.mxu0 0.0
    %1442 = vmatpush1.msra.mxu0 0.0
    %1443 = vmatprep.subr.mxu0 0.0
    %1444 = vmatpush1.msra.mxu0 0.0
    %1445 = vmatprep.subr.mxu0 0.0
    %1446 = vmatpush1.msra.mxu0 0.0
    %1447 = vmatprep.subr.mxu0 0.0
    %1448 = vmatpush1.msra.mxu0 0.0
    %1449 = vmatprep.subr.mxu0 0.0
    %1450 = vmatpush1.msra.mxu0 0.0
    %1451 = vmatprep.subr.mxu0 0.0
    %1452 = vmatpush1.msra.mxu0 0.0
    %1453 = vmatprep.subr.mxu0 0.0
    %1454 = vmatpush1.msra.mxu0 0.0
    %1455 = vmatprep.mubr.f32.mxu0 0.0
    %1456 = vmatmul.mubr.f32.gmra.mrb[0].mxu0 %v1255
    %v1457 = vpop.f32.mrb[0].mxu0
    %v1458 = vadd.f32 0.0, %v1457
    %v1459 = vpop.f32.mrb[0].mxu0
    %v1460 = vadd.f32 0.0, %v1459
    %1461 = vdwg.mxu0
    %v1462 = vadd.f32 %v1251, %v1387
    %v1463 = vadd.f32 %v1252, %v1389
    %v1464 = vadd.f32 %v1253, %v1458
    %v1465 = vadd.f32 %v1254, %v1460
    %v1466 = vld [vmem:[#allocation7] sm:$0xff]
    %v1467 = vxor.u32 %v1462, 2147483648
    %v1468 = vmul.f32 %v1467, 1.442695
    %v1469 = vpow.pop %v1468
    %v1470 = vadd.f32 %v1469, 1.0
    %v1471 = vrcp.pop %v1470
    %v1472 = vmul.f32 1.0, %v1471
    %v1473 = vxor.u32 %v1463, 2147483648
    %v1474 = vmul.f32 %v1473, 1.442695
    %v1475 = vpow.pop %v1474
    %v1476 = vadd.f32 %v1475, 1.0
    %v1477 = vrcp.pop %v1476
    %v1478 = vmul.f32 1.0, %v1477
    %v1479 = vtanh.pop %v1464
    %v1480 = vxor.u32 %v1465, 2147483648
    %v1481 = vmul.f32 %v1480, 1.442695
    %v1482 = vpow.pop %v1481
    %v1483 = vadd.f32 %v1482, 1.0
    %v1484 = vrcp.pop %v1483
    %v1485 = vmul.f32 1.0, %v1484
    %v1486 = vmul.f32 %v1478, %v1466
    %v1487 = vmul.f32 %v1472, %v1479
    %v1488 = vadd.f32 %v1486, %v1487
    %v1489 = vtanh.pop %v1488
    %v1490 = vmul.f32 %v1485, %v1489
    %1491 = vst [vmem:[#allocation6] sm:$0xff] %v1490
    %1492 = vst [vmem:[#allocation7] sm:$0xff] %v1488
    %s1493 = scalar_lea.vmem [#allocation3], 24
    %1494 = vst [vmem:[%s1493] sm:$0xff] %v1490
    %s1495 = smul.u32 4, 4
    %s1496 = smul.addr %s1495, 8
    %s1497 = scalar_lea.vmem [#allocation2], %s1496
    %v1498 = vld [vmem:[%s1497] sm:$0xff]
    %v1499 = vld [vmem:[%s1497 + $0x8] sm:$0xff]
    %v1500 = vld [vmem:[%s1497 + $0x10] sm:$0xff]
    %v1501 = vld [vmem:[%s1497 + $0x18] sm:$0xff]
    %v1502 = vld [vmem:[#allocation6] sm:$0xff]
    %v1503 = vld [vmem:[#allocation16] sm:$0xff]
    %v1504 = vld [vmem:[#allocation16 + $0x8] sm:$0xff]
    %v1505 = vld [vmem:[#allocation16 + $0x10] sm:$0xff]
    %v1506 = vld [vmem:[#allocation16 + $0x18] sm:$0xff]
    %v1507 = vld [vmem:[#allocation16 + $0x20] sm:$0xff]
    %v1508 = vld [vmem:[#allocation16 + $0x28] sm:$0xff]
    %v1509 = vld [vmem:[#allocation16 + $0x30] sm:$0xff]
    %v1510 = vld [vmem:[#allocation16 + $0x38] sm:$0xff]
    %v1511 = vld [vmem:[#allocation16 + $0x40] sm:$0xff]
    %v1512 = vld [vmem:[#allocation16 + $0x48] sm:$0xff]
    %v1513 = vld [vmem:[#allocation16 + $0x50] sm:$0xff]
    %v1514 = vld [vmem:[#allocation16 + $0x58] sm:$0xff]
    %v1515 = vld [vmem:[#allocation16 + $0x60] sm:$0xff]
    %v1516 = vld [vmem:[#allocation16 + $0x68] sm:$0xff]
    %v1517 = vld [vmem:[#allocation16 + $0x70] sm:$0xff]
    %v1518 = vld [vmem:[#allocation16 + $0x78] sm:$0xff]
    %v1519 = vld [vmem:[#allocation16 + $0x80] sm:$0xff]
    %v1520 = vld [vmem:[#allocation16 + $0x88] sm:$0xff]
    %v1521 = vld [vmem:[#allocation16 + $0x90] sm:$0xff]
    %v1522 = vld [vmem:[#allocation16 + $0x98] sm:$0xff]
    %v1523 = vld [vmem:[#allocation16 + $0xa0] sm:$0xff]
    %v1524 = vld [vmem:[#allocation16 + $0xa8] sm:$0xff]
    %v1525 = vld [vmem:[#allocation16 + $0xb0] sm:$0xff]
    %v1526 = vld [vmem:[#allocation16 + $0xb8] sm:$0xff]
    %v1527 = vld [vmem:[#allocation16 + $0xc0] sm:$0xff]
    %v1528 = vld [vmem:[#allocation16 + $0xc8] sm:$0xff]
    %v1529 = vld [vmem:[#allocation16 + $0xd0] sm:$0xff]
    %v1530 = vld [vmem:[#allocation16 + $0xd8] sm:$0xff]
    %v1531 = vld [vmem:[#allocation16 + $0xe0] sm:$0xff]
    %v1532 = vld [vmem:[#allocation16 + $0xe8] sm:$0xff]
    %v1533 = vld [vmem:[#allocation16 + $0xf0] sm:$0xff]
    %v1534 = vld [vmem:[#allocation16 + $0xf8] sm:$0xff]
    %v1535 = vld [vmem:[#allocation16 + $0x100] sm:$0xff]
    %v1536 = vld [vmem:[#allocation16 + $0x108] sm:$0xff]
    %v1537 = vld [vmem:[#allocation16 + $0x110] sm:$0xff]
    %v1538 = vld [vmem:[#allocation16 + $0x118] sm:$0xff]
    %v1539 = vld [vmem:[#allocation16 + $0x120] sm:$0xff]
    %v1540 = vld [vmem:[#allocation16 + $0x128] sm:$0xff]
    %v1541 = vld [vmem:[#allocation16 + $0x130] sm:$0xff]
    %v1542 = vld [vmem:[#allocation16 + $0x138] sm:$0xff]
    %v1543 = vld [vmem:[#allocation16 + $0x140] sm:$0xff]
    %v1544 = vld [vmem:[#allocation16 + $0x148] sm:$0xff]
    %v1545 = vld [vmem:[#allocation16 + $0x150] sm:$0xff]
    %v1546 = vld [vmem:[#allocation16 + $0x158] sm:$0xff]
    %v1547 = vld [vmem:[#allocation16 + $0x160] sm:$0xff]
    %v1548 = vld [vmem:[#allocation16 + $0x168] sm:$0xff]
    %v1549 = vld [vmem:[#allocation16 + $0x170] sm:$0xff]
    %v1550 = vld [vmem:[#allocation16 + $0x178] sm:$0xff]
    %v1551 = vld [vmem:[#allocation16 + $0x180] sm:$0xff]
    %v1552 = vld [vmem:[#allocation16 + $0x188] sm:$0xff]
    %v1553 = vld [vmem:[#allocation16 + $0x190] sm:$0xff]
    %v1554 = vld [vmem:[#allocation16 + $0x198] sm:$0xff]
    %v1555 = vld [vmem:[#allocation16 + $0x1a0] sm:$0xff]
    %v1556 = vld [vmem:[#allocation16 + $0x1a8] sm:$0xff]
    %v1557 = vld [vmem:[#allocation16 + $0x1b0] sm:$0xff]
    %v1558 = vld [vmem:[#allocation16 + $0x1b8] sm:$0xff]
    %v1559 = vld [vmem:[#allocation16 + $0x1c0] sm:$0xff]
    %v1560 = vld [vmem:[#allocation16 + $0x1c8] sm:$0xff]
    %v1561 = vld [vmem:[#allocation16 + $0x1d0] sm:$0xff]
    %v1562 = vld [vmem:[#allocation16 + $0x1d8] sm:$0xff]
    %v1563 = vld [vmem:[#allocation16 + $0x1e0] sm:$0xff]
    %v1564 = vld [vmem:[#allocation16 + $0x1e8] sm:$0xff]
    %v1565 = vld [vmem:[#allocation16 + $0x1f0] sm:$0xff]
    %v1566 = vld [vmem:[#allocation16 + $0x1f8] sm:$0xff]
    %1567 = vmatprep.subr.mxu0 %v1504
    %1568 = vmatpush1.msra.mxu0 %v1503
    %1569 = vmatprep.subr.mxu0 %v1508
    %1570 = vmatpush1.msra.mxu0 %v1507
    %1571 = vmatprep.subr.mxu0 %v1512
    %1572 = vmatpush1.msra.mxu0 %v1511
    %1573 = vmatprep.subr.mxu0 %v1516
    %1574 = vmatpush1.msra.mxu0 %v1515
    %1575 = vmatprep.subr.mxu0 %v1520
    %1576 = vmatpush1.msra.mxu0 %v1519
    %1577 = vmatprep.subr.mxu0 %v1524
    %1578 = vmatpush1.msra.mxu0 %v1523
    %1579 = vmatprep.subr.mxu0 %v1528
    %1580 = vmatpush1.msra.mxu0 %v1527
    %1581 = vmatprep.subr.mxu0 %v1532
    %1582 = vmatpush1.msra.mxu0 %v1531
    %1583 = vmatprep.subr.mxu0 %v1536
    %1584 = vmatpush1.msra.mxu0 %v1535
    %1585 = vmatprep.subr.mxu0 %v1540
    %1586 = vmatpush1.msra.mxu0 %v1539
    %1587 = vmatprep.subr.mxu0 %v1544
    %1588 = vmatpush1.msra.mxu0 %v1543
    %1589 = vmatprep.subr.mxu0 %v1548
    %1590 = vmatpush1.msra.mxu0 %v1547
    %1591 = vmatprep.subr.mxu0 %v1552
    %1592 = vmatpush1.msra.mxu0 %v1551
    %1593 = vmatprep.subr.mxu0 %v1556
    %1594 = vmatpush1.msra.mxu0 %v1555
    %1595 = vmatprep.subr.mxu0 %v1560
    %1596 = vmatpush1.msra.mxu0 %v1559
    %1597 = vmatprep.subr.mxu0 %v1564
    %1598 = vmatpush1.msra.mxu0 %v1563
    %1599 = vmatprep.subr.mxu0 0.0
    %1600 = vmatpush1.msra.mxu0 0.0
    %1601 = vmatprep.subr.mxu0 0.0
    %1602 = vmatpush1.msra.mxu0 0.0
    %1603 = vmatprep.subr.mxu0 0.0
    %1604 = vmatpush1.msra.mxu0 0.0
    %1605 = vmatprep.subr.mxu0 0.0
    %1606 = vmatpush1.msra.mxu0 0.0
    %1607 = vmatprep.subr.mxu0 0.0
    %1608 = vmatpush1.msra.mxu0 0.0
    %1609 = vmatprep.subr.mxu0 0.0
    %1610 = vmatpush1.msra.mxu0 0.0
    %1611 = vmatprep.subr.mxu0 0.0
    %1612 = vmatpush1.msra.mxu0 0.0
    %1613 = vmatprep.subr.mxu0 0.0
    %1614 = vmatpush1.msra.mxu0 0.0
    %1615 = vmatprep.subr.mxu0 0.0
    %1616 = vmatpush1.msra.mxu0 0.0
    %1617 = vmatprep.subr.mxu0 0.0
    %1618 = vmatpush1.msra.mxu0 0.0
    %1619 = vmatprep.subr.mxu0 0.0
    %1620 = vmatpush1.msra.mxu0 0.0
    %1621 = vmatprep.subr.mxu0 0.0
    %1622 = vmatpush1.msra.mxu0 0.0
    %1623 = vmatprep.subr.mxu0 0.0
    %1624 = vmatpush1.msra.mxu0 0.0
    %1625 = vmatprep.subr.mxu0 0.0
    %1626 = vmatpush1.msra.mxu0 0.0
    %1627 = vmatprep.subr.mxu0 0.0
    %1628 = vmatpush1.msra.mxu0 0.0
    %1629 = vmatprep.subr.mxu0 0.0
    %1630 = vmatpush1.msra.mxu0 0.0
    %1631 = vmatprep.mubr.f32.mxu0 0.0
    %1632 = vmatmul.mubr.f32.gmra.mrb[0].mxu0 %v1502
    %v1633 = vpop.f32.mrb[0].mxu0
    %v1634 = vadd.f32 0.0, %v1633
    %v1635 = vpop.f32.mrb[0].mxu0
    %v1636 = vadd.f32 0.0, %v1635
    %1637 = vdwg.mxu0
    %1638 = vmatprep.subr.mxu0 %v1506
    %1639 = vmatpush1.msra.mxu0 %v1505
    %1640 = vmatprep.subr.mxu0 %v1510
    %1641 = vmatpush1.msra.mxu0 %v1509
    %1642 = vmatprep.subr.mxu0 %v1514
    %1643 = vmatpush1.msra.mxu0 %v1513
    %1644 = vmatprep.subr.mxu0 %v1518
    %1645 = vmatpush1.msra.mxu0 %v1517
    %1646 = vmatprep.subr.mxu0 %v1522
    %1647 = vmatpush1.msra.mxu0 %v1521
    %1648 = vmatprep.subr.mxu0 %v1526
    %1649 = vmatpush1.msra.mxu0 %v1525
    %1650 = vmatprep.subr.mxu0 %v1530
    %1651 = vmatpush1.msra.mxu0 %v1529
    %1652 = vmatprep.subr.mxu0 %v1534
    %1653 = vmatpush1.msra.mxu0 %v1533
    %1654 = vmatprep.subr.mxu0 %v1538
    %1655 = vmatpush1.msra.mxu0 %v1537
    %1656 = vmatprep.subr.mxu0 %v1542
    %1657 = vmatpush1.msra.mxu0 %v1541
    %1658 = vmatprep.subr.mxu0 %v1546
    %1659 = vmatpush1.msra.mxu0 %v1545
    %1660 = vmatprep.subr.mxu0 %v1550
    %1661 = vmatpush1.msra.mxu0 %v1549
    %1662 = vmatprep.subr.mxu0 %v1554
    %1663 = vmatpush1.msra.mxu0 %v1553
    %1664 = vmatprep.subr.mxu0 %v1558
    %1665 = vmatpush1.msra.mxu0 %v1557
    %1666 = vmatprep.subr.mxu0 %v1562
    %1667 = vmatpush1.msra.mxu0 %v1561
    %1668 = vmatprep.subr.mxu0 %v1566
    %1669 = vmatpush1.msra.mxu0 %v1565
    %1670 = vmatprep.subr.mxu0 0.0
    %1671 = vmatpush1.msra.mxu0 0.0
    %1672 = vmatprep.subr.mxu0 0.0
    %1673 = vmatpush1.msra.mxu0 0.0
    %1674 = vmatprep.subr.mxu0 0.0
    %1675 = vmatpush1.msra.mxu0 0.0
    %1676 = vmatprep.subr.mxu0 0.0
    %1677 = vmatpush1.msra.mxu0 0.0
    %1678 = vmatprep.subr.mxu0 0.0
    %1679 = vmatpush1.msra.mxu0 0.0
    %1680 = vmatprep.subr.mxu0 0.0
    %1681 = vmatpush1.msra.mxu0 0.0
    %1682 = vmatprep.subr.mxu0 0.0
    %1683 = vmatpush1.msra.mxu0 0.0
    %1684 = vmatprep.subr.mxu0 0.0
    %1685 = vmatpush1.msra.mxu0 0.0
    %1686 = vmatprep.subr.mxu0 0.0
    %1687 = vmatpush1.msra.mxu0 0.0
    %1688 = vmatprep.subr.mxu0 0.0
    %1689 = vmatpush1.msra.mxu0 0.0
    %1690 = vmatprep.subr.mxu0 0.0
    %1691 = vmatpush1.msra.mxu0 0.0
    %1692 = vmatprep.subr.mxu0 0.0
    %1693 = vmatpush1.msra.mxu0 0.0
    %1694 = vmatprep.subr.mxu0 0.0
    %1695 = vmatpush1.msra.mxu0 0.0
    %1696 = vmatprep.subr.mxu0 0.0
    %1697 = vmatpush1.msra.mxu0 0.0
    %1698 = vmatprep.subr.mxu0 0.0
    %1699 = vmatpush1.msra.mxu0 0.0
    %1700 = vmatprep.subr.mxu0 0.0
    %1701 = vmatpush1.msra.mxu0 0.0
    %1702 = vmatprep.mubr.f32.mxu0 0.0
    %1703 = vmatmul.mubr.f32.gmra.mrb[0].mxu0 %v1502
    %v1704 = vpop.f32.mrb[0].mxu0
    %v1705 = vadd.f32 0.0, %v1704
    %v1706 = vpop.f32.mrb[0].mxu0
    %v1707 = vadd.f32 0.0, %v1706
    %1708 = vdwg.mxu0
    %v1709 = vadd.f32 %v1498, %v1634
    %v1710 = vadd.f32 %v1499, %v1636
    %v1711 = vadd.f32 %v1500, %v1705
    %v1712 = vadd.f32 %v1501, %v1707
    %v1713 = vld [vmem:[#allocation7] sm:$0xff]
    %v1714 = vxor.u32 %v1709, 2147483648
    %v1715 = vmul.f32 %v1714, 1.442695
    %v1716 = vpow.pop %v1715
    %v1717 = vadd.f32 %v1716, 1.0
    %v1718 = vrcp.pop %v1717
    %v1719 = vmul.f32 1.0, %v1718
    %v1720 = vxor.u32 %v1710, 2147483648
    %v1721 = vmul.f32 %v1720, 1.442695
    %v1722 = vpow.pop %v1721
    %v1723 = vadd.f32 %v1722, 1.0
    %v1724 = vrcp.pop %v1723
    %v1725 = vmul.f32 1.0, %v1724
    %v1726 = vtanh.pop %v1711
    %v1727 = vxor.u32 %v1712, 2147483648
    %v1728 = vmul.f32 %v1727, 1.442695
    %v1729 = vpow.pop %v1728
    %v1730 = vadd.f32 %v1729, 1.0
    %v1731 = vrcp.pop %v1730
    %v1732 = vmul.f32 1.0, %v1731
    %v1733 = vmul.f32 %v1725, %v1713
    %v1734 = vmul.f32 %v1719, %v1726
    %v1735 = vadd.f32 %v1733, %v1734
    %v1736 = vtanh.pop %v1735
    %v1737 = vmul.f32 %v1732, %v1736
    %1738 = vst [vmem:[#allocation6] sm:$0xff] %v1737
    %1739 = vst [vmem:[#allocation7] sm:$0xff] %v1735
    %s1740 = scalar_lea.vmem [#allocation3], 32
    %1741 = vst [vmem:[%s1740] sm:$0xff] %v1737
    %s1742 = smul.u32 5, 4
    %s1743 = smul.addr %s1742, 8
    %s1744 = scalar_lea.vmem [#allocation2], %s1743
    %v1745 = vld [vmem:[%s1744] sm:$0xff]
    %v1746 = vld [vmem:[%s1744 + $0x8] sm:$0xff]
    %v1747 = vld [vmem:[%s1744 + $0x10] sm:$0xff]
    %v1748 = vld [vmem:[%s1744 + $0x18] sm:$0xff]
    %v1749 = vld [vmem:[#allocation6] sm:$0xff]
    %v1750 = vld [vmem:[#allocation16] sm:$0xff]
    %v1751 = vld [vmem:[#allocation16 + $0x8] sm:$0xff]
    %v1752 = vld [vmem:[#allocation16 + $0x10] sm:$0xff]
    %v1753 = vld [vmem:[#allocation16 + $0x18] sm:$0xff]
    %v1754 = vld [vmem:[#allocation16 + $0x20] sm:$0xff]
    %v1755 = vld [vmem:[#allocation16 + $0x28] sm:$0xff]
    %v1756 = vld [vmem:[#allocation16 + $0x30] sm:$0xff]
    %v1757 = vld [vmem:[#allocation16 + $0x38] sm:$0xff]
    %v1758 = vld [vmem:[#allocation16 + $0x40] sm:$0xff]
    %v1759 = vld [vmem:[#allocation16 + $0x48] sm:$0xff]
    %v1760 = vld [vmem:[#allocation16 + $0x50] sm:$0xff]
    %v1761 = vld [vmem:[#allocation16 + $0x58] sm:$0xff]
    %v1762 = vld [vmem:[#allocation16 + $0x60] sm:$0xff]
    %v1763 = vld [vmem:[#allocation16 + $0x68] sm:$0xff]
    %v1764 = vld [vmem:[#allocation16 + $0x70] sm:$0xff]
    %v1765 = vld [vmem:[#allocation16 + $0x78] sm:$0xff]
    %v1766 = vld [vmem:[#allocation16 + $0x80] sm:$0xff]
    %v1767 = vld [vmem:[#allocation16 + $0x88] sm:$0xff]
    %v1768 = vld [vmem:[#allocation16 + $0x90] sm:$0xff]
    %v1769 = vld [vmem:[#allocation16 + $0x98] sm:$0xff]
    %v1770 = vld [vmem:[#allocation16 + $0xa0] sm:$0xff]
    %v1771 = vld [vmem:[#allocation16 + $0xa8] sm:$0xff]
    %v1772 = vld [vmem:[#allocation16 + $0xb0] sm:$0xff]
    %v1773 = vld [vmem:[#allocation16 + $0xb8] sm:$0xff]
    %v1774 = vld [vmem:[#allocation16 + $0xc0] sm:$0xff]
    %v1775 = vld [vmem:[#allocation16 + $0xc8] sm:$0xff]
    %v1776 = vld [vmem:[#allocation16 + $0xd0] sm:$0xff]
    %v1777 = vld [vmem:[#allocation16 + $0xd8] sm:$0xff]
    %v1778 = vld [vmem:[#allocation16 + $0xe0] sm:$0xff]
    %v1779 = vld [vmem:[#allocation16 + $0xe8] sm:$0xff]
    %v1780 = vld [vmem:[#allocation16 + $0xf0] sm:$0xff]
    %v1781 = vld [vmem:[#allocation16 + $0xf8] sm:$0xff]
    %v1782 = vld [vmem:[#allocation16 + $0x100] sm:$0xff]
    %v1783 = vld [vmem:[#allocation16 + $0x108] sm:$0xff]
    %v1784 = vld [vmem:[#allocation16 + $0x110] sm:$0xff]
    %v1785 = vld [vmem:[#allocation16 + $0x118] sm:$0xff]
    %v1786 = vld [vmem:[#allocation16 + $0x120] sm:$0xff]
    %v1787 = vld [vmem:[#allocation16 + $0x128] sm:$0xff]
    %v1788 = vld [vmem:[#allocation16 + $0x130] sm:$0xff]
    %v1789 = vld [vmem:[#allocation16 + $0x138] sm:$0xff]
    %v1790 = vld [vmem:[#allocation16 + $0x140] sm:$0xff]
    %v1791 = vld [vmem:[#allocation16 + $0x148] sm:$0xff]
    %v1792 = vld [vmem:[#allocation16 + $0x150] sm:$0xff]
    %v1793 = vld [vmem:[#allocation16 + $0x158] sm:$0xff]
    %v1794 = vld [vmem:[#allocation16 + $0x160] sm:$0xff]
    %v1795 = vld [vmem:[#allocation16 + $0x168] sm:$0xff]
    %v1796 = vld [vmem:[#allocation16 + $0x170] sm:$0xff]
    %v1797 = vld [vmem:[#allocation16 + $0x178] sm:$0xff]
    %v1798 = vld [vmem:[#allocation16 + $0x180] sm:$0xff]
    %v1799 = vld [vmem:[#allocation16 + $0x188] sm:$0xff]
    %v1800 = vld [vmem:[#allocation16 + $0x190] sm:$0xff]
    %v1801 = vld [vmem:[#allocation16 + $0x198] sm:$0xff]
    %v1802 = vld [vmem:[#allocation16 + $0x1a0] sm:$0xff]
    %v1803 = vld [vmem:[#allocation16 + $0x1a8] sm:$0xff]
    %v1804 = vld [vmem:[#allocation16 + $0x1b0] sm:$0xff]
    %v1805 = vld [vmem:[#allocation16 + $0x1b8] sm:$0xff]
    %v1806 = vld [vmem:[#allocation16 + $0x1c0] sm:$0xff]
    %v1807 = vld [vmem:[#allocation16 + $0x1c8] sm:$0xff]
    %v1808 = vld [vmem:[#allocation16 + $0x1d0] sm:$0xff]
    %v1809 = vld [vmem:[#allocation16 + $0x1d8] sm:$0xff]
    %v1810 = vld [vmem:[#allocation16 + $0x1e0] sm:$0xff]
    %v1811 = vld [vmem:[#allocation16 + $0x1e8] sm:$0xff]
    %v1812 = vld [vmem:[#allocation16 + $0x1f0] sm:$0xff]
    %v1813 = vld [vmem:[#allocation16 + $0x1f8] sm:$0xff]
    %1814 = vmatprep.subr.mxu0 %v1751
    %1815 = vmatpush1.msra.mxu0 %v1750
    %1816 = vmatprep.subr.mxu0 %v1755
    %1817 = vmatpush1.msra.mxu0 %v1754
    %1818 = vmatprep.subr.mxu0 %v1759
    %1819 = vmatpush1.msra.mxu0 %v1758
    %1820 = vmatprep.subr.mxu0 %v1763
    %1821 = vmatpush1.msra.mxu0 %v1762
    %1822 = vmatprep.subr.mxu0 %v1767
    %1823 = vmatpush1.msra.mxu0 %v1766
    %1824 = vmatprep.subr.mxu0 %v1771
    %1825 = vmatpush1.msra.mxu0 %v1770
    %1826 = vmatprep.subr.mxu0 %v1775
    %1827 = vmatpush1.msra.mxu0 %v1774
    %1828 = vmatprep.subr.mxu0 %v1779
    %1829 = vmatpush1.msra.mxu0 %v1778
    %1830 = vmatprep.subr.mxu0 %v1783
    %1831 = vmatpush1.msra.mxu0 %v1782
    %1832 = vmatprep.subr.mxu0 %v1787
    %1833 = vmatpush1.msra.mxu0 %v1786
    %1834 = vmatprep.subr.mxu0 %v1791
    %1835 = vmatpush1.msra.mxu0 %v1790
    %1836 = vmatprep.subr.mxu0 %v1795
    %1837 = vmatpush1.msra.mxu0 %v1794
    %1838 = vmatprep.subr.mxu0 %v1799
    %1839 = vmatpush1.msra.mxu0 %v1798
    %1840 = vmatprep.subr.mxu0 %v1803
    %1841 = vmatpush1.msra.mxu0 %v1802
    %1842 = vmatprep.subr.mxu0 %v1807
    %1843 = vmatpush1.msra.mxu0 %v1806
    %1844 = vmatprep.subr.mxu0 %v1811
    %1845 = vmatpush1.msra.mxu0 %v1810
    %1846 = vmatprep.subr.mxu0 0.0
    %1847 = vmatpush1.msra.mxu0 0.0
    %1848 = vmatprep.subr.mxu0 0.0
    %1849 = vmatpush1.msra.mxu0 0.0
    %1850 = vmatprep.subr.mxu0 0.0
    %1851 = vmatpush1.msra.mxu0 0.0
    %1852 = vmatprep.subr.mxu0 0.0
    %1853 = vmatpush1.msra.mxu0 0.0
    %1854 = vmatprep.subr.mxu0 0.0
    %1855 = vmatpush1.msra.mxu0 0.0
    %1856 = vmatprep.subr.mxu0 0.0
    %1857 = vmatpush1.msra.mxu0 0.0
    %1858 = vmatprep.subr.mxu0 0.0
    %1859 = vmatpush1.msra.mxu0 0.0
    %1860 = vmatprep.subr.mxu0 0.0
    %1861 = vmatpush1.msra.mxu0 0.0
    %1862 = vmatprep.subr.mxu0 0.0
    %1863 = vmatpush1.msra.mxu0 0.0
    %1864 = vmatprep.subr.mxu0 0.0
    %1865 = vmatpush1.msra.mxu0 0.0
    %1866 = vmatprep.subr.mxu0 0.0
    %1867 = vmatpush1.msra.mxu0 0.0
    %1868 = vmatprep.subr.mxu0 0.0
    %1869 = vmatpush1.msra.mxu0 0.0
    %1870 = vmatprep.subr.mxu0 0.0
    %1871 = vmatpush1.msra.mxu0 0.0
    %1872 = vmatprep.subr.mxu0 0.0
    %1873 = vmatpush1.msra.mxu0 0.0
    %1874 = vmatprep.subr.mxu0 0.0
    %1875 = vmatpush1.msra.mxu0 0.0
    %1876 = vmatprep.subr.mxu0 0.0
    %1877 = vmatpush1.msra.mxu0 0.0
    %1878 = vmatprep.mubr.f32.mxu0 0.0
    %1879 = vmatmul.mubr.f32.gmra.mrb[0].mxu0 %v1749
    %v1880 = vpop.f32.mrb[0].mxu0
    %v1881 = vadd.f32 0.0, %v1880
    %v1882 = vpop.f32.mrb[0].mxu0
    %v1883 = vadd.f32 0.0, %v1882
    %1884 = vdwg.mxu0
    %1885 = vmatprep.subr.mxu0 %v1753
    %1886 = vmatpush1.msra.mxu0 %v1752
    %1887 = vmatprep.subr.mxu0 %v1757
    %1888 = vmatpush1.msra.mxu0 %v1756
    %1889 = vmatprep.subr.mxu0 %v1761
    %1890 = vmatpush1.msra.mxu0 %v1760
    %1891 = vmatprep.subr.mxu0 %v1765
    %1892 = vmatpush1.msra.mxu0 %v1764
    %1893 = vmatprep.subr.mxu0 %v1769
    %1894 = vmatpush1.msra.mxu0 %v1768
    %1895 = vmatprep.subr.mxu0 %v1773
    %1896 = vmatpush1.msra.mxu0 %v1772
    %1897 = vmatprep.subr.mxu0 %v1777
    %1898 = vmatpush1.msra.mxu0 %v1776
    %1899 = vmatprep.subr.mxu0 %v1781
    %1900 = vmatpush1.msra.mxu0 %v1780
    %1901 = vmatprep.subr.mxu0 %v1785
    %1902 = vmatpush1.msra.mxu0 %v1784
    %1903 = vmatprep.subr.mxu0 %v1789
    %1904 = vmatpush1.msra.mxu0 %v1788
    %1905 = vmatprep.subr.mxu0 %v1793
    %1906 = vmatpush1.msra.mxu0 %v1792
    %1907 = vmatprep.subr.mxu0 %v1797
    %1908 = vmatpush1.msra.mxu0 %v1796
    %1909 = vmatprep.subr.mxu0 %v1801
    %1910 = vmatpush1.msra.mxu0 %v1800
    %1911 = vmatprep.subr.mxu0 %v1805
    %1912 = vmatpush1.msra.mxu0 %v1804
    %1913 = vmatprep.subr.mxu0 %v1809
    %1914 = vmatpush1.msra.mxu0 %v1808
    %1915 = vmatprep.subr.mxu0 %v1813
    %1916 = vmatpush1.msra.mxu0 %v1812
    %1917 = vmatprep.subr.mxu0 0.0
    %1918 = vmatpush1.msra.mxu0 0.0
    %1919 = vmatprep.subr.mxu0 0.0
    %1920 = vmatpush1.msra.mxu0 0.0
    %1921 = vmatprep.subr.mxu0 0.0
    %1922 = vmatpush1.msra.mxu0 0.0
    %1923 = vmatprep.subr.mxu0 0.0
    %1924 = vmatpush1.msra.mxu0 0.0
    %1925 = vmatprep.subr.mxu0 0.0
    %1926 = vmatpush1.msra.mxu0 0.0
    %1927 = vmatprep.subr.mxu0 0.0
    %1928 = vmatpush1.msra.mxu0 0.0
    %1929 = vmatprep.subr.mxu0 0.0
    %1930 = vmatpush1.msra.mxu0 0.0
    %1931 = vmatprep.subr.mxu0 0.0
    %1932 = vmatpush1.msra.mxu0 0.0
    %1933 = vmatprep.subr.mxu0 0.0
    %1934 = vmatpush1.msra.mxu0 0.0
    %1935 = vmatprep.subr.mxu0 0.0
    %1936 = vmatpush1.msra.mxu0 0.0
    %1937 = vmatprep.subr.mxu0 0.0
    %1938 = vmatpush1.msra.mxu0 0.0
    %1939 = vmatprep.subr.mxu0 0.0
    %1940 = vmatpush1.msra.mxu0 0.0
    %1941 = vmatprep.subr.mxu0 0.0
    %1942 = vmatpush1.msra.mxu0 0.0
    %1943 = vmatprep.subr.mxu0 0.0
    %1944 = vmatpush1.msra.mxu0 0.0
    %1945 = vmatprep.subr.mxu0 0.0
    %1946 = vmatpush1.msra.mxu0 0.0
    %1947 = vmatprep.subr.mxu0 0.0
    %1948 = vmatpush1.msra.mxu0 0.0
    %1949 = vmatprep.mubr.f32.mxu0 0.0
    %1950 = vmatmul.mubr.f32.gmra.mrb[0].mxu0 %v1749
    %v1951 = vpop.f32.mrb[0].mxu0
    %v1952 = vadd.f32 0.0, %v1951
    %v1953 = vpop.f32.mrb[0].mxu0
    %v1954 = vadd.f32 0.0, %v1953
    %1955 = vdwg.mxu0
    %v1956 = vadd.f32 %v1745, %v1881
    %v1957 = vadd.f32 %v1746, %v1883
    %v1958 = vadd.f32 %v1747, %v1952
    %v1959 = vadd.f32 %v1748, %v1954
    %v1960 = vld [vmem:[#allocation7] sm:$0xff]
    %v1961 = vxor.u32 %v1956, 2147483648
    %v1962 = vmul.f32 %v1961, 1.442695
    %v1963 = vpow.pop %v1962
    %v1964 = vadd.f32 %v1963, 1.0
    %v1965 = vrcp.pop %v1964
    %v1966 = vmul.f32 1.0, %v1965
    %v1967 = vxor.u32 %v1957, 2147483648
    %v1968 = vmul.f32 %v1967, 1.442695
    %v1969 = vpow.pop %v1968
    %v1970 = vadd.f32 %v1969, 1.0
    %v1971 = vrcp.pop %v1970
    %v1972 = vmul.f32 1.0, %v1971
    %v1973 = vtanh.pop %v1958
    %v1974 = vxor.u32 %v1959, 2147483648
    %v1975 = vmul.f32 %v1974, 1.442695
    %v1976 = vpow.pop %v1975
    %v1977 = vadd.f32 %v1976, 1.0
    %v1978 = vrcp.pop %v1977
    %v1979 = vmul.f32 1.0, %v1978
    %v1980 = vmul.f32 %v1972, %v1960
    %v1981 = vmul.f32 %v1966, %v1973
    %v1982 = vadd.f32 %v1980, %v1981
    %v1983 = vtanh.pop %v1982
    %v1984 = vmul.f32 %v1979, %v1983
    %1985 = vst [vmem:[#allocation6] sm:$0xff] %v1984
    %1986 = vst [vmem:[#allocation7] sm:$0xff] %v1982
    %s1987 = scalar_lea.vmem [#allocation3], 40
    %1988 = vst [vmem:[%s1987] sm:$0xff] %v1984
    %s1989 = smul.u32 6, 4
    %s1990 = smul.addr %s1989, 8
    %s1991 = scalar_lea.vmem [#allocation2], %s1990
    %v1992 = vld [vmem:[%s1991] sm:$0xff]
    %v1993 = vld [vmem:[%s1991 + $0x8] sm:$0xff]
    %v1994 = vld [vmem:[%s1991 + $0x10] sm:$0xff]
    %v1995 = vld [vmem:[%s1991 + $0x18] sm:$0xff]
    %v1996 = vld [vmem:[#allocation6] sm:$0xff]
    %v1997 = vld [vmem:[#allocation16] sm:$0xff]
    %v1998 = vld [vmem:[#allocation16 + $0x8] sm:$0xff]
    %v1999 = vld [vmem:[#allocation16 + $0x10] sm:$0xff]
    %v2000 = vld [vmem:[#allocation16 + $0x18] sm:$0xff]
    %v2001 = vld [vmem:[#allocation16 + $0x20] sm:$0xff]
    %v2002 = vld [vmem:[#allocation16 + $0x28] sm:$0xff]
    %v2003 = vld [vmem:[#allocation16 + $0x30] sm:$0xff]
    %v2004 = vld [vmem:[#allocation16 + $0x38] sm:$0xff]
    %v2005 = vld [vmem:[#allocation16 + $0x40] sm:$0xff]
    %v2006 = vld [vmem:[#allocation16 + $0x48] sm:$0xff]
    %v2007 = vld [vmem:[#allocation16 + $0x50] sm:$0xff]
    %v2008 = vld [vmem:[#allocation16 + $0x58] sm:$0xff]
    %v2009 = vld [vmem:[#allocation16 + $0x60] sm:$0xff]
    %v2010 = vld [vmem:[#allocation16 + $0x68] sm:$0xff]
    %v2011 = vld [vmem:[#allocation16 + $0x70] sm:$0xff]
    %v2012 = vld [vmem:[#allocation16 + $0x78] sm:$0xff]
    %v2013 = vld [vmem:[#allocation16 + $0x80] sm:$0xff]
    %v2014 = vld [vmem:[#allocation16 + $0x88] sm:$0xff]
    %v2015 = vld [vmem:[#allocation16 + $0x90] sm:$0xff]
    %v2016 = vld [vmem:[#allocation16 + $0x98] sm:$0xff]
    %v2017 = vld [vmem:[#allocation16 + $0xa0] sm:$0xff]
    %v2018 = vld [vmem:[#allocation16 + $0xa8] sm:$0xff]
    %v2019 = vld [vmem:[#allocation16 + $0xb0] sm:$0xff]
    %v2020 = vld [vmem:[#allocation16 + $0xb8] sm:$0xff]
    %v2021 = vld [vmem:[#allocation16 + $0xc0] sm:$0xff]
    %v2022 = vld [vmem:[#allocation16 + $0xc8] sm:$0xff]
    %v2023 = vld [vmem:[#allocation16 + $0xd0] sm:$0xff]
    %v2024 = vld [vmem:[#allocation16 + $0xd8] sm:$0xff]
    %v2025 = vld [vmem:[#allocation16 + $0xe0] sm:$0xff]
    %v2026 = vld [vmem:[#allocation16 + $0xe8] sm:$0xff]
    %v2027 = vld [vmem:[#allocation16 + $0xf0] sm:$0xff]
    %v2028 = vld [vmem:[#allocation16 + $0xf8] sm:$0xff]
    %v2029 = vld [vmem:[#allocation16 + $0x100] sm:$0xff]
    %v2030 = vld [vmem:[#allocation16 + $0x108] sm:$0xff]
    %v2031 = vld [vmem:[#allocation16 + $0x110] sm:$0xff]
    %v2032 = vld [vmem:[#allocation16 + $0x118] sm:$0xff]
    %v2033 = vld [vmem:[#allocation16 + $0x120] sm:$0xff]
    %v2034 = vld [vmem:[#allocation16 + $0x128] sm:$0xff]
    %v2035 = vld [vmem:[#allocation16 + $0x130] sm:$0xff]
    %v2036 = vld [vmem:[#allocation16 + $0x138] sm:$0xff]
    %v2037 = vld [vmem:[#allocation16 + $0x140] sm:$0xff]
    %v2038 = vld [vmem:[#allocation16 + $0x148] sm:$0xff]
    %v2039 = vld [vmem:[#allocation16 + $0x150] sm:$0xff]
    %v2040 = vld [vmem:[#allocation16 + $0x158] sm:$0xff]
    %v2041 = vld [vmem:[#allocation16 + $0x160] sm:$0xff]
    %v2042 = vld [vmem:[#allocation16 + $0x168] sm:$0xff]
    %v2043 = vld [vmem:[#allocation16 + $0x170] sm:$0xff]
    %v2044 = vld [vmem:[#allocation16 + $0x178] sm:$0xff]
    %v2045 = vld [vmem:[#allocation16 + $0x180] sm:$0xff]
    %v2046 = vld [vmem:[#allocation16 + $0x188] sm:$0xff]
    %v2047 = vld [vmem:[#allocation16 + $0x190] sm:$0xff]
    %v2048 = vld [vmem:[#allocation16 + $0x198] sm:$0xff]
    %v2049 = vld [vmem:[#allocation16 + $0x1a0] sm:$0xff]
    %v2050 = vld [vmem:[#allocation16 + $0x1a8] sm:$0xff]
    %v2051 = vld [vmem:[#allocation16 + $0x1b0] sm:$0xff]
    %v2052 = vld [vmem:[#allocation16 + $0x1b8] sm:$0xff]
    %v2053 = vld [vmem:[#allocation16 + $0x1c0] sm:$0xff]
    %v2054 = vld [vmem:[#allocation16 + $0x1c8] sm:$0xff]
    %v2055 = vld [vmem:[#allocation16 + $0x1d0] sm:$0xff]
    %v2056 = vld [vmem:[#allocation16 + $0x1d8] sm:$0xff]
    %v2057 = vld [vmem:[#allocation16 + $0x1e0] sm:$0xff]
    %v2058 = vld [vmem:[#allocation16 + $0x1e8] sm:$0xff]
    %v2059 = vld [vmem:[#allocation16 + $0x1f0] sm:$0xff]
    %v2060 = vld [vmem:[#allocation16 + $0x1f8] sm:$0xff]
    %2061 = vmatprep.subr.mxu0 %v1998
    %2062 = vmatpush1.msra.mxu0 %v1997
    %2063 = vmatprep.subr.mxu0 %v2002
    %2064 = vmatpush1.msra.mxu0 %v2001
    %2065 = vmatprep.subr.mxu0 %v2006
    %2066 = vmatpush1.msra.mxu0 %v2005
    %2067 = vmatprep.subr.mxu0 %v2010
    %2068 = vmatpush1.msra.mxu0 %v2009
    %2069 = vmatprep.subr.mxu0 %v2014
    %2070 = vmatpush1.msra.mxu0 %v2013
    %2071 = vmatprep.subr.mxu0 %v2018
    %2072 = vmatpush1.msra.mxu0 %v2017
    %2073 = vmatprep.subr.mxu0 %v2022
    %2074 = vmatpush1.msra.mxu0 %v2021
    %2075 = vmatprep.subr.mxu0 %v2026
    %2076 = vmatpush1.msra.mxu0 %v2025
    %2077 = vmatprep.subr.mxu0 %v2030
    %2078 = vmatpush1.msra.mxu0 %v2029
    %2079 = vmatprep.subr.mxu0 %v2034
    %2080 = vmatpush1.msra.mxu0 %v2033
    %2081 = vmatprep.subr.mxu0 %v2038
    %2082 = vmatpush1.msra.mxu0 %v2037
    %2083 = vmatprep.subr.mxu0 %v2042
    %2084 = vmatpush1.msra.mxu0 %v2041
    %2085 = vmatprep.subr.mxu0 %v2046
    %2086 = vmatpush1.msra.mxu0 %v2045
    %2087 = vmatprep.subr.mxu0 %v2050
    %2088 = vmatpush1.msra.mxu0 %v2049
    %2089 = vmatprep.subr.mxu0 %v2054
    %2090 = vmatpush1.msra.mxu0 %v2053
    %2091 = vmatprep.subr.mxu0 %v2058
    %2092 = vmatpush1.msra.mxu0 %v2057
    %2093 = vmatprep.subr.mxu0 0.0
    %2094 = vmatpush1.msra.mxu0 0.0
    %2095 = vmatprep.subr.mxu0 0.0
    %2096 = vmatpush1.msra.mxu0 0.0
    %2097 = vmatprep.subr.mxu0 0.0
    %2098 = vmatpush1.msra.mxu0 0.0
    %2099 = vmatprep.subr.mxu0 0.0
    %2100 = vmatpush1.msra.mxu0 0.0
    %2101 = vmatprep.subr.mxu0 0.0
    %2102 = vmatpush1.msra.mxu0 0.0
    %2103 = vmatprep.subr.mxu0 0.0
    %2104 = vmatpush1.msra.mxu0 0.0
    %2105 = vmatprep.subr.mxu0 0.0
    %2106 = vmatpush1.msra.mxu0 0.0
    %2107 = vmatprep.subr.mxu0 0.0
    %2108 = vmatpush1.msra.mxu0 0.0
    %2109 = vmatprep.subr.mxu0 0.0
    %2110 = vmatpush1.msra.mxu0 0.0
    %2111 = vmatprep.subr.mxu0 0.0
    %2112 = vmatpush1.msra.mxu0 0.0
    %2113 = vmatprep.subr.mxu0 0.0
    %2114 = vmatpush1.msra.mxu0 0.0
    %2115 = vmatprep.subr.mxu0 0.0
    %2116 = vmatpush1.msra.mxu0 0.0
    %2117 = vmatprep.subr.mxu0 0.0
    %2118 = vmatpush1.msra.mxu0 0.0
    %2119 = vmatprep.subr.mxu0 0.0
    %2120 = vmatpush1.msra.mxu0 0.0
    %2121 = vmatprep.subr.mxu0 0.0
    %2122 = vmatpush1.msra.mxu0 0.0
    %2123 = vmatprep.subr.mxu0 0.0
    %2124 = vmatpush1.msra.mxu0 0.0
    %2125 = vmatprep.mubr.f32.mxu0 0.0
    %2126 = vmatmul.mubr.f32.gmra.mrb[0].mxu0 %v1996
    %v2127 = vpop.f32.mrb[0].mxu0
    %v2128 = vadd.f32 0.0, %v2127
    %v2129 = vpop.f32.mrb[0].mxu0
    %v2130 = vadd.f32 0.0, %v2129
    %2131 = vdwg.mxu0
    %2132 = vmatprep.subr.mxu0 %v2000
    %2133 = vmatpush1.msra.mxu0 %v1999
    %2134 = vmatprep.subr.mxu0 %v2004
    %2135 = vmatpush1.msra.mxu0 %v2003
    %2136 = vmatprep.subr.mxu0 %v2008
    %2137 = vmatpush1.msra.mxu0 %v2007
    %2138 = vmatprep.subr.mxu0 %v2012
    %2139 = vmatpush1.msra.mxu0 %v2011
    %2140 = vmatprep.subr.mxu0 %v2016
    %2141 = vmatpush1.msra.mxu0 %v2015
    %2142 = vmatprep.subr.mxu0 %v2020
    %2143 = vmatpush1.msra.mxu0 %v2019
    %2144 = vmatprep.subr.mxu0 %v2024
    %2145 = vmatpush1.msra.mxu0 %v2023
    %2146 = vmatprep.subr.mxu0 %v2028
    %2147 = vmatpush1.msra.mxu0 %v2027
    %2148 = vmatprep.subr.mxu0 %v2032
    %2149 = vmatpush1.msra.mxu0 %v2031
    %2150 = vmatprep.subr.mxu0 %v2036
    %2151 = vmatpush1.msra.mxu0 %v2035
    %2152 = vmatprep.subr.mxu0 %v2040
    %2153 = vmatpush1.msra.mxu0 %v2039
    %2154 = vmatprep.subr.mxu0 %v2044
    %2155 = vmatpush1.msra.mxu0 %v2043
    %2156 = vmatprep.subr.mxu0 %v2048
    %2157 = vmatpush1.msra.mxu0 %v2047
    %2158 = vmatprep.subr.mxu0 %v2052
    %2159 = vmatpush1.msra.mxu0 %v2051
    %2160 = vmatprep.subr.mxu0 %v2056
    %2161 = vmatpush1.msra.mxu0 %v2055
    %2162 = vmatprep.subr.mxu0 %v2060
    %2163 = vmatpush1.msra.mxu0 %v2059
    %2164 = vmatprep.subr.mxu0 0.0
    %2165 = vmatpush1.msra.mxu0 0.0
    %2166 = vmatprep.subr.mxu0 0.0
    %2167 = vmatpush1.msra.mxu0 0.0
    %2168 = vmatprep.subr.mxu0 0.0
    %2169 = vmatpush1.msra.mxu0 0.0
    %2170 = vmatprep.subr.mxu0 0.0
    %2171 = vmatpush1.msra.mxu0 0.0
    %2172 = vmatprep.subr.mxu0 0.0
    %2173 = vmatpush1.msra.mxu0 0.0
    %2174 = vmatprep.subr.mxu0 0.0
    %2175 = vmatpush1.msra.mxu0 0.0
    %2176 = vmatprep.subr.mxu0 0.0
    %2177 = vmatpush1.msra.mxu0 0.0
    %2178 = vmatprep.subr.mxu0 0.0
    %2179 = vmatpush1.msra.mxu0 0.0
    %2180 = vmatprep.subr.mxu0 0.0
    %2181 = vmatpush1.msra.mxu0 0.0
    %2182 = vmatprep.subr.mxu0 0.0
    %2183 = vmatpush1.msra.mxu0 0.0
    %2184 = vmatprep.subr.mxu0 0.0
    %2185 = vmatpush1.msra.mxu0 0.0
    %2186 = vmatprep.subr.mxu0 0.0
    %2187 = vmatpush1.msra.mxu0 0.0
    %2188 = vmatprep.subr.mxu0 0.0
    %2189 = vmatpush1.msra.mxu0 0.0
    %2190 = vmatprep.subr.mxu0 0.0
    %2191 = vmatpush1.msra.mxu0 0.0
    %2192 = vmatprep.subr.mxu0 0.0
    %2193 = vmatpush1.msra.mxu0 0.0
    %2194 = vmatprep.subr.mxu0 0.0
    %2195 = vmatpush1.msra.mxu0 0.0
    %2196 = vmatprep.mubr.f32.mxu0 0.0
    %2197 = vmatmul.mubr.f32.gmra.mrb[0].mxu0 %v1996
    %v2198 = vpop.f32.mrb[0].mxu0
    %v2199 = vadd.f32 0.0, %v2198
    %v2200 = vpop.f32.mrb[0].mxu0
    %v2201 = vadd.f32 0.0, %v2200
    %2202 = vdwg.mxu0
    %v2203 = vadd.f32 %v1992, %v2128
    %v2204 = vadd.f32 %v1993, %v2130
    %v2205 = vadd.f32 %v1994, %v2199
    %v2206 = vadd.f32 %v1995, %v2201
    %v2207 = vld [vmem:[#allocation7] sm:$0xff]
    %v2208 = vxor.u32 %v2203, 2147483648
    %v2209 = vmul.f32 %v2208, 1.442695
    %v2210 = vpow.pop %v2209
    %v2211 = vadd.f32 %v2210, 1.0
    %v2212 = vrcp.pop %v2211
    %v2213 = vmul.f32 1.0, %v2212
    %v2214 = vxor.u32 %v2204, 2147483648
    %v2215 = vmul.f32 %v2214, 1.442695
    %v2216 = vpow.pop %v2215
    %v2217 = vadd.f32 %v2216, 1.0
    %v2218 = vrcp.pop %v2217
    %v2219 = vmul.f32 1.0, %v2218
    %v2220 = vtanh.pop %v2205
    %v2221 = vxor.u32 %v2206, 2147483648
    %v2222 = vmul.f32 %v2221, 1.442695
    %v2223 = vpow.pop %v2222
    %v2224 = vadd.f32 %v2223, 1.0
    %v2225 = vrcp.pop %v2224
    %v2226 = vmul.f32 1.0, %v2225
    %v2227 = vmul.f32 %v2219, %v2207
    %v2228 = vmul.f32 %v2213, %v2220
    %v2229 = vadd.f32 %v2227, %v2228
    %v2230 = vtanh.pop %v2229
    %v2231 = vmul.f32 %v2226, %v2230
    %2232 = vst [vmem:[#allocation6] sm:$0xff] %v2231
    %2233 = vst [vmem:[#allocation7] sm:$0xff] %v2229
    %s2234 = scalar_lea.vmem [#allocation3], 48
    %2235 = vst [vmem:[%s2234] sm:$0xff] %v2231
    %s2236 = smul.u32 7, 4
    %s2237 = smul.addr %s2236, 8
    %s2238 = scalar_lea.vmem [#allocation2], %s2237
    %v2239 = vld [vmem:[%s2238] sm:$0xff]
    %v2240 = vld [vmem:[%s2238 + $0x8] sm:$0xff]
    %v2241 = vld [vmem:[%s2238 + $0x10] sm:$0xff]
    %v2242 = vld [vmem:[%s2238 + $0x18] sm:$0xff]
    %v2243 = vld [vmem:[#allocation6] sm:$0xff]
    %v2244 = vld [vmem:[#allocation16] sm:$0xff]
    %v2245 = vld [vmem:[#allocation16 + $0x8] sm:$0xff]
    %v2246 = vld [vmem:[#allocation16 + $0x10] sm:$0xff]
    %v2247 = vld [vmem:[#allocation16 + $0x18] sm:$0xff]
    %v2248 = vld [vmem:[#allocation16 + $0x20] sm:$0xff]
    %v2249 = vld [vmem:[#allocation16 + $0x28] sm:$0xff]
    %v2250 = vld [vmem:[#allocation16 + $0x30] sm:$0xff]
    %v2251 = vld [vmem:[#allocation16 + $0x38] sm:$0xff]
    %v2252 = vld [vmem:[#allocation16 + $0x40] sm:$0xff]
    %v2253 = vld [vmem:[#allocation16 + $0x48] sm:$0xff]
    %v2254 = vld [vmem:[#allocation16 + $0x50] sm:$0xff]
    %v2255 = vld [vmem:[#allocation16 + $0x58] sm:$0xff]
    %v2256 = vld [vmem:[#allocation16 + $0x60] sm:$0xff]
    %v2257 = vld [vmem:[#allocation16 + $0x68] sm:$0xff]
    %v2258 = vld [vmem:[#allocation16 + $0x70] sm:$0xff]
    %v2259 = vld [vmem:[#allocation16 + $0x78] sm:$0xff]
    %v2260 = vld [vmem:[#allocation16 + $0x80] sm:$0xff]
    %v2261 = vld [vmem:[#allocation16 + $0x88] sm:$0xff]
    %v2262 = vld [vmem:[#allocation16 + $0x90] sm:$0xff]
    %v2263 = vld [vmem:[#allocation16 + $0x98] sm:$0xff]
    %v2264 = vld [vmem:[#allocation16 + $0xa0] sm:$0xff]
    %v2265 = vld [vmem:[#allocation16 + $0xa8] sm:$0xff]
    %v2266 = vld [vmem:[#allocation16 + $0xb0] sm:$0xff]
    %v2267 = vld [vmem:[#allocation16 + $0xb8] sm:$0xff]
    %v2268 = vld [vmem:[#allocation16 + $0xc0] sm:$0xff]
    %v2269 = vld [vmem:[#allocation16 + $0xc8] sm:$0xff]
    %v2270 = vld [vmem:[#allocation16 + $0xd0] sm:$0xff]
    %v2271 = vld [vmem:[#allocation16 + $0xd8] sm:$0xff]
    %v2272 = vld [vmem:[#allocation16 + $0xe0] sm:$0xff]
    %v2273 = vld [vmem:[#allocation16 + $0xe8] sm:$0xff]
    %v2274 = vld [vmem:[#allocation16 + $0xf0] sm:$0xff]
    %v2275 = vld [vmem:[#allocation16 + $0xf8] sm:$0xff]
    %v2276 = vld [vmem:[#allocation16 + $0x100] sm:$0xff]
    %v2277 = vld [vmem:[#allocation16 + $0x108] sm:$0xff]
    %v2278 = vld [vmem:[#allocation16 + $0x110] sm:$0xff]
    %v2279 = vld [vmem:[#allocation16 + $0x118] sm:$0xff]
    %v2280 = vld [vmem:[#allocation16 + $0x120] sm:$0xff]
    %v2281 = vld [vmem:[#allocation16 + $0x128] sm:$0xff]
    %v2282 = vld [vmem:[#allocation16 + $0x130] sm:$0xff]
    %v2283 = vld [vmem:[#allocation16 + $0x138] sm:$0xff]
    %v2284 = vld [vmem:[#allocation16 + $0x140] sm:$0xff]
    %v2285 = vld [vmem:[#allocation16 + $0x148] sm:$0xff]
    %v2286 = vld [vmem:[#allocation16 + $0x150] sm:$0xff]
    %v2287 = vld [vmem:[#allocation16 + $0x158] sm:$0xff]
    %v2288 = vld [vmem:[#allocation16 + $0x160] sm:$0xff]
    %v2289 = vld [vmem:[#allocation16 + $0x168] sm:$0xff]
    %v2290 = vld [vmem:[#allocation16 + $0x170] sm:$0xff]
    %v2291 = vld [vmem:[#allocation16 + $0x178] sm:$0xff]
    %v2292 = vld [vmem:[#allocation16 + $0x180] sm:$0xff]
    %v2293 = vld [vmem:[#allocation16 + $0x188] sm:$0xff]
    %v2294 = vld [vmem:[#allocation16 + $0x190] sm:$0xff]
    %v2295 = vld [vmem:[#allocation16 + $0x198] sm:$0xff]
    %v2296 = vld [vmem:[#allocation16 + $0x1a0] sm:$0xff]
    %v2297 = vld [vmem:[#allocation16 + $0x1a8] sm:$0xff]
    %v2298 = vld [vmem:[#allocation16 + $0x1b0] sm:$0xff]
    %v2299 = vld [vmem:[#allocation16 + $0x1b8] sm:$0xff]
    %v2300 = vld [vmem:[#allocation16 + $0x1c0] sm:$0xff]
    %v2301 = vld [vmem:[#allocation16 + $0x1c8] sm:$0xff]
    %v2302 = vld [vmem:[#allocation16 + $0x1d0] sm:$0xff]
    %v2303 = vld [vmem:[#allocation16 + $0x1d8] sm:$0xff]
    %v2304 = vld [vmem:[#allocation16 + $0x1e0] sm:$0xff]
    %v2305 = vld [vmem:[#allocation16 + $0x1e8] sm:$0xff]
    %v2306 = vld [vmem:[#allocation16 + $0x1f0] sm:$0xff]
    %v2307 = vld [vmem:[#allocation16 + $0x1f8] sm:$0xff]
    %2308 = vmatprep.subr.mxu0 %v2245
    %2309 = vmatpush1.msra.mxu0 %v2244
    %2310 = vmatprep.subr.mxu0 %v2249
    %2311 = vmatpush1.msra.mxu0 %v2248
    %2312 = vmatprep.subr.mxu0 %v2253
    %2313 = vmatpush1.msra.mxu0 %v2252
    %2314 = vmatprep.subr.mxu0 %v2257
    %2315 = vmatpush1.msra.mxu0 %v2256
    %2316 = vmatprep.subr.mxu0 %v2261
    %2317 = vmatpush1.msra.mxu0 %v2260
    %2318 = vmatprep.subr.mxu0 %v2265
    %2319 = vmatpush1.msra.mxu0 %v2264
    %2320 = vmatprep.subr.mxu0 %v2269
    %2321 = vmatpush1.msra.mxu0 %v2268
    %2322 = vmatprep.subr.mxu0 %v2273
    %2323 = vmatpush1.msra.mxu0 %v2272
    %2324 = vmatprep.subr.mxu0 %v2277
    %2325 = vmatpush1.msra.mxu0 %v2276
    %2326 = vmatprep.subr.mxu0 %v2281
    %2327 = vmatpush1.msra.mxu0 %v2280
    %2328 = vmatprep.subr.mxu0 %v2285
    %2329 = vmatpush1.msra.mxu0 %v2284
    %2330 = vmatprep.subr.mxu0 %v2289
    %2331 = vmatpush1.msra.mxu0 %v2288
    %2332 = vmatprep.subr.mxu0 %v2293
    %2333 = vmatpush1.msra.mxu0 %v2292
    %2334 = vmatprep.subr.mxu0 %v2297
    %2335 = vmatpush1.msra.mxu0 %v2296
    %2336 = vmatprep.subr.mxu0 %v2301
    %2337 = vmatpush1.msra.mxu0 %v2300
    %2338 = vmatprep.subr.mxu0 %v2305
    %2339 = vmatpush1.msra.mxu0 %v2304
    %2340 = vmatprep.subr.mxu0 0.0
    %2341 = vmatpush1.msra.mxu0 0.0
    %2342 = vmatprep.subr.mxu0 0.0
    %2343 = vmatpush1.msra.mxu0 0.0
    %2344 = vmatprep.subr.mxu0 0.0
    %2345 = vmatpush1.msra.mxu0 0.0
    %2346 = vmatprep.subr.mxu0 0.0
    %2347 = vmatpush1.msra.mxu0 0.0
    %2348 = vmatprep.subr.mxu0 0.0
    %2349 = vmatpush1.msra.mxu0 0.0
    %2350 = vmatprep.subr.mxu0 0.0
    %2351 = vmatpush1.msra.mxu0 0.0
    %2352 = vmatprep.subr.mxu0 0.0
    %2353 = vmatpush1.msra.mxu0 0.0
    %2354 = vmatprep.subr.mxu0 0.0
    %2355 = vmatpush1.msra.mxu0 0.0
    %2356 = vmatprep.subr.mxu0 0.0
    %2357 = vmatpush1.msra.mxu0 0.0
    %2358 = vmatprep.subr.mxu0 0.0
    %2359 = vmatpush1.msra.mxu0 0.0
    %2360 = vmatprep.subr.mxu0 0.0
    %2361 = vmatpush1.msra.mxu0 0.0
    %2362 = vmatprep.subr.mxu0 0.0
    %2363 = vmatpush1.msra.mxu0 0.0
    %2364 = vmatprep.subr.mxu0 0.0
    %2365 = vmatpush1.msra.mxu0 0.0
    %2366 = vmatprep.subr.mxu0 0.0
    %2367 = vmatpush1.msra.mxu0 0.0
    %2368 = vmatprep.subr.mxu0 0.0
    %2369 = vmatpush1.msra.mxu0 0.0
    %2370 = vmatprep.subr.mxu0 0.0
    %2371 = vmatpush1.msra.mxu0 0.0
    %2372 = vmatprep.mubr.f32.mxu0 0.0
    %2373 = vmatmul.mubr.f32.gmra.mrb[0].mxu0 %v2243
    %v2374 = vpop.f32.mrb[0].mxu0
    %v2375 = vadd.f32 0.0, %v2374
    %v2376 = vpop.f32.mrb[0].mxu0
    %v2377 = vadd.f32 0.0, %v2376
    %2378 = vdwg.mxu0
    %2379 = vmatprep.subr.mxu0 %v2247
    %2380 = vmatpush1.msra.mxu0 %v2246
    %2381 = vmatprep.subr.mxu0 %v2251
    %2382 = vmatpush1.msra.mxu0 %v2250
    %2383 = vmatprep.subr.mxu0 %v2255
    %2384 = vmatpush1.msra.mxu0 %v2254
    %2385 = vmatprep.subr.mxu0 %v2259
    %2386 = vmatpush1.msra.mxu0 %v2258
    %2387 = vmatprep.subr.mxu0 %v2263
    %2388 = vmatpush1.msra.mxu0 %v2262
    %2389 = vmatprep.subr.mxu0 %v2267
    %2390 = vmatpush1.msra.mxu0 %v2266
    %2391 = vmatprep.subr.mxu0 %v2271
    %2392 = vmatpush1.msra.mxu0 %v2270
    %2393 = vmatprep.subr.mxu0 %v2275
    %2394 = vmatpush1.msra.mxu0 %v2274
    %2395 = vmatprep.subr.mxu0 %v2279
    %2396 = vmatpush1.msra.mxu0 %v2278
    %2397 = vmatprep.subr.mxu0 %v2283
    %2398 = vmatpush1.msra.mxu0 %v2282
    %2399 = vmatprep.subr.mxu0 %v2287
    %2400 = vmatpush1.msra.mxu0 %v2286
    %2401 = vmatprep.subr.mxu0 %v2291
    %2402 = vmatpush1.msra.mxu0 %v2290
    %2403 = vmatprep.subr.mxu0 %v2295
    %2404 = vmatpush1.msra.mxu0 %v2294
    %2405 = vmatprep.subr.mxu0 %v2299
    %2406 = vmatpush1.msra.mxu0 %v2298
    %2407 = vmatprep.subr.mxu0 %v2303
    %2408 = vmatpush1.msra.mxu0 %v2302
    %2409 = vmatprep.subr.mxu0 %v2307
    %2410 = vmatpush1.msra.mxu0 %v2306
    %2411 = vmatprep.subr.mxu0 0.0
    %2412 = vmatpush1.msra.mxu0 0.0
    %2413 = vmatprep.subr.mxu0 0.0
    %2414 = vmatpush1.msra.mxu0 0.0
    %2415 = vmatprep.subr.mxu0 0.0
    %2416 = vmatpush1.msra.mxu0 0.0
    %2417 = vmatprep.subr.mxu0 0.0
    %2418 = vmatpush1.msra.mxu0 0.0
    %2419 = vmatprep.subr.mxu0 0.0
    %2420 = vmatpush1.msra.mxu0 0.0
    %2421 = vmatprep.subr.mxu0 0.0
    %2422 = vmatpush1.msra.mxu0 0.0
    %2423 = vmatprep.subr.mxu0 0.0
    %2424 = vmatpush1.msra.mxu0 0.0
    %2425 = vmatprep.subr.mxu0 0.0
    %2426 = vmatpush1.msra.mxu0 0.0
    %2427 = vmatprep.subr.mxu0 0.0
    %2428 = vmatpush1.msra.mxu0 0.0
    %2429 = vmatprep.subr.mxu0 0.0
    %2430 = vmatpush1.msra.mxu0 0.0
    %2431 = vmatprep.subr.mxu0 0.0
    %2432 = vmatpush1.msra.mxu0 0.0
    %2433 = vmatprep.subr.mxu0 0.0
    %2434 = vmatpush1.msra.mxu0 0.0
    %2435 = vmatprep.subr.mxu0 0.0
    %2436 = vmatpush1.msra.mxu0 0.0
    %2437 = vmatprep.subr.mxu0 0.0
    %2438 = vmatpush1.msra.mxu0 0.0
    %2439 = vmatprep.subr.mxu0 0.0
    %2440 = vmatpush1.msra.mxu0 0.0
    %2441 = vmatprep.subr.mxu0 0.0
    %2442 = vmatpush1.msra.mxu0 0.0
    %2443 = vmatprep.mubr.f32.mxu0 0.0
    %2444 = vmatmul.mubr.f32.gmra.mrb[0].mxu0 %v2243
    %v2445 = vpop.f32.mrb[0].mxu0
    %v2446 = vadd.f32 0.0, %v2445
    %v2447 = vpop.f32.mrb[0].mxu0
    %v2448 = vadd.f32 0.0, %v2447
    %2449 = vdwg.mxu0
    %v2450 = vadd.f32 %v2239, %v2375
    %v2451 = vadd.f32 %v2240, %v2377
    %v2452 = vadd.f32 %v2241, %v2446
    %v2453 = vadd.f32 %v2242, %v2448
    %v2454 = vld [vmem:[#allocation7] sm:$0xff]
    %v2455 = vxor.u32 %v2450, 2147483648
    %v2456 = vmul.f32 %v2455, 1.442695
    %v2457 = vpow.pop %v2456
    %v2458 = vadd.f32 %v2457, 1.0
    %v2459 = vrcp.pop %v2458
    %v2460 = vmul.f32 1.0, %v2459
    %v2461 = vxor.u32 %v2451, 2147483648
    %v2462 = vmul.f32 %v2461, 1.442695
    %v2463 = vpow.pop %v2462
    %v2464 = vadd.f32 %v2463, 1.0
    %v2465 = vrcp.pop %v2464
    %v2466 = vmul.f32 1.0, %v2465
    %v2467 = vtanh.pop %v2452
    %v2468 = vxor.u32 %v2453, 2147483648
    %v2469 = vmul.f32 %v2468, 1.442695
    %v2470 = vpow.pop %v2469
    %v2471 = vadd.f32 %v2470, 1.0
    %v2472 = vrcp.pop %v2471
    %v2473 = vmul.f32 1.0, %v2472
    %v2474 = vmul.f32 %v2466, %v2454
    %v2475 = vmul.f32 %v2460, %v2467
    %v2476 = vadd.f32 %v2474, %v2475
    %v2477 = vtanh.pop %v2476
    %v2478 = vmul.f32 %v2473, %v2477
    %2479 = vst [vmem:[#allocation6] sm:$0xff] %v2478
    %2480 = vst [vmem:[#allocation7] sm:$0xff] %v2476
    %s2481 = scalar_lea.vmem [#allocation3], 56
    %2482 = vst [vmem:[%s2481] sm:$0xff] %v2478
    %v2483 = vld [vmem:[#allocation6] sm:$0xff]
    %2484 = vst [vmem:[#allocation23] sm:$0xff] %v2483
    %v2485 = vld [vmem:[#allocation7] sm:$0xff]
    %2486 = vst [vmem:[#allocation25] sm:$0xff] %v2485
    %v2487 = vld [vmem:[#allocation3] sm:$0xff]
    %v2488 = vld [vmem:[#allocation3 + $0x8] sm:$0xff]
    %v2489 = vld [vmem:[#allocation3 + $0x10] sm:$0xff]
    %v2490 = vld [vmem:[#allocation3 + $0x18] sm:$0xff]
    %v2491 = vld [vmem:[#allocation3 + $0x20] sm:$0xff]
    %v2492 = vld [vmem:[#allocation3 + $0x28] sm:$0xff]
    %v2493 = vld [vmem:[#allocation3 + $0x30] sm:$0xff]
    %v2494 = vld [vmem:[#allocation3 + $0x38] sm:$0xff]
    %v2495 = vld [vmem:[#allocation17] sm:$0xff]
    %v2496 = vld [vmem:[#allocation17 + $0x8] sm:$0xff]
    %v2497 = vld [vmem:[#allocation17 + $0x10] sm:$0xff]
    %v2498 = vld [vmem:[#allocation17 + $0x18] sm:$0xff]
    %v2499 = vld [vmem:[#allocation17 + $0x20] sm:$0xff]
    %v2500 = vld [vmem:[#allocation17 + $0x28] sm:$0xff]
    %v2501 = vld [vmem:[#allocation17 + $0x30] sm:$0xff]
    %v2502 = vld [vmem:[#allocation17 + $0x38] sm:$0xff]
    %v2503 = vld [vmem:[#allocation17 + $0x40] sm:$0xff]
    %v2504 = vld [vmem:[#allocation17 + $0x48] sm:$0xff]
    %v2505 = vld [vmem:[#allocation17 + $0x50] sm:$0xff]
    %v2506 = vld [vmem:[#allocation17 + $0x58] sm:$0xff]
    %v2507 = vld [vmem:[#allocation17 + $0x60] sm:$0xff]
    %v2508 = vld [vmem:[#allocation17 + $0x68] sm:$0xff]
    %v2509 = vld [vmem:[#allocation17 + $0x70] sm:$0xff]
    %v2510 = vld [vmem:[#allocation17 + $0x78] sm:$0xff]
    %v2511 = vld [vmem:[#allocation17 + $0x80] sm:$0xff]
    %v2512 = vld [vmem:[#allocation17 + $0x88] sm:$0xff]
    %v2513 = vld [vmem:[#allocation17 + $0x90] sm:$0xff]
    %v2514 = vld [vmem:[#allocation17 + $0x98] sm:$0xff]
    %v2515 = vld [vmem:[#allocation17 + $0xa0] sm:$0xff]
    %v2516 = vld [vmem:[#allocation17 + $0xa8] sm:$0xff]
    %v2517 = vld [vmem:[#allocation17 + $0xb0] sm:$0xff]
    %v2518 = vld [vmem:[#allocation17 + $0xb8] sm:$0xff]
    %v2519 = vld [vmem:[#allocation17 + $0xc0] sm:$0xff]
    %v2520 = vld [vmem:[#allocation17 + $0xc8] sm:$0xff]
    %v2521 = vld [vmem:[#allocation17 + $0xd0] sm:$0xff]
    %v2522 = vld [vmem:[#allocation17 + $0xd8] sm:$0xff]
    %v2523 = vld [vmem:[#allocation17 + $0xe0] sm:$0xff]
    %v2524 = vld [vmem:[#allocation17 + $0xe8] sm:$0xff]
    %v2525 = vld [vmem:[#allocation17 + $0xf0] sm:$0xff]
    %v2526 = vld [vmem:[#allocation17 + $0xf8] sm:$0xff]
    %v2527 = vld [vmem:[#allocation17 + $0x100] sm:$0xff]
    %v2528 = vld [vmem:[#allocation17 + $0x108] sm:$0xff]
    %v2529 = vld [vmem:[#allocation17 + $0x110] sm:$0xff]
    %v2530 = vld [vmem:[#allocation17 + $0x118] sm:$0xff]
    %v2531 = vld [vmem:[#allocation17 + $0x120] sm:$0xff]
    %v2532 = vld [vmem:[#allocation17 + $0x128] sm:$0xff]
    %v2533 = vld [vmem:[#allocation17 + $0x130] sm:$0xff]
    %v2534 = vld [vmem:[#allocation17 + $0x138] sm:$0xff]
    %v2535 = vld [vmem:[#allocation17 + $0x140] sm:$0xff]
    %v2536 = vld [vmem:[#allocation17 + $0x148] sm:$0xff]
    %v2537 = vld [vmem:[#allocation17 + $0x150] sm:$0xff]
    %v2538 = vld [vmem:[#allocation17 + $0x158] sm:$0xff]
    %v2539 = vld [vmem:[#allocation17 + $0x160] sm:$0xff]
    %v2540 = vld [vmem:[#allocation17 + $0x168] sm:$0xff]
    %v2541 = vld [vmem:[#allocation17 + $0x170] sm:$0xff]
    %v2542 = vld [vmem:[#allocation17 + $0x178] sm:$0xff]
    %v2543 = vld [vmem:[#allocation17 + $0x180] sm:$0xff]
    %v2544 = vld [vmem:[#allocation17 + $0x188] sm:$0xff]
    %v2545 = vld [vmem:[#allocation17 + $0x190] sm:$0xff]
    %v2546 = vld [vmem:[#allocation17 + $0x198] sm:$0xff]
    %v2547 = vld [vmem:[#allocation17 + $0x1a0] sm:$0xff]
    %v2548 = vld [vmem:[#allocation17 + $0x1a8] sm:$0xff]
    %v2549 = vld [vmem:[#allocation17 + $0x1b0] sm:$0xff]
    %v2550 = vld [vmem:[#allocation17 + $0x1b8] sm:$0xff]
    %v2551 = vld [vmem:[#allocation17 + $0x1c0] sm:$0xff]
    %v2552 = vld [vmem:[#allocation17 + $0x1c8] sm:$0xff]
    %v2553 = vld [vmem:[#allocation17 + $0x1d0] sm:$0xff]
    %v2554 = vld [vmem:[#allocation17 + $0x1d8] sm:$0xff]
    %v2555 = vld [vmem:[#allocation17 + $0x1e0] sm:$0xff]
    %v2556 = vld [vmem:[#allocation17 + $0x1e8] sm:$0xff]
    %v2557 = vld [vmem:[#allocation17 + $0x1f0] sm:$0xff]
    %v2558 = vld [vmem:[#allocation17 + $0x1f8] sm:$0xff]
    %v2559 = vld [vmem:[%s8] sm:$0xf]
    %v2561 = vlaneseq
    %v2562 = vshrl.u32 %v2561, 7
    %v2563 = vsub.s32 0, %v2562
    %v2564 = vrot.slane %v2559, %v2563
    %v2565 = vlaneseq
    %v2566 = vshrl.u32 %v2565, 7
    %v2567 = vsub.s32 1, %v2566
    %v2568 = vrot.slane %v2559, %v2567
    %v2569 = vlaneseq
    %v2570 = vshrl.u32 %v2569, 7
    %v2571 = vsub.s32 2, %v2570
    %v2572 = vrot.slane %v2559, %v2571
    %v2573 = vlaneseq
    %v2574 = vshrl.u32 %v2573, 7
    %v2575 = vsub.s32 3, %v2574
    %v2576 = vrot.slane %v2559, %v2575
    %2581 = vmatprep.subr.mxu0 %v2496
    %2582 = vmatpush1.msra.mxu0 %v2495
    %2583 = vmatprep.subr.mxu0 %v2500
    %2584 = vmatpush1.msra.mxu0 %v2499
    %2585 = vmatprep.subr.mxu0 %v2504
    %2586 = vmatpush1.msra.mxu0 %v2503
    %2587 = vmatprep.subr.mxu0 %v2508
    %2588 = vmatpush1.msra.mxu0 %v2507
    %2589 = vmatprep.subr.mxu0 %v2512
    %2590 = vmatpush1.msra.mxu0 %v2511
    %2591 = vmatprep.subr.mxu0 %v2516
    %2592 = vmatpush1.msra.mxu0 %v2515
    %2593 = vmatprep.subr.mxu0 %v2520
    %2594 = vmatpush1.msra.mxu0 %v2519
    %2595 = vmatprep.subr.mxu0 %v2524
    %2596 = vmatpush1.msra.mxu0 %v2523
    %2597 = vmatprep.subr.mxu0 %v2528
    %2598 = vmatpush1.msra.mxu0 %v2527
    %2599 = vmatprep.subr.mxu0 %v2532
    %2600 = vmatpush1.msra.mxu0 %v2531
    %2601 = vmatprep.subr.mxu0 %v2536
    %2602 = vmatpush1.msra.mxu0 %v2535
    %2603 = vmatprep.subr.mxu0 %v2540
    %2604 = vmatpush1.msra.mxu0 %v2539
    %2605 = vmatprep.subr.mxu0 %v2544
    %2606 = vmatpush1.msra.mxu0 %v2543
    %2607 = vmatprep.subr.mxu0 %v2548
    %2608 = vmatpush1.msra.mxu0 %v2547
    %2609 = vmatprep.subr.mxu0 %v2552
    %2610 = vmatpush1.msra.mxu0 %v2551
    %2611 = vmatprep.subr.mxu0 %v2556
    %2612 = vmatpush1.msra.mxu0 %v2555
    %2613 = vmatprep.subr.mxu0 0.0
    %2614 = vmatpush1.msra.mxu0 0.0
    %2615 = vmatprep.subr.mxu0 0.0
    %2616 = vmatpush1.msra.mxu0 0.0
    %2617 = vmatprep.subr.mxu0 0.0
    %2618 = vmatpush1.msra.mxu0 0.0
    %2619 = vmatprep.subr.mxu0 0.0
    %2620 = vmatpush1.msra.mxu0 0.0
    %2621 = vmatprep.subr.mxu0 0.0
    %2622 = vmatpush1.msra.mxu0 0.0
    %2623 = vmatprep.subr.mxu0 0.0
    %2624 = vmatpush1.msra.mxu0 0.0
    %2625 = vmatprep.subr.mxu0 0.0
    %2626 = vmatpush1.msra.mxu0 0.0
    %2627 = vmatprep.subr.mxu0 0.0
    %2628 = vmatpush1.msra.mxu0 0.0
    %2629 = vmatprep.subr.mxu0 0.0
    %2630 = vmatpush1.msra.mxu0 0.0
    %2631 = vmatprep.subr.mxu0 0.0
    %2632 = vmatpush1.msra.mxu0 0.0
    %2633 = vmatprep.subr.mxu0 0.0
    %2634 = vmatpush1.msra.mxu0 0.0
    %2635 = vmatprep.subr.mxu0 0.0
    %2636 = vmatpush1.msra.mxu0 0.0
    %2637 = vmatprep.subr.mxu0 0.0
    %2638 = vmatpush1.msra.mxu0 0.0
    %2639 = vmatprep.subr.mxu0 0.0
    %2640 = vmatpush1.msra.mxu0 0.0
    %2641 = vmatprep.subr.mxu0 0.0
    %2642 = vmatpush1.msra.mxu0 0.0
    %2643 = vmatprep.subr.mxu0 0.0
    %2644 = vmatpush1.msra.mxu0 0.0
    %2645 = vmatprep.mubr.f32.mxu0 0.0
    %2646 = vmatmul.mubr.f32.gmra.mrb[0].mxu0 %v2487
    %v2647 = vpop.f32.mrb[0].mxu0
    %v2648 = vadd.f32 %v2564, %v2647
    %v2649 = vpop.f32.mrb[0].mxu0
    %v2650 = vadd.f32 %v2568, %v2649
    %2651 = vmatprep.mubr.f32.mxu0 0.0
    %2652 = vmatmul.mubr.f32.gmra.mrb[0].mxu0 %v2488
    %v2653 = vpop.f32.mrb[0].mxu0
    %v2654 = vadd.f32 %v2564, %v2653
    %v2655 = vpop.f32.mrb[0].mxu0
    %v2656 = vadd.f32 %v2568, %v2655
    %2657 = vmatprep.mubr.f32.mxu0 0.0
    %2658 = vmatmul.mubr.f32.gmra.mrb[0].mxu0 %v2489
    %v2659 = vpop.f32.mrb[0].mxu0
    %v2660 = vadd.f32 %v2564, %v2659
    %v2661 = vpop.f32.mrb[0].mxu0
    %v2662 = vadd.f32 %v2568, %v2661
    %2663 = vmatprep.mubr.f32.mxu0 0.0
    %2664 = vmatmul.mubr.f32.gmra.mrb[0].mxu0 %v2490
    %v2665 = vpop.f32.mrb[0].mxu0
    %v2666 = vadd.f32 %v2564, %v2665
    %v2667 = vpop.f32.mrb[0].mxu0
    %v2668 = vadd.f32 %v2568, %v2667
    %2669 = vmatprep.mubr.f32.mxu0 0.0
    %2670 = vmatmul.mubr.f32.gmra.mrb[0].mxu0 %v2491
    %v2671 = vpop.f32.mrb[0].mxu0
    %v2672 = vadd.f32 %v2564, %v2671
    %v2673 = vpop.f32.mrb[0].mxu0
    %v2674 = vadd.f32 %v2568, %v2673
    %2675 = vmatprep.mubr.f32.mxu0 0.0
    %2676 = vmatmul.mubr.f32.gmra.mrb[0].mxu0 %v2492
    %v2677 = vpop.f32.mrb[0].mxu0
    %v2678 = vadd.f32 %v2564, %v2677
    %v2679 = vpop.f32.mrb[0].mxu0
    %v2680 = vadd.f32 %v2568, %v2679
    %2681 = vmatprep.mubr.f32.mxu0 0.0
    %2682 = vmatmul.mubr.f32.gmra.mrb[0].mxu0 %v2493
    %v2683 = vpop.f32.mrb[0].mxu0
    %v2684 = vadd.f32 %v2564, %v2683
    %v2685 = vpop.f32.mrb[0].mxu0
    %v2686 = vadd.f32 %v2568, %v2685
    %2687 = vmatprep.mubr.f32.mxu0 0.0
    %2688 = vmatmul.mubr.f32.gmra.mrb[0].mxu0 %v2494
    %v2689 = vpop.f32.mrb[0].mxu0
    %v2690 = vadd.f32 %v2564, %v2689
    %v2691 = vpop.f32.mrb[0].mxu0
    %v2692 = vadd.f32 %v2568, %v2691
    %2693 = vdwg.mxu0
    %2694 = vmatprep.subr.mxu0 %v2498
    %2695 = vmatpush1.msra.mxu0 %v2497
    %2696 = vmatprep.subr.mxu0 %v2502
    %2697 = vmatpush1.msra.mxu0 %v2501
    %2698 = vmatprep.subr.mxu0 %v2506
    %2699 = vmatpush1.msra.mxu0 %v2505
    %2700 = vmatprep.subr.mxu0 %v2510
    %2701 = vmatpush1.msra.mxu0 %v2509
    %2702 = vmatprep.subr.mxu0 %v2514
    %2703 = vmatpush1.msra.mxu0 %v2513
    %2704 = vmatprep.subr.mxu0 %v2518
    %2705 = vmatpush1.msra.mxu0 %v2517
    %2706 = vmatprep.subr.mxu0 %v2522
    %2707 = vmatpush1.msra.mxu0 %v2521
    %2708 = vmatprep.subr.mxu0 %v2526
    %2709 = vmatpush1.msra.mxu0 %v2525
    %2710 = vmatprep.subr.mxu0 %v2530
    %2711 = vmatpush1.msra.mxu0 %v2529
    %2712 = vmatprep.subr.mxu0 %v2534
    %2713 = vmatpush1.msra.mxu0 %v2533
    %2714 = vmatprep.subr.mxu0 %v2538
    %2715 = vmatpush1.msra.mxu0 %v2537
    %2716 = vmatprep.subr.mxu0 %v2542
    %2717 = vmatpush1.msra.mxu0 %v2541
    %2718 = vmatprep.subr.mxu0 %v2546
    %2719 = vmatpush1.msra.mxu0 %v2545
    %2720 = vmatprep.subr.mxu0 %v2550
    %2721 = vmatpush1.msra.mxu0 %v2549
    %2722 = vmatprep.subr.mxu0 %v2554
    %2723 = vmatpush1.msra.mxu0 %v2553
    %2724 = vmatprep.subr.mxu0 %v2558
    %2725 = vmatpush1.msra.mxu0 %v2557
    %2726 = vmatprep.subr.mxu0 0.0
    %2727 = vmatpush1.msra.mxu0 0.0
    %2728 = vmatprep.subr.mxu0 0.0
    %2729 = vmatpush1.msra.mxu0 0.0
    %2730 = vmatprep.subr.mxu0 0.0
    %2731 = vmatpush1.msra.mxu0 0.0
    %2732 = vmatprep.subr.mxu0 0.0
    %2733 = vmatpush1.msra.mxu0 0.0
    %2734 = vmatprep.subr.mxu0 0.0
    %2735 = vmatpush1.msra.mxu0 0.0
    %2736 = vmatprep.subr.mxu0 0.0
    %2737 = vmatpush1.msra.mxu0 0.0
    %2738 = vmatprep.subr.mxu0 0.0
    %2739 = vmatpush1.msra.mxu0 0.0
    %2740 = vmatprep.subr.mxu0 0.0
    %2741 = vmatpush1.msra.mxu0 0.0
    %2742 = vmatprep.subr.mxu0 0.0
    %2743 = vmatpush1.msra.mxu0 0.0
    %2744 = vmatprep.subr.mxu0 0.0
    %2745 = vmatpush1.msra.mxu0 0.0
    %2746 = vmatprep.subr.mxu0 0.0
    %2747 = vmatpush1.msra.mxu0 0.0
    %2748 = vmatprep.subr.mxu0 0.0
    %2749 = vmatpush1.msra.mxu0 0.0
    %2750 = vmatprep.subr.mxu0 0.0
    %2751 = vmatpush1.msra.mxu0 0.0
    %2752 = vmatprep.subr.mxu0 0.0
    %2753 = vmatpush1.msra.mxu0 0.0
    %2754 = vmatprep.subr.mxu0 0.0
    %2755 = vmatpush1.msra.mxu0 0.0
    %2756 = vmatprep.subr.mxu0 0.0
    %2757 = vmatpush1.msra.mxu0 0.0
    %2758 = vmatprep.mubr.f32.mxu0 0.0
    %2759 = vmatmul.mubr.f32.gmra.mrb[0].mxu0 %v2487
    %v2760 = vpop.f32.mrb[0].mxu0
    %v2761 = vadd.f32 %v2572, %v2760
    %v2762 = vpop.f32.mrb[0].mxu0
    %v2763 = vadd.f32 %v2576, %v2762
    %2764 = vmatprep.mubr.f32.mxu0 0.0
    %2765 = vmatmul.mubr.f32.gmra.mrb[0].mxu0 %v2488
    %v2766 = vpop.f32.mrb[0].mxu0
    %v2767 = vadd.f32 %v2572, %v2766
    %v2768 = vpop.f32.mrb[0].mxu0
    %v2769 = vadd.f32 %v2576, %v2768
    %2770 = vmatprep.mubr.f32.mxu0 0.0
    %2771 = vmatmul.mubr.f32.gmra.mrb[0].mxu0 %v2489
    %v2772 = vpop.f32.mrb[0].mxu0
    %v2773 = vadd.f32 %v2572, %v2772
    %v2774 = vpop.f32.mrb[0].mxu0
    %v2775 = vadd.f32 %v2576, %v2774
    %2776 = vmatprep.mubr.f32.mxu0 0.0
    %2777 = vmatmul.mubr.f32.gmra.mrb[0].mxu0 %v2490
    %v2778 = vpop.f32.mrb[0].mxu0
    %v2779 = vadd.f32 %v2572, %v2778
    %v2780 = vpop.f32.mrb[0].mxu0
    %v2781 = vadd.f32 %v2576, %v2780
    %2782 = vmatprep.mubr.f32.mxu0 0.0
    %2783 = vmatmul.mubr.f32.gmra.mrb[0].mxu0 %v2491
    %v2784 = vpop.f32.mrb[0].mxu0
    %v2785 = vadd.f32 %v2572, %v2784
    %v2786 = vpop.f32.mrb[0].mxu0
    %v2787 = vadd.f32 %v2576, %v2786
    %2788 = vmatprep.mubr.f32.mxu0 0.0
    %2789 = vmatmul.mubr.f32.gmra.mrb[0].mxu0 %v2492
    %v2790 = vpop.f32.mrb[0].mxu0
    %v2791 = vadd.f32 %v2572, %v2790
    %v2792 = vpop.f32.mrb[0].mxu0
    %v2793 = vadd.f32 %v2576, %v2792
    %2794 = vmatprep.mubr.f32.mxu0 0.0
    %2795 = vmatmul.mubr.f32.gmra.mrb[0].mxu0 %v2493
    %v2796 = vpop.f32.mrb[0].mxu0
    %v2797 = vadd.f32 %v2572, %v2796
    %v2798 = vpop.f32.mrb[0].mxu0
    %v2799 = vadd.f32 %v2576, %v2798
    %2800 = vmatprep.mubr.f32.mxu0 0.0
    %2801 = vmatmul.mubr.f32.gmra.mrb[0].mxu0 %v2494
    %v2802 = vpop.f32.mrb[0].mxu0
    %v2803 = vadd.f32 %v2572, %v2802
    %v2804 = vpop.f32.mrb[0].mxu0
    %v2805 = vadd.f32 %v2576, %v2804
    %2806 = vdwg.mxu0
    %2807 = vst [vmem:[#allocation4] sm:$0xff] %v2648
    %2808 = vst [vmem:[#allocation4 + $0x8] sm:$0xff] %v2650
    %2809 = vst [vmem:[#allocation4 + $0x10] sm:$0xff] %v2761
    %2810 = vst [vmem:[#allocation4 + $0x18] sm:$0xff] %v2763
    %2811 = vst [vmem:[#allocation4 + $0x20] sm:$0xff] %v2654
    %2812 = vst [vmem:[#allocation4 + $0x28] sm:$0xff] %v2656
    %2813 = vst [vmem:[#allocation4 + $0x30] sm:$0xff] %v2767
    %2814 = vst [vmem:[#allocation4 + $0x38] sm:$0xff] %v2769
    %2815 = vst [vmem:[#allocation4 + $0x40] sm:$0xff] %v2660
    %2816 = vst [vmem:[#allocation4 + $0x48] sm:$0xff] %v2662
    %2817 = vst [vmem:[#allocation4 + $0x50] sm:$0xff] %v2773
    %2818 = vst [vmem:[#allocation4 + $0x58] sm:$0xff] %v2775
    %2819 = vst [vmem:[#allocation4 + $0x60] sm:$0xff] %v2666
    %2820 = vst [vmem:[#allocation4 + $0x68] sm:$0xff] %v2668
    %2821 = vst [vmem:[#allocation4 + $0x70] sm:$0xff] %v2779
    %2822 = vst [vmem:[#allocation4 + $0x78] sm:$0xff] %v2781
    %2823 = vst [vmem:[#allocation4 + $0x80] sm:$0xff] %v2672
    %2824 = vst [vmem:[#allocation4 + $0x88] sm:$0xff] %v2674
    %2825 = vst [vmem:[#allocation4 + $0x90] sm:$0xff] %v2785
    %2826 = vst [vmem:[#allocation4 + $0x98] sm:$0xff] %v2787
    %2827 = vst [vmem:[#allocation4 + $0xa0] sm:$0xff] %v2678
    %2828 = vst [vmem:[#allocation4 + $0xa8] sm:$0xff] %v2680
    %2829 = vst [vmem:[#allocation4 + $0xb0] sm:$0xff] %v2791
    %2830 = vst [vmem:[#allocation4 + $0xb8] sm:$0xff] %v2793
    %2831 = vst [vmem:[#allocation4 + $0xc0] sm:$0xff] %v2684
    %2832 = vst [vmem:[#allocation4 + $0xc8] sm:$0xff] %v2686
    %2833 = vst [vmem:[#allocation4 + $0xd0] sm:$0xff] %v2797
    %2834 = vst [vmem:[#allocation4 + $0xd8] sm:$0xff] %v2799
    %2835 = vst [vmem:[#allocation4 + $0xe0] sm:$0xff] %v2690
    %2836 = vst [vmem:[#allocation4 + $0xe8] sm:$0xff] %v2692
    %2837 = vst [vmem:[#allocation4 + $0xf0] sm:$0xff] %v2803
    %2838 = vst [vmem:[#allocation4 + $0xf8] sm:$0xff] %v2805
    %s2839 = scalar_lea.vmem [#allocation11], 8
    %v2840 = vld [vmem:[%s2839] sm:$0xff]
    %2841 = vst [vmem:[#allocation6] sm:$0xff] %v2840
    %s2842 = scalar_lea.vmem [#allocation13], 8
    %v2843 = vld [vmem:[%s2842] sm:$0xff]
    %2844 = vst [vmem:[#allocation7] sm:$0xff] %v2843
    %s2845 = smul.addr %s508, 8
    %s2846 = scalar_lea.vmem [#allocation4], %s2845
    %v2847 = vld [vmem:[%s2846] sm:$0xff]
    %v2848 = vld [vmem:[%s2846 + $0x8] sm:$0xff]
    %v2849 = vld [vmem:[%s2846 + $0x10] sm:$0xff]
    %v2850 = vld [vmem:[%s2846 + $0x18] sm:$0xff]
    %v2851 = vld [vmem:[#allocation6] sm:$0xff]
    %v2852 = vld [vmem:[#allocation19] sm:$0xff]
    %v2853 = vld [vmem:[#allocation19 + $0x8] sm:$0xff]
    %v2854 = vld [vmem:[#allocation19 + $0x10] sm:$0xff]
    %v2855 = vld [vmem:[#allocation19 + $0x18] sm:$0xff]
    %v2856 = vld [vmem:[#allocation19 + $0x20] sm:$0xff]
    %v2857 = vld [vmem:[#allocation19 + $0x28] sm:$0xff]
    %v2858 = vld [vmem:[#allocation19 + $0x30] sm:$0xff]
    %v2859 = vld [vmem:[#allocation19 + $0x38] sm:$0xff]
    %v2860 = vld [vmem:[#allocation19 + $0x40] sm:$0xff]
    %v2861 = vld [vmem:[#allocation19 + $0x48] sm:$0xff]
    %v2862 = vld [vmem:[#allocation19 + $0x50] sm:$0xff]
    %v2863 = vld [vmem:[#allocation19 + $0x58] sm:$0xff]
    %v2864 = vld [vmem:[#allocation19 + $0x60] sm:$0xff]
    %v2865 = vld [vmem:[#allocation19 + $0x68] sm:$0xff]
    %v2866 = vld [vmem:[#allocation19 + $0x70] sm:$0xff]
    %v2867 = vld [vmem:[#allocation19 + $0x78] sm:$0xff]
    %v2868 = vld [vmem:[#allocation19 + $0x80] sm:$0xff]
    %v2869 = vld [vmem:[#allocation19 + $0x88] sm:$0xff]
    %v2870 = vld [vmem:[#allocation19 + $0x90] sm:$0xff]
    %v2871 = vld [vmem:[#allocation19 + $0x98] sm:$0xff]
    %v2872 = vld [vmem:[#allocation19 + $0xa0] sm:$0xff]
    %v2873 = vld [vmem:[#allocation19 + $0xa8] sm:$0xff]
    %v2874 = vld [vmem:[#allocation19 + $0xb0] sm:$0xff]
    %v2875 = vld [vmem:[#allocation19 + $0xb8] sm:$0xff]
    %v2876 = vld [vmem:[#allocation19 + $0xc0] sm:$0xff]
    %v2877 = vld [vmem:[#allocation19 + $0xc8] sm:$0xff]
    %v2878 = vld [vmem:[#allocation19 + $0xd0] sm:$0xff]
    %v2879 = vld [vmem:[#allocation19 + $0xd8] sm:$0xff]
    %v2880 = vld [vmem:[#allocation19 + $0xe0] sm:$0xff]
    %v2881 = vld [vmem:[#allocation19 + $0xe8] sm:$0xff]
    %v2882 = vld [vmem:[#allocation19 + $0xf0] sm:$0xff]
    %v2883 = vld [vmem:[#allocation19 + $0xf8] sm:$0xff]
    %v2884 = vld [vmem:[#allocation19 + $0x100] sm:$0xff]
    %v2885 = vld [vmem:[#allocation19 + $0x108] sm:$0xff]
    %v2886 = vld [vmem:[#allocation19 + $0x110] sm:$0xff]
    %v2887 = vld [vmem:[#allocation19 + $0x118] sm:$0xff]
    %v2888 = vld [vmem:[#allocation19 + $0x120] sm:$0xff]
    %v2889 = vld [vmem:[#allocation19 + $0x128] sm:$0xff]
    %v2890 = vld [vmem:[#allocation19 + $0x130] sm:$0xff]
    %v2891 = vld [vmem:[#allocation19 + $0x138] sm:$0xff]
    %v2892 = vld [vmem:[#allocation19 + $0x140] sm:$0xff]
    %v2893 = vld [vmem:[#allocation19 + $0x148] sm:$0xff]
    %v2894 = vld [vmem:[#allocation19 + $0x150] sm:$0xff]
    %v2895 = vld [vmem:[#allocation19 + $0x158] sm:$0xff]
    %v2896 = vld [vmem:[#allocation19 + $0x160] sm:$0xff]
    %v2897 = vld [vmem:[#allocation19 + $0x168] sm:$0xff]
    %v2898 = vld [vmem:[#allocation19 + $0x170] sm:$0xff]
    %v2899 = vld [vmem:[#allocation19 + $0x178] sm:$0xff]
    %v2900 = vld [vmem:[#allocation19 + $0x180] sm:$0xff]
    %v2901 = vld [vmem:[#allocation19 + $0x188] sm:$0xff]
    %v2902 = vld [vmem:[#allocation19 + $0x190] sm:$0xff]
    %v2903 = vld [vmem:[#allocation19 + $0x198] sm:$0xff]
    %v2904 = vld [vmem:[#allocation19 + $0x1a0] sm:$0xff]
    %v2905 = vld [vmem:[#allocation19 + $0x1a8] sm:$0xff]
    %v2906 = vld [vmem:[#allocation19 + $0x1b0] sm:$0xff]
    %v2907 = vld [vmem:[#allocation19 + $0x1b8] sm:$0xff]
    %v2908 = vld [vmem:[#allocation19 + $0x1c0] sm:$0xff]
    %v2909 = vld [vmem:[#allocation19 + $0x1c8] sm:$0xff]
    %v2910 = vld [vmem:[#allocation19 + $0x1d0] sm:$0xff]
    %v2911 = vld [vmem:[#allocation19 + $0x1d8] sm:$0xff]
    %v2912 = vld [vmem:[#allocation19 + $0x1e0] sm:$0xff]
    %v2913 = vld [vmem:[#allocation19 + $0x1e8] sm:$0xff]
    %v2914 = vld [vmem:[#allocation19 + $0x1f0] sm:$0xff]
    %v2915 = vld [vmem:[#allocation19 + $0x1f8] sm:$0xff]
    %2916 = vmatprep.subr.mxu0 %v2853
    %2917 = vmatpush1.msra.mxu0 %v2852
    %2918 = vmatprep.subr.mxu0 %v2857
    %2919 = vmatpush1.msra.mxu0 %v2856
    %2920 = vmatprep.subr.mxu0 %v2861
    %2921 = vmatpush1.msra.mxu0 %v2860
    %2922 = vmatprep.subr.mxu0 %v2865
    %2923 = vmatpush1.msra.mxu0 %v2864
    %2924 = vmatprep.subr.mxu0 %v2869
    %2925 = vmatpush1.msra.mxu0 %v2868
    %2926 = vmatprep.subr.mxu0 %v2873
    %2927 = vmatpush1.msra.mxu0 %v2872
    %2928 = vmatprep.subr.mxu0 %v2877
    %2929 = vmatpush1.msra.mxu0 %v2876
    %2930 = vmatprep.subr.mxu0 %v2881
    %2931 = vmatpush1.msra.mxu0 %v2880
    %2932 = vmatprep.subr.mxu0 %v2885
    %2933 = vmatpush1.msra.mxu0 %v2884
    %2934 = vmatprep.subr.mxu0 %v2889
    %2935 = vmatpush1.msra.mxu0 %v2888
    %2936 = vmatprep.subr.mxu0 %v2893
    %2937 = vmatpush1.msra.mxu0 %v2892
    %2938 = vmatprep.subr.mxu0 %v2897
    %2939 = vmatpush1.msra.mxu0 %v2896
    %2940 = vmatprep.subr.mxu0 %v2901
    %2941 = vmatpush1.msra.mxu0 %v2900
    %2942 = vmatprep.subr.mxu0 %v2905
    %2943 = vmatpush1.msra.mxu0 %v2904
    %2944 = vmatprep.subr.mxu0 %v2909
    %2945 = vmatpush1.msra.mxu0 %v2908
    %2946 = vmatprep.subr.mxu0 %v2913
    %2947 = vmatpush1.msra.mxu0 %v2912
    %2948 = vmatprep.subr.mxu0 0.0
    %2949 = vmatpush1.msra.mxu0 0.0
    %2950 = vmatprep.subr.mxu0 0.0
    %2951 = vmatpush1.msra.mxu0 0.0
    %2952 = vmatprep.subr.mxu0 0.0
    %2953 = vmatpush1.msra.mxu0 0.0
    %2954 = vmatprep.subr.mxu0 0.0
    %2955 = vmatpush1.msra.mxu0 0.0
    %2956 = vmatprep.subr.mxu0 0.0
    %2957 = vmatpush1.msra.mxu0 0.0
    %2958 = vmatprep.subr.mxu0 0.0
    %2959 = vmatpush1.msra.mxu0 0.0
    %2960 = vmatprep.subr.mxu0 0.0
    %2961 = vmatpush1.msra.mxu0 0.0
    %2962 = vmatprep.subr.mxu0 0.0
    %2963 = vmatpush1.msra.mxu0 0.0
    %2964 = vmatprep.subr.mxu0 0.0
    %2965 = vmatpush1.msra.mxu0 0.0
    %2966 = vmatprep.subr.mxu0 0.0
    %2967 = vmatpush1.msra.mxu0 0.0
    %2968 = vmatprep.subr.mxu0 0.0
    %2969 = vmatpush1.msra.mxu0 0.0
    %2970 = vmatprep.subr.mxu0 0.0
    %2971 = vmatpush1.msra.mxu0 0.0
    %2972 = vmatprep.subr.mxu0 0.0
    %2973 = vmatpush1.msra.mxu0 0.0
    %2974 = vmatprep.subr.mxu0 0.0
    %2975 = vmatpush1.msra.mxu0 0.0
    %2976 = vmatprep.subr.mxu0 0.0
    %2977 = vmatpush1.msra.mxu0 0.0
    %2978 = vmatprep.subr.mxu0 0.0
    %2979 = vmatpush1.msra.mxu0 0.0
    %2980 = vmatprep.mubr.f32.mxu0 0.0
    %2981 = vmatmul.mubr.f32.gmra.mrb[0].mxu0 %v2851
    %v2982 = vpop.f32.mrb[0].mxu0
    %v2983 = vadd.f32 0.0, %v2982
    %v2984 = vpop.f32.mrb[0].mxu0
    %v2985 = vadd.f32 0.0, %v2984
    %2986 = vdwg.mxu0
    %2987 = vmatprep.subr.mxu0 %v2855
    %2988 = vmatpush1.msra.mxu0 %v2854
    %2989 = vmatprep.subr.mxu0 %v2859
    %2990 = vmatpush1.msra.mxu0 %v2858
    %2991 = vmatprep.subr.mxu0 %v2863
    %2992 = vmatpush1.msra.mxu0 %v2862
    %2993 = vmatprep.subr.mxu0 %v2867
    %2994 = vmatpush1.msra.mxu0 %v2866
    %2995 = vmatprep.subr.mxu0 %v2871
    %2996 = vmatpush1.msra.mxu0 %v2870
    %2997 = vmatprep.subr.mxu0 %v2875
    %2998 = vmatpush1.msra.mxu0 %v2874
    %2999 = vmatprep.subr.mxu0 %v2879
    %3000 = vmatpush1.msra.mxu0 %v2878
    %3001 = vmatprep.subr.mxu0 %v2883
    %3002 = vmatpush1.msra.mxu0 %v2882
    %3003 = vmatprep.subr.mxu0 %v2887
    %3004 = vmatpush1.msra.mxu0 %v2886
    %3005 = vmatprep.subr.mxu0 %v2891
    %3006 = vmatpush1.msra.mxu0 %v2890
    %3007 = vmatprep.subr.mxu0 %v2895
    %3008 = vmatpush1.msra.mxu0 %v2894
    %3009 = vmatprep.subr.mxu0 %v2899
    %3010 = vmatpush1.msra.mxu0 %v2898
    %3011 = vmatprep.subr.mxu0 %v2903
    %3012 = vmatpush1.msra.mxu0 %v2902
    %3013 = vmatprep.subr.mxu0 %v2907
    %3014 = vmatpush1.msra.mxu0 %v2906
    %3015 = vmatprep.subr.mxu0 %v2911
    %3016 = vmatpush1.msra.mxu0 %v2910
    %3017 = vmatprep.subr.mxu0 %v2915
    %3018 = vmatpush1.msra.mxu0 %v2914
    %3019 = vmatprep.subr.mxu0 0.0
    %3020 = vmatpush1.msra.mxu0 0.0
    %3021 = vmatprep.subr.mxu0 0.0
    %3022 = vmatpush1.msra.mxu0 0.0
    %3023 = vmatprep.subr.mxu0 0.0
    %3024 = vmatpush1.msra.mxu0 0.0
    %3025 = vmatprep.subr.mxu0 0.0
    %3026 = vmatpush1.msra.mxu0 0.0
    %3027 = vmatprep.subr.mxu0 0.0
    %3028 = vmatpush1.msra.mxu0 0.0
    %3029 = vmatprep.subr.mxu0 0.0
    %3030 = vmatpush1.msra.mxu0 0.0
    %3031 = vmatprep.subr.mxu0 0.0
    %3032 = vmatpush1.msra.mxu0 0.0
    %3033 = vmatprep.subr.mxu0 0.0
    %3034 = vmatpush1.msra.mxu0 0.0
    %3035 = vmatprep.subr.mxu0 0.0
    %3036 = vmatpush1.msra.mxu0 0.0
    %3037 = vmatprep.subr.mxu0 0.0
    %3038 = vmatpush1.msra.mxu0 0.0
    %3039 = vmatprep.subr.mxu0 0.0
    %3040 = vmatpush1.msra.mxu0 0.0
    %3041 = vmatprep.subr.mxu0 0.0
    %3042 = vmatpush1.msra.mxu0 0.0
    %3043 = vmatprep.subr.mxu0 0.0
    %3044 = vmatpush1.msra.mxu0 0.0
    %3045 = vmatprep.subr.mxu0 0.0
    %3046 = vmatpush1.msra.mxu0 0.0
    %3047 = vmatprep.subr.mxu0 0.0
    %3048 = vmatpush1.msra.mxu0 0.0
    %3049 = vmatprep.subr.mxu0 0.0
    %3050 = vmatpush1.msra.mxu0 0.0
    %3051 = vmatprep.mubr.f32.mxu0 0.0
    %3052 = vmatmul.mubr.f32.gmra.mrb[0].mxu0 %v2851
    %v3053 = vpop.f32.mrb[0].mxu0
    %v3054 = vadd.f32 0.0, %v3053
    %v3055 = vpop.f32.mrb[0].mxu0
    %v3056 = vadd.f32 0.0, %v3055
    %3057 = vdwg.mxu0
    %v3058 = vadd.f32 %v2847, %v2983
    %v3059 = vadd.f32 %v2848, %v2985
    %v3060 = vadd.f32 %v2849, %v3054
    %v3061 = vadd.f32 %v2850, %v3056
    %v3062 = vld [vmem:[#allocation7] sm:$0xff]
    %v3063 = vxor.u32 %v3058, 2147483648
    %v3064 = vmul.f32 %v3063, 1.442695
    %v3065 = vpow.pop %v3064
    %v3066 = vadd.f32 %v3065, 1.0
    %v3067 = vrcp.pop %v3066
    %v3068 = vmul.f32 1.0, %v3067
    %v3069 = vxor.u32 %v3059, 2147483648
    %v3070 = vmul.f32 %v3069, 1.442695
    %v3071 = vpow.pop %v3070
    %v3072 = vadd.f32 %v3071, 1.0
    %v3073 = vrcp.pop %v3072
    %v3074 = vmul.f32 1.0, %v3073
    %v3075 = vtanh.pop %v3060
    %v3076 = vxor.u32 %v3061, 2147483648
    %v3077 = vmul.f32 %v3076, 1.442695
    %v3078 = vpow.pop %v3077
    %v3079 = vadd.f32 %v3078, 1.0
    %v3080 = vrcp.pop %v3079
    %v3081 = vmul.f32 1.0, %v3080
    %v3082 = vmul.f32 %v3074, %v3062
    %v3083 = vmul.f32 %v3068, %v3075
    %v3084 = vadd.f32 %v3082, %v3083
    %v3085 = vtanh.pop %v3084
    %v3086 = vmul.f32 %v3081, %v3085
    %3087 = vst [vmem:[#allocation6] sm:$0xff] %v3086
    %3088 = vst [vmem:[#allocation7] sm:$0xff] %v3084
    %3089 = vst [vmem:[#allocation5] sm:$0xff] %v3086
    %s3090 = smul.addr %s754, 8
    %s3091 = scalar_lea.vmem [#allocation4], %s3090
    %v3092 = vld [vmem:[%s3091] sm:$0xff]
    %v3093 = vld [vmem:[%s3091 + $0x8] sm:$0xff]
    %v3094 = vld [vmem:[%s3091 + $0x10] sm:$0xff]
    %v3095 = vld [vmem:[%s3091 + $0x18] sm:$0xff]
    %v3096 = vld [vmem:[#allocation6] sm:$0xff]
    %v3097 = vld [vmem:[#allocation19] sm:$0xff]
    %v3098 = vld [vmem:[#allocation19 + $0x8] sm:$0xff]
    %v3099 = vld [vmem:[#allocation19 + $0x10] sm:$0xff]
    %v3100 = vld [vmem:[#allocation19 + $0x18] sm:$0xff]
    %v3101 = vld [vmem:[#allocation19 + $0x20] sm:$0xff]
    %v3102 = vld [vmem:[#allocation19 + $0x28] sm:$0xff]
    %v3103 = vld [vmem:[#allocation19 + $0x30] sm:$0xff]
    %v3104 = vld [vmem:[#allocation19 + $0x38] sm:$0xff]
    %v3105 = vld [vmem:[#allocation19 + $0x40] sm:$0xff]
    %v3106 = vld [vmem:[#allocation19 + $0x48] sm:$0xff]
    %v3107 = vld [vmem:[#allocation19 + $0x50] sm:$0xff]
    %v3108 = vld [vmem:[#allocation19 + $0x58] sm:$0xff]
    %v3109 = vld [vmem:[#allocation19 + $0x60] sm:$0xff]
    %v3110 = vld [vmem:[#allocation19 + $0x68] sm:$0xff]
    %v3111 = vld [vmem:[#allocation19 + $0x70] sm:$0xff]
    %v3112 = vld [vmem:[#allocation19 + $0x78] sm:$0xff]
    %v3113 = vld [vmem:[#allocation19 + $0x80] sm:$0xff]
    %v3114 = vld [vmem:[#allocation19 + $0x88] sm:$0xff]
    %v3115 = vld [vmem:[#allocation19 + $0x90] sm:$0xff]
    %v3116 = vld [vmem:[#allocation19 + $0x98] sm:$0xff]
    %v3117 = vld [vmem:[#allocation19 + $0xa0] sm:$0xff]
    %v3118 = vld [vmem:[#allocation19 + $0xa8] sm:$0xff]
    %v3119 = vld [vmem:[#allocation19 + $0xb0] sm:$0xff]
    %v3120 = vld [vmem:[#allocation19 + $0xb8] sm:$0xff]
    %v3121 = vld [vmem:[#allocation19 + $0xc0] sm:$0xff]
    %v3122 = vld [vmem:[#allocation19 + $0xc8] sm:$0xff]
    %v3123 = vld [vmem:[#allocation19 + $0xd0] sm:$0xff]
    %v3124 = vld [vmem:[#allocation19 + $0xd8] sm:$0xff]
    %v3125 = vld [vmem:[#allocation19 + $0xe0] sm:$0xff]
    %v3126 = vld [vmem:[#allocation19 + $0xe8] sm:$0xff]
    %v3127 = vld [vmem:[#allocation19 + $0xf0] sm:$0xff]
    %v3128 = vld [vmem:[#allocation19 + $0xf8] sm:$0xff]
    %v3129 = vld [vmem:[#allocation19 + $0x100] sm:$0xff]
    %v3130 = vld [vmem:[#allocation19 + $0x108] sm:$0xff]
    %v3131 = vld [vmem:[#allocation19 + $0x110] sm:$0xff]
    %v3132 = vld [vmem:[#allocation19 + $0x118] sm:$0xff]
    %v3133 = vld [vmem:[#allocation19 + $0x120] sm:$0xff]
    %v3134 = vld [vmem:[#allocation19 + $0x128] sm:$0xff]
    %v3135 = vld [vmem:[#allocation19 + $0x130] sm:$0xff]
    %v3136 = vld [vmem:[#allocation19 + $0x138] sm:$0xff]
    %v3137 = vld [vmem:[#allocation19 + $0x140] sm:$0xff]
    %v3138 = vld [vmem:[#allocation19 + $0x148] sm:$0xff]
    %v3139 = vld [vmem:[#allocation19 + $0x150] sm:$0xff]
    %v3140 = vld [vmem:[#allocation19 + $0x158] sm:$0xff]
    %v3141 = vld [vmem:[#allocation19 + $0x160] sm:$0xff]
    %v3142 = vld [vmem:[#allocation19 + $0x168] sm:$0xff]
    %v3143 = vld [vmem:[#allocation19 + $0x170] sm:$0xff]
    %v3144 = vld [vmem:[#allocation19 + $0x178] sm:$0xff]
    %v3145 = vld [vmem:[#allocation19 + $0x180] sm:$0xff]
    %v3146 = vld [vmem:[#allocation19 + $0x188] sm:$0xff]
    %v3147 = vld [vmem:[#allocation19 + $0x190] sm:$0xff]
    %v3148 = vld [vmem:[#allocation19 + $0x198] sm:$0xff]
    %v3149 = vld [vmem:[#allocation19 + $0x1a0] sm:$0xff]
    %v3150 = vld [vmem:[#allocation19 + $0x1a8] sm:$0xff]
    %v3151 = vld [vmem:[#allocation19 + $0x1b0] sm:$0xff]
    %v3152 = vld [vmem:[#allocation19 + $0x1b8] sm:$0xff]
    %v3153 = vld [vmem:[#allocation19 + $0x1c0] sm:$0xff]
    %v3154 = vld [vmem:[#allocation19 + $0x1c8] sm:$0xff]
    %v3155 = vld [vmem:[#allocation19 + $0x1d0] sm:$0xff]
    %v3156 = vld [vmem:[#allocation19 + $0x1d8] sm:$0xff]
    %v3157 = vld [vmem:[#allocation19 + $0x1e0] sm:$0xff]
    %v3158 = vld [vmem:[#allocation19 + $0x1e8] sm:$0xff]
    %v3159 = vld [vmem:[#allocation19 + $0x1f0] sm:$0xff]
    %v3160 = vld [vmem:[#allocation19 + $0x1f8] sm:$0xff]
    %3161 = vmatprep.subr.mxu0 %v3098
    %3162 = vmatpush1.msra.mxu0 %v3097
    %3163 = vmatprep.subr.mxu0 %v3102
    %3164 = vmatpush1.msra.mxu0 %v3101
    %3165 = vmatprep.subr.mxu0 %v3106
    %3166 = vmatpush1.msra.mxu0 %v3105
    %3167 = vmatprep.subr.mxu0 %v3110
    %3168 = vmatpush1.msra.mxu0 %v3109
    %3169 = vmatprep.subr.mxu0 %v3114
    %3170 = vmatpush1.msra.mxu0 %v3113
    %3171 = vmatprep.subr.mxu0 %v3118
    %3172 = vmatpush1.msra.mxu0 %v3117
    %3173 = vmatprep.subr.mxu0 %v3122
    %3174 = vmatpush1.msra.mxu0 %v3121
    %3175 = vmatprep.subr.mxu0 %v3126
    %3176 = vmatpush1.msra.mxu0 %v3125
    %3177 = vmatprep.subr.mxu0 %v3130
    %3178 = vmatpush1.msra.mxu0 %v3129
    %3179 = vmatprep.subr.mxu0 %v3134
    %3180 = vmatpush1.msra.mxu0 %v3133
    %3181 = vmatprep.subr.mxu0 %v3138
    %3182 = vmatpush1.msra.mxu0 %v3137
    %3183 = vmatprep.subr.mxu0 %v3142
    %3184 = vmatpush1.msra.mxu0 %v3141
    %3185 = vmatprep.subr.mxu0 %v3146
    %3186 = vmatpush1.msra.mxu0 %v3145
    %3187 = vmatprep.subr.mxu0 %v3150
    %3188 = vmatpush1.msra.mxu0 %v3149
    %3189 = vmatprep.subr.mxu0 %v3154
    %3190 = vmatpush1.msra.mxu0 %v3153
    %3191 = vmatprep.subr.mxu0 %v3158
    %3192 = vmatpush1.msra.mxu0 %v3157
    %3193 = vmatprep.subr.mxu0 0.0
    %3194 = vmatpush1.msra.mxu0 0.0
    %3195 = vmatprep.subr.mxu0 0.0
    %3196 = vmatpush1.msra.mxu0 0.0
    %3197 = vmatprep.subr.mxu0 0.0
    %3198 = vmatpush1.msra.mxu0 0.0
    %3199 = vmatprep.subr.mxu0 0.0
    %3200 = vmatpush1.msra.mxu0 0.0
    %3201 = vmatprep.subr.mxu0 0.0
    %3202 = vmatpush1.msra.mxu0 0.0
    %3203 = vmatprep.subr.mxu0 0.0
    %3204 = vmatpush1.msra.mxu0 0.0
    %3205 = vmatprep.subr.mxu0 0.0
    %3206 = vmatpush1.msra.mxu0 0.0
    %3207 = vmatprep.subr.mxu0 0.0
    %3208 = vmatpush1.msra.mxu0 0.0
    %3209 = vmatprep.subr.mxu0 0.0
    %3210 = vmatpush1.msra.mxu0 0.0
    %3211 = vmatprep.subr.mxu0 0.0
    %3212 = vmatpush1.msra.mxu0 0.0
    %3213 = vmatprep.subr.mxu0 0.0
    %3214 = vmatpush1.msra.mxu0 0.0
    %3215 = vmatprep.subr.mxu0 0.0
    %3216 = vmatpush1.msra.mxu0 0.0
    %3217 = vmatprep.subr.mxu0 0.0
    %3218 = vmatpush1.msra.mxu0 0.0
    %3219 = vmatprep.subr.mxu0 0.0
    %3220 = vmatpush1.msra.mxu0 0.0
    %3221 = vmatprep.subr.mxu0 0.0
    %3222 = vmatpush1.msra.mxu0 0.0
    %3223 = vmatprep.subr.mxu0 0.0
    %3224 = vmatpush1.msra.mxu0 0.0
    %3225 = vmatprep.mubr.f32.mxu0 0.0
    %3226 = vmatmul.mubr.f32.gmra.mrb[0].mxu0 %v3096
    %v3227 = vpop.f32.mrb[0].mxu0
    %v3228 = vadd.f32 0.0, %v3227
    %v3229 = vpop.f32.mrb[0].mxu0
    %v3230 = vadd.f32 0.0, %v3229
    %3231 = vdwg.mxu0
    %3232 = vmatprep.subr.mxu0 %v3100
    %3233 = vmatpush1.msra.mxu0 %v3099
    %3234 = vmatprep.subr.mxu0 %v3104
    %3235 = vmatpush1.msra.mxu0 %v3103
    %3236 = vmatprep.subr.mxu0 %v3108
    %3237 = vmatpush1.msra.mxu0 %v3107
    %3238 = vmatprep.subr.mxu0 %v3112
    %3239 = vmatpush1.msra.mxu0 %v3111
    %3240 = vmatprep.subr.mxu0 %v3116
    %3241 = vmatpush1.msra.mxu0 %v3115
    %3242 = vmatprep.subr.mxu0 %v3120
    %3243 = vmatpush1.msra.mxu0 %v3119
    %3244 = vmatprep.subr.mxu0 %v3124
    %3245 = vmatpush1.msra.mxu0 %v3123
    %3246 = vmatprep.subr.mxu0 %v3128
    %3247 = vmatpush1.msra.mxu0 %v3127
    %3248 = vmatprep.subr.mxu0 %v3132
    %3249 = vmatpush1.msra.mxu0 %v3131
    %3250 = vmatprep.subr.mxu0 %v3136
    %3251 = vmatpush1.msra.mxu0 %v3135
    %3252 = vmatprep.subr.mxu0 %v3140
    %3253 = vmatpush1.msra.mxu0 %v3139
    %3254 = vmatprep.subr.mxu0 %v3144
    %3255 = vmatpush1.msra.mxu0 %v3143
    %3256 = vmatprep.subr.mxu0 %v3148
    %3257 = vmatpush1.msra.mxu0 %v3147
    %3258 = vmatprep.subr.mxu0 %v3152
    %3259 = vmatpush1.msra.mxu0 %v3151
    %3260 = vmatprep.subr.mxu0 %v3156
    %3261 = vmatpush1.msra.mxu0 %v3155
    %3262 = vmatprep.subr.mxu0 %v3160
    %3263 = vmatpush1.msra.mxu0 %v3159
    %3264 = vmatprep.subr.mxu0 0.0
    %3265 = vmatpush1.msra.mxu0 0.0
    %3266 = vmatprep.subr.mxu0 0.0
    %3267 = vmatpush1.msra.mxu0 0.0
    %3268 = vmatprep.subr.mxu0 0.0
    %3269 = vmatpush1.msra.mxu0 0.0
    %3270 = vmatprep.subr.mxu0 0.0
    %3271 = vmatpush1.msra.mxu0 0.0
    %3272 = vmatprep.subr.mxu0 0.0
    %3273 = vmatpush1.msra.mxu0 0.0
    %3274 = vmatprep.subr.mxu0 0.0
    %3275 = vmatpush1.msra.mxu0 0.0
    %3276 = vmatprep.subr.mxu0 0.0
    %3277 = vmatpush1.msra.mxu0 0.0
    %3278 = vmatprep.subr.mxu0 0.0
    %3279 = vmatpush1.msra.mxu0 0.0
    %3280 = vmatprep.subr.mxu0 0.0
    %3281 = vmatpush1.msra.mxu0 0.0
    %3282 = vmatprep.subr.mxu0 0.0
    %3283 = vmatpush1.msra.mxu0 0.0
    %3284 = vmatprep.subr.mxu0 0.0
    %3285 = vmatpush1.msra.mxu0 0.0
    %3286 = vmatprep.subr.mxu0 0.0
    %3287 = vmatpush1.msra.mxu0 0.0
    %3288 = vmatprep.subr.mxu0 0.0
    %3289 = vmatpush1.msra.mxu0 0.0
    %3290 = vmatprep.subr.mxu0 0.0
    %3291 = vmatpush1.msra.mxu0 0.0
    %3292 = vmatprep.subr.mxu0 0.0
    %3293 = vmatpush1.msra.mxu0 0.0
    %3294 = vmatprep.subr.mxu0 0.0
    %3295 = vmatpush1.msra.mxu0 0.0
    %3296 = vmatprep.mubr.f32.mxu0 0.0
    %3297 = vmatmul.mubr.f32.gmra.mrb[0].mxu0 %v3096
    %v3298 = vpop.f32.mrb[0].mxu0
    %v3299 = vadd.f32 0.0, %v3298
    %v3300 = vpop.f32.mrb[0].mxu0
    %v3301 = vadd.f32 0.0, %v3300
    %3302 = vdwg.mxu0
    %v3303 = vadd.f32 %v3092, %v3228
    %v3304 = vadd.f32 %v3093, %v3230
    %v3305 = vadd.f32 %v3094, %v3299
    %v3306 = vadd.f32 %v3095, %v3301
    %v3307 = vld [vmem:[#allocation7] sm:$0xff]
    %v3308 = vxor.u32 %v3303, 2147483648
    %v3309 = vmul.f32 %v3308, 1.442695
    %v3310 = vpow.pop %v3309
    %v3311 = vadd.f32 %v3310, 1.0
    %v3312 = vrcp.pop %v3311
    %v3313 = vmul.f32 1.0, %v3312
    %v3314 = vxor.u32 %v3304, 2147483648
    %v3315 = vmul.f32 %v3314, 1.442695
    %v3316 = vpow.pop %v3315
    %v3317 = vadd.f32 %v3316, 1.0
    %v3318 = vrcp.pop %v3317
    %v3319 = vmul.f32 1.0, %v3318
    %v3320 = vtanh.pop %v3305
    %v3321 = vxor.u32 %v3306, 2147483648
    %v3322 = vmul.f32 %v3321, 1.442695
    %v3323 = vpow.pop %v3322
    %v3324 = vadd.f32 %v3323, 1.0
    %v3325 = vrcp.pop %v3324
    %v3326 = vmul.f32 1.0, %v3325
    %v3327 = vmul.f32 %v3319, %v3307
    %v3328 = vmul.f32 %v3313, %v3320
    %v3329 = vadd.f32 %v3327, %v3328
    %v3330 = vtanh.pop %v3329
    %v3331 = vmul.f32 %v3326, %v3330
    %3332 = vst [vmem:[#allocation6] sm:$0xff] %v3331
    %3333 = vst [vmem:[#allocation7] sm:$0xff] %v3329
    %s3334 = scalar_lea.vmem [#allocation5], 8
    %3335 = vst [vmem:[%s3334] sm:$0xff] %v3331
    %s3336 = smul.addr %s1001, 8
    %s3337 = scalar_lea.vmem [#allocation4], %s3336
    %v3338 = vld [vmem:[%s3337] sm:$0xff]
    %v3339 = vld [vmem:[%s3337 + $0x8] sm:$0xff]
    %v3340 = vld [vmem:[%s3337 + $0x10] sm:$0xff]
    %v3341 = vld [vmem:[%s3337 + $0x18] sm:$0xff]
    %v3342 = vld [vmem:[#allocation6] sm:$0xff]
    %v3343 = vld [vmem:[#allocation19] sm:$0xff]
    %v3344 = vld [vmem:[#allocation19 + $0x8] sm:$0xff]
    %v3345 = vld [vmem:[#allocation19 + $0x10] sm:$0xff]
    %v3346 = vld [vmem:[#allocation19 + $0x18] sm:$0xff]
    %v3347 = vld [vmem:[#allocation19 + $0x20] sm:$0xff]
    %v3348 = vld [vmem:[#allocation19 + $0x28] sm:$0xff]
    %v3349 = vld [vmem:[#allocation19 + $0x30] sm:$0xff]
    %v3350 = vld [vmem:[#allocation19 + $0x38] sm:$0xff]
    %v3351 = vld [vmem:[#allocation19 + $0x40] sm:$0xff]
    %v3352 = vld [vmem:[#allocation19 + $0x48] sm:$0xff]
    %v3353 = vld [vmem:[#allocation19 + $0x50] sm:$0xff]
    %v3354 = vld [vmem:[#allocation19 + $0x58] sm:$0xff]
    %v3355 = vld [vmem:[#allocation19 + $0x60] sm:$0xff]
    %v3356 = vld [vmem:[#allocation19 + $0x68] sm:$0xff]
    %v3357 = vld [vmem:[#allocation19 + $0x70] sm:$0xff]
    %v3358 = vld [vmem:[#allocation19 + $0x78] sm:$0xff]
    %v3359 = vld [vmem:[#allocation19 + $0x80] sm:$0xff]
    %v3360 = vld [vmem:[#allocation19 + $0x88] sm:$0xff]
    %v3361 = vld [vmem:[#allocation19 + $0x90] sm:$0xff]
    %v3362 = vld [vmem:[#allocation19 + $0x98] sm:$0xff]
    %v3363 = vld [vmem:[#allocation19 + $0xa0] sm:$0xff]
    %v3364 = vld [vmem:[#allocation19 + $0xa8] sm:$0xff]
    %v3365 = vld [vmem:[#allocation19 + $0xb0] sm:$0xff]
    %v3366 = vld [vmem:[#allocation19 + $0xb8] sm:$0xff]
    %v3367 = vld [vmem:[#allocation19 + $0xc0] sm:$0xff]
    %v3368 = vld [vmem:[#allocation19 + $0xc8] sm:$0xff]
    %v3369 = vld [vmem:[#allocation19 + $0xd0] sm:$0xff]
    %v3370 = vld [vmem:[#allocation19 + $0xd8] sm:$0xff]
    %v3371 = vld [vmem:[#allocation19 + $0xe0] sm:$0xff]
    %v3372 = vld [vmem:[#allocation19 + $0xe8] sm:$0xff]
    %v3373 = vld [vmem:[#allocation19 + $0xf0] sm:$0xff]
    %v3374 = vld [vmem:[#allocation19 + $0xf8] sm:$0xff]
    %v3375 = vld [vmem:[#allocation19 + $0x100] sm:$0xff]
    %v3376 = vld [vmem:[#allocation19 + $0x108] sm:$0xff]
    %v3377 = vld [vmem:[#allocation19 + $0x110] sm:$0xff]
    %v3378 = vld [vmem:[#allocation19 + $0x118] sm:$0xff]
    %v3379 = vld [vmem:[#allocation19 + $0x120] sm:$0xff]
    %v3380 = vld [vmem:[#allocation19 + $0x128] sm:$0xff]
    %v3381 = vld [vmem:[#allocation19 + $0x130] sm:$0xff]
    %v3382 = vld [vmem:[#allocation19 + $0x138] sm:$0xff]
    %v3383 = vld [vmem:[#allocation19 + $0x140] sm:$0xff]
    %v3384 = vld [vmem:[#allocation19 + $0x148] sm:$0xff]
    %v3385 = vld [vmem:[#allocation19 + $0x150] sm:$0xff]
    %v3386 = vld [vmem:[#allocation19 + $0x158] sm:$0xff]
    %v3387 = vld [vmem:[#allocation19 + $0x160] sm:$0xff]
    %v3388 = vld [vmem:[#allocation19 + $0x168] sm:$0xff]
    %v3389 = vld [vmem:[#allocation19 + $0x170] sm:$0xff]
    %v3390 = vld [vmem:[#allocation19 + $0x178] sm:$0xff]
    %v3391 = vld [vmem:[#allocation19 + $0x180] sm:$0xff]
    %v3392 = vld [vmem:[#allocation19 + $0x188] sm:$0xff]
    %v3393 = vld [vmem:[#allocation19 + $0x190] sm:$0xff]
    %v3394 = vld [vmem:[#allocation19 + $0x198] sm:$0xff]
    %v3395 = vld [vmem:[#allocation19 + $0x1a0] sm:$0xff]
    %v3396 = vld [vmem:[#allocation19 + $0x1a8] sm:$0xff]
    %v3397 = vld [vmem:[#allocation19 + $0x1b0] sm:$0xff]
    %v3398 = vld [vmem:[#allocation19 + $0x1b8] sm:$0xff]
    %v3399 = vld [vmem:[#allocation19 + $0x1c0] sm:$0xff]
    %v3400 = vld [vmem:[#allocation19 + $0x1c8] sm:$0xff]
    %v3401 = vld [vmem:[#allocation19 + $0x1d0] sm:$0xff]
    %v3402 = vld [vmem:[#allocation19 + $0x1d8] sm:$0xff]
    %v3403 = vld [vmem:[#allocation19 + $0x1e0] sm:$0xff]
    %v3404 = vld [vmem:[#allocation19 + $0x1e8] sm:$0xff]
    %v3405 = vld [vmem:[#allocation19 + $0x1f0] sm:$0xff]
    %v3406 = vld [vmem:[#allocation19 + $0x1f8] sm:$0xff]
    %3407 = vmatprep.subr.mxu0 %v3344
    %3408 = vmatpush1.msra.mxu0 %v3343
    %3409 = vmatprep.subr.mxu0 %v3348
    %3410 = vmatpush1.msra.mxu0 %v3347
    %3411 = vmatprep.subr.mxu0 %v3352
    %3412 = vmatpush1.msra.mxu0 %v3351
    %3413 = vmatprep.subr.mxu0 %v3356
    %3414 = vmatpush1.msra.mxu0 %v3355
    %3415 = vmatprep.subr.mxu0 %v3360
    %3416 = vmatpush1.msra.mxu0 %v3359
    %3417 = vmatprep.subr.mxu0 %v3364
    %3418 = vmatpush1.msra.mxu0 %v3363
    %3419 = vmatprep.subr.mxu0 %v3368
    %3420 = vmatpush1.msra.mxu0 %v3367
    %3421 = vmatprep.subr.mxu0 %v3372
    %3422 = vmatpush1.msra.mxu0 %v3371
    %3423 = vmatprep.subr.mxu0 %v3376
    %3424 = vmatpush1.msra.mxu0 %v3375
    %3425 = vmatprep.subr.mxu0 %v3380
    %3426 = vmatpush1.msra.mxu0 %v3379
    %3427 = vmatprep.subr.mxu0 %v3384
    %3428 = vmatpush1.msra.mxu0 %v3383
    %3429 = vmatprep.subr.mxu0 %v3388
    %3430 = vmatpush1.msra.mxu0 %v3387
    %3431 = vmatprep.subr.mxu0 %v3392
    %3432 = vmatpush1.msra.mxu0 %v3391
    %3433 = vmatprep.subr.mxu0 %v3396
    %3434 = vmatpush1.msra.mxu0 %v3395
    %3435 = vmatprep.subr.mxu0 %v3400
    %3436 = vmatpush1.msra.mxu0 %v3399
    %3437 = vmatprep.subr.mxu0 %v3404
    %3438 = vmatpush1.msra.mxu0 %v3403
    %3439 = vmatprep.subr.mxu0 0.0
    %3440 = vmatpush1.msra.mxu0 0.0
    %3441 = vmatprep.subr.mxu0 0.0
    %3442 = vmatpush1.msra.mxu0 0.0
    %3443 = vmatprep.subr.mxu0 0.0
    %3444 = vmatpush1.msra.mxu0 0.0
    %3445 = vmatprep.subr.mxu0 0.0
    %3446 = vmatpush1.msra.mxu0 0.0
    %3447 = vmatprep.subr.mxu0 0.0
    %3448 = vmatpush1.msra.mxu0 0.0
    %3449 = vmatprep.subr.mxu0 0.0
    %3450 = vmatpush1.msra.mxu0 0.0
    %3451 = vmatprep.subr.mxu0 0.0
    %3452 = vmatpush1.msra.mxu0 0.0
    %3453 = vmatprep.subr.mxu0 0.0
    %3454 = vmatpush1.msra.mxu0 0.0
    %3455 = vmatprep.subr.mxu0 0.0
    %3456 = vmatpush1.msra.mxu0 0.0
    %3457 = vmatprep.subr.mxu0 0.0
    %3458 = vmatpush1.msra.mxu0 0.0
    %3459 = vmatprep.subr.mxu0 0.0
    %3460 = vmatpush1.msra.mxu0 0.0
    %3461 = vmatprep.subr.mxu0 0.0
    %3462 = vmatpush1.msra.mxu0 0.0
    %3463 = vmatprep.subr.mxu0 0.0
    %3464 = vmatpush1.msra.mxu0 0.0
    %3465 = vmatprep.subr.mxu0 0.0
    %3466 = vmatpush1.msra.mxu0 0.0
    %3467 = vmatprep.subr.mxu0 0.0
    %3468 = vmatpush1.msra.mxu0 0.0
    %3469 = vmatprep.subr.mxu0 0.0
    %3470 = vmatpush1.msra.mxu0 0.0
    %3471 = vmatprep.mubr.f32.mxu0 0.0
    %3472 = vmatmul.mubr.f32.gmra.mrb[0].mxu0 %v3342
    %v3473 = vpop.f32.mrb[0].mxu0
    %v3474 = vadd.f32 0.0, %v3473
    %v3475 = vpop.f32.mrb[0].mxu0
    %v3476 = vadd.f32 0.0, %v3475
    %3477 = vdwg.mxu0
    %3478 = vmatprep.subr.mxu0 %v3346
    %3479 = vmatpush1.msra.mxu0 %v3345
    %3480 = vmatprep.subr.mxu0 %v3350
    %3481 = vmatpush1.msra.mxu0 %v3349
    %3482 = vmatprep.subr.mxu0 %v3354
    %3483 = vmatpush1.msra.mxu0 %v3353
    %3484 = vmatprep.subr.mxu0 %v3358
    %3485 = vmatpush1.msra.mxu0 %v3357
    %3486 = vmatprep.subr.mxu0 %v3362
    %3487 = vmatpush1.msra.mxu0 %v3361
    %3488 = vmatprep.subr.mxu0 %v3366
    %3489 = vmatpush1.msra.mxu0 %v3365
    %3490 = vmatprep.subr.mxu0 %v3370
    %3491 = vmatpush1.msra.mxu0 %v3369
    %3492 = vmatprep.subr.mxu0 %v3374
    %3493 = vmatpush1.msra.mxu0 %v3373
    %3494 = vmatprep.subr.mxu0 %v3378
    %3495 = vmatpush1.msra.mxu0 %v3377
    %3496 = vmatprep.subr.mxu0 %v3382
    %3497 = vmatpush1.msra.mxu0 %v3381
    %3498 = vmatprep.subr.mxu0 %v3386
    %3499 = vmatpush1.msra.mxu0 %v3385
    %3500 = vmatprep.subr.mxu0 %v3390
    %3501 = vmatpush1.msra.mxu0 %v3389
    %3502 = vmatprep.subr.mxu0 %v3394
    %3503 = vmatpush1.msra.mxu0 %v3393
    %3504 = vmatprep.subr.mxu0 %v3398
    %3505 = vmatpush1.msra.mxu0 %v3397
    %3506 = vmatprep.subr.mxu0 %v3402
    %3507 = vmatpush1.msra.mxu0 %v3401
    %3508 = vmatprep.subr.mxu0 %v3406
    %3509 = vmatpush1.msra.mxu0 %v3405
    %3510 = vmatprep.subr.mxu0 0.0
    %3511 = vmatpush1.msra.mxu0 0.0
    %3512 = vmatprep.subr.mxu0 0.0
    %3513 = vmatpush1.msra.mxu0 0.0
    %3514 = vmatprep.subr.mxu0 0.0
    %3515 = vmatpush1.msra.mxu0 0.0
    %3516 = vmatprep.subr.mxu0 0.0
    %3517 = vmatpush1.msra.mxu0 0.0
    %3518 = vmatprep.subr.mxu0 0.0
    %3519 = vmatpush1.msra.mxu0 0.0
    %3520 = vmatprep.subr.mxu0 0.0
    %3521 = vmatpush1.msra.mxu0 0.0
    %3522 = vmatprep.subr.mxu0 0.0
    %3523 = vmatpush1.msra.mxu0 0.0
    %3524 = vmatprep.subr.mxu0 0.0
    %3525 = vmatpush1.msra.mxu0 0.0
    %3526 = vmatprep.subr.mxu0 0.0
    %3527 = vmatpush1.msra.mxu0 0.0
    %3528 = vmatprep.subr.mxu0 0.0
    %3529 = vmatpush1.msra.mxu0 0.0
    %3530 = vmatprep.subr.mxu0 0.0
    %3531 = vmatpush1.msra.mxu0 0.0
    %3532 = vmatprep.subr.mxu0 0.0
    %3533 = vmatpush1.msra.mxu0 0.0
    %3534 = vmatprep.subr.mxu0 0.0
    %3535 = vmatpush1.msra.mxu0 0.0
    %3536 = vmatprep.subr.mxu0 0.0
    %3537 = vmatpush1.msra.mxu0 0.0
    %3538 = vmatprep.subr.mxu0 0.0
    %3539 = vmatpush1.msra.mxu0 0.0
    %3540 = vmatprep.subr.mxu0 0.0
    %3541 = vmatpush1.msra.mxu0 0.0
    %3542 = vmatprep.mubr.f32.mxu0 0.0
    %3543 = vmatmul.mubr.f32.gmra.mrb[0].mxu0 %v3342
    %v3544 = vpop.f32.mrb[0].mxu0
    %v3545 = vadd.f32 0.0, %v3544
    %v3546 = vpop.f32.mrb[0].mxu0
    %v3547 = vadd.f32 0.0, %v3546
    %3548 = vdwg.mxu0
    %v3549 = vadd.f32 %v3338, %v3474
    %v3550 = vadd.f32 %v3339, %v3476
    %v3551 = vadd.f32 %v3340, %v3545
    %v3552 = vadd.f32 %v3341, %v3547
    %v3553 = vld [vmem:[#allocation7] sm:$0xff]
    %v3554 = vxor.u32 %v3549, 2147483648
    %v3555 = vmul.f32 %v3554, 1.442695
    %v3556 = vpow.pop %v3555
    %v3557 = vadd.f32 %v3556, 1.0
    %v3558 = vrcp.pop %v3557
    %v3559 = vmul.f32 1.0, %v3558
    %v3560 = vxor.u32 %v3550, 2147483648
    %v3561 = vmul.f32 %v3560, 1.442695
    %v3562 = vpow.pop %v3561
    %v3563 = vadd.f32 %v3562, 1.0
    %v3564 = vrcp.pop %v3563
    %v3565 = vmul.f32 1.0, %v3564
    %v3566 = vtanh.pop %v3551
    %v3567 = vxor.u32 %v3552, 2147483648
    %v3568 = vmul.f32 %v3567, 1.442695
    %v3569 = vpow.pop %v3568
    %v3570 = vadd.f32 %v3569, 1.0
    %v3571 = vrcp.pop %v3570
    %v3572 = vmul.f32 1.0, %v3571
    %v3573 = vmul.f32 %v3565, %v3553
    %v3574 = vmul.f32 %v3559, %v3566
    %v3575 = vadd.f32 %v3573, %v3574
    %v3576 = vtanh.pop %v3575
    %v3577 = vmul.f32 %v3572, %v3576
    %3578 = vst [vmem:[#allocation6] sm:$0xff] %v3577
    %3579 = vst [vmem:[#allocation7] sm:$0xff] %v3575
    %s3580 = scalar_lea.vmem [#allocation5], 16
    %3581 = vst [vmem:[%s3580] sm:$0xff] %v3577
    %s3582 = smul.addr %s1248, 8
    %s3583 = scalar_lea.vmem [#allocation4], %s3582
    %v3584 = vld [vmem:[%s3583] sm:$0xff]
    %v3585 = vld [vmem:[%s3583 + $0x8] sm:$0xff]
    %v3586 = vld [vmem:[%s3583 + $0x10] sm:$0xff]
    %v3587 = vld [vmem:[%s3583 + $0x18] sm:$0xff]
    %v3588 = vld [vmem:[#allocation6] sm:$0xff]
    %v3589 = vld [vmem:[#allocation19] sm:$0xff]
    %v3590 = vld [vmem:[#allocation19 + $0x8] sm:$0xff]
    %v3591 = vld [vmem:[#allocation19 + $0x10] sm:$0xff]
    %v3592 = vld [vmem:[#allocation19 + $0x18] sm:$0xff]
    %v3593 = vld [vmem:[#allocation19 + $0x20] sm:$0xff]
    %v3594 = vld [vmem:[#allocation19 + $0x28] sm:$0xff]
    %v3595 = vld [vmem:[#allocation19 + $0x30] sm:$0xff]
    %v3596 = vld [vmem:[#allocation19 + $0x38] sm:$0xff]
    %v3597 = vld [vmem:[#allocation19 + $0x40] sm:$0xff]
    %v3598 = vld [vmem:[#allocation19 + $0x48] sm:$0xff]
    %v3599 = vld [vmem:[#allocation19 + $0x50] sm:$0xff]
    %v3600 = vld [vmem:[#allocation19 + $0x58] sm:$0xff]
    %v3601 = vld [vmem:[#allocation19 + $0x60] sm:$0xff]
    %v3602 = vld [vmem:[#allocation19 + $0x68] sm:$0xff]
    %v3603 = vld [vmem:[#allocation19 + $0x70] sm:$0xff]
    %v3604 = vld [vmem:[#allocation19 + $0x78] sm:$0xff]
    %v3605 = vld [vmem:[#allocation19 + $0x80] sm:$0xff]
    %v3606 = vld [vmem:[#allocation19 + $0x88] sm:$0xff]
    %v3607 = vld [vmem:[#allocation19 + $0x90] sm:$0xff]
    %v3608 = vld [vmem:[#allocation19 + $0x98] sm:$0xff]
    %v3609 = vld [vmem:[#allocation19 + $0xa0] sm:$0xff]
    %v3610 = vld [vmem:[#allocation19 + $0xa8] sm:$0xff]
    %v3611 = vld [vmem:[#allocation19 + $0xb0] sm:$0xff]
    %v3612 = vld [vmem:[#allocation19 + $0xb8] sm:$0xff]
    %v3613 = vld [vmem:[#allocation19 + $0xc0] sm:$0xff]
    %v3614 = vld [vmem:[#allocation19 + $0xc8] sm:$0xff]
    %v3615 = vld [vmem:[#allocation19 + $0xd0] sm:$0xff]
    %v3616 = vld [vmem:[#allocation19 + $0xd8] sm:$0xff]
    %v3617 = vld [vmem:[#allocation19 + $0xe0] sm:$0xff]
    %v3618 = vld [vmem:[#allocation19 + $0xe8] sm:$0xff]
    %v3619 = vld [vmem:[#allocation19 + $0xf0] sm:$0xff]
    %v3620 = vld [vmem:[#allocation19 + $0xf8] sm:$0xff]
    %v3621 = vld [vmem:[#allocation19 + $0x100] sm:$0xff]
    %v3622 = vld [vmem:[#allocation19 + $0x108] sm:$0xff]
    %v3623 = vld [vmem:[#allocation19 + $0x110] sm:$0xff]
    %v3624 = vld [vmem:[#allocation19 + $0x118] sm:$0xff]
    %v3625 = vld [vmem:[#allocation19 + $0x120] sm:$0xff]
    %v3626 = vld [vmem:[#allocation19 + $0x128] sm:$0xff]
    %v3627 = vld [vmem:[#allocation19 + $0x130] sm:$0xff]
    %v3628 = vld [vmem:[#allocation19 + $0x138] sm:$0xff]
    %v3629 = vld [vmem:[#allocation19 + $0x140] sm:$0xff]
    %v3630 = vld [vmem:[#allocation19 + $0x148] sm:$0xff]
    %v3631 = vld [vmem:[#allocation19 + $0x150] sm:$0xff]
    %v3632 = vld [vmem:[#allocation19 + $0x158] sm:$0xff]
    %v3633 = vld [vmem:[#allocation19 + $0x160] sm:$0xff]
    %v3634 = vld [vmem:[#allocation19 + $0x168] sm:$0xff]
    %v3635 = vld [vmem:[#allocation19 + $0x170] sm:$0xff]
    %v3636 = vld [vmem:[#allocation19 + $0x178] sm:$0xff]
    %v3637 = vld [vmem:[#allocation19 + $0x180] sm:$0xff]
    %v3638 = vld [vmem:[#allocation19 + $0x188] sm:$0xff]
    %v3639 = vld [vmem:[#allocation19 + $0x190] sm:$0xff]
    %v3640 = vld [vmem:[#allocation19 + $0x198] sm:$0xff]
    %v3641 = vld [vmem:[#allocation19 + $0x1a0] sm:$0xff]
    %v3642 = vld [vmem:[#allocation19 + $0x1a8] sm:$0xff]
    %v3643 = vld [vmem:[#allocation19 + $0x1b0] sm:$0xff]
    %v3644 = vld [vmem:[#allocation19 + $0x1b8] sm:$0xff]
    %v3645 = vld [vmem:[#allocation19 + $0x1c0] sm:$0xff]
    %v3646 = vld [vmem:[#allocation19 + $0x1c8] sm:$0xff]
    %v3647 = vld [vmem:[#allocation19 + $0x1d0] sm:$0xff]
    %v3648 = vld [vmem:[#allocation19 + $0x1d8] sm:$0xff]
    %v3649 = vld [vmem:[#allocation19 + $0x1e0] sm:$0xff]
    %v3650 = vld [vmem:[#allocation19 + $0x1e8] sm:$0xff]
    %v3651 = vld [vmem:[#allocation19 + $0x1f0] sm:$0xff]
    %v3652 = vld [vmem:[#allocation19 + $0x1f8] sm:$0xff]
    %3653 = vmatprep.subr.mxu0 %v3590
    %3654 = vmatpush1.msra.mxu0 %v3589
    %3655 = vmatprep.subr.mxu0 %v3594
    %3656 = vmatpush1.msra.mxu0 %v3593
    %3657 = vmatprep.subr.mxu0 %v3598
    %3658 = vmatpush1.msra.mxu0 %v3597
    %3659 = vmatprep.subr.mxu0 %v3602
    %3660 = vmatpush1.msra.mxu0 %v3601
    %3661 = vmatprep.subr.mxu0 %v3606
    %3662 = vmatpush1.msra.mxu0 %v3605
    %3663 = vmatprep.subr.mxu0 %v3610
    %3664 = vmatpush1.msra.mxu0 %v3609
    %3665 = vmatprep.subr.mxu0 %v3614
    %3666 = vmatpush1.msra.mxu0 %v3613
    %3667 = vmatprep.subr.mxu0 %v3618
    %3668 = vmatpush1.msra.mxu0 %v3617
    %3669 = vmatprep.subr.mxu0 %v3622
    %3670 = vmatpush1.msra.mxu0 %v3621
    %3671 = vmatprep.subr.mxu0 %v3626
    %3672 = vmatpush1.msra.mxu0 %v3625
    %3673 = vmatprep.subr.mxu0 %v3630
    %3674 = vmatpush1.msra.mxu0 %v3629
    %3675 = vmatprep.subr.mxu0 %v3634
    %3676 = vmatpush1.msra.mxu0 %v3633
    %3677 = vmatprep.subr.mxu0 %v3638
    %3678 = vmatpush1.msra.mxu0 %v3637
    %3679 = vmatprep.subr.mxu0 %v3642
    %3680 = vmatpush1.msra.mxu0 %v3641
    %3681 = vmatprep.subr.mxu0 %v3646
    %3682 = vmatpush1.msra.mxu0 %v3645
    %3683 = vmatprep.subr.mxu0 %v3650
    %3684 = vmatpush1.msra.mxu0 %v3649
    %3685 = vmatprep.subr.mxu0 0.0
    %3686 = vmatpush1.msra.mxu0 0.0
    %3687 = vmatprep.subr.mxu0 0.0
    %3688 = vmatpush1.msra.mxu0 0.0
    %3689 = vmatprep.subr.mxu0 0.0
    %3690 = vmatpush1.msra.mxu0 0.0
    %3691 = vmatprep.subr.mxu0 0.0
    %3692 = vmatpush1.msra.mxu0 0.0
    %3693 = vmatprep.subr.mxu0 0.0
    %3694 = vmatpush1.msra.mxu0 0.0
    %3695 = vmatprep.subr.mxu0 0.0
    %3696 = vmatpush1.msra.mxu0 0.0
    %3697 = vmatprep.subr.mxu0 0.0
    %3698 = vmatpush1.msra.mxu0 0.0
    %3699 = vmatprep.subr.mxu0 0.0
    %3700 = vmatpush1.msra.mxu0 0.0
    %3701 = vmatprep.subr.mxu0 0.0
    %3702 = vmatpush1.msra.mxu0 0.0
    %3703 = vmatprep.subr.mxu0 0.0
    %3704 = vmatpush1.msra.mxu0 0.0
    %3705 = vmatprep.subr.mxu0 0.0
    %3706 = vmatpush1.msra.mxu0 0.0
    %3707 = vmatprep.subr.mxu0 0.0
    %3708 = vmatpush1.msra.mxu0 0.0
    %3709 = vmatprep.subr.mxu0 0.0
    %3710 = vmatpush1.msra.mxu0 0.0
    %3711 = vmatprep.subr.mxu0 0.0
    %3712 = vmatpush1.msra.mxu0 0.0
    %3713 = vmatprep.subr.mxu0 0.0
    %3714 = vmatpush1.msra.mxu0 0.0
    %3715 = vmatprep.subr.mxu0 0.0
    %3716 = vmatpush1.msra.mxu0 0.0
    %3717 = vmatprep.mubr.f32.mxu0 0.0
    %3718 = vmatmul.mubr.f32.gmra.mrb[0].mxu0 %v3588
    %v3719 = vpop.f32.mrb[0].mxu0
    %v3720 = vadd.f32 0.0, %v3719
    %v3721 = vpop.f32.mrb[0].mxu0
    %v3722 = vadd.f32 0.0, %v3721
    %3723 = vdwg.mxu0
    %3724 = vmatprep.subr.mxu0 %v3592
    %3725 = vmatpush1.msra.mxu0 %v3591
    %3726 = vmatprep.subr.mxu0 %v3596
    %3727 = vmatpush1.msra.mxu0 %v3595
    %3728 = vmatprep.subr.mxu0 %v3600
    %3729 = vmatpush1.msra.mxu0 %v3599
    %3730 = vmatprep.subr.mxu0 %v3604
    %3731 = vmatpush1.msra.mxu0 %v3603
    %3732 = vmatprep.subr.mxu0 %v3608
    %3733 = vmatpush1.msra.mxu0 %v3607
    %3734 = vmatprep.subr.mxu0 %v3612
    %3735 = vmatpush1.msra.mxu0 %v3611
    %3736 = vmatprep.subr.mxu0 %v3616
    %3737 = vmatpush1.msra.mxu0 %v3615
    %3738 = vmatprep.subr.mxu0 %v3620
    %3739 = vmatpush1.msra.mxu0 %v3619
    %3740 = vmatprep.subr.mxu0 %v3624
    %3741 = vmatpush1.msra.mxu0 %v3623
    %3742 = vmatprep.subr.mxu0 %v3628
    %3743 = vmatpush1.msra.mxu0 %v3627
    %3744 = vmatprep.subr.mxu0 %v3632
    %3745 = vmatpush1.msra.mxu0 %v3631
    %3746 = vmatprep.subr.mxu0 %v3636
    %3747 = vmatpush1.msra.mxu0 %v3635
    %3748 = vmatprep.subr.mxu0 %v3640
    %3749 = vmatpush1.msra.mxu0 %v3639
    %3750 = vmatprep.subr.mxu0 %v3644
    %3751 = vmatpush1.msra.mxu0 %v3643
    %3752 = vmatprep.subr.mxu0 %v3648
    %3753 = vmatpush1.msra.mxu0 %v3647
    %3754 = vmatprep.subr.mxu0 %v3652
    %3755 = vmatpush1.msra.mxu0 %v3651
    %3756 = vmatprep.subr.mxu0 0.0
    %3757 = vmatpush1.msra.mxu0 0.0
    %3758 = vmatprep.subr.mxu0 0.0
    %3759 = vmatpush1.msra.mxu0 0.0
    %3760 = vmatprep.subr.mxu0 0.0
    %3761 = vmatpush1.msra.mxu0 0.0
    %3762 = vmatprep.subr.mxu0 0.0
    %3763 = vmatpush1.msra.mxu0 0.0
    %3764 = vmatprep.subr.mxu0 0.0
    %3765 = vmatpush1.msra.mxu0 0.0
    %3766 = vmatprep.subr.mxu0 0.0
    %3767 = vmatpush1.msra.mxu0 0.0
    %3768 = vmatprep.subr.mxu0 0.0
    %3769 = vmatpush1.msra.mxu0 0.0
    %3770 = vmatprep.subr.mxu0 0.0
    %3771 = vmatpush1.msra.mxu0 0.0
    %3772 = vmatprep.subr.mxu0 0.0
    %3773 = vmatpush1.msra.mxu0 0.0
    %3774 = vmatprep.subr.mxu0 0.0
    %3775 = vmatpush1.msra.mxu0 0.0
    %3776 = vmatprep.subr.mxu0 0.0
    %3777 = vmatpush1.msra.mxu0 0.0
    %3778 = vmatprep.subr.mxu0 0.0
    %3779 = vmatpush1.msra.mxu0 0.0
    %3780 = vmatprep.subr.mxu0 0.0
    %3781 = vmatpush1.msra.mxu0 0.0
    %3782 = vmatprep.subr.mxu0 0.0
    %3783 = vmatpush1.msra.mxu0 0.0
    %3784 = vmatprep.subr.mxu0 0.0
    %3785 = vmatpush1.msra.mxu0 0.0
    %3786 = vmatprep.subr.mxu0 0.0
    %3787 = vmatpush1.msra.mxu0 0.0
    %3788 = vmatprep.mubr.f32.mxu0 0.0
    %3789 = vmatmul.mubr.f32.gmra.mrb[0].mxu0 %v3588
    %v3790 = vpop.f32.mrb[0].mxu0
    %v3791 = vadd.f32 0.0, %v3790
    %v3792 = vpop.f32.mrb[0].mxu0
    %v3793 = vadd.f32 0.0, %v3792
    %3794 = vdwg.mxu0
    %v3795 = vadd.f32 %v3584, %v3720
    %v3796 = vadd.f32 %v3585, %v3722
    %v3797 = vadd.f32 %v3586, %v3791
    %v3798 = vadd.f32 %v3587, %v3793
    %v3799 = vld [vmem:[#allocation7] sm:$0xff]
    %v3800 = vxor.u32 %v3795, 2147483648
    %v3801 = vmul.f32 %v3800, 1.442695
    %v3802 = vpow.pop %v3801
    %v3803 = vadd.f32 %v3802, 1.0
    %v3804 = vrcp.pop %v3803
    %v3805 = vmul.f32 1.0, %v3804
    %v3806 = vxor.u32 %v3796, 2147483648
    %v3807 = vmul.f32 %v3806, 1.442695
    %v3808 = vpow.pop %v3807
    %v3809 = vadd.f32 %v3808, 1.0
    %v3810 = vrcp.pop %v3809
    %v3811 = vmul.f32 1.0, %v3810
    %v3812 = vtanh.pop %v3797
    %v3813 = vxor.u32 %v3798, 2147483648
    %v3814 = vmul.f32 %v3813, 1.442695
    %v3815 = vpow.pop %v3814
    %v3816 = vadd.f32 %v3815, 1.0
    %v3817 = vrcp.pop %v3816
    %v3818 = vmul.f32 1.0, %v3817
    %v3819 = vmul.f32 %v3811, %v3799
    %v3820 = vmul.f32 %v3805, %v3812
    %v3821 = vadd.f32 %v3819, %v3820
    %v3822 = vtanh.pop %v3821
    %v3823 = vmul.f32 %v3818, %v3822
    %3824 = vst [vmem:[#allocation6] sm:$0xff] %v3823
    %3825 = vst [vmem:[#allocation7] sm:$0xff] %v3821
    %s3826 = scalar_lea.vmem [#allocation5], 24
    %3827 = vst [vmem:[%s3826] sm:$0xff] %v3823
    %s3828 = smul.addr %s1495, 8
    %s3829 = scalar_lea.vmem [#allocation4], %s3828
    %v3830 = vld [vmem:[%s3829] sm:$0xff]
    %v3831 = vld [vmem:[%s3829 + $0x8] sm:$0xff]
    %v3832 = vld [vmem:[%s3829 + $0x10] sm:$0xff]
    %v3833 = vld [vmem:[%s3829 + $0x18] sm:$0xff]
    %v3834 = vld [vmem:[#allocation6] sm:$0xff]
    %v3835 = vld [vmem:[#allocation19] sm:$0xff]
    %v3836 = vld [vmem:[#allocation19 + $0x8] sm:$0xff]
    %v3837 = vld [vmem:[#allocation19 + $0x10] sm:$0xff]
    %v3838 = vld [vmem:[#allocation19 + $0x18] sm:$0xff]
    %v3839 = vld [vmem:[#allocation19 + $0x20] sm:$0xff]
    %v3840 = vld [vmem:[#allocation19 + $0x28] sm:$0xff]
    %v3841 = vld [vmem:[#allocation19 + $0x30] sm:$0xff]
    %v3842 = vld [vmem:[#allocation19 + $0x38] sm:$0xff]
    %v3843 = vld [vmem:[#allocation19 + $0x40] sm:$0xff]
    %v3844 = vld [vmem:[#allocation19 + $0x48] sm:$0xff]
    %v3845 = vld [vmem:[#allocation19 + $0x50] sm:$0xff]
    %v3846 = vld [vmem:[#allocation19 + $0x58] sm:$0xff]
    %v3847 = vld [vmem:[#allocation19 + $0x60] sm:$0xff]
    %v3848 = vld [vmem:[#allocation19 + $0x68] sm:$0xff]
    %v3849 = vld [vmem:[#allocation19 + $0x70] sm:$0xff]
    %v3850 = vld [vmem:[#allocation19 + $0x78] sm:$0xff]
    %v3851 = vld [vmem:[#allocation19 + $0x80] sm:$0xff]
    %v3852 = vld [vmem:[#allocation19 + $0x88] sm:$0xff]
    %v3853 = vld [vmem:[#allocation19 + $0x90] sm:$0xff]
    %v3854 = vld [vmem:[#allocation19 + $0x98] sm:$0xff]
    %v3855 = vld [vmem:[#allocation19 + $0xa0] sm:$0xff]
    %v3856 = vld [vmem:[#allocation19 + $0xa8] sm:$0xff]
    %v3857 = vld [vmem:[#allocation19 + $0xb0] sm:$0xff]
    %v3858 = vld [vmem:[#allocation19 + $0xb8] sm:$0xff]
    %v3859 = vld [vmem:[#allocation19 + $0xc0] sm:$0xff]
    %v3860 = vld [vmem:[#allocation19 + $0xc8] sm:$0xff]
    %v3861 = vld [vmem:[#allocation19 + $0xd0] sm:$0xff]
    %v3862 = vld [vmem:[#allocation19 + $0xd8] sm:$0xff]
    %v3863 = vld [vmem:[#allocation19 + $0xe0] sm:$0xff]
    %v3864 = vld [vmem:[#allocation19 + $0xe8] sm:$0xff]
    %v3865 = vld [vmem:[#allocation19 + $0xf0] sm:$0xff]
    %v3866 = vld [vmem:[#allocation19 + $0xf8] sm:$0xff]
    %v3867 = vld [vmem:[#allocation19 + $0x100] sm:$0xff]
    %v3868 = vld [vmem:[#allocation19 + $0x108] sm:$0xff]
    %v3869 = vld [vmem:[#allocation19 + $0x110] sm:$0xff]
    %v3870 = vld [vmem:[#allocation19 + $0x118] sm:$0xff]
    %v3871 = vld [vmem:[#allocation19 + $0x120] sm:$0xff]
    %v3872 = vld [vmem:[#allocation19 + $0x128] sm:$0xff]
    %v3873 = vld [vmem:[#allocation19 + $0x130] sm:$0xff]
    %v3874 = vld [vmem:[#allocation19 + $0x138] sm:$0xff]
    %v3875 = vld [vmem:[#allocation19 + $0x140] sm:$0xff]
    %v3876 = vld [vmem:[#allocation19 + $0x148] sm:$0xff]
    %v3877 = vld [vmem:[#allocation19 + $0x150] sm:$0xff]
    %v3878 = vld [vmem:[#allocation19 + $0x158] sm:$0xff]
    %v3879 = vld [vmem:[#allocation19 + $0x160] sm:$0xff]
    %v3880 = vld [vmem:[#allocation19 + $0x168] sm:$0xff]
    %v3881 = vld [vmem:[#allocation19 + $0x170] sm:$0xff]
    %v3882 = vld [vmem:[#allocation19 + $0x178] sm:$0xff]
    %v3883 = vld [vmem:[#allocation19 + $0x180] sm:$0xff]
    %v3884 = vld [vmem:[#allocation19 + $0x188] sm:$0xff]
    %v3885 = vld [vmem:[#allocation19 + $0x190] sm:$0xff]
    %v3886 = vld [vmem:[#allocation19 + $0x198] sm:$0xff]
    %v3887 = vld [vmem:[#allocation19 + $0x1a0] sm:$0xff]
    %v3888 = vld [vmem:[#allocation19 + $0x1a8] sm:$0xff]
    %v3889 = vld [vmem:[#allocation19 + $0x1b0] sm:$0xff]
    %v3890 = vld [vmem:[#allocation19 + $0x1b8] sm:$0xff]
    %v3891 = vld [vmem:[#allocation19 + $0x1c0] sm:$0xff]
    %v3892 = vld [vmem:[#allocation19 + $0x1c8] sm:$0xff]
    %v3893 = vld [vmem:[#allocation19 + $0x1d0] sm:$0xff]
    %v3894 = vld [vmem:[#allocation19 + $0x1d8] sm:$0xff]
    %v3895 = vld [vmem:[#allocation19 + $0x1e0] sm:$0xff]
    %v3896 = vld [vmem:[#allocation19 + $0x1e8] sm:$0xff]
    %v3897 = vld [vmem:[#allocation19 + $0x1f0] sm:$0xff]
    %v3898 = vld [vmem:[#allocation19 + $0x1f8] sm:$0xff]
    %3899 = vmatprep.subr.mxu0 %v3836
    %3900 = vmatpush1.msra.mxu0 %v3835
    %3901 = vmatprep.subr.mxu0 %v3840
    %3902 = vmatpush1.msra.mxu0 %v3839
    %3903 = vmatprep.subr.mxu0 %v3844
    %3904 = vmatpush1.msra.mxu0 %v3843
    %3905 = vmatprep.subr.mxu0 %v3848
    %3906 = vmatpush1.msra.mxu0 %v3847
    %3907 = vmatprep.subr.mxu0 %v3852
    %3908 = vmatpush1.msra.mxu0 %v3851
    %3909 = vmatprep.subr.mxu0 %v3856
    %3910 = vmatpush1.msra.mxu0 %v3855
    %3911 = vmatprep.subr.mxu0 %v3860
    %3912 = vmatpush1.msra.mxu0 %v3859
    %3913 = vmatprep.subr.mxu0 %v3864
    %3914 = vmatpush1.msra.mxu0 %v3863
    %3915 = vmatprep.subr.mxu0 %v3868
    %3916 = vmatpush1.msra.mxu0 %v3867
    %3917 = vmatprep.subr.mxu0 %v3872
    %3918 = vmatpush1.msra.mxu0 %v3871
    %3919 = vmatprep.subr.mxu0 %v3876
    %3920 = vmatpush1.msra.mxu0 %v3875
    %3921 = vmatprep.subr.mxu0 %v3880
    %3922 = vmatpush1.msra.mxu0 %v3879
    %3923 = vmatprep.subr.mxu0 %v3884
    %3924 = vmatpush1.msra.mxu0 %v3883
    %3925 = vmatprep.subr.mxu0 %v3888
    %3926 = vmatpush1.msra.mxu0 %v3887
    %3927 = vmatprep.subr.mxu0 %v3892
    %3928 = vmatpush1.msra.mxu0 %v3891
    %3929 = vmatprep.subr.mxu0 %v3896
    %3930 = vmatpush1.msra.mxu0 %v3895
    %3931 = vmatprep.subr.mxu0 0.0
    %3932 = vmatpush1.msra.mxu0 0.0
    %3933 = vmatprep.subr.mxu0 0.0
    %3934 = vmatpush1.msra.mxu0 0.0
    %3935 = vmatprep.subr.mxu0 0.0
    %3936 = vmatpush1.msra.mxu0 0.0
    %3937 = vmatprep.subr.mxu0 0.0
    %3938 = vmatpush1.msra.mxu0 0.0
    %3939 = vmatprep.subr.mxu0 0.0
    %3940 = vmatpush1.msra.mxu0 0.0
    %3941 = vmatprep.subr.mxu0 0.0
    %3942 = vmatpush1.msra.mxu0 0.0
    %3943 = vmatprep.subr.mxu0 0.0
    %3944 = vmatpush1.msra.mxu0 0.0
    %3945 = vmatprep.subr.mxu0 0.0
    %3946 = vmatpush1.msra.mxu0 0.0
    %3947 = vmatprep.subr.mxu0 0.0
    %3948 = vmatpush1.msra.mxu0 0.0
    %3949 = vmatprep.subr.mxu0 0.0
    %3950 = vmatpush1.msra.mxu0 0.0
    %3951 = vmatprep.subr.mxu0 0.0
    %3952 = vmatpush1.msra.mxu0 0.0
    %3953 = vmatprep.subr.mxu0 0.0
    %3954 = vmatpush1.msra.mxu0 0.0
    %3955 = vmatprep.subr.mxu0 0.0
    %3956 = vmatpush1.msra.mxu0 0.0
    %3957 = vmatprep.subr.mxu0 0.0
    %3958 = vmatpush1.msra.mxu0 0.0
    %3959 = vmatprep.subr.mxu0 0.0
    %3960 = vmatpush1.msra.mxu0 0.0
    %3961 = vmatprep.subr.mxu0 0.0
    %3962 = vmatpush1.msra.mxu0 0.0
    %3963 = vmatprep.mubr.f32.mxu0 0.0
    %3964 = vmatmul.mubr.f32.gmra.mrb[0].mxu0 %v3834
    %v3965 = vpop.f32.mrb[0].mxu0
    %v3966 = vadd.f32 0.0, %v3965
    %v3967 = vpop.f32.mrb[0].mxu0
    %v3968 = vadd.f32 0.0, %v3967
    %3969 = vdwg.mxu0
    %3970 = vmatprep.subr.mxu0 %v3838
    %3971 = vmatpush1.msra.mxu0 %v3837
    %3972 = vmatprep.subr.mxu0 %v3842
    %3973 = vmatpush1.msra.mxu0 %v3841
    %3974 = vmatprep.subr.mxu0 %v3846
    %3975 = vmatpush1.msra.mxu0 %v3845
    %3976 = vmatprep.subr.mxu0 %v3850
    %3977 = vmatpush1.msra.mxu0 %v3849
    %3978 = vmatprep.subr.mxu0 %v3854
    %3979 = vmatpush1.msra.mxu0 %v3853
    %3980 = vmatprep.subr.mxu0 %v3858
    %3981 = vmatpush1.msra.mxu0 %v3857
    %3982 = vmatprep.subr.mxu0 %v3862
    %3983 = vmatpush1.msra.mxu0 %v3861
    %3984 = vmatprep.subr.mxu0 %v3866
    %3985 = vmatpush1.msra.mxu0 %v3865
    %3986 = vmatprep.subr.mxu0 %v3870
    %3987 = vmatpush1.msra.mxu0 %v3869
    %3988 = vmatprep.subr.mxu0 %v3874
    %3989 = vmatpush1.msra.mxu0 %v3873
    %3990 = vmatprep.subr.mxu0 %v3878
    %3991 = vmatpush1.msra.mxu0 %v3877
    %3992 = vmatprep.subr.mxu0 %v3882
    %3993 = vmatpush1.msra.mxu0 %v3881
    %3994 = vmatprep.subr.mxu0 %v3886
    %3995 = vmatpush1.msra.mxu0 %v3885
    %3996 = vmatprep.subr.mxu0 %v3890
    %3997 = vmatpush1.msra.mxu0 %v3889
    %3998 = vmatprep.subr.mxu0 %v3894
    %3999 = vmatpush1.msra.mxu0 %v3893
    %4000 = vmatprep.subr.mxu0 %v3898
    %4001 = vmatpush1.msra.mxu0 %v3897
    %4002 = vmatprep.subr.mxu0 0.0
    %4003 = vmatpush1.msra.mxu0 0.0
    %4004 = vmatprep.subr.mxu0 0.0
    %4005 = vmatpush1.msra.mxu0 0.0
    %4006 = vmatprep.subr.mxu0 0.0
    %4007 = vmatpush1.msra.mxu0 0.0
    %4008 = vmatprep.subr.mxu0 0.0
    %4009 = vmatpush1.msra.mxu0 0.0
    %4010 = vmatprep.subr.mxu0 0.0
    %4011 = vmatpush1.msra.mxu0 0.0
    %4012 = vmatprep.subr.mxu0 0.0
    %4013 = vmatpush1.msra.mxu0 0.0
    %4014 = vmatprep.subr.mxu0 0.0
    %4015 = vmatpush1.msra.mxu0 0.0
    %4016 = vmatprep.subr.mxu0 0.0
    %4017 = vmatpush1.msra.mxu0 0.0
    %4018 = vmatprep.subr.mxu0 0.0
    %4019 = vmatpush1.msra.mxu0 0.0
    %4020 = vmatprep.subr.mxu0 0.0
    %4021 = vmatpush1.msra.mxu0 0.0
    %4022 = vmatprep.subr.mxu0 0.0
    %4023 = vmatpush1.msra.mxu0 0.0
    %4024 = vmatprep.subr.mxu0 0.0
    %4025 = vmatpush1.msra.mxu0 0.0
    %4026 = vmatprep.subr.mxu0 0.0
    %4027 = vmatpush1.msra.mxu0 0.0
    %4028 = vmatprep.subr.mxu0 0.0
    %4029 = vmatpush1.msra.mxu0 0.0
    %4030 = vmatprep.subr.mxu0 0.0
    %4031 = vmatpush1.msra.mxu0 0.0
    %4032 = vmatprep.subr.mxu0 0.0
    %4033 = vmatpush1.msra.mxu0 0.0
    %4034 = vmatprep.mubr.f32.mxu0 0.0
    %4035 = vmatmul.mubr.f32.gmra.mrb[0].mxu0 %v3834
    %v4036 = vpop.f32.mrb[0].mxu0
    %v4037 = vadd.f32 0.0, %v4036
    %v4038 = vpop.f32.mrb[0].mxu0
    %v4039 = vadd.f32 0.0, %v4038
    %4040 = vdwg.mxu0
    %v4041 = vadd.f32 %v3830, %v3966
    %v4042 = vadd.f32 %v3831, %v3968
    %v4043 = vadd.f32 %v3832, %v4037
    %v4044 = vadd.f32 %v3833, %v4039
    %v4045 = vld [vmem:[#allocation7] sm:$0xff]
    %v4046 = vxor.u32 %v4041, 2147483648
    %v4047 = vmul.f32 %v4046, 1.442695
    %v4048 = vpow.pop %v4047
    %v4049 = vadd.f32 %v4048, 1.0
    %v4050 = vrcp.pop %v4049
    %v4051 = vmul.f32 1.0, %v4050
    %v4052 = vxor.u32 %v4042, 2147483648
    %v4053 = vmul.f32 %v4052, 1.442695
    %v4054 = vpow.pop %v4053
    %v4055 = vadd.f32 %v4054, 1.0
    %v4056 = vrcp.pop %v4055
    %v4057 = vmul.f32 1.0, %v4056
    %v4058 = vtanh.pop %v4043
    %v4059 = vxor.u32 %v4044, 2147483648
    %v4060 = vmul.f32 %v4059, 1.442695
    %v4061 = vpow.pop %v4060
    %v4062 = vadd.f32 %v4061, 1.0
    %v4063 = vrcp.pop %v4062
    %v4064 = vmul.f32 1.0, %v4063
    %v4065 = vmul.f32 %v4057, %v4045
    %v4066 = vmul.f32 %v4051, %v4058
    %v4067 = vadd.f32 %v4065, %v4066
    %v4068 = vtanh.pop %v4067
    %v4069 = vmul.f32 %v4064, %v4068
    %4070 = vst [vmem:[#allocation6] sm:$0xff] %v4069
    %4071 = vst [vmem:[#allocation7] sm:$0xff] %v4067
    %s4072 = scalar_lea.vmem [#allocation5], 32
    %4073 = vst [vmem:[%s4072] sm:$0xff] %v4069
    %s4074 = smul.addr %s1742, 8
    %s4075 = scalar_lea.vmem [#allocation4], %s4074
    %v4076 = vld [vmem:[%s4075] sm:$0xff]
    %v4077 = vld [vmem:[%s4075 + $0x8] sm:$0xff]
    %v4078 = vld [vmem:[%s4075 + $0x10] sm:$0xff]
    %v4079 = vld [vmem:[%s4075 + $0x18] sm:$0xff]
    %v4080 = vld [vmem:[#allocation6] sm:$0xff]
    %v4081 = vld [vmem:[#allocation19] sm:$0xff]
    %v4082 = vld [vmem:[#allocation19 + $0x8] sm:$0xff]
    %v4083 = vld [vmem:[#allocation19 + $0x10] sm:$0xff]
    %v4084 = vld [vmem:[#allocation19 + $0x18] sm:$0xff]
    %v4085 = vld [vmem:[#allocation19 + $0x20] sm:$0xff]
    %v4086 = vld [vmem:[#allocation19 + $0x28] sm:$0xff]
    %v4087 = vld [vmem:[#allocation19 + $0x30] sm:$0xff]
    %v4088 = vld [vmem:[#allocation19 + $0x38] sm:$0xff]
    %v4089 = vld [vmem:[#allocation19 + $0x40] sm:$0xff]
    %v4090 = vld [vmem:[#allocation19 + $0x48] sm:$0xff]
    %v4091 = vld [vmem:[#allocation19 + $0x50] sm:$0xff]
    %v4092 = vld [vmem:[#allocation19 + $0x58] sm:$0xff]
    %v4093 = vld [vmem:[#allocation19 + $0x60] sm:$0xff]
    %v4094 = vld [vmem:[#allocation19 + $0x68] sm:$0xff]
    %v4095 = vld [vmem:[#allocation19 + $0x70] sm:$0xff]
    %v4096 = vld [vmem:[#allocation19 + $0x78] sm:$0xff]
    %v4097 = vld [vmem:[#allocation19 + $0x80] sm:$0xff]
    %v4098 = vld [vmem:[#allocation19 + $0x88] sm:$0xff]
    %v4099 = vld [vmem:[#allocation19 + $0x90] sm:$0xff]
    %v4100 = vld [vmem:[#allocation19 + $0x98] sm:$0xff]
    %v4101 = vld [vmem:[#allocation19 + $0xa0] sm:$0xff]
    %v4102 = vld [vmem:[#allocation19 + $0xa8] sm:$0xff]
    %v4103 = vld [vmem:[#allocation19 + $0xb0] sm:$0xff]
    %v4104 = vld [vmem:[#allocation19 + $0xb8] sm:$0xff]
    %v4105 = vld [vmem:[#allocation19 + $0xc0] sm:$0xff]
    %v4106 = vld [vmem:[#allocation19 + $0xc8] sm:$0xff]
    %v4107 = vld [vmem:[#allocation19 + $0xd0] sm:$0xff]
    %v4108 = vld [vmem:[#allocation19 + $0xd8] sm:$0xff]
    %v4109 = vld [vmem:[#allocation19 + $0xe0] sm:$0xff]
    %v4110 = vld [vmem:[#allocation19 + $0xe8] sm:$0xff]
    %v4111 = vld [vmem:[#allocation19 + $0xf0] sm:$0xff]
    %v4112 = vld [vmem:[#allocation19 + $0xf8] sm:$0xff]
    %v4113 = vld [vmem:[#allocation19 + $0x100] sm:$0xff]
    %v4114 = vld [vmem:[#allocation19 + $0x108] sm:$0xff]
    %v4115 = vld [vmem:[#allocation19 + $0x110] sm:$0xff]
    %v4116 = vld [vmem:[#allocation19 + $0x118] sm:$0xff]
    %v4117 = vld [vmem:[#allocation19 + $0x120] sm:$0xff]
    %v4118 = vld [vmem:[#allocation19 + $0x128] sm:$0xff]
    %v4119 = vld [vmem:[#allocation19 + $0x130] sm:$0xff]
    %v4120 = vld [vmem:[#allocation19 + $0x138] sm:$0xff]
    %v4121 = vld [vmem:[#allocation19 + $0x140] sm:$0xff]
    %v4122 = vld [vmem:[#allocation19 + $0x148] sm:$0xff]
    %v4123 = vld [vmem:[#allocation19 + $0x150] sm:$0xff]
    %v4124 = vld [vmem:[#allocation19 + $0x158] sm:$0xff]
    %v4125 = vld [vmem:[#allocation19 + $0x160] sm:$0xff]
    %v4126 = vld [vmem:[#allocation19 + $0x168] sm:$0xff]
    %v4127 = vld [vmem:[#allocation19 + $0x170] sm:$0xff]
    %v4128 = vld [vmem:[#allocation19 + $0x178] sm:$0xff]
    %v4129 = vld [vmem:[#allocation19 + $0x180] sm:$0xff]
    %v4130 = vld [vmem:[#allocation19 + $0x188] sm:$0xff]
    %v4131 = vld [vmem:[#allocation19 + $0x190] sm:$0xff]
    %v4132 = vld [vmem:[#allocation19 + $0x198] sm:$0xff]
    %v4133 = vld [vmem:[#allocation19 + $0x1a0] sm:$0xff]
    %v4134 = vld [vmem:[#allocation19 + $0x1a8] sm:$0xff]
    %v4135 = vld [vmem:[#allocation19 + $0x1b0] sm:$0xff]
    %v4136 = vld [vmem:[#allocation19 + $0x1b8] sm:$0xff]
    %v4137 = vld [vmem:[#allocation19 + $0x1c0] sm:$0xff]
    %v4138 = vld [vmem:[#allocation19 + $0x1c8] sm:$0xff]
    %v4139 = vld [vmem:[#allocation19 + $0x1d0] sm:$0xff]
    %v4140 = vld [vmem:[#allocation19 + $0x1d8] sm:$0xff]
    %v4141 = vld [vmem:[#allocation19 + $0x1e0] sm:$0xff]
    %v4142 = vld [vmem:[#allocation19 + $0x1e8] sm:$0xff]
    %v4143 = vld [vmem:[#allocation19 + $0x1f0] sm:$0xff]
    %v4144 = vld [vmem:[#allocation19 + $0x1f8] sm:$0xff]
    %4145 = vmatprep.subr.mxu0 %v4082
    %4146 = vmatpush1.msra.mxu0 %v4081
    %4147 = vmatprep.subr.mxu0 %v4086
    %4148 = vmatpush1.msra.mxu0 %v4085
    %4149 = vmatprep.subr.mxu0 %v4090
    %4150 = vmatpush1.msra.mxu0 %v4089
    %4151 = vmatprep.subr.mxu0 %v4094
    %4152 = vmatpush1.msra.mxu0 %v4093
    %4153 = vmatprep.subr.mxu0 %v4098
    %4154 = vmatpush1.msra.mxu0 %v4097
    %4155 = vmatprep.subr.mxu0 %v4102
    %4156 = vmatpush1.msra.mxu0 %v4101
    %4157 = vmatprep.subr.mxu0 %v4106
    %4158 = vmatpush1.msra.mxu0 %v4105
    %4159 = vmatprep.subr.mxu0 %v4110
    %4160 = vmatpush1.msra.mxu0 %v4109
    %4161 = vmatprep.subr.mxu0 %v4114
    %4162 = vmatpush1.msra.mxu0 %v4113
    %4163 = vmatprep.subr.mxu0 %v4118
    %4164 = vmatpush1.msra.mxu0 %v4117
    %4165 = vmatprep.subr.mxu0 %v4122
    %4166 = vmatpush1.msra.mxu0 %v4121
    %4167 = vmatprep.subr.mxu0 %v4126
    %4168 = vmatpush1.msra.mxu0 %v4125
    %4169 = vmatprep.subr.mxu0 %v4130
    %4170 = vmatpush1.msra.mxu0 %v4129
    %4171 = vmatprep.subr.mxu0 %v4134
    %4172 = vmatpush1.msra.mxu0 %v4133
    %4173 = vmatprep.subr.mxu0 %v4138
    %4174 = vmatpush1.msra.mxu0 %v4137
    %4175 = vmatprep.subr.mxu0 %v4142
    %4176 = vmatpush1.msra.mxu0 %v4141
    %4177 = vmatprep.subr.mxu0 0.0
    %4178 = vmatpush1.msra.mxu0 0.0
    %4179 = vmatprep.subr.mxu0 0.0
    %4180 = vmatpush1.msra.mxu0 0.0
    %4181 = vmatprep.subr.mxu0 0.0
    %4182 = vmatpush1.msra.mxu0 0.0
    %4183 = vmatprep.subr.mxu0 0.0
    %4184 = vmatpush1.msra.mxu0 0.0
    %4185 = vmatprep.subr.mxu0 0.0
    %4186 = vmatpush1.msra.mxu0 0.0
    %4187 = vmatprep.subr.mxu0 0.0
    %4188 = vmatpush1.msra.mxu0 0.0
    %4189 = vmatprep.subr.mxu0 0.0
    %4190 = vmatpush1.msra.mxu0 0.0
    %4191 = vmatprep.subr.mxu0 0.0
    %4192 = vmatpush1.msra.mxu0 0.0
    %4193 = vmatprep.subr.mxu0 0.0
    %4194 = vmatpush1.msra.mxu0 0.0
    %4195 = vmatprep.subr.mxu0 0.0
    %4196 = vmatpush1.msra.mxu0 0.0
    %4197 = vmatprep.subr.mxu0 0.0
    %4198 = vmatpush1.msra.mxu0 0.0
    %4199 = vmatprep.subr.mxu0 0.0
    %4200 = vmatpush1.msra.mxu0 0.0
    %4201 = vmatprep.subr.mxu0 0.0
    %4202 = vmatpush1.msra.mxu0 0.0
    %4203 = vmatprep.subr.mxu0 0.0
    %4204 = vmatpush1.msra.mxu0 0.0
    %4205 = vmatprep.subr.mxu0 0.0
    %4206 = vmatpush1.msra.mxu0 0.0
    %4207 = vmatprep.subr.mxu0 0.0
    %4208 = vmatpush1.msra.mxu0 0.0
    %4209 = vmatprep.mubr.f32.mxu0 0.0
    %4210 = vmatmul.mubr.f32.gmra.mrb[0].mxu0 %v4080
    %v4211 = vpop.f32.mrb[0].mxu0
    %v4212 = vadd.f32 0.0, %v4211
    %v4213 = vpop.f32.mrb[0].mxu0
    %v4214 = vadd.f32 0.0, %v4213
    %4215 = vdwg.mxu0
    %4216 = vmatprep.subr.mxu0 %v4084
    %4217 = vmatpush1.msra.mxu0 %v4083
    %4218 = vmatprep.subr.mxu0 %v4088
    %4219 = vmatpush1.msra.mxu0 %v4087
    %4220 = vmatprep.subr.mxu0 %v4092
    %4221 = vmatpush1.msra.mxu0 %v4091
    %4222 = vmatprep.subr.mxu0 %v4096
    %4223 = vmatpush1.msra.mxu0 %v4095
    %4224 = vmatprep.subr.mxu0 %v4100
    %4225 = vmatpush1.msra.mxu0 %v4099
    %4226 = vmatprep.subr.mxu0 %v4104
    %4227 = vmatpush1.msra.mxu0 %v4103
    %4228 = vmatprep.subr.mxu0 %v4108
    %4229 = vmatpush1.msra.mxu0 %v4107
    %4230 = vmatprep.subr.mxu0 %v4112
    %4231 = vmatpush1.msra.mxu0 %v4111
    %4232 = vmatprep.subr.mxu0 %v4116
    %4233 = vmatpush1.msra.mxu0 %v4115
    %4234 = vmatprep.subr.mxu0 %v4120
    %4235 = vmatpush1.msra.mxu0 %v4119
    %4236 = vmatprep.subr.mxu0 %v4124
    %4237 = vmatpush1.msra.mxu0 %v4123
    %4238 = vmatprep.subr.mxu0 %v4128
    %4239 = vmatpush1.msra.mxu0 %v4127
    %4240 = vmatprep.subr.mxu0 %v4132
    %4241 = vmatpush1.msra.mxu0 %v4131
    %4242 = vmatprep.subr.mxu0 %v4136
    %4243 = vmatpush1.msra.mxu0 %v4135
    %4244 = vmatprep.subr.mxu0 %v4140
    %4245 = vmatpush1.msra.mxu0 %v4139
    %4246 = vmatprep.subr.mxu0 %v4144
    %4247 = vmatpush1.msra.mxu0 %v4143
    %4248 = vmatprep.subr.mxu0 0.0
    %4249 = vmatpush1.msra.mxu0 0.0
    %4250 = vmatprep.subr.mxu0 0.0
    %4251 = vmatpush1.msra.mxu0 0.0
    %4252 = vmatprep.subr.mxu0 0.0
    %4253 = vmatpush1.msra.mxu0 0.0
    %4254 = vmatprep.subr.mxu0 0.0
    %4255 = vmatpush1.msra.mxu0 0.0
    %4256 = vmatprep.subr.mxu0 0.0
    %4257 = vmatpush1.msra.mxu0 0.0
    %4258 = vmatprep.subr.mxu0 0.0
    %4259 = vmatpush1.msra.mxu0 0.0
    %4260 = vmatprep.subr.mxu0 0.0
    %4261 = vmatpush1.msra.mxu0 0.0
    %4262 = vmatprep.subr.mxu0 0.0
    %4263 = vmatpush1.msra.mxu0 0.0
    %4264 = vmatprep.subr.mxu0 0.0
    %4265 = vmatpush1.msra.mxu0 0.0
    %4266 = vmatprep.subr.mxu0 0.0
    %4267 = vmatpush1.msra.mxu0 0.0
    %4268 = vmatprep.subr.mxu0 0.0
    %4269 = vmatpush1.msra.mxu0 0.0
    %4270 = vmatprep.subr.mxu0 0.0
    %4271 = vmatpush1.msra.mxu0 0.0
    %4272 = vmatprep.subr.mxu0 0.0
    %4273 = vmatpush1.msra.mxu0 0.0
    %4274 = vmatprep.subr.mxu0 0.0
    %4275 = vmatpush1.msra.mxu0 0.0
    %4276 = vmatprep.subr.mxu0 0.0
    %4277 = vmatpush1.msra.mxu0 0.0
    %4278 = vmatprep.subr.mxu0 0.0
    %4279 = vmatpush1.msra.mxu0 0.0
    %4280 = vmatprep.mubr.f32.mxu0 0.0
    %4281 = vmatmul.mubr.f32.gmra.mrb[0].mxu0 %v4080
    %v4282 = vpop.f32.mrb[0].mxu0
    %v4283 = vadd.f32 0.0, %v4282
    %v4284 = vpop.f32.mrb[0].mxu0
    %v4285 = vadd.f32 0.0, %v4284
    %4286 = vdwg.mxu0
    %v4287 = vadd.f32 %v4076, %v4212
    %v4288 = vadd.f32 %v4077, %v4214
    %v4289 = vadd.f32 %v4078, %v4283
    %v4290 = vadd.f32 %v4079, %v4285
    %v4291 = vld [vmem:[#allocation7] sm:$0xff]
    %v4292 = vxor.u32 %v4287, 2147483648
    %v4293 = vmul.f32 %v4292, 1.442695
    %v4294 = vpow.pop %v4293
    %v4295 = vadd.f32 %v4294, 1.0
    %v4296 = vrcp.pop %v4295
    %v4297 = vmul.f32 1.0, %v4296
    %v4298 = vxor.u32 %v4288, 2147483648
    %v4299 = vmul.f32 %v4298, 1.442695
    %v4300 = vpow.pop %v4299
    %v4301 = vadd.f32 %v4300, 1.0
    %v4302 = vrcp.pop %v4301
    %v4303 = vmul.f32 1.0, %v4302
    %v4304 = vtanh.pop %v4289
    %v4305 = vxor.u32 %v4290, 2147483648
    %v4306 = vmul.f32 %v4305, 1.442695
    %v4307 = vpow.pop %v4306
    %v4308 = vadd.f32 %v4307, 1.0
    %v4309 = vrcp.pop %v4308
    %v4310 = vmul.f32 1.0, %v4309
    %v4311 = vmul.f32 %v4303, %v4291
    %v4312 = vmul.f32 %v4297, %v4304
    %v4313 = vadd.f32 %v4311, %v4312
    %v4314 = vtanh.pop %v4313
    %v4315 = vmul.f32 %v4310, %v4314
    %4316 = vst [vmem:[#allocation6] sm:$0xff] %v4315
    %4317 = vst [vmem:[#allocation7] sm:$0xff] %v4313
    %s4318 = scalar_lea.vmem [#allocation5], 40
    %4319 = vst [vmem:[%s4318] sm:$0xff] %v4315
    %s4320 = smul.addr %s1989, 8
    %s4321 = scalar_lea.vmem [#allocation4], %s4320
    %v4322 = vld [vmem:[%s4321] sm:$0xff]
    %v4323 = vld [vmem:[%s4321 + $0x8] sm:$0xff]
    %v4324 = vld [vmem:[%s4321 + $0x10] sm:$0xff]
    %v4325 = vld [vmem:[%s4321 + $0x18] sm:$0xff]
    %v4326 = vld [vmem:[#allocation6] sm:$0xff]
    %v4327 = vld [vmem:[#allocation19] sm:$0xff]
    %v4328 = vld [vmem:[#allocation19 + $0x8] sm:$0xff]
    %v4329 = vld [vmem:[#allocation19 + $0x10] sm:$0xff]
    %v4330 = vld [vmem:[#allocation19 + $0x18] sm:$0xff]
    %v4331 = vld [vmem:[#allocation19 + $0x20] sm:$0xff]
    %v4332 = vld [vmem:[#allocation19 + $0x28] sm:$0xff]
    %v4333 = vld [vmem:[#allocation19 + $0x30] sm:$0xff]
    %v4334 = vld [vmem:[#allocation19 + $0x38] sm:$0xff]
    %v4335 = vld [vmem:[#allocation19 + $0x40] sm:$0xff]
    %v4336 = vld [vmem:[#allocation19 + $0x48] sm:$0xff]
    %v4337 = vld [vmem:[#allocation19 + $0x50] sm:$0xff]
    %v4338 = vld [vmem:[#allocation19 + $0x58] sm:$0xff]
    %v4339 = vld [vmem:[#allocation19 + $0x60] sm:$0xff]
    %v4340 = vld [vmem:[#allocation19 + $0x68] sm:$0xff]
    %v4341 = vld [vmem:[#allocation19 + $0x70] sm:$0xff]
    %v4342 = vld [vmem:[#allocation19 + $0x78] sm:$0xff]
    %v4343 = vld [vmem:[#allocation19 + $0x80] sm:$0xff]
    %v4344 = vld [vmem:[#allocation19 + $0x88] sm:$0xff]
    %v4345 = vld [vmem:[#allocation19 + $0x90] sm:$0xff]
    %v4346 = vld [vmem:[#allocation19 + $0x98] sm:$0xff]
    %v4347 = vld [vmem:[#allocation19 + $0xa0] sm:$0xff]
    %v4348 = vld [vmem:[#allocation19 + $0xa8] sm:$0xff]
    %v4349 = vld [vmem:[#allocation19 + $0xb0] sm:$0xff]
    %v4350 = vld [vmem:[#allocation19 + $0xb8] sm:$0xff]
    %v4351 = vld [vmem:[#allocation19 + $0xc0] sm:$0xff]
    %v4352 = vld [vmem:[#allocation19 + $0xc8] sm:$0xff]
    %v4353 = vld [vmem:[#allocation19 + $0xd0] sm:$0xff]
    %v4354 = vld [vmem:[#allocation19 + $0xd8] sm:$0xff]
    %v4355 = vld [vmem:[#allocation19 + $0xe0] sm:$0xff]
    %v4356 = vld [vmem:[#allocation19 + $0xe8] sm:$0xff]
    %v4357 = vld [vmem:[#allocation19 + $0xf0] sm:$0xff]
    %v4358 = vld [vmem:[#allocation19 + $0xf8] sm:$0xff]
    %v4359 = vld [vmem:[#allocation19 + $0x100] sm:$0xff]
    %v4360 = vld [vmem:[#allocation19 + $0x108] sm:$0xff]
    %v4361 = vld [vmem:[#allocation19 + $0x110] sm:$0xff]
    %v4362 = vld [vmem:[#allocation19 + $0x118] sm:$0xff]
    %v4363 = vld [vmem:[#allocation19 + $0x120] sm:$0xff]
    %v4364 = vld [vmem:[#allocation19 + $0x128] sm:$0xff]
    %v4365 = vld [vmem:[#allocation19 + $0x130] sm:$0xff]
    %v4366 = vld [vmem:[#allocation19 + $0x138] sm:$0xff]
    %v4367 = vld [vmem:[#allocation19 + $0x140] sm:$0xff]
    %v4368 = vld [vmem:[#allocation19 + $0x148] sm:$0xff]
    %v4369 = vld [vmem:[#allocation19 + $0x150] sm:$0xff]
    %v4370 = vld [vmem:[#allocation19 + $0x158] sm:$0xff]
    %v4371 = vld [vmem:[#allocation19 + $0x160] sm:$0xff]
    %v4372 = vld [vmem:[#allocation19 + $0x168] sm:$0xff]
    %v4373 = vld [vmem:[#allocation19 + $0x170] sm:$0xff]
    %v4374 = vld [vmem:[#allocation19 + $0x178] sm:$0xff]
    %v4375 = vld [vmem:[#allocation19 + $0x180] sm:$0xff]
    %v4376 = vld [vmem:[#allocation19 + $0x188] sm:$0xff]
    %v4377 = vld [vmem:[#allocation19 + $0x190] sm:$0xff]
    %v4378 = vld [vmem:[#allocation19 + $0x198] sm:$0xff]
    %v4379 = vld [vmem:[#allocation19 + $0x1a0] sm:$0xff]
    %v4380 = vld [vmem:[#allocation19 + $0x1a8] sm:$0xff]
    %v4381 = vld [vmem:[#allocation19 + $0x1b0] sm:$0xff]
    %v4382 = vld [vmem:[#allocation19 + $0x1b8] sm:$0xff]
    %v4383 = vld [vmem:[#allocation19 + $0x1c0] sm:$0xff]
    %v4384 = vld [vmem:[#allocation19 + $0x1c8] sm:$0xff]
    %v4385 = vld [vmem:[#allocation19 + $0x1d0] sm:$0xff]
    %v4386 = vld [vmem:[#allocation19 + $0x1d8] sm:$0xff]
    %v4387 = vld [vmem:[#allocation19 + $0x1e0] sm:$0xff]
    %v4388 = vld [vmem:[#allocation19 + $0x1e8] sm:$0xff]
    %v4389 = vld [vmem:[#allocation19 + $0x1f0] sm:$0xff]
    %v4390 = vld [vmem:[#allocation19 + $0x1f8] sm:$0xff]
    %4391 = vmatprep.subr.mxu0 %v4328
    %4392 = vmatpush1.msra.mxu0 %v4327
    %4393 = vmatprep.subr.mxu0 %v4332
    %4394 = vmatpush1.msra.mxu0 %v4331
    %4395 = vmatprep.subr.mxu0 %v4336
    %4396 = vmatpush1.msra.mxu0 %v4335
    %4397 = vmatprep.subr.mxu0 %v4340
    %4398 = vmatpush1.msra.mxu0 %v4339
    %4399 = vmatprep.subr.mxu0 %v4344
    %4400 = vmatpush1.msra.mxu0 %v4343
    %4401 = vmatprep.subr.mxu0 %v4348
    %4402 = vmatpush1.msra.mxu0 %v4347
    %4403 = vmatprep.subr.mxu0 %v4352
    %4404 = vmatpush1.msra.mxu0 %v4351
    %4405 = vmatprep.subr.mxu0 %v4356
    %4406 = vmatpush1.msra.mxu0 %v4355
    %4407 = vmatprep.subr.mxu0 %v4360
    %4408 = vmatpush1.msra.mxu0 %v4359
    %4409 = vmatprep.subr.mxu0 %v4364
    %4410 = vmatpush1.msra.mxu0 %v4363
    %4411 = vmatprep.subr.mxu0 %v4368
    %4412 = vmatpush1.msra.mxu0 %v4367
    %4413 = vmatprep.subr.mxu0 %v4372
    %4414 = vmatpush1.msra.mxu0 %v4371
    %4415 = vmatprep.subr.mxu0 %v4376
    %4416 = vmatpush1.msra.mxu0 %v4375
    %4417 = vmatprep.subr.mxu0 %v4380
    %4418 = vmatpush1.msra.mxu0 %v4379
    %4419 = vmatprep.subr.mxu0 %v4384
    %4420 = vmatpush1.msra.mxu0 %v4383
    %4421 = vmatprep.subr.mxu0 %v4388
    %4422 = vmatpush1.msra.mxu0 %v4387
    %4423 = vmatprep.subr.mxu0 0.0
    %4424 = vmatpush1.msra.mxu0 0.0
    %4425 = vmatprep.subr.mxu0 0.0
    %4426 = vmatpush1.msra.mxu0 0.0
    %4427 = vmatprep.subr.mxu0 0.0
    %4428 = vmatpush1.msra.mxu0 0.0
    %4429 = vmatprep.subr.mxu0 0.0
    %4430 = vmatpush1.msra.mxu0 0.0
    %4431 = vmatprep.subr.mxu0 0.0
    %4432 = vmatpush1.msra.mxu0 0.0
    %4433 = vmatprep.subr.mxu0 0.0
    %4434 = vmatpush1.msra.mxu0 0.0
    %4435 = vmatprep.subr.mxu0 0.0
    %4436 = vmatpush1.msra.mxu0 0.0
    %4437 = vmatprep.subr.mxu0 0.0
    %4438 = vmatpush1.msra.mxu0 0.0
    %4439 = vmatprep.subr.mxu0 0.0
    %4440 = vmatpush1.msra.mxu0 0.0
    %4441 = vmatprep.subr.mxu0 0.0
    %4442 = vmatpush1.msra.mxu0 0.0
    %4443 = vmatprep.subr.mxu0 0.0
    %4444 = vmatpush1.msra.mxu0 0.0
    %4445 = vmatprep.subr.mxu0 0.0
    %4446 = vmatpush1.msra.mxu0 0.0
    %4447 = vmatprep.subr.mxu0 0.0
    %4448 = vmatpush1.msra.mxu0 0.0
    %4449 = vmatprep.subr.mxu0 0.0
    %4450 = vmatpush1.msra.mxu0 0.0
    %4451 = vmatprep.subr.mxu0 0.0
    %4452 = vmatpush1.msra.mxu0 0.0
    %4453 = vmatprep.subr.mxu0 0.0
    %4454 = vmatpush1.msra.mxu0 0.0
    %4455 = vmatprep.mubr.f32.mxu0 0.0
    %4456 = vmatmul.mubr.f32.gmra.mrb[0].mxu0 %v4326
    %v4457 = vpop.f32.mrb[0].mxu0
    %v4458 = vadd.f32 0.0, %v4457
    %v4459 = vpop.f32.mrb[0].mxu0
    %v4460 = vadd.f32 0.0, %v4459
    %4461 = vdwg.mxu0
    %4462 = vmatprep.subr.mxu0 %v4330
    %4463 = vmatpush1.msra.mxu0 %v4329
    %4464 = vmatprep.subr.mxu0 %v4334
    %4465 = vmatpush1.msra.mxu0 %v4333
    %4466 = vmatprep.subr.mxu0 %v4338
    %4467 = vmatpush1.msra.mxu0 %v4337
    %4468 = vmatprep.subr.mxu0 %v4342
    %4469 = vmatpush1.msra.mxu0 %v4341
    %4470 = vmatprep.subr.mxu0 %v4346
    %4471 = vmatpush1.msra.mxu0 %v4345
    %4472 = vmatprep.subr.mxu0 %v4350
    %4473 = vmatpush1.msra.mxu0 %v4349
    %4474 = vmatprep.subr.mxu0 %v4354
    %4475 = vmatpush1.msra.mxu0 %v4353
    %4476 = vmatprep.subr.mxu0 %v4358
    %4477 = vmatpush1.msra.mxu0 %v4357
    %4478 = vmatprep.subr.mxu0 %v4362
    %4479 = vmatpush1.msra.mxu0 %v4361
    %4480 = vmatprep.subr.mxu0 %v4366
    %4481 = vmatpush1.msra.mxu0 %v4365
    %4482 = vmatprep.subr.mxu0 %v4370
    %4483 = vmatpush1.msra.mxu0 %v4369
    %4484 = vmatprep.subr.mxu0 %v4374
    %4485 = vmatpush1.msra.mxu0 %v4373
    %4486 = vmatprep.subr.mxu0 %v4378
    %4487 = vmatpush1.msra.mxu0 %v4377
    %4488 = vmatprep.subr.mxu0 %v4382
    %4489 = vmatpush1.msra.mxu0 %v4381
    %4490 = vmatprep.subr.mxu0 %v4386
    %4491 = vmatpush1.msra.mxu0 %v4385
    %4492 = vmatprep.subr.mxu0 %v4390
    %4493 = vmatpush1.msra.mxu0 %v4389
    %4494 = vmatprep.subr.mxu0 0.0
    %4495 = vmatpush1.msra.mxu0 0.0
    %4496 = vmatprep.subr.mxu0 0.0
    %4497 = vmatpush1.msra.mxu0 0.0
    %4498 = vmatprep.subr.mxu0 0.0
    %4499 = vmatpush1.msra.mxu0 0.0
    %4500 = vmatprep.subr.mxu0 0.0
    %4501 = vmatpush1.msra.mxu0 0.0
    %4502 = vmatprep.subr.mxu0 0.0
    %4503 = vmatpush1.msra.mxu0 0.0
    %4504 = vmatprep.subr.mxu0 0.0
    %4505 = vmatpush1.msra.mxu0 0.0
    %4506 = vmatprep.subr.mxu0 0.0
    %4507 = vmatpush1.msra.mxu0 0.0
    %4508 = vmatprep.subr.mxu0 0.0
    %4509 = vmatpush1.msra.mxu0 0.0
    %4510 = vmatprep.subr.mxu0 0.0
    %4511 = vmatpush1.msra.mxu0 0.0
    %4512 = vmatprep.subr.mxu0 0.0
    %4513 = vmatpush1.msra.mxu0 0.0
    %4514 = vmatprep.subr.mxu0 0.0
    %4515 = vmatpush1.msra.mxu0 0.0
    %4516 = vmatprep.subr.mxu0 0.0
    %4517 = vmatpush1.msra.mxu0 0.0
    %4518 = vmatprep.subr.mxu0 0.0
    %4519 = vmatpush1.msra.mxu0 0.0
    %4520 = vmatprep.subr.mxu0 0.0
    %4521 = vmatpush1.msra.mxu0 0.0
    %4522 = vmatprep.subr.mxu0 0.0
    %4523 = vmatpush1.msra.mxu0 0.0
    %4524 = vmatprep.subr.mxu0 0.0
    %4525 = vmatpush1.msra.mxu0 0.0
    %4526 = vmatprep.mubr.f32.mxu0 0.0
    %4527 = vmatmul.mubr.f32.gmra.mrb[0].mxu0 %v4326
    %v4528 = vpop.f32.mrb[0].mxu0
    %v4529 = vadd.f32 0.0, %v4528
    %v4530 = vpop.f32.mrb[0].mxu0
    %v4531 = vadd.f32 0.0, %v4530
    %4532 = vdwg.mxu0
    %v4533 = vadd.f32 %v4322, %v4458
    %v4534 = vadd.f32 %v4323, %v4460
    %v4535 = vadd.f32 %v4324, %v4529
    %v4536 = vadd.f32 %v4325, %v4531
    %v4537 = vld [vmem:[#allocation7] sm:$0xff]
    %v4538 = vxor.u32 %v4533, 2147483648
    %v4539 = vmul.f32 %v4538, 1.442695
    %v4540 = vpow.pop %v4539
    %v4541 = vadd.f32 %v4540, 1.0
    %v4542 = vrcp.pop %v4541
    %v4543 = vmul.f32 1.0, %v4542
    %v4544 = vxor.u32 %v4534, 2147483648
    %v4545 = vmul.f32 %v4544, 1.442695
    %v4546 = vpow.pop %v4545
    %v4547 = vadd.f32 %v4546, 1.0
    %v4548 = vrcp.pop %v4547
    %v4549 = vmul.f32 1.0, %v4548
    %v4550 = vtanh.pop %v4535
    %v4551 = vxor.u32 %v4536, 2147483648
    %v4552 = vmul.f32 %v4551, 1.442695
    %v4553 = vpow.pop %v4552
    %v4554 = vadd.f32 %v4553, 1.0
    %v4555 = vrcp.pop %v4554
    %v4556 = vmul.f32 1.0, %v4555
    %v4557 = vmul.f32 %v4549, %v4537
    %v4558 = vmul.f32 %v4543, %v4550
    %v4559 = vadd.f32 %v4557, %v4558
    %v4560 = vtanh.pop %v4559
    %v4561 = vmul.f32 %v4556, %v4560
    %4562 = vst [vmem:[#allocation6] sm:$0xff] %v4561
    %4563 = vst [vmem:[#allocation7] sm:$0xff] %v4559
    %s4564 = scalar_lea.vmem [#allocation5], 48
    %4565 = vst [vmem:[%s4564] sm:$0xff] %v4561
    %s4566 = smul.addr %s2236, 8
    %s4567 = scalar_lea.vmem [#allocation4], %s4566
    %v4568 = vld [vmem:[%s4567] sm:$0xff]
    %v4569 = vld [vmem:[%s4567 + $0x8] sm:$0xff]
    %v4570 = vld [vmem:[%s4567 + $0x10] sm:$0xff]
    %v4571 = vld [vmem:[%s4567 + $0x18] sm:$0xff]
    %v4572 = vld [vmem:[#allocation6] sm:$0xff]
    %v4573 = vld [vmem:[#allocation19] sm:$0xff]
    %v4574 = vld [vmem:[#allocation19 + $0x8] sm:$0xff]
    %v4575 = vld [vmem:[#allocation19 + $0x10] sm:$0xff]
    %v4576 = vld [vmem:[#allocation19 + $0x18] sm:$0xff]
    %v4577 = vld [vmem:[#allocation19 + $0x20] sm:$0xff]
    %v4578 = vld [vmem:[#allocation19 + $0x28] sm:$0xff]
    %v4579 = vld [vmem:[#allocation19 + $0x30] sm:$0xff]
    %v4580 = vld [vmem:[#allocation19 + $0x38] sm:$0xff]
    %v4581 = vld [vmem:[#allocation19 + $0x40] sm:$0xff]
    %v4582 = vld [vmem:[#allocation19 + $0x48] sm:$0xff]
    %v4583 = vld [vmem:[#allocation19 + $0x50] sm:$0xff]
    %v4584 = vld [vmem:[#allocation19 + $0x58] sm:$0xff]
    %v4585 = vld [vmem:[#allocation19 + $0x60] sm:$0xff]
    %v4586 = vld [vmem:[#allocation19 + $0x68] sm:$0xff]
    %v4587 = vld [vmem:[#allocation19 + $0x70] sm:$0xff]
    %v4588 = vld [vmem:[#allocation19 + $0x78] sm:$0xff]
    %v4589 = vld [vmem:[#allocation19 + $0x80] sm:$0xff]
    %v4590 = vld [vmem:[#allocation19 + $0x88] sm:$0xff]
    %v4591 = vld [vmem:[#allocation19 + $0x90] sm:$0xff]
    %v4592 = vld [vmem:[#allocation19 + $0x98] sm:$0xff]
    %v4593 = vld [vmem:[#allocation19 + $0xa0] sm:$0xff]
    %v4594 = vld [vmem:[#allocation19 + $0xa8] sm:$0xff]
    %v4595 = vld [vmem:[#allocation19 + $0xb0] sm:$0xff]
    %v4596 = vld [vmem:[#allocation19 + $0xb8] sm:$0xff]
    %v4597 = vld [vmem:[#allocation19 + $0xc0] sm:$0xff]
    %v4598 = vld [vmem:[#allocation19 + $0xc8] sm:$0xff]
    %v4599 = vld [vmem:[#allocation19 + $0xd0] sm:$0xff]
    %v4600 = vld [vmem:[#allocation19 + $0xd8] sm:$0xff]
    %v4601 = vld [vmem:[#allocation19 + $0xe0] sm:$0xff]
    %v4602 = vld [vmem:[#allocation19 + $0xe8] sm:$0xff]
    %v4603 = vld [vmem:[#allocation19 + $0xf0] sm:$0xff]
    %v4604 = vld [vmem:[#allocation19 + $0xf8] sm:$0xff]
    %v4605 = vld [vmem:[#allocation19 + $0x100] sm:$0xff]
    %v4606 = vld [vmem:[#allocation19 + $0x108] sm:$0xff]
    %v4607 = vld [vmem:[#allocation19 + $0x110] sm:$0xff]
    %v4608 = vld [vmem:[#allocation19 + $0x118] sm:$0xff]
    %v4609 = vld [vmem:[#allocation19 + $0x120] sm:$0xff]
    %v4610 = vld [vmem:[#allocation19 + $0x128] sm:$0xff]
    %v4611 = vld [vmem:[#allocation19 + $0x130] sm:$0xff]
    %v4612 = vld [vmem:[#allocation19 + $0x138] sm:$0xff]
    %v4613 = vld [vmem:[#allocation19 + $0x140] sm:$0xff]
    %v4614 = vld [vmem:[#allocation19 + $0x148] sm:$0xff]
    %v4615 = vld [vmem:[#allocation19 + $0x150] sm:$0xff]
    %v4616 = vld [vmem:[#allocation19 + $0x158] sm:$0xff]
    %v4617 = vld [vmem:[#allocation19 + $0x160] sm:$0xff]
    %v4618 = vld [vmem:[#allocation19 + $0x168] sm:$0xff]
    %v4619 = vld [vmem:[#allocation19 + $0x170] sm:$0xff]
    %v4620 = vld [vmem:[#allocation19 + $0x178] sm:$0xff]
    %v4621 = vld [vmem:[#allocation19 + $0x180] sm:$0xff]
    %v4622 = vld [vmem:[#allocation19 + $0x188] sm:$0xff]
    %v4623 = vld [vmem:[#allocation19 + $0x190] sm:$0xff]
    %v4624 = vld [vmem:[#allocation19 + $0x198] sm:$0xff]
    %v4625 = vld [vmem:[#allocation19 + $0x1a0] sm:$0xff]
    %v4626 = vld [vmem:[#allocation19 + $0x1a8] sm:$0xff]
    %v4627 = vld [vmem:[#allocation19 + $0x1b0] sm:$0xff]
    %v4628 = vld [vmem:[#allocation19 + $0x1b8] sm:$0xff]
    %v4629 = vld [vmem:[#allocation19 + $0x1c0] sm:$0xff]
    %v4630 = vld [vmem:[#allocation19 + $0x1c8] sm:$0xff]
    %v4631 = vld [vmem:[#allocation19 + $0x1d0] sm:$0xff]
    %v4632 = vld [vmem:[#allocation19 + $0x1d8] sm:$0xff]
    %v4633 = vld [vmem:[#allocation19 + $0x1e0] sm:$0xff]
    %v4634 = vld [vmem:[#allocation19 + $0x1e8] sm:$0xff]
    %v4635 = vld [vmem:[#allocation19 + $0x1f0] sm:$0xff]
    %v4636 = vld [vmem:[#allocation19 + $0x1f8] sm:$0xff]
    %4637 = vmatprep.subr.mxu0 %v4574
    %4638 = vmatpush1.msra.mxu0 %v4573
    %4639 = vmatprep.subr.mxu0 %v4578
    %4640 = vmatpush1.msra.mxu0 %v4577
    %4641 = vmatprep.subr.mxu0 %v4582
    %4642 = vmatpush1.msra.mxu0 %v4581
    %4643 = vmatprep.subr.mxu0 %v4586
    %4644 = vmatpush1.msra.mxu0 %v4585
    %4645 = vmatprep.subr.mxu0 %v4590
    %4646 = vmatpush1.msra.mxu0 %v4589
    %4647 = vmatprep.subr.mxu0 %v4594
    %4648 = vmatpush1.msra.mxu0 %v4593
    %4649 = vmatprep.subr.mxu0 %v4598
    %4650 = vmatpush1.msra.mxu0 %v4597
    %4651 = vmatprep.subr.mxu0 %v4602
    %4652 = vmatpush1.msra.mxu0 %v4601
    %4653 = vmatprep.subr.mxu0 %v4606
    %4654 = vmatpush1.msra.mxu0 %v4605
    %4655 = vmatprep.subr.mxu0 %v4610
    %4656 = vmatpush1.msra.mxu0 %v4609
    %4657 = vmatprep.subr.mxu0 %v4614
    %4658 = vmatpush1.msra.mxu0 %v4613
    %4659 = vmatprep.subr.mxu0 %v4618
    %4660 = vmatpush1.msra.mxu0 %v4617
    %4661 = vmatprep.subr.mxu0 %v4622
    %4662 = vmatpush1.msra.mxu0 %v4621
    %4663 = vmatprep.subr.mxu0 %v4626
    %4664 = vmatpush1.msra.mxu0 %v4625
    %4665 = vmatprep.subr.mxu0 %v4630
    %4666 = vmatpush1.msra.mxu0 %v4629
    %4667 = vmatprep.subr.mxu0 %v4634
    %4668 = vmatpush1.msra.mxu0 %v4633
    %4669 = vmatprep.subr.mxu0 0.0
    %4670 = vmatpush1.msra.mxu0 0.0
    %4671 = vmatprep.subr.mxu0 0.0
    %4672 = vmatpush1.msra.mxu0 0.0
    %4673 = vmatprep.subr.mxu0 0.0
    %4674 = vmatpush1.msra.mxu0 0.0
    %4675 = vmatprep.subr.mxu0 0.0
    %4676 = vmatpush1.msra.mxu0 0.0
    %4677 = vmatprep.subr.mxu0 0.0
    %4678 = vmatpush1.msra.mxu0 0.0
    %4679 = vmatprep.subr.mxu0 0.0
    %4680 = vmatpush1.msra.mxu0 0.0
    %4681 = vmatprep.subr.mxu0 0.0
    %4682 = vmatpush1.msra.mxu0 0.0
    %4683 = vmatprep.subr.mxu0 0.0
    %4684 = vmatpush1.msra.mxu0 0.0
    %4685 = vmatprep.subr.mxu0 0.0
    %4686 = vmatpush1.msra.mxu0 0.0
    %4687 = vmatprep.subr.mxu0 0.0
    %4688 = vmatpush1.msra.mxu0 0.0
    %4689 = vmatprep.subr.mxu0 0.0
    %4690 = vmatpush1.msra.mxu0 0.0
    %4691 = vmatprep.subr.mxu0 0.0
    %4692 = vmatpush1.msra.mxu0 0.0
    %4693 = vmatprep.subr.mxu0 0.0
    %4694 = vmatpush1.msra.mxu0 0.0
    %4695 = vmatprep.subr.mxu0 0.0
    %4696 = vmatpush1.msra.mxu0 0.0
    %4697 = vmatprep.subr.mxu0 0.0
    %4698 = vmatpush1.msra.mxu0 0.0
    %4699 = vmatprep.subr.mxu0 0.0
    %4700 = vmatpush1.msra.mxu0 0.0
    %4701 = vmatprep.mubr.f32.mxu0 0.0
    %4702 = vmatmul.mubr.f32.gmra.mrb[0].mxu0 %v4572
    %v4703 = vpop.f32.mrb[0].mxu0
    %v4704 = vadd.f32 0.0, %v4703
    %v4705 = vpop.f32.mrb[0].mxu0
    %v4706 = vadd.f32 0.0, %v4705
    %4707 = vdwg.mxu0
    %4708 = vmatprep.subr.mxu0 %v4576
    %4709 = vmatpush1.msra.mxu0 %v4575
    %4710 = vmatprep.subr.mxu0 %v4580
    %4711 = vmatpush1.msra.mxu0 %v4579
    %4712 = vmatprep.subr.mxu0 %v4584
    %4713 = vmatpush1.msra.mxu0 %v4583
    %4714 = vmatprep.subr.mxu0 %v4588
    %4715 = vmatpush1.msra.mxu0 %v4587
    %4716 = vmatprep.subr.mxu0 %v4592
    %4717 = vmatpush1.msra.mxu0 %v4591
    %4718 = vmatprep.subr.mxu0 %v4596
    %4719 = vmatpush1.msra.mxu0 %v4595
    %4720 = vmatprep.subr.mxu0 %v4600
    %4721 = vmatpush1.msra.mxu0 %v4599
    %4722 = vmatprep.subr.mxu0 %v4604
    %4723 = vmatpush1.msra.mxu0 %v4603
    %4724 = vmatprep.subr.mxu0 %v4608
    %4725 = vmatpush1.msra.mxu0 %v4607
    %4726 = vmatprep.subr.mxu0 %v4612
    %4727 = vmatpush1.msra.mxu0 %v4611
    %4728 = vmatprep.subr.mxu0 %v4616
    %4729 = vmatpush1.msra.mxu0 %v4615
    %4730 = vmatprep.subr.mxu0 %v4620
    %4731 = vmatpush1.msra.mxu0 %v4619
    %4732 = vmatprep.subr.mxu0 %v4624
    %4733 = vmatpush1.msra.mxu0 %v4623
    %4734 = vmatprep.subr.mxu0 %v4628
    %4735 = vmatpush1.msra.mxu0 %v4627
    %4736 = vmatprep.subr.mxu0 %v4632
    %4737 = vmatpush1.msra.mxu0 %v4631
    %4738 = vmatprep.subr.mxu0 %v4636
    %4739 = vmatpush1.msra.mxu0 %v4635
    %4740 = vmatprep.subr.mxu0 0.0
    %4741 = vmatpush1.msra.mxu0 0.0
    %4742 = vmatprep.subr.mxu0 0.0
    %4743 = vmatpush1.msra.mxu0 0.0
    %4744 = vmatprep.subr.mxu0 0.0
    %4745 = vmatpush1.msra.mxu0 0.0
    %4746 = vmatprep.subr.mxu0 0.0
    %4747 = vmatpush1.msra.mxu0 0.0
    %4748 = vmatprep.subr.mxu0 0.0
    %4749 = vmatpush1.msra.mxu0 0.0
    %4750 = vmatprep.subr.mxu0 0.0
    %4751 = vmatpush1.msra.mxu0 0.0
    %4752 = vmatprep.subr.mxu0 0.0
    %4753 = vmatpush1.msra.mxu0 0.0
    %4754 = vmatprep.subr.mxu0 0.0
    %4755 = vmatpush1.msra.mxu0 0.0
    %4756 = vmatprep.subr.mxu0 0.0
    %4757 = vmatpush1.msra.mxu0 0.0
    %4758 = vmatprep.subr.mxu0 0.0
    %4759 = vmatpush1.msra.mxu0 0.0
    %4760 = vmatprep.subr.mxu0 0.0
    %4761 = vmatpush1.msra.mxu0 0.0
    %4762 = vmatprep.subr.mxu0 0.0
    %4763 = vmatpush1.msra.mxu0 0.0
    %4764 = vmatprep.subr.mxu0 0.0
    %4765 = vmatpush1.msra.mxu0 0.0
    %4766 = vmatprep.subr.mxu0 0.0
    %4767 = vmatpush1.msra.mxu0 0.0
    %4768 = vmatprep.subr.mxu0 0.0
    %4769 = vmatpush1.msra.mxu0 0.0
    %4770 = vmatprep.subr.mxu0 0.0
    %4771 = vmatpush1.msra.mxu0 0.0
    %4772 = vmatprep.mubr.f32.mxu0 0.0
    %4773 = vmatmul.mubr.f32.gmra.mrb[0].mxu0 %v4572
    %v4774 = vpop.f32.mrb[0].mxu0
    %v4775 = vadd.f32 0.0, %v4774
    %v4776 = vpop.f32.mrb[0].mxu0
    %v4777 = vadd.f32 0.0, %v4776
    %4778 = vdwg.mxu0
    %v4779 = vadd.f32 %v4568, %v4704
    %v4780 = vadd.f32 %v4569, %v4706
    %v4781 = vadd.f32 %v4570, %v4775
    %v4782 = vadd.f32 %v4571, %v4777
    %v4783 = vld [vmem:[#allocation7] sm:$0xff]
    %v4784 = vxor.u32 %v4779, 2147483648
    %v4785 = vmul.f32 %v4784, 1.442695
    %v4786 = vpow.pop %v4785
    %v4787 = vadd.f32 %v4786, 1.0
    %v4788 = vrcp.pop %v4787
    %v4789 = vmul.f32 1.0, %v4788
    %v4790 = vxor.u32 %v4780, 2147483648
    %v4791 = vmul.f32 %v4790, 1.442695
    %v4792 = vpow.pop %v4791
    %v4793 = vadd.f32 %v4792, 1.0
    %v4794 = vrcp.pop %v4793
    %v4795 = vmul.f32 1.0, %v4794
    %v4796 = vtanh.pop %v4781
    %v4797 = vxor.u32 %v4782, 2147483648
    %v4798 = vmul.f32 %v4797, 1.442695
    %v4799 = vpow.pop %v4798
    %v4800 = vadd.f32 %v4799, 1.0
    %v4801 = vrcp.pop %v4800
    %v4802 = vmul.f32 1.0, %v4801
    %v4803 = vmul.f32 %v4795, %v4783
    %v4804 = vmul.f32 %v4789, %v4796
    %v4805 = vadd.f32 %v4803, %v4804
    %v4806 = vtanh.pop %v4805
    %v4807 = vmul.f32 %v4802, %v4806
    %4808 = vst [vmem:[#allocation6] sm:$0xff] %v4807
    %4809 = vst [vmem:[#allocation7] sm:$0xff] %v4805
    %s4810 = scalar_lea.vmem [#allocation5], 56
    %4811 = vst [vmem:[%s4810] sm:$0xff] %v4807
    %v4812 = vld [vmem:[#allocation6] sm:$0xff]
    %s4813 = scalar_lea.vmem [#allocation23], 8
    %4814 = vst [vmem:[%s4813] sm:$0xff] %v4812
    %v4815 = vld [vmem:[#allocation7] sm:$0xff]
    %s4816 = scalar_lea.vmem [#allocation25], 8
    %4817 = vst [vmem:[%s4816] sm:$0xff] %v4815
    %v4818 = vld [vmem:[#allocation5] sm:$0xff]
    %v4819 = vld [vmem:[#allocation5 + $0x8] sm:$0xff]
    %v4820 = vld [vmem:[#allocation5 + $0x10] sm:$0xff]
    %v4821 = vld [vmem:[#allocation5 + $0x18] sm:$0xff]
    %v4822 = vld [vmem:[#allocation5 + $0x20] sm:$0xff]
    %v4823 = vld [vmem:[#allocation5 + $0x28] sm:$0xff]
    %v4824 = vld [vmem:[#allocation5 + $0x30] sm:$0xff]
    %v4825 = vld [vmem:[#allocation5 + $0x38] sm:$0xff]
    %v4826 = vld [vmem:[#allocation20] sm:$0xff]
    %v4827 = vld [vmem:[#allocation20 + $0x8] sm:$0xff]
    %v4828 = vld [vmem:[#allocation20 + $0x10] sm:$0xff]
    %v4829 = vld [vmem:[#allocation20 + $0x18] sm:$0xff]
    %v4830 = vld [vmem:[#allocation20 + $0x20] sm:$0xff]
    %v4831 = vld [vmem:[#allocation20 + $0x28] sm:$0xff]
    %v4832 = vld [vmem:[#allocation20 + $0x30] sm:$0xff]
    %v4833 = vld [vmem:[#allocation20 + $0x38] sm:$0xff]
    %v4834 = vld [vmem:[#allocation20 + $0x40] sm:$0xff]
    %v4835 = vld [vmem:[#allocation20 + $0x48] sm:$0xff]
    %v4836 = vld [vmem:[#allocation20 + $0x50] sm:$0xff]
    %v4837 = vld [vmem:[#allocation20 + $0x58] sm:$0xff]
    %v4838 = vld [vmem:[#allocation20 + $0x60] sm:$0xff]
    %v4839 = vld [vmem:[#allocation20 + $0x68] sm:$0xff]
    %v4840 = vld [vmem:[#allocation20 + $0x70] sm:$0xff]
    %v4841 = vld [vmem:[#allocation20 + $0x78] sm:$0xff]
    %v4842 = vld [vmem:[%s10] sm:$0x1]
    %v4844 = vlaneseq
    %v4845 = vshrl.u32 %v4844, 7
    %v4846 = vsub.s32 0, %v4845
    %v4847 = vrot.slane %v4842, %v4846
    %4849 = vmatprep.subr.mxu0 0.0
    %4850 = vmatpush1.msra.mxu0 %v4826
    %4851 = vmatprep.subr.mxu0 0.0
    %4852 = vmatpush1.msra.mxu0 %v4827
    %4853 = vmatprep.subr.mxu0 0.0
    %4854 = vmatpush1.msra.mxu0 %v4828
    %4855 = vmatprep.subr.mxu0 0.0
    %4856 = vmatpush1.msra.mxu0 %v4829
    %4857 = vmatprep.subr.mxu0 0.0
    %4858 = vmatpush1.msra.mxu0 %v4830
    %4859 = vmatprep.subr.mxu0 0.0
    %4860 = vmatpush1.msra.mxu0 %v4831
    %4861 = vmatprep.subr.mxu0 0.0
    %4862 = vmatpush1.msra.mxu0 %v4832
    %4863 = vmatprep.subr.mxu0 0.0
    %4864 = vmatpush1.msra.mxu0 %v4833
    %4865 = vmatprep.subr.mxu0 0.0
    %4866 = vmatpush1.msra.mxu0 %v4834
    %4867 = vmatprep.subr.mxu0 0.0
    %4868 = vmatpush1.msra.mxu0 %v4835
    %4869 = vmatprep.subr.mxu0 0.0
    %4870 = vmatpush1.msra.mxu0 %v4836
    %4871 = vmatprep.subr.mxu0 0.0
    %4872 = vmatpush1.msra.mxu0 %v4837
    %4873 = vmatprep.subr.mxu0 0.0
    %4874 = vmatpush1.msra.mxu0 %v4838
    %4875 = vmatprep.subr.mxu0 0.0
    %4876 = vmatpush1.msra.mxu0 %v4839
    %4877 = vmatprep.subr.mxu0 0.0
    %4878 = vmatpush1.msra.mxu0 %v4840
    %4879 = vmatprep.subr.mxu0 0.0
    %4880 = vmatpush1.msra.mxu0 %v4841
    %4881 = vmatprep.subr.mxu0 0.0
    %4882 = vmatpush1.msra.mxu0 0.0
    %4883 = vmatprep.subr.mxu0 0.0
    %4884 = vmatpush1.msra.mxu0 0.0
    %4885 = vmatprep.subr.mxu0 0.0
    %4886 = vmatpush1.msra.mxu0 0.0
    %4887 = vmatprep.subr.mxu0 0.0
    %4888 = vmatpush1.msra.mxu0 0.0
    %4889 = vmatprep.subr.mxu0 0.0
    %4890 = vmatpush1.msra.mxu0 0.0
    %4891 = vmatprep.subr.mxu0 0.0
    %4892 = vmatpush1.msra.mxu0 0.0
    %4893 = vmatprep.subr.mxu0 0.0
    %4894 = vmatpush1.msra.mxu0 0.0
    %4895 = vmatprep.subr.mxu0 0.0
    %4896 = vmatpush1.msra.mxu0 0.0
    %4897 = vmatprep.subr.mxu0 0.0
    %4898 = vmatpush1.msra.mxu0 0.0
    %4899 = vmatprep.subr.mxu0 0.0
    %4900 = vmatpush1.msra.mxu0 0.0
    %4901 = vmatprep.subr.mxu0 0.0
    %4902 = vmatpush1.msra.mxu0 0.0
    %4903 = vmatprep.subr.mxu0 0.0
    %4904 = vmatpush1.msra.mxu0 0.0
    %4905 = vmatprep.subr.mxu0 0.0
    %4906 = vmatpush1.msra.mxu0 0.0
    %4907 = vmatprep.subr.mxu0 0.0
    %4908 = vmatpush1.msra.mxu0 0.0
    %4909 = vmatprep.subr.mxu0 0.0
    %4910 = vmatpush1.msra.mxu0 0.0
    %4911 = vmatprep.subr.mxu0 0.0
    %4912 = vmatpush1.msra.mxu0 0.0
    %4913 = vmatprep.mubr.f32.mxu0 0.0
    %4914 = vmatmul.mubr.f32.gmra.mrb[0].mxu0 %v4818
    %v4915 = vpop.f32.mrb[0].mxu0
    %v4916 = vadd.f32 %v4847, %v4915
    %v4917 = vpop.f32.mrb[0].mxu0
    %4918 = vmatprep.mubr.f32.mxu0 0.0
    %4919 = vmatmul.mubr.f32.gmra.mrb[0].mxu0 %v4819
    %v4920 = vpop.f32.mrb[0].mxu0
    %v4921 = vadd.f32 %v4847, %v4920
    %v4922 = vpop.f32.mrb[0].mxu0
    %4923 = vmatprep.mubr.f32.mxu0 0.0
    %4924 = vmatmul.mubr.f32.gmra.mrb[0].mxu0 %v4820
    %v4925 = vpop.f32.mrb[0].mxu0
    %v4926 = vadd.f32 %v4847, %v4925
    %v4927 = vpop.f32.mrb[0].mxu0
    %4928 = vmatprep.mubr.f32.mxu0 0.0
    %4929 = vmatmul.mubr.f32.gmra.mrb[0].mxu0 %v4821
    %v4930 = vpop.f32.mrb[0].mxu0
    %v4931 = vadd.f32 %v4847, %v4930
    %v4932 = vpop.f32.mrb[0].mxu0
    %4933 = vmatprep.mubr.f32.mxu0 0.0
    %4934 = vmatmul.mubr.f32.gmra.mrb[0].mxu0 %v4822
    %v4935 = vpop.f32.mrb[0].mxu0
    %v4936 = vadd.f32 %v4847, %v4935
    %v4937 = vpop.f32.mrb[0].mxu0
    %4938 = vmatprep.mubr.f32.mxu0 0.0
    %4939 = vmatmul.mubr.f32.gmra.mrb[0].mxu0 %v4823
    %v4940 = vpop.f32.mrb[0].mxu0
    %v4941 = vadd.f32 %v4847, %v4940
    %v4942 = vpop.f32.mrb[0].mxu0
    %4943 = vmatprep.mubr.f32.mxu0 0.0
    %4944 = vmatmul.mubr.f32.gmra.mrb[0].mxu0 %v4824
    %v4945 = vpop.f32.mrb[0].mxu0
    %v4946 = vadd.f32 %v4847, %v4945
    %v4947 = vpop.f32.mrb[0].mxu0
    %4948 = vmatprep.mubr.f32.mxu0 0.0
    %4949 = vmatmul.mubr.f32.gmra.mrb[0].mxu0 %v4825
    %v4950 = vpop.f32.mrb[0].mxu0
    %v4951 = vadd.f32 %v4847, %v4950
    %v4952 = vpop.f32.mrb[0].mxu0
    %4953 = vdwg.mxu0
    %4954 = vst [vmem:[#allocation22] sm:$0xff] %v4916
    %4955 = vst [vmem:[#allocation22 + $0x8] sm:$0xff] %v4921
    %4956 = vst [vmem:[#allocation22 + $0x10] sm:$0xff] %v4926
    %4957 = vst [vmem:[#allocation22 + $0x18] sm:$0xff] %v4931
    %4958 = vst [vmem:[#allocation22 + $0x20] sm:$0xff] %v4936
    %4959 = vst [vmem:[#allocation22 + $0x28] sm:$0xff] %v4941
    %4960 = vst [vmem:[#allocation22 + $0x30] sm:$0xff] %v4946
    %4961 = vst [vmem:[#allocation22 + $0x38] sm:$0xff] %v4951
    // Predicated region
    $region78: #{tpu_custom_call.1} parent=1 // pred_check
      _
    $region79: #{tpu_custom_call.1} parent=1 // pred_check_branch
      %4963 = sbr.rel (0) target = $region81
    $region80: #{tpu_custom_call.1} parent=1 // pred_region
      %s4965 = ssub.s32 1024, 1024
      %4966 = vsyncadd [#allocation10], %s4965
      %s4967 = sshll.u32 [#allocation22], 4
      %s4968 = int_to_ptr.vmem [resolvable:$true] %s4967
      %4973 = dma.vmem_to_hbm [thread:$0]  %s4968, 1024, %s11, [#allocation10], 128, 128, 8
    $region81: #{tpu_custom_call.1} parent=1 // pred_fallthru
      _
    // Predicated region
    $region82: #{tpu_custom_call.1} parent=1 // pred_check
      _
    $region83: #{tpu_custom_call.1} parent=1 // pred_check_branch
      %4975 = sbr.rel (0) target = $region85
    $region84: #{tpu_custom_call.1} parent=1 // pred_region
      %s4977 = ssub.s32 256, 256
      %4978 = vsyncadd [#allocation24], %s4977
      %s4979 = sshll.u32 [#allocation23], 4
      %s4980 = int_to_ptr.vmem [resolvable:$true] %s4979
      %4985 = dma.vmem_to_hbm [thread:$0]  %s4980, 256, %s12, [#allocation24], 128, 128, 8
    $region85: #{tpu_custom_call.1} parent=1 // pred_fallthru
      _
    // Predicated region
    $region86: #{tpu_custom_call.1} parent=1 // pred_check
      _
    $region87: #{tpu_custom_call.1} parent=1 // pred_check_branch
      %4987 = sbr.rel (0) target = $region89
    $region88: #{tpu_custom_call.1} parent=1 // pred_region
      %s4989 = ssub.s32 256, 256
      %4990 = vsyncadd [#allocation24], %s4989
      %s4991 = sshll.u32 [#allocation25], 4
      %s4992 = int_to_ptr.vmem [resolvable:$true] %s4991
      %4997 = dma.vmem_to_hbm [thread:$0]  %s4992, 256, %s13, [#allocation24], 128, 128, 8
    $region89: #{tpu_custom_call.1} parent=1 // pred_fallthru
      _
    // Predicated region
    $region90: #{tpu_custom_call.1} parent=1 // pred_check
      _
    $region91: #{tpu_custom_call.1} parent=1 // pred_check_branch
      %4999 = sbr.rel (0) target = $region93
    $region92: #{tpu_custom_call.1} parent=1 // pred_region
      %5000 = dma.done [#allocation10], 1024
    $region93: #{tpu_custom_call.1} parent=1 // pred_fallthru
      _
    // Predicated region
    $region94: #{tpu_custom_call.1} parent=1 // pred_check
      _
    $region95: #{tpu_custom_call.1} parent=1 // pred_check_branch
      %5002 = sbr.rel (0) target = $region97
    $region96: #{tpu_custom_call.1} parent=1 // pred_region
      %5003 = dma.done [#allocation24], 256
    $region97: #{tpu_custom_call.1} parent=1 // pred_fallthru
      _
    // Predicated region
    $region98: #{tpu_custom_call.1} parent=1 // pred_check
      _
    $region99: #{tpu_custom_call.1} parent=1 // pred_check_branch
      %5005 = sbr.rel (0) target = $region101
    $region100: #{tpu_custom_call.1} parent=1 // pred_region
      %5006 = dma.done [#allocation24], 256
    $region101: #{tpu_custom_call.1} parent=1 // pred_fallthru
      _
    %5007 = vsyncpa [#allocation9], 1
    %5008 = vsyncpa [#allocation12], 1
    %5009 = vsyncpa [#allocation15], 1
    %5010 = vsyncpa [#allocation18], 1
    %5011 = vsyncpa [#allocation21], 1
    %5012 = vsyncpa [#allocation10], 1
    %5013 = vsyncpa [#allocation24], 1

</llo_original>
